<compile_context>
chip_gen: v5e
topology: v5e:2x2
jax: 0.10.0
libtpu: 0.0.40
codegen_flags: <defaults>
</compile_context>

<pallas_src>
import functools

import jax
import jax.numpy as jnp
from jax.experimental import pallas as pl
from jax.experimental.pallas import tpu as pltpu


# For output phase ph (pw), the 3x3 kernel rows (cols) that collapse onto the
# two original-resolution input taps:  _PHASE_GROUPS[phase][tap] -> 3x3 indices
# whose weights are summed (nearest-x2 duplicates pixels, so taps merge).
_PHASE_GROUPS = (((0,), (1, 2)), ((0, 1), (2,)))


# ---------------------------------------------------------------------------
# Pass 1: fused nearest-x2-upsample + 3x3 conv + per-block BN-stat partials.
# ---------------------------------------------------------------------------
def _upconv_kernel(x_ref, w_ref, o_ref, sum_ref, sq_ref):
    # x_ref  : (1, H+2, W+2, Cin)       bf16  whole zero-padded original image
    # w_ref  : (16, Cin, coutp)         bf16  per-(phase, tap) collapsed kernels
    # o_ref  : (th, 2, W, 2*coutp)      bf16  phase-interleaved conv output
    # sum_ref, sq_ref : (1, 1, 1, coutp) f32  per-block channel sum / sum-of-sq
    th, _, W, two_coutp = o_ref.shape
    coutp = two_coutp // 2
    cin = x_ref.shape[-1]

    hb = pl.program_id(1)
    row0 = hb * th

    # The 9 shifted views of the original-resolution image this row block
    # needs, flattened to (th*W, Cin) matmul operands.  All VMEM-local; the
    # im2col matrix never exists in HBM.  (The leading-dim merge is layout
    # free when W is a multiple of the bf16 sublane tile, as in the demo.)
    taps = {}
    for r in range(3):
        for c in range(3):
            t = x_ref[0, pl.ds(row0 + r, th), c:c + W, :]   # (th, W, Cin)
            taps[(r, c)] = t.reshape(th * W, cin)

    s_acc = jnp.zeros((1, coutp), jnp.float32)
    q_acc = jnp.zeros((1, coutp), jnp.float32)
    for ph in range(2):
        for pw in range(2):
            acc = jnp.zeros((th * W, coutp), jnp.float32)
            for a in range(2):
                for b in range(2):
                    w_idx = ((ph * 2 + pw) * 2 + a) * 2 + b
                    acc += jnp.dot(taps[(ph + a, pw + b)], w_ref[w_idx],
                                   preferred_element_type=jnp.float32)
            # BN statistics from the f32 accumulator (before bf16 rounding).
            s_acc = s_acc + jnp.sum(acc, axis=0, keepdims=True)
            q_acc = q_acc + jnp.sum(acc * acc, axis=0, keepdims=True)
            y = acc.reshape(th, W, coutp).astype(o_ref.dtype)
            # Lane-aligned (offset 0 or 128k) full-width store.
            o_ref[:, ph, :, pw * coutp:(pw + 1) * coutp] = y
    sum_ref[0, 0] = s_acc
    sq_ref[0, 0] = q_acc


# ---------------------------------------------------------------------------
# Pass 2: BatchNorm affine (precomputed per-channel scale/shift) + ReLU.
# ---------------------------------------------------------------------------
def _bn_relu_kernel(y_ref, scale_ref, shift_ref, o_ref):
    y = y_ref[...].astype(jnp.float32)
    o_ref[...] = jnp.maximum(y * scale_ref[...] + shift_ref[...], 0.0)


def _round_up(x, m):
    return ((x + m - 1) // m) * m


def _largest_divisor(n, cap):
    cap = max(1, min(cap, n))
    for d in range(cap, 0, -1):
        if n % d == 0:
            return d
    return 1


@functools.partial(jax.jit, static_argnames=("eps",))
def upblock2d_forward(x_nchw, weight, bias, gamma, beta, eps=1e-5):
    """x_nchw: (N, Cin, H, W). weight: (Cout, Cin, 3, 3). Returns (N, Cout, 2H, 2W)."""
    del bias  # exact cancellation under train-mode BatchNorm (see header note)
    N, Cin, H, W = x_nchw.shape
    Cout = weight.shape[0]
    H2, W2 = 2 * H, 2 * W
    M2 = N * H2 * W2
    coutp = _round_up(Cout, 128)          # lane-dense channel tile

    # ---- tiny XLA glue on the (small) input side ---------------------------
    x = jnp.transpose(x_nchw, (0, 2, 3, 1)).astype(jnp.bfloat16)      # NHWC
    x_pad = jnp.pad(x, ((0, 0), (1, 1), (1, 1), (0, 0)))              # (N,H+2,W+2,Cin)

    # Collapse the 3x3 kernel into 4 phase-specific 2x2 kernels acting on the
    # original-resolution input (the nearest-x2 upsample folded into algebra).
    w3 = jnp.transpose(weight, (2, 3, 1, 0)).astype(jnp.float32)      # (3,3,Cin,Cout)
    w3 = jnp.pad(w3, ((0, 0), (0, 0), (0, 0), (0, coutp - Cout)))

    def _phase_tap(ph, pw, a, b):
        return sum(w3[dy, dx]
                   for dy in _PHASE_GROUPS[ph][a]
                   for dx in _PHASE_GROUPS[pw][b])

    wp = jnp.stack([_phase_tap(ph, pw, a, b)
                    for ph in range(2) for pw in range(2)
                    for a in range(2) for b in range(2)])
    wp = wp.reshape(16, Cin, coutp).astype(jnp.bfloat16)

    # Row-block tile (original resolution): keep the per-phase matmul M dim
    # (th * W) around <= 2048 rows so double-buffered blocks fit comfortably
    # in VMEM on v7x (64 MiB) as well as v5e/v6e (128 MiB).
    th = _largest_divisor(H, max(1, 2048 // max(W, 1)))
    n_h = H // th

    # ---- Pallas pass 1: upsample+conv, phase-interleaved output + stats -----
    conv_ph, sum_part, sq_part = pl.pallas_call(
        _upconv_kernel,
        grid=(N, n_h),
        in_specs=[
            # Whole padded image per n (stays resident across the h axis).
            pl.BlockSpec((1, H + 2, W + 2, Cin), lambda n, h: (n, 0, 0, 0)),
            pl.BlockSpec((16, Cin, coutp), lambda n, h: (0, 0, 0)),
        ],
        out_specs=(
            pl.BlockSpec((th, 2, W, 2 * coutp),
                         lambda n, h: (n * n_h + h, 0, 0, 0)),
            pl.BlockSpec((1, 1, 1, coutp), lambda n, h: (n, h, 0, 0)),
            pl.BlockSpec((1, 1, 1, coutp), lambda n, h: (n, h, 0, 0)),
        ),
        out_shape=(
            # (N*H, ph, W, pw*coutp)  ==  free reshape of NHWC (N, H2, W2, coutp)
            jax.ShapeDtypeStruct((N * H, 2, W, 2 * coutp), jnp.bfloat16),
            jax.ShapeDtypeStruct((N, n_h, 1, coutp), jnp.float32),
            jax.ShapeDtypeStruct((N, n_h, 1, coutp), jnp.float32),
        ),
        compiler_params=pltpu.CompilerParams(
            dimension_semantics=("parallel", "parallel"),
            vmem_limit_bytes=48 * 1024 * 1024),
    )(x_pad, wp)
    # TODO(synk): add Cin / Cout grid tiling for very large channel counts
    # (>~1k); at those sizes the single 128-lane-padded Cout block gets big.

    # ---- glue: batch statistics -> per-channel scale / shift ---------------
    ch_sum = jnp.sum(sum_part, axis=(0, 1, 2))                 # (coutp,)
    ch_sq = jnp.sum(sq_part, axis=(0, 1, 2))
    mean = ch_sum / M2
    var = jnp.maximum(ch_sq / M2 - mean * mean, 0.0)           # clamp f32 cancellation
    gamma_p = jnp.pad(gamma.astype(jnp.float32), (0, coutp - Cout))
    beta_p = jnp.pad(beta.astype(jnp.float32), (0, coutp - Cout))
    scale = gamma_p * jax.lax.rsqrt(var + eps)
    shift = beta_p - mean * scale

    # ---- Pallas pass 2: BN affine + ReLU (lane-dense, large row tiles) ------
    conv_rows = conv_ph.reshape(M2, coutp)                     # free reshape
    tm2 = _largest_divisor(M2, 2048)
    out_rows = pl.pallas_call(
        _bn_relu_kernel,
        grid=(M2 // tm2,),
        in_specs=[
            pl.BlockSpec((tm2, coutp), lambda i: (i, 0)),
            pl.BlockSpec((1, coutp), lambda i: (0, 0)),
            pl.BlockSpec((1, coutp), lambda i: (0, 0)),
        ],
        out_specs=pl.BlockSpec((tm2, coutp), lambda i: (i, 0)),
        out_shape=jax.ShapeDtypeStruct((M2, coutp), jnp.float32),
        compiler_params=pltpu.CompilerParams(
            dimension_semantics=("parallel",),
            vmem_limit_bytes=48 * 1024 * 1024),
    )(conv_rows, scale.reshape(1, coutp), shift.reshape(1, coutp))

    out = out_rows.reshape(N, H2, W2, coutp)[..., :Cout]
    # TODO(synk): a consumer that accepts NHWC could skip this final
    # slice + transpose (one extra XLA copy pass over the output tensor).
    return jnp.transpose(out, (0, 3, 1, 2))                    # NCHW


# ---------------------------------------------------------------------------
# Pure-JAX reference (inputs pre-cast to bf16 to match the MXU operand dtype).
# ---------------------------------------------------------------------------
def upblock2d_reference(x, weight, bias, gamma, beta, eps=1e-5):
    xb = x.astype(jnp.bfloat16).astype(jnp.float32)
    wb = weight.astype(jnp.bfloat16).astype(jnp.float32)
    up = jnp.repeat(jnp.repeat(xb, 2, axis=2), 2, axis=3)      # nearest x2
    conv = jax.lax.conv_general_dilated(
        up, wb, window_strides=(1, 1), padding=((1, 1), (1, 1)),
        dimension_numbers=("NCHW", "OIHW", "NCHW"))
    conv = conv + bias[None, :, None, None]
    mean = jnp.mean(conv, axis=(0, 2, 3), keepdims=True)
    var = jnp.var(conv, axis=(0, 2, 3), keepdims=True)         # biased, as BN uses
    y = (conv - mean) * jax.lax.rsqrt(var + eps)
    y = y * gamma[None, :, None, None] + beta[None, :, None, None]
    return jnp.maximum(y, 0.0)


if __name__ == "__main__":
    # Small shapes consistent with the module: N=2, Cin=4, H=W=16, Cout=8
    N, Cin, H, W = 2, 4, 16, 16
    Cout, ksize = 8, 3

    key = jax.random.PRNGKey(0)
    kx, kw, kb = jax.random.split(key, 3)

    x = jax.random.normal(kx, (N, Cin, H, W), dtype=jnp.float32)

    # Deterministic parameter init (shapes per nn.Conv2d / nn.BatchNorm2d).
    fan_in = Cin * ksize * ksize
    bound = 1.0 / (fan_in ** 0.5)
    weight = jax.random.uniform(kw, (Cout, Cin, ksize, ksize),
                                minval=-bound, maxval=bound, dtype=jnp.float32)
    bias = jax.random.uniform(kb, (Cout,), minval=-bound, maxval=bound,
                              dtype=jnp.float32)
    gamma = jnp.ones((Cout,), dtype=jnp.float32)   # BatchNorm2d weight init
    beta = jnp.zeros((Cout,), dtype=jnp.float32)   # BatchNorm2d bias init

    out = upblock2d_forward(x, weight, bias, gamma, beta)
    jax.block_until_ready(out)

    assert out.shape == (N, Cout, 2 * H, 2 * W)
    assert bool(jnp.all(jnp.isfinite(out)))

    # Correctness vs pure-JAX reference (loose tol: bf16 intermediate storage).
    ref = upblock2d_reference(x, weight, bias, gamma, beta)
    max_err = float(jnp.max(jnp.abs(out - ref)))
    assert max_err < 5e-2, f"max abs error vs reference: {max_err}"

    print("KERNEL_OK")
</pallas_src>

<mosaic_0001>
module attributes {stable_mosaic.version = 11 : i64} {
  func.func @_upconv_kernel(%arg0: i32, %arg1: i32, %arg2: memref<1x18x18x4xbf16, #tpu.memory_space<vmem>>, %arg3: memref<16x4x128xbf16, #tpu.memory_space<vmem>>, %arg4: memref<16x2x16x256xbf16, #tpu.memory_space<vmem>>, %arg5: memref<1x1x1x128xf32, #tpu.memory_space<vmem>>, %arg6: memref<1x1x1x128xf32, #tpu.memory_space<vmem>>) attributes {dimension_semantics = [#tpu.dimension_semantics<parallel>, #tpu.dimension_semantics<parallel>], iteration_bounds = array<i64: 2, 1>, scalar_prefetch = 0 : i64, scratch_operands = 0 : i64, tpu.core_type = #tpu.core_type<tc>, window_params = [{transform_indices = @transform_0, window_bounds = array<i64: 1, 18, 18, 4>}, {pipeline_mode = #tpu.pipeline_mode<synchronous>, transform_indices = @transform_1, window_bounds = array<i64: 16, 4, 128>}, {transform_indices = @transform_2, window_bounds = array<i64: 16, 2, 16, 256>}, {transform_indices = @transform_3, window_bounds = array<i64: 1, 1, 1, 128>}, {transform_indices = @transform_4, window_bounds = array<i64: 1, 1, 1, 128>}]} {
    %c16_i32 = arith.constant 16 : i32
    %0 = arith.muli %arg1, %c16_i32 : i32
    %c0_i32 = arith.constant 0 : i32
    %1 = arith.addi %0, %c0_i32 : i32
    %c0 = arith.constant 0 : index
    %2 = arith.index_cast %1 : i32 to index
    %c0_0 = arith.constant 0 : index
    %c0_1 = arith.constant 0 : index
    %3 = vector.load %arg2[%c0, %2, %c0_0, %c0_1] : memref<1x18x18x4xbf16, #tpu.memory_space<vmem>>, vector<1x16x16x4xbf16>
    %4 = vector.shape_cast %3 : vector<1x16x16x4xbf16> to vector<16x16x4xbf16>
    %5 = vector.shape_cast %4 : vector<16x16x4xbf16> to vector<256x4xbf16>
    %c0_i32_2 = arith.constant 0 : i32
    %6 = arith.addi %0, %c0_i32_2 : i32
    %c0_3 = arith.constant 0 : index
    %7 = arith.index_cast %6 : i32 to index
    %c1 = arith.constant 1 : index
    %c0_4 = arith.constant 0 : index
    %8 = vector.load %arg2[%c0_3, %7, %c1, %c0_4] : memref<1x18x18x4xbf16, #tpu.memory_space<vmem>>, vector<1x16x16x4xbf16>
    %9 = vector.shape_cast %8 : vector<1x16x16x4xbf16> to vector<16x16x4xbf16>
    %10 = vector.shape_cast %9 : vector<16x16x4xbf16> to vector<256x4xbf16>
    %c0_i32_5 = arith.constant 0 : i32
    %11 = arith.addi %0, %c0_i32_5 : i32
    %c0_6 = arith.constant 0 : index
    %12 = arith.index_cast %11 : i32 to index
    %c2 = arith.constant 2 : index
    %c0_7 = arith.constant 0 : index
    %13 = vector.load %arg2[%c0_6, %12, %c2, %c0_7] : memref<1x18x18x4xbf16, #tpu.memory_space<vmem>>, vector<1x16x16x4xbf16>
    %14 = vector.shape_cast %13 : vector<1x16x16x4xbf16> to vector<16x16x4xbf16>
    %15 = vector.shape_cast %14 : vector<16x16x4xbf16> to vector<256x4xbf16>
    %c1_i32 = arith.constant 1 : i32
    %16 = arith.addi %0, %c1_i32 : i32
    %c0_8 = arith.constant 0 : index
    %17 = arith.index_cast %16 : i32 to index
    %c0_9 = arith.constant 0 : index
    %c0_10 = arith.constant 0 : index
    %18 = vector.load %arg2[%c0_8, %17, %c0_9, %c0_10] : memref<1x18x18x4xbf16, #tpu.memory_space<vmem>>, vector<1x16x16x4xbf16>
    %19 = vector.shape_cast %18 : vector<1x16x16x4xbf16> to vector<16x16x4xbf16>
    %20 = vector.shape_cast %19 : vector<16x16x4xbf16> to vector<256x4xbf16>
    %c1_i32_11 = arith.constant 1 : i32
    %21 = arith.addi %0, %c1_i32_11 : i32
    %c0_12 = arith.constant 0 : index
    %22 = arith.index_cast %21 : i32 to index
    %c1_13 = arith.constant 1 : index
    %c0_14 = arith.constant 0 : index
    %23 = vector.load %arg2[%c0_12, %22, %c1_13, %c0_14] : memref<1x18x18x4xbf16, #tpu.memory_space<vmem>>, vector<1x16x16x4xbf16>
    %24 = vector.shape_cast %23 : vector<1x16x16x4xbf16> to vector<16x16x4xbf16>
    %25 = vector.shape_cast %24 : vector<16x16x4xbf16> to vector<256x4xbf16>
    %c1_i32_15 = arith.constant 1 : i32
    %26 = arith.addi %0, %c1_i32_15 : i32
    %c0_16 = arith.constant 0 : index
    %27 = arith.index_cast %26 : i32 to index
    %c2_17 = arith.constant 2 : index
    %c0_18 = arith.constant 0 : index
    %28 = vector.load %arg2[%c0_16, %27, %c2_17, %c0_18] : memref<1x18x18x4xbf16, #tpu.memory_space<vmem>>, vector<1x16x16x4xbf16>
    %29 = vector.shape_cast %28 : vector<1x16x16x4xbf16> to vector<16x16x4xbf16>
    %30 = vector.shape_cast %29 : vector<16x16x4xbf16> to vector<256x4xbf16>
    %c2_i32 = arith.constant 2 : i32
    %31 = arith.addi %0, %c2_i32 : i32
    %c0_19 = arith.constant 0 : index
    %32 = arith.index_cast %31 : i32 to index
    %c0_20 = arith.constant 0 : index
    %c0_21 = arith.constant 0 : index
    %33 = vector.load %arg2[%c0_19, %32, %c0_20, %c0_21] : memref<1x18x18x4xbf16, #tpu.memory_space<vmem>>, vector<1x16x16x4xbf16>
    %34 = vector.shape_cast %33 : vector<1x16x16x4xbf16> to vector<16x16x4xbf16>
    %35 = vector.shape_cast %34 : vector<16x16x4xbf16> to vector<256x4xbf16>
    %c2_i32_22 = arith.constant 2 : i32
    %36 = arith.addi %0, %c2_i32_22 : i32
    %c0_23 = arith.constant 0 : index
    %37 = arith.index_cast %36 : i32 to index
    %c1_24 = arith.constant 1 : index
    %c0_25 = arith.constant 0 : index
    %38 = vector.load %arg2[%c0_23, %37, %c1_24, %c0_25] : memref<1x18x18x4xbf16, #tpu.memory_space<vmem>>, vector<1x16x16x4xbf16>
    %39 = vector.shape_cast %38 : vector<1x16x16x4xbf16> to vector<16x16x4xbf16>
    %40 = vector.shape_cast %39 : vector<16x16x4xbf16> to vector<256x4xbf16>
    %c2_i32_26 = arith.constant 2 : i32
    %41 = arith.addi %0, %c2_i32_26 : i32
    %c0_27 = arith.constant 0 : index
    %42 = arith.index_cast %41 : i32 to index
    %c2_28 = arith.constant 2 : index
    %c0_29 = arith.constant 0 : index
    %43 = vector.load %arg2[%c0_27, %42, %c2_28, %c0_29] : memref<1x18x18x4xbf16, #tpu.memory_space<vmem>>, vector<1x16x16x4xbf16>
    %44 = vector.shape_cast %43 : vector<1x16x16x4xbf16> to vector<16x16x4xbf16>
    %45 = vector.shape_cast %44 : vector<16x16x4xbf16> to vector<256x4xbf16>
    %cst = arith.constant 0.000000e+00 : f32
    %46 = vector.broadcast %cst : f32 to vector<1x128xf32>
    %cst_30 = arith.constant 0.000000e+00 : f32
    %47 = vector.broadcast %cst_30 : f32 to vector<1x128xf32>
    %cst_31 = arith.constant 0.000000e+00 : f32
    %48 = vector.broadcast %cst_31 : f32 to vector<256x128xf32>
    %c0_32 = arith.constant 0 : index
    %c0_33 = arith.constant 0 : index
    %c0_34 = arith.constant 0 : index
    %49 = vector.load %arg3[%c0_32, %c0_33, %c0_34] : memref<16x4x128xbf16, #tpu.memory_space<vmem>>, vector<1x4x128xbf16>
    %50 = vector.shape_cast %49 : vector<1x4x128xbf16> to vector<4x128xbf16>
    %cst_35 = arith.constant dense<0.000000e+00> : vector<256x128xf32>
    %51 = tpu.matmul %5, %50, %cst_35 {dimension_numbers = #tpu.dot_dimension_numbers<[1], [0], [0], [1], [0, 0, 1, 1], [], []>} : vector<256x4xbf16>, vector<4x128xbf16>, vector<256x128xf32> -> vector<256x128xf32>
    %52 = arith.addf %48, %51 : vector<256x128xf32>
    %c1_36 = arith.constant 1 : index
    %c0_37 = arith.constant 0 : index
    %c0_38 = arith.constant 0 : index
    %53 = vector.load %arg3[%c1_36, %c0_37, %c0_38] : memref<16x4x128xbf16, #tpu.memory_space<vmem>>, vector<1x4x128xbf16>
    %54 = vector.shape_cast %53 : vector<1x4x128xbf16> to vector<4x128xbf16>
    %cst_39 = arith.constant dense<0.000000e+00> : vector<256x128xf32>
    %55 = tpu.matmul %10, %54, %cst_39 {dimension_numbers = #tpu.dot_dimension_numbers<[1], [0], [0], [1], [0, 0, 1, 1], [], []>} : vector<256x4xbf16>, vector<4x128xbf16>, vector<256x128xf32> -> vector<256x128xf32>
    %56 = arith.addf %52, %55 : vector<256x128xf32>
    %c2_40 = arith.constant 2 : index
    %c0_41 = arith.constant 0 : index
    %c0_42 = arith.constant 0 : index
    %57 = vector.load %arg3[%c2_40, %c0_41, %c0_42] : memref<16x4x128xbf16, #tpu.memory_space<vmem>>, vector<1x4x128xbf16>
    %58 = vector.shape_cast %57 : vector<1x4x128xbf16> to vector<4x128xbf16>
    %cst_43 = arith.constant dense<0.000000e+00> : vector<256x128xf32>
    %59 = tpu.matmul %20, %58, %cst_43 {dimension_numbers = #tpu.dot_dimension_numbers<[1], [0], [0], [1], [0, 0, 1, 1], [], []>} : vector<256x4xbf16>, vector<4x128xbf16>, vector<256x128xf32> -> vector<256x128xf32>
    %60 = arith.addf %56, %59 : vector<256x128xf32>
    %c3 = arith.constant 3 : index
    %c0_44 = arith.constant 0 : index
    %c0_45 = arith.constant 0 : index
    %61 = vector.load %arg3[%c3, %c0_44, %c0_45] : memref<16x4x128xbf16, #tpu.memory_space<vmem>>, vector<1x4x128xbf16>
    %62 = vector.shape_cast %61 : vector<1x4x128xbf16> to vector<4x128xbf16>
    %cst_46 = arith.constant dense<0.000000e+00> : vector<256x128xf32>
    %63 = tpu.matmul %25, %62, %cst_46 {dimension_numbers = #tpu.dot_dimension_numbers<[1], [0], [0], [1], [0, 0, 1, 1], [], []>} : vector<256x4xbf16>, vector<4x128xbf16>, vector<256x128xf32> -> vector<256x128xf32>
    %64 = arith.addf %60, %63 : vector<256x128xf32>
    %cst_47 = arith.constant dense<0.000000e+00> : vector<128xf32>
    %65 = vector.multi_reduction <add>, %64, %cst_47 [0] : vector<256x128xf32> to vector<128xf32>
    %66 = vector.shape_cast %65 : vector<128xf32> to vector<1x128xf32>
    %67 = arith.addf %46, %66 : vector<1x128xf32>
    %68 = arith.mulf %64, %64 : vector<256x128xf32>
    %cst_48 = arith.constant dense<0.000000e+00> : vector<128xf32>
    %69 = vector.multi_reduction <add>, %68, %cst_48 [0] : vector<256x128xf32> to vector<128xf32>
    %70 = vector.shape_cast %69 : vector<128xf32> to vector<1x128xf32>
    %71 = arith.addf %47, %70 : vector<1x128xf32>
    %72 = vector.shape_cast %64 : vector<256x128xf32> to vector<16x16x128xf32>
    %73 = arith.truncf %72 : vector<16x16x128xf32> to vector<16x16x128xbf16>
    %c0_49 = arith.constant 0 : index
    %c0_50 = arith.constant 0 : index
    %c0_51 = arith.constant 0 : index
    %c0_52 = arith.constant 0 : index
    %74 = vector.load %arg4[%c0_49, %c0_50, %c0_51, %c0_52] : memref<16x2x16x256xbf16, #tpu.memory_space<vmem>>, vector<16x1x16x128xbf16>
    %75 = vector.shape_cast %74 : vector<16x1x16x128xbf16> to vector<16x16x128xbf16>
    %76 = vector.shape_cast %73 : vector<16x16x128xbf16> to vector<16x1x16x128xbf16>
    tpu.vector_store %arg4[%c0_49, %c0_50, %c0_51, %c0_52], %76 {strides = array<i32>} : memref<16x2x16x256xbf16, #tpu.memory_space<vmem>>, vector<16x1x16x128xbf16>,
    %cst_53 = arith.constant 0.000000e+00 : f32
    %77 = vector.broadcast %cst_53 : f32 to vector<256x128xf32>
    %c4 = arith.constant 4 : index
    %c0_54 = arith.constant 0 : index
    %c0_55 = arith.constant 0 : index
    %78 = vector.load %arg3[%c4, %c0_54, %c0_55] : memref<16x4x128xbf16, #tpu.memory_space<vmem>>, vector<1x4x128xbf16>
    %79 = vector.shape_cast %78 : vector<1x4x128xbf16> to vector<4x128xbf16>
    %cst_56 = arith.constant dense<0.000000e+00> : vector<256x128xf32>
    %80 = tpu.matmul %10, %79, %cst_56 {dimension_numbers = #tpu.dot_dimension_numbers<[1], [0], [0], [1], [0, 0, 1, 1], [], []>} : vector<256x4xbf16>, vector<4x128xbf16>, vector<256x128xf32> -> vector<256x128xf32>
    %81 = arith.addf %77, %80 : vector<256x128xf32>
    %c5 = arith.constant 5 : index
    %c0_57 = arith.constant 0 : index
    %c0_58 = arith.constant 0 : index
    %82 = vector.load %arg3[%c5, %c0_57, %c0_58] : memref<16x4x128xbf16, #tpu.memory_space<vmem>>, vector<1x4x128xbf16>
    %83 = vector.shape_cast %82 : vector<1x4x128xbf16> to vector<4x128xbf16>
    %cst_59 = arith.constant dense<0.000000e+00> : vector<256x128xf32>
    %84 = tpu.matmul %15, %83, %cst_59 {dimension_numbers = #tpu.dot_dimension_numbers<[1], [0], [0], [1], [0, 0, 1, 1], [], []>} : vector<256x4xbf16>, vector<4x128xbf16>, vector<256x128xf32> -> vector<256x128xf32>
    %85 = arith.addf %81, %84 : vector<256x128xf32>
    %c6 = arith.constant 6 : index
    %c0_60 = arith.constant 0 : index
    %c0_61 = arith.constant 0 : index
    %86 = vector.load %arg3[%c6, %c0_60, %c0_61] : memref<16x4x128xbf16, #tpu.memory_space<vmem>>, vector<1x4x128xbf16>
    %87 = vector.shape_cast %86 : vector<1x4x128xbf16> to vector<4x128xbf16>
    %cst_62 = arith.constant dense<0.000000e+00> : vector<256x128xf32>
    %88 = tpu.matmul %25, %87, %cst_62 {dimension_numbers = #tpu.dot_dimension_numbers<[1], [0], [0], [1], [0, 0, 1, 1], [], []>} : vector<256x4xbf16>, vector<4x128xbf16>, vector<256x128xf32> -> vector<256x128xf32>
    %89 = arith.addf %85, %88 : vector<256x128xf32>
    %c7 = arith.constant 7 : index
    %c0_63 = arith.constant 0 : index
    %c0_64 = arith.constant 0 : index
    %90 = vector.load %arg3[%c7, %c0_63, %c0_64] : memref<16x4x128xbf16, #tpu.memory_space<vmem>>, vector<1x4x128xbf16>
    %91 = vector.shape_cast %90 : vector<1x4x128xbf16> to vector<4x128xbf16>
    %cst_65 = arith.constant dense<0.000000e+00> : vector<256x128xf32>
    %92 = tpu.matmul %30, %91, %cst_65 {dimension_numbers = #tpu.dot_dimension_numbers<[1], [0], [0], [1], [0, 0, 1, 1], [], []>} : vector<256x4xbf16>, vector<4x128xbf16>, vector<256x128xf32> -> vector<256x128xf32>
    %93 = arith.addf %89, %92 : vector<256x128xf32>
    %cst_66 = arith.constant dense<0.000000e+00> : vector<128xf32>
    %94 = vector.multi_reduction <add>, %93, %cst_66 [0] : vector<256x128xf32> to vector<128xf32>
    %95 = vector.shape_cast %94 : vector<128xf32> to vector<1x128xf32>
    %96 = arith.addf %67, %95 : vector<1x128xf32>
    %97 = arith.mulf %93, %93 : vector<256x128xf32>
    %cst_67 = arith.constant dense<0.000000e+00> : vector<128xf32>
    %98 = vector.multi_reduction <add>, %97, %cst_67 [0] : vector<256x128xf32> to vector<128xf32>
    %99 = vector.shape_cast %98 : vector<128xf32> to vector<1x128xf32>
    %100 = arith.addf %71, %99 : vector<1x128xf32>
    %101 = vector.shape_cast %93 : vector<256x128xf32> to vector<16x16x128xf32>
    %102 = arith.truncf %101 : vector<16x16x128xf32> to vector<16x16x128xbf16>
    %c0_68 = arith.constant 0 : index
    %c0_69 = arith.constant 0 : index
    %c0_70 = arith.constant 0 : index
    %c128 = arith.constant 128 : index
    %103 = vector.load %arg4[%c0_68, %c0_69, %c0_70, %c128] : memref<16x2x16x256xbf16, #tpu.memory_space<vmem>>, vector<16x1x16x128xbf16>
    %104 = vector.shape_cast %103 : vector<16x1x16x128xbf16> to vector<16x16x128xbf16>
    %105 = vector.shape_cast %102 : vector<16x16x128xbf16> to vector<16x1x16x128xbf16>
    tpu.vector_store %arg4[%c0_68, %c0_69, %c0_70, %c128], %105 {strides = array<i32>} : memref<16x2x16x256xbf16, #tpu.memory_space<vmem>>, vector<16x1x16x128xbf16>,
    %cst_71 = arith.constant 0.000000e+00 : f32
    %106 = vector.broadcast %cst_71 : f32 to vector<256x128xf32>
    %c8 = arith.constant 8 : index
    %c0_72 = arith.constant 0 : index
    %c0_73 = arith.constant 0 : index
    %107 = vector.load %arg3[%c8, %c0_72, %c0_73] : memref<16x4x128xbf16, #tpu.memory_space<vmem>>, vector<1x4x128xbf16>
    %108 = vector.shape_cast %107 : vector<1x4x128xbf16> to vector<4x128xbf16>
    %cst_74 = arith.constant dense<0.000000e+00> : vector<256x128xf32>
    %109 = tpu.matmul %20, %108, %cst_74 {dimension_numbers = #tpu.dot_dimension_numbers<[1], [0], [0], [1], [0, 0, 1, 1], [], []>} : vector<256x4xbf16>, vector<4x128xbf16>, vector<256x128xf32> -> vector<256x128xf32>
    %110 = arith.addf %106, %109 : vector<256x128xf32>
    %c9 = arith.constant 9 : index
    %c0_75 = arith.constant 0 : index
    %c0_76 = arith.constant 0 : index
    %111 = vector.load %arg3[%c9, %c0_75, %c0_76] : memref<16x4x128xbf16, #tpu.memory_space<vmem>>, vector<1x4x128xbf16>
    %112 = vector.shape_cast %111 : vector<1x4x128xbf16> to vector<4x128xbf16>
    %cst_77 = arith.constant dense<0.000000e+00> : vector<256x128xf32>
    %113 = tpu.matmul %25, %112, %cst_77 {dimension_numbers = #tpu.dot_dimension_numbers<[1], [0], [0], [1], [0, 0, 1, 1], [], []>} : vector<256x4xbf16>, vector<4x128xbf16>, vector<256x128xf32> -> vector<256x128xf32>
    %114 = arith.addf %110, %113 : vector<256x128xf32>
    %c10 = arith.constant 10 : index
    %c0_78 = arith.constant 0 : index
    %c0_79 = arith.constant 0 : index
    %115 = vector.load %arg3[%c10, %c0_78, %c0_79] : memref<16x4x128xbf16, #tpu.memory_space<vmem>>, vector<1x4x128xbf16>
    %116 = vector.shape_cast %115 : vector<1x4x128xbf16> to vector<4x128xbf16>
    %cst_80 = arith.constant dense<0.000000e+00> : vector<256x128xf32>
    %117 = tpu.matmul %35, %116, %cst_80 {dimension_numbers = #tpu.dot_dimension_numbers<[1], [0], [0], [1], [0, 0, 1, 1], [], []>} : vector<256x4xbf16>, vector<4x128xbf16>, vector<256x128xf32> -> vector<256x128xf32>
    %118 = arith.addf %114, %117 : vector<256x128xf32>
    %c11 = arith.constant 11 : index
    %c0_81 = arith.constant 0 : index
    %c0_82 = arith.constant 0 : index
    %119 = vector.load %arg3[%c11, %c0_81, %c0_82] : memref<16x4x128xbf16, #tpu.memory_space<vmem>>, vector<1x4x128xbf16>
    %120 = vector.shape_cast %119 : vector<1x4x128xbf16> to vector<4x128xbf16>
    %cst_83 = arith.constant dense<0.000000e+00> : vector<256x128xf32>
    %121 = tpu.matmul %40, %120, %cst_83 {dimension_numbers = #tpu.dot_dimension_numbers<[1], [0], [0], [1], [0, 0, 1, 1], [], []>} : vector<256x4xbf16>, vector<4x128xbf16>, vector<256x128xf32> -> vector<256x128xf32>
    %122 = arith.addf %118, %121 : vector<256x128xf32>
    %cst_84 = arith.constant dense<0.000000e+00> : vector<128xf32>
    %123 = vector.multi_reduction <add>, %122, %cst_84 [0] : vector<256x128xf32> to vector<128xf32>
    %124 = vector.shape_cast %123 : vector<128xf32> to vector<1x128xf32>
    %125 = arith.addf %96, %124 : vector<1x128xf32>
    %126 = arith.mulf %122, %122 : vector<256x128xf32>
    %cst_85 = arith.constant dense<0.000000e+00> : vector<128xf32>
    %127 = vector.multi_reduction <add>, %126, %cst_85 [0] : vector<256x128xf32> to vector<128xf32>
    %128 = vector.shape_cast %127 : vector<128xf32> to vector<1x128xf32>
    %129 = arith.addf %100, %128 : vector<1x128xf32>
    %130 = vector.shape_cast %122 : vector<256x128xf32> to vector<16x16x128xf32>
    %131 = arith.truncf %130 : vector<16x16x128xf32> to vector<16x16x128xbf16>
    %c0_86 = arith.constant 0 : index
    %c1_87 = arith.constant 1 : index
    %c0_88 = arith.constant 0 : index
    %c0_89 = arith.constant 0 : index
    %132 = vector.load %arg4[%c0_86, %c1_87, %c0_88, %c0_89] : memref<16x2x16x256xbf16, #tpu.memory_space<vmem>>, vector<16x1x16x128xbf16>
    %133 = vector.shape_cast %132 : vector<16x1x16x128xbf16> to vector<16x16x128xbf16>
    %134 = vector.shape_cast %131 : vector<16x16x128xbf16> to vector<16x1x16x128xbf16>
    tpu.vector_store %arg4[%c0_86, %c1_87, %c0_88, %c0_89], %134 {strides = array<i32>} : memref<16x2x16x256xbf16, #tpu.memory_space<vmem>>, vector<16x1x16x128xbf16>,
    %cst_90 = arith.constant 0.000000e+00 : f32
    %135 = vector.broadcast %cst_90 : f32 to vector<256x128xf32>
    %c12 = arith.constant 12 : index
    %c0_91 = arith.constant 0 : index
    %c0_92 = arith.constant 0 : index
    %136 = vector.load %arg3[%c12, %c0_91, %c0_92] : memref<16x4x128xbf16, #tpu.memory_space<vmem>>, vector<1x4x128xbf16>
    %137 = vector.shape_cast %136 : vector<1x4x128xbf16> to vector<4x128xbf16>
    %cst_93 = arith.constant dense<0.000000e+00> : vector<256x128xf32>
    %138 = tpu.matmul %25, %137, %cst_93 {dimension_numbers = #tpu.dot_dimension_numbers<[1], [0], [0], [1], [0, 0, 1, 1], [], []>} : vector<256x4xbf16>, vector<4x128xbf16>, vector<256x128xf32> -> vector<256x128xf32>
    %139 = arith.addf %135, %138 : vector<256x128xf32>
    %c13 = arith.constant 13 : index
    %c0_94 = arith.constant 0 : index
    %c0_95 = arith.constant 0 : index
    %140 = vector.load %arg3[%c13, %c0_94, %c0_95] : memref<16x4x128xbf16, #tpu.memory_space<vmem>>, vector<1x4x128xbf16>
    %141 = vector.shape_cast %140 : vector<1x4x128xbf16> to vector<4x128xbf16>
    %cst_96 = arith.constant dense<0.000000e+00> : vector<256x128xf32>
    %142 = tpu.matmul %30, %141, %cst_96 {dimension_numbers = #tpu.dot_dimension_numbers<[1], [0], [0], [1], [0, 0, 1, 1], [], []>} : vector<256x4xbf16>, vector<4x128xbf16>, vector<256x128xf32> -> vector<256x128xf32>
    %143 = arith.addf %139, %142 : vector<256x128xf32>
    %c14 = arith.constant 14 : index
    %c0_97 = arith.constant 0 : index
    %c0_98 = arith.constant 0 : index
    %144 = vector.load %arg3[%c14, %c0_97, %c0_98] : memref<16x4x128xbf16, #tpu.memory_space<vmem>>, vector<1x4x128xbf16>
    %145 = vector.shape_cast %144 : vector<1x4x128xbf16> to vector<4x128xbf16>
    %cst_99 = arith.constant dense<0.000000e+00> : vector<256x128xf32>
    %146 = tpu.matmul %40, %145, %cst_99 {dimension_numbers = #tpu.dot_dimension_numbers<[1], [0], [0], [1], [0, 0, 1, 1], [], []>} : vector<256x4xbf16>, vector<4x128xbf16>, vector<256x128xf32> -> vector<256x128xf32>
    %147 = arith.addf %143, %146 : vector<256x128xf32>
    %c15 = arith.constant 15 : index
    %c0_100 = arith.constant 0 : index
    %c0_101 = arith.constant 0 : index
    %148 = vector.load %arg3[%c15, %c0_100, %c0_101] : memref<16x4x128xbf16, #tpu.memory_space<vmem>>, vector<1x4x128xbf16>
    %149 = vector.shape_cast %148 : vector<1x4x128xbf16> to vector<4x128xbf16>
    %cst_102 = arith.constant dense<0.000000e+00> : vector<256x128xf32>
    %150 = tpu.matmul %45, %149, %cst_102 {dimension_numbers = #tpu.dot_dimension_numbers<[1], [0], [0], [1], [0, 0, 1, 1], [], []>} : vector<256x4xbf16>, vector<4x128xbf16>, vector<256x128xf32> -> vector<256x128xf32>
    %151 = arith.addf %147, %150 : vector<256x128xf32>
    %cst_103 = arith.constant dense<0.000000e+00> : vector<128xf32>
    %152 = vector.multi_reduction <add>, %151, %cst_103 [0] : vector<256x128xf32> to vector<128xf32>
    %153 = vector.shape_cast %152 : vector<128xf32> to vector<1x128xf32>
    %154 = arith.addf %125, %153 : vector<1x128xf32>
    %155 = arith.mulf %151, %151 : vector<256x128xf32>
    %cst_104 = arith.constant dense<0.000000e+00> : vector<128xf32>
    %156 = vector.multi_reduction <add>, %155, %cst_104 [0] : vector<256x128xf32> to vector<128xf32>
    %157 = vector.shape_cast %156 : vector<128xf32> to vector<1x128xf32>
    %158 = arith.addf %129, %157 : vector<1x128xf32>
    %159 = vector.shape_cast %151 : vector<256x128xf32> to vector<16x16x128xf32>
    %160 = arith.truncf %159 : vector<16x16x128xf32> to vector<16x16x128xbf16>
    %c0_105 = arith.constant 0 : index
    %c1_106 = arith.constant 1 : index
    %c0_107 = arith.constant 0 : index
    %c128_108 = arith.constant 128 : index
    %161 = vector.load %arg4[%c0_105, %c1_106, %c0_107, %c128_108] : memref<16x2x16x256xbf16, #tpu.memory_space<vmem>>, vector<16x1x16x128xbf16>
    %162 = vector.shape_cast %161 : vector<16x1x16x128xbf16> to vector<16x16x128xbf16>
    %163 = vector.shape_cast %160 : vector<16x16x128xbf16> to vector<16x1x16x128xbf16>
    tpu.vector_store %arg4[%c0_105, %c1_106, %c0_107, %c128_108], %163 {strides = array<i32>} : memref<16x2x16x256xbf16, #tpu.memory_space<vmem>>, vector<16x1x16x128xbf16>,
    %c0_109 = arith.constant 0 : index
    %c0_110 = arith.constant 0 : index
    %c0_111 = arith.constant 0 : index
    %c0_112 = arith.constant 0 : index
    %164 = vector.load %arg5[%c0_109, %c0_110, %c0_111, %c0_112] : memref<1x1x1x128xf32, #tpu.memory_space<vmem>>, vector<1x1x1x128xf32>
    %165 = vector.shape_cast %164 : vector<1x1x1x128xf32> to vector<1x128xf32>
    %166 = vector.shape_cast %154 : vector<1x128xf32> to vector<1x1x1x128xf32>
    tpu.vector_store %arg5[%c0_109, %c0_110, %c0_111, %c0_112], %166 {strides = array<i32>} : memref<1x1x1x128xf32, #tpu.memory_space<vmem>>, vector<1x1x1x128xf32>,
    %c0_113 = arith.constant 0 : index
    %c0_114 = arith.constant 0 : index
    %c0_115 = arith.constant 0 : index
    %c0_116 = arith.constant 0 : index
    %167 = vector.load %arg6[%c0_113, %c0_114, %c0_115, %c0_116] : memref<1x1x1x128xf32, #tpu.memory_space<vmem>>, vector<1x1x1x128xf32>
    %168 = vector.shape_cast %167 : vector<1x1x1x128xf32> to vector<1x128xf32>
    %169 = vector.shape_cast %158 : vector<1x128xf32> to vector<1x1x1x128xf32>
    tpu.vector_store %arg6[%c0_113, %c0_114, %c0_115, %c0_116], %169 {strides = array<i32>} : memref<1x1x1x128xf32, #tpu.memory_space<vmem>>, vector<1x1x1x128xf32>,
    return
  }
  func.func @transform_0(%arg0: i32, %arg1: i32) -> (i32, i32, i32, i32) {
    %c0_i32 = arith.constant 0 : i32
    %c0_i32_0 = arith.constant 0 : i32
    %c0_i32_1 = arith.constant 0 : i32
    %c0_i32_2 = arith.constant 0 : i32
    return %arg0, %c0_i32, %c0_i32_0, %c0_i32_1 : i32, i32, i32, i32
  }
  func.func @transform_1(%arg0: i32, %arg1: i32) -> (i32, i32, i32) {
    %c0_i32 = arith.constant 0 : i32
    %c0_i32_0 = arith.constant 0 : i32
    %c0_i32_1 = arith.constant 0 : i32
    %c0_i32_2 = arith.constant 0 : i32
    return %c0_i32, %c0_i32_0, %c0_i32_1 : i32, i32, i32
  }
  func.func @transform_2(%arg0: i32, %arg1: i32) -> (i32, i32, i32, i32) {
    %c1_i32 = arith.constant 1 : i32
    %0 = arith.muli %arg0, %c1_i32 : i32
    %1 = arith.addi %0, %arg1 : i32
    %c0_i32 = arith.constant 0 : i32
    %c0_i32_0 = arith.constant 0 : i32
    %c0_i32_1 = arith.constant 0 : i32
    %c0_i32_2 = arith.constant 0 : i32
    return %1, %c0_i32, %c0_i32_0, %c0_i32_1 : i32, i32, i32, i32
  }
  func.func @transform_3(%arg0: i32, %arg1: i32) -> (i32, i32, i32, i32) {
    %c0_i32 = arith.constant 0 : i32
    %c0_i32_0 = arith.constant 0 : i32
    %c0_i32_1 = arith.constant 0 : i32
    return %arg0, %arg1, %c0_i32, %c0_i32_0 : i32, i32, i32, i32
  }
  func.func @transform_4(%arg0: i32, %arg1: i32) -> (i32, i32, i32, i32) {
    %c0_i32 = arith.constant 0 : i32
    %c0_i32_0 = arith.constant 0 : i32
    %c0_i32_1 = arith.constant 0 : i32
    return %arg0, %arg1, %c0_i32, %c0_i32_0 : i32, i32, i32, i32
  }
}

module attributes {stable_mosaic.version = 11 : i64} {
  func.func @_bn_relu_kernel(%arg0: i32, %arg1: memref<2048x128xbf16, #tpu.memory_space<vmem>>, %arg2: memref<1x128xf32, #tpu.memory_space<vmem>>, %arg3: memref<1x128xf32, #tpu.memory_space<vmem>>, %arg4: memref<2048x128xf32, #tpu.memory_space<vmem>>) attributes {dimension_semantics = [#tpu.dimension_semantics<parallel>], iteration_bounds = array<i64: 1>, scalar_prefetch = 0 : i64, scratch_operands = 0 : i64, tpu.core_type = #tpu.core_type<tc>, window_params = [{transform_indices = @transform_0, window_bounds = array<i64: 2048, 128>}, {pipeline_mode = #tpu.pipeline_mode<synchronous>, transform_indices = @transform_1, window_bounds = array<i64: 1, 128>}, {pipeline_mode = #tpu.pipeline_mode<synchronous>, transform_indices = @transform_2, window_bounds = array<i64: 1, 128>}, {transform_indices = @transform_3, window_bounds = array<i64: 2048, 128>}]} {
    %c0 = arith.constant 0 : index
    %c0_0 = arith.constant 0 : index
    %0 = vector.load %arg1[%c0, %c0_0] : memref<2048x128xbf16, #tpu.memory_space<vmem>>, vector<2048x128xbf16>
    %1 = arith.extf %0 : vector<2048x128xbf16> to vector<2048x128xf32>
    %c0_1 = arith.constant 0 : index
    %c0_2 = arith.constant 0 : index
    %2 = vector.load %arg2[%c0_1, %c0_2] : memref<1x128xf32, #tpu.memory_space<vmem>>, vector<1x128xf32>
    %3 = vector.broadcast %2 : vector<1x128xf32> to vector<2048x128xf32>
    %4 = arith.mulf %1, %3 : vector<2048x128xf32>
    %c0_3 = arith.constant 0 : index
    %c0_4 = arith.constant 0 : index
    %5 = vector.load %arg3[%c0_3, %c0_4] : memref<1x128xf32, #tpu.memory_space<vmem>>, vector<1x128xf32>
    %6 = vector.broadcast %5 : vector<1x128xf32> to vector<2048x128xf32>
    %7 = arith.addf %4, %6 : vector<2048x128xf32>
    %cst = arith.constant 0.000000e+00 : f32
    %8 = vector.broadcast %cst : f32 to vector<2048x128xf32>
    %9 = arith.maximumf %7, %8 : vector<2048x128xf32>
    %c0_5 = arith.constant 0 : index
    %c0_6 = arith.constant 0 : index
    %10 = vector.load %arg4[%c0_5, %c0_6] : memref<2048x128xf32, #tpu.memory_space<vmem>>, vector<2048x128xf32>
    tpu.vector_store %arg4[%c0_5, %c0_6], %9 {strides = array<i32>} : memref<2048x128xf32, #tpu.memory_space<vmem>>, vector<2048x128xf32>,
    return
  }
  func.func @transform_0(%arg0: i32) -> (i32, i32) {
    %c0_i32 = arith.constant 0 : i32
    %c0_i32_0 = arith.constant 0 : i32
    return %arg0, %c0_i32 : i32, i32
  }
  func.func @transform_1(%arg0: i32) -> (i32, i32) {
    %c0_i32 = arith.constant 0 : i32
    %c0_i32_0 = arith.constant 0 : i32
    %c0_i32_1 = arith.constant 0 : i32
    return %c0_i32, %c0_i32_0 : i32, i32
  }
  func.func @transform_2(%arg0: i32) -> (i32, i32) {
    %c0_i32 = arith.constant 0 : i32
    %c0_i32_0 = arith.constant 0 : i32
    %c0_i32_1 = arith.constant 0 : i32
    return %c0_i32, %c0_i32_0 : i32, i32
  }
  func.func @transform_3(%arg0: i32) -> (i32, i32) {
    %c0_i32 = arith.constant 0 : i32
    %c0_i32_0 = arith.constant 0 : i32
    return %arg0, %c0_i32 : i32, i32
  }
}

</mosaic_0001>

<llo_original>
// kernel: upblock2d_forward.3
$region0: #{upblock2d_forward.3}
  #allocation0 [shape = 'u32[]', space=smem, size = 0x4, offset = 0x4, fixed_abs, tag = 'smem constant byte address 0x4 - core index']
  #allocation1 [shape = 'u32[72,128]{1,0:T(1,128)}', space=vmem, size = 0x9000, scoped, tag = 'internal scratch']
  %s0 = inlined_call_operand.vmem [shape: bf16[2048,128], index: 0, kind: input, shape index: {}]
  %s1 = inlined_call_operand.vmem [shape: f32[1,128], index: 1, kind: input, shape index: {}]
  %s2 = inlined_call_operand.vmem [shape: f32[1,128], index: 2, kind: input, shape index: {}]
  %s3 = inlined_call_operand.vmem [shape: f32[2048,128], index: 3, kind: output, shape index: {}]
  %s4 = sld [smem:[#allocation0]]
  $region22: #{upblock2d_forward.3} parent=0
    _
  %s6 = ssub.s32 1, %s4
  %s7 = scalar_select 0, %s6, %s4
  // Predicated region
  $region2: #{upblock2d_forward.3} parent=0 // pred_check
    _
  $region3: #{upblock2d_forward.3} parent=0 // pred_check_branch
    %9 = sbr.rel (0) target = $region5
  $region4: #{upblock2d_forward.3} parent=0 // pred_region
    _
  $region5: #{upblock2d_forward.3} parent=0 // pred_fallthru
    _
  // Predicated region
  $region6: #{upblock2d_forward.3} parent=0 // pred_check
    _
  $region7: #{upblock2d_forward.3} parent=0 // pred_check_branch
    %11 = sbr.rel (0) target = $region9
  $region8: #{upblock2d_forward.3} parent=0 // pred_region
    _
  $region9: #{upblock2d_forward.3} parent=0 // pred_fallthru
    _
  // Predicated region
  $region10: #{upblock2d_forward.3} parent=0 // pred_check
    _
  $region11: #{upblock2d_forward.3} parent=0 // pred_check_branch
    %13 = sbr.rel (0) target = $region13
  $region12: #{upblock2d_forward.3} parent=0 // pred_region
    _
  $region13: #{upblock2d_forward.3} parent=0 // pred_fallthru
    _
  %v14 = vld [vmem:[%s0] sm:$0xf]
  %v15 = vld [vmem:[%s0 + $0x4] sm:$0xf]
  %v16 = vld [vmem:[%s0 + $0x8] sm:$0xf]
  %v17 = vld [vmem:[%s0 + $0xc] sm:$0xf]
  %v18 = vld [vmem:[%s0 + $0x10] sm:$0xf]
  %v19 = vld [vmem:[%s0 + $0x14] sm:$0xf]
  %v20 = vld [vmem:[%s0 + $0x18] sm:$0xf]
  %v21 = vld [vmem:[%s0 + $0x1c] sm:$0xf]
  %v22 = vld [vmem:[%s0 + $0x20] sm:$0xf]
  %v23 = vld [vmem:[%s0 + $0x24] sm:$0xf]
  %v24 = vld [vmem:[%s0 + $0x28] sm:$0xf]
  %v25 = vld [vmem:[%s0 + $0x2c] sm:$0xf]
  %v26 = vld [vmem:[%s0 + $0x30] sm:$0xf]
  %v27 = vld [vmem:[%s0 + $0x34] sm:$0xf]
  %v28 = vld [vmem:[%s0 + $0x38] sm:$0xf]
  %v29 = vld [vmem:[%s0 + $0x3c] sm:$0xf]
  %v30 = vld [vmem:[%s0 + $0x40] sm:$0xf]
  %v31 = vld [vmem:[%s0 + $0x44] sm:$0xf]
  %v32 = vld [vmem:[%s0 + $0x48] sm:$0xf]
  %v33 = vld [vmem:[%s0 + $0x4c] sm:$0xf]
  %v34 = vld [vmem:[%s0 + $0x50] sm:$0xf]
  %v35 = vld [vmem:[%s0 + $0x54] sm:$0xf]
  %v36 = vld [vmem:[%s0 + $0x58] sm:$0xf]
  %v37 = vld [vmem:[%s0 + $0x5c] sm:$0xf]
  %v38 = vld [vmem:[%s0 + $0x60] sm:$0xf]
  %v39 = vld [vmem:[%s0 + $0x64] sm:$0xf]
  %v40 = vld [vmem:[%s0 + $0x68] sm:$0xf]
  %v41 = vld [vmem:[%s0 + $0x6c] sm:$0xf]
  %v42 = vld [vmem:[%s0 + $0x70] sm:$0xf]
  %v43 = vld [vmem:[%s0 + $0x74] sm:$0xf]
  %v44 = vld [vmem:[%s0 + $0x78] sm:$0xf]
  %v45 = vld [vmem:[%s0 + $0x7c] sm:$0xf]
  %v46 = vld [vmem:[%s0 + $0x80] sm:$0xf]
  %v47 = vld [vmem:[%s0 + $0x84] sm:$0xf]
  %v48 = vld [vmem:[%s0 + $0x88] sm:$0xf]
  %v49 = vld [vmem:[%s0 + $0x8c] sm:$0xf]
  %v50 = vld [vmem:[%s0 + $0x90] sm:$0xf]
  %v51 = vld [vmem:[%s0 + $0x94] sm:$0xf]
  %v52 = vld [vmem:[%s0 + $0x98] sm:$0xf]
  %v53 = vld [vmem:[%s0 + $0x9c] sm:$0xf]
  %v54 = vld [vmem:[%s0 + $0xa0] sm:$0xf]
  %v55 = vld [vmem:[%s0 + $0xa4] sm:$0xf]
  %v56 = vld [vmem:[%s0 + $0xa8] sm:$0xf]
  %v57 = vld [vmem:[%s0 + $0xac] sm:$0xf]
  %v58 = vld [vmem:[%s0 + $0xb0] sm:$0xf]
  %v59 = vld [vmem:[%s0 + $0xb4] sm:$0xf]
  %v60 = vld [vmem:[%s0 + $0xb8] sm:$0xf]
  %v61 = vld [vmem:[%s0 + $0xbc] sm:$0xf]
  %v62 = vld [vmem:[%s0 + $0xc0] sm:$0xf]
  %v63 = vld [vmem:[%s0 + $0xc4] sm:$0xf]
  %v64 = vld [vmem:[%s0 + $0xc8] sm:$0xf]
  %v65 = vld [vmem:[%s0 + $0xcc] sm:$0xf]
  %v66 = vld [vmem:[%s0 + $0xd0] sm:$0xf]
  %v67 = vld [vmem:[%s0 + $0xd4] sm:$0xf]
  %v68 = vld [vmem:[%s0 + $0xd8] sm:$0xf]
  %v69 = vld [vmem:[%s0 + $0xdc] sm:$0xf]
  %v70 = vld [vmem:[%s0 + $0xe0] sm:$0xf]
  %v71 = vld [vmem:[%s0 + $0xe4] sm:$0xf]
  %v72 = vld [vmem:[%s0 + $0xe8] sm:$0xf]
  %v73 = vld [vmem:[%s0 + $0xec] sm:$0xf]
  %v74 = vld [vmem:[%s0 + $0xf0] sm:$0xf]
  %v75 = vld [vmem:[%s0 + $0xf4] sm:$0xf]
  %v76 = vld [vmem:[%s0 + $0xf8] sm:$0xf]
  %v77 = vld [vmem:[%s0 + $0xfc] sm:$0xf]
  %v78 = vld [vmem:[%s0 + $0x100] sm:$0xf]
  %v79 = vld [vmem:[%s0 + $0x104] sm:$0xf]
  %v80 = vld [vmem:[%s0 + $0x108] sm:$0xf]
  %v81 = vld [vmem:[%s0 + $0x10c] sm:$0xf]
  %v82 = vld [vmem:[%s0 + $0x110] sm:$0xf]
  %v83 = vld [vmem:[%s0 + $0x114] sm:$0xf]
  %v84 = vld [vmem:[%s0 + $0x118] sm:$0xf]
  %v85 = vld [vmem:[%s0 + $0x11c] sm:$0xf]
  %v86 = vld [vmem:[%s0 + $0x120] sm:$0xf]
  %v87 = vld [vmem:[%s0 + $0x124] sm:$0xf]
  %v88 = vld [vmem:[%s0 + $0x128] sm:$0xf]
  %v89 = vld [vmem:[%s0 + $0x12c] sm:$0xf]
  %v90 = vld [vmem:[%s0 + $0x130] sm:$0xf]
  %v91 = vld [vmem:[%s0 + $0x134] sm:$0xf]
  %v92 = vld [vmem:[%s0 + $0x138] sm:$0xf]
  %v93 = vld [vmem:[%s0 + $0x13c] sm:$0xf]
  %v94 = vld [vmem:[%s0 + $0x140] sm:$0xf]
  %v95 = vld [vmem:[%s0 + $0x144] sm:$0xf]
  %v96 = vld [vmem:[%s0 + $0x148] sm:$0xf]
  %v97 = vld [vmem:[%s0 + $0x14c] sm:$0xf]
  %v98 = vld [vmem:[%s0 + $0x150] sm:$0xf]
  %v99 = vld [vmem:[%s0 + $0x154] sm:$0xf]
  %v100 = vld [vmem:[%s0 + $0x158] sm:$0xf]
  %v101 = vld [vmem:[%s0 + $0x15c] sm:$0xf]
  %v102 = vld [vmem:[%s0 + $0x160] sm:$0xf]
  %v103 = vld [vmem:[%s0 + $0x164] sm:$0xf]
  %v104 = vld [vmem:[%s0 + $0x168] sm:$0xf]
  %v105 = vld [vmem:[%s0 + $0x16c] sm:$0xf]
  %v106 = vld [vmem:[%s0 + $0x170] sm:$0xf]
  %v107 = vld [vmem:[%s0 + $0x174] sm:$0xf]
  %v108 = vld [vmem:[%s0 + $0x178] sm:$0xf]
  %v109 = vld [vmem:[%s0 + $0x17c] sm:$0xf]
  %v110 = vld [vmem:[%s0 + $0x180] sm:$0xf]
  %v111 = vld [vmem:[%s0 + $0x184] sm:$0xf]
  %v112 = vld [vmem:[%s0 + $0x188] sm:$0xf]
  %v113 = vld [vmem:[%s0 + $0x18c] sm:$0xf]
  %v114 = vld [vmem:[%s0 + $0x190] sm:$0xf]
  %v115 = vld [vmem:[%s0 + $0x194] sm:$0xf]
  %v116 = vld [vmem:[%s0 + $0x198] sm:$0xf]
  %v117 = vld [vmem:[%s0 + $0x19c] sm:$0xf]
  %v118 = vld [vmem:[%s0 + $0x1a0] sm:$0xf]
  %v119 = vld [vmem:[%s0 + $0x1a4] sm:$0xf]
  %v120 = vld [vmem:[%s0 + $0x1a8] sm:$0xf]
  %v121 = vld [vmem:[%s0 + $0x1ac] sm:$0xf]
  %v122 = vld [vmem:[%s0 + $0x1b0] sm:$0xf]
  %v123 = vld [vmem:[%s0 + $0x1b4] sm:$0xf]
  %v124 = vld [vmem:[%s0 + $0x1b8] sm:$0xf]
  %v125 = vld [vmem:[%s0 + $0x1bc] sm:$0xf]
  %v126 = vld [vmem:[%s0 + $0x1c0] sm:$0xf]
  %v127 = vld [vmem:[%s0 + $0x1c4] sm:$0xf]
  %v128 = vld [vmem:[%s0 + $0x1c8] sm:$0xf]
  %v129 = vld [vmem:[%s0 + $0x1cc] sm:$0xf]
  %v130 = vld [vmem:[%s0 + $0x1d0] sm:$0xf]
  %v131 = vld [vmem:[%s0 + $0x1d4] sm:$0xf]
  %v132 = vld [vmem:[%s0 + $0x1d8] sm:$0xf]
  %v133 = vld [vmem:[%s0 + $0x1dc] sm:$0xf]
  %v134 = vld [vmem:[%s0 + $0x1e0] sm:$0xf]
  %v135 = vld [vmem:[%s0 + $0x1e4] sm:$0xf]
  %v136 = vld [vmem:[%s0 + $0x1e8] sm:$0xf]
  %v137 = vld [vmem:[%s0 + $0x1ec] sm:$0xf]
  %v138 = vld [vmem:[%s0 + $0x1f0] sm:$0xf]
  %v139 = vld [vmem:[%s0 + $0x1f4] sm:$0xf]
  %v140 = vld [vmem:[%s0 + $0x1f8] sm:$0xf]
  %v141 = vld [vmem:[%s0 + $0x1fc] sm:$0xf]
  %v142 = vld [vmem:[%s0 + $0x200] sm:$0xf]
  %v143 = vld [vmem:[%s0 + $0x204] sm:$0xf]
  %v144 = vld [vmem:[%s0 + $0x208] sm:$0xf]
  %v145 = vld [vmem:[%s0 + $0x20c] sm:$0xf]
  %v146 = vld [vmem:[%s0 + $0x210] sm:$0xf]
  %v147 = vld [vmem:[%s0 + $0x214] sm:$0xf]
  %v148 = vld [vmem:[%s0 + $0x218] sm:$0xf]
  %v149 = vld [vmem:[%s0 + $0x21c] sm:$0xf]
  %v150 = vld [vmem:[%s0 + $0x220] sm:$0xf]
  %v151 = vld [vmem:[%s0 + $0x224] sm:$0xf]
  %v152 = vld [vmem:[%s0 + $0x228] sm:$0xf]
  %v153 = vld [vmem:[%s0 + $0x22c] sm:$0xf]
  %v154 = vld [vmem:[%s0 + $0x230] sm:$0xf]
  %v155 = vld [vmem:[%s0 + $0x234] sm:$0xf]
  %v156 = vld [vmem:[%s0 + $0x238] sm:$0xf]
  %v157 = vld [vmem:[%s0 + $0x23c] sm:$0xf]
  %v158 = vld [vmem:[%s0 + $0x240] sm:$0xf]
  %v159 = vld [vmem:[%s0 + $0x244] sm:$0xf]
  %v160 = vld [vmem:[%s0 + $0x248] sm:$0xf]
  %v161 = vld [vmem:[%s0 + $0x24c] sm:$0xf]
  %v162 = vld [vmem:[%s0 + $0x250] sm:$0xf]
  %v163 = vld [vmem:[%s0 + $0x254] sm:$0xf]
  %v164 = vld [vmem:[%s0 + $0x258] sm:$0xf]
  %v165 = vld [vmem:[%s0 + $0x25c] sm:$0xf]
  %v166 = vld [vmem:[%s0 + $0x260] sm:$0xf]
  %v167 = vld [vmem:[%s0 + $0x264] sm:$0xf]
  %v168 = vld [vmem:[%s0 + $0x268] sm:$0xf]
  %v169 = vld [vmem:[%s0 + $0x26c] sm:$0xf]
  %v170 = vld [vmem:[%s0 + $0x270] sm:$0xf]
  %v171 = vld [vmem:[%s0 + $0x274] sm:$0xf]
  %v172 = vld [vmem:[%s0 + $0x278] sm:$0xf]
  %v173 = vld [vmem:[%s0 + $0x27c] sm:$0xf]
  %v174 = vld [vmem:[%s0 + $0x280] sm:$0xf]
  %v175 = vld [vmem:[%s0 + $0x284] sm:$0xf]
  %v176 = vld [vmem:[%s0 + $0x288] sm:$0xf]
  %v177 = vld [vmem:[%s0 + $0x28c] sm:$0xf]
  %v178 = vld [vmem:[%s0 + $0x290] sm:$0xf]
  %v179 = vld [vmem:[%s0 + $0x294] sm:$0xf]
  %v180 = vld [vmem:[%s0 + $0x298] sm:$0xf]
  %v181 = vld [vmem:[%s0 + $0x29c] sm:$0xf]
  %v182 = vld [vmem:[%s0 + $0x2a0] sm:$0xf]
  %v183 = vld [vmem:[%s0 + $0x2a4] sm:$0xf]
  %v184 = vld [vmem:[%s0 + $0x2a8] sm:$0xf]
  %v185 = vld [vmem:[%s0 + $0x2ac] sm:$0xf]
  %v186 = vld [vmem:[%s0 + $0x2b0] sm:$0xf]
  %v187 = vld [vmem:[%s0 + $0x2b4] sm:$0xf]
  %v188 = vld [vmem:[%s0 + $0x2b8] sm:$0xf]
  %v189 = vld [vmem:[%s0 + $0x2bc] sm:$0xf]
  %v190 = vld [vmem:[%s0 + $0x2c0] sm:$0xf]
  %v191 = vld [vmem:[%s0 + $0x2c4] sm:$0xf]
  %v192 = vld [vmem:[%s0 + $0x2c8] sm:$0xf]
  %v193 = vld [vmem:[%s0 + $0x2cc] sm:$0xf]
  %v194 = vld [vmem:[%s0 + $0x2d0] sm:$0xf]
  %v195 = vld [vmem:[%s0 + $0x2d4] sm:$0xf]
  %v196 = vld [vmem:[%s0 + $0x2d8] sm:$0xf]
  %v197 = vld [vmem:[%s0 + $0x2dc] sm:$0xf]
  %v198 = vld [vmem:[%s0 + $0x2e0] sm:$0xf]
  %v199 = vld [vmem:[%s0 + $0x2e4] sm:$0xf]
  %v200 = vld [vmem:[%s0 + $0x2e8] sm:$0xf]
  %v201 = vld [vmem:[%s0 + $0x2ec] sm:$0xf]
  %v202 = vld [vmem:[%s0 + $0x2f0] sm:$0xf]
  %v203 = vld [vmem:[%s0 + $0x2f4] sm:$0xf]
  %v204 = vld [vmem:[%s0 + $0x2f8] sm:$0xf]
  %v205 = vld [vmem:[%s0 + $0x2fc] sm:$0xf]
  %v206 = vld [vmem:[%s0 + $0x300] sm:$0xf]
  %v207 = vld [vmem:[%s0 + $0x304] sm:$0xf]
  %v208 = vld [vmem:[%s0 + $0x308] sm:$0xf]
  %v209 = vld [vmem:[%s0 + $0x30c] sm:$0xf]
  %v210 = vld [vmem:[%s0 + $0x310] sm:$0xf]
  %v211 = vld [vmem:[%s0 + $0x314] sm:$0xf]
  %v212 = vld [vmem:[%s0 + $0x318] sm:$0xf]
  %v213 = vld [vmem:[%s0 + $0x31c] sm:$0xf]
  %v214 = vld [vmem:[%s0 + $0x320] sm:$0xf]
  %v215 = vld [vmem:[%s0 + $0x324] sm:$0xf]
  %v216 = vld [vmem:[%s0 + $0x328] sm:$0xf]
  %v217 = vld [vmem:[%s0 + $0x32c] sm:$0xf]
  %v218 = vld [vmem:[%s0 + $0x330] sm:$0xf]
  %v219 = vld [vmem:[%s0 + $0x334] sm:$0xf]
  %v220 = vld [vmem:[%s0 + $0x338] sm:$0xf]
  %v221 = vld [vmem:[%s0 + $0x33c] sm:$0xf]
  %v222 = vld [vmem:[%s0 + $0x340] sm:$0xf]
  %v223 = vld [vmem:[%s0 + $0x344] sm:$0xf]
  %v224 = vld [vmem:[%s0 + $0x348] sm:$0xf]
  %v225 = vld [vmem:[%s0 + $0x34c] sm:$0xf]
  %v226 = vld [vmem:[%s0 + $0x350] sm:$0xf]
  %v227 = vld [vmem:[%s0 + $0x354] sm:$0xf]
  %v228 = vld [vmem:[%s0 + $0x358] sm:$0xf]
  %v229 = vld [vmem:[%s0 + $0x35c] sm:$0xf]
  %v230 = vld [vmem:[%s0 + $0x360] sm:$0xf]
  %v231 = vld [vmem:[%s0 + $0x364] sm:$0xf]
  %v232 = vld [vmem:[%s0 + $0x368] sm:$0xf]
  %v233 = vld [vmem:[%s0 + $0x36c] sm:$0xf]
  %v234 = vld [vmem:[%s0 + $0x370] sm:$0xf]
  %v235 = vld [vmem:[%s0 + $0x374] sm:$0xf]
  %v236 = vld [vmem:[%s0 + $0x378] sm:$0xf]
  %v237 = vld [vmem:[%s0 + $0x37c] sm:$0xf]
  %v238 = vld [vmem:[%s0 + $0x380] sm:$0xf]
  %v239 = vld [vmem:[%s0 + $0x384] sm:$0xf]
  %v240 = vld [vmem:[%s0 + $0x388] sm:$0xf]
  %v241 = vld [vmem:[%s0 + $0x38c] sm:$0xf]
  %v242 = vld [vmem:[%s0 + $0x390] sm:$0xf]
  %v243 = vld [vmem:[%s0 + $0x394] sm:$0xf]
  %v244 = vld [vmem:[%s0 + $0x398] sm:$0xf]
  %v245 = vld [vmem:[%s0 + $0x39c] sm:$0xf]
  %v246 = vld [vmem:[%s0 + $0x3a0] sm:$0xf]
  %v247 = vld [vmem:[%s0 + $0x3a4] sm:$0xf]
  %v248 = vld [vmem:[%s0 + $0x3a8] sm:$0xf]
  %v249 = vld [vmem:[%s0 + $0x3ac] sm:$0xf]
  %v250 = vld [vmem:[%s0 + $0x3b0] sm:$0xf]
  %v251 = vld [vmem:[%s0 + $0x3b4] sm:$0xf]
  %v252 = vld [vmem:[%s0 + $0x3b8] sm:$0xf]
  %v253 = vld [vmem:[%s0 + $0x3bc] sm:$0xf]
  %v254 = vld [vmem:[%s0 + $0x3c0] sm:$0xf]
  %v255 = vld [vmem:[%s0 + $0x3c4] sm:$0xf]
  %v256 = vld [vmem:[%s0 + $0x3c8] sm:$0xf]
  %v257 = vld [vmem:[%s0 + $0x3cc] sm:$0xf]
  %v258 = vld [vmem:[%s0 + $0x3d0] sm:$0xf]
  %v259 = vld [vmem:[%s0 + $0x3d4] sm:$0xf]
  %v260 = vld [vmem:[%s0 + $0x3d8] sm:$0xf]
  %v261 = vld [vmem:[%s0 + $0x3dc] sm:$0xf]
  %v262 = vld [vmem:[%s0 + $0x3e0] sm:$0xf]
  %v263 = vld [vmem:[%s0 + $0x3e4] sm:$0xf]
  %v264 = vld [vmem:[%s0 + $0x3e8] sm:$0xf]
  %v265 = vld [vmem:[%s0 + $0x3ec] sm:$0xf]
  %v266 = vld [vmem:[%s0 + $0x3f0] sm:$0xf]
  %v267 = vld [vmem:[%s0 + $0x3f4] sm:$0xf]
  %v268 = vld [vmem:[%s0 + $0x3f8] sm:$0xf]
  %v269 = vld [vmem:[%s0 + $0x3fc] sm:$0xf]
  %v270 = vunpack.c.l.bf16 %v14
  %v271 = vunpack.c.l.bf16 %v15
  %v272 = vunpack.c.l.bf16 %v16
  %v273 = vunpack.c.l.bf16 %v17
  %v274 = vunpack.c.l.bf16 %v18
  %v275 = vunpack.c.l.bf16 %v19
  %v276 = vunpack.c.l.bf16 %v20
  %v277 = vunpack.c.l.bf16 %v21
  %v278 = vunpack.c.l.bf16 %v22
  %v279 = vunpack.c.l.bf16 %v23
  %v280 = vunpack.c.l.bf16 %v24
  %v281 = vunpack.c.l.bf16 %v25
  %v282 = vunpack.c.l.bf16 %v26
  %v283 = vunpack.c.l.bf16 %v27
  %v284 = vunpack.c.l.bf16 %v28
  %v285 = vunpack.c.l.bf16 %v29
  %v286 = vunpack.c.l.bf16 %v30
  %v287 = vunpack.c.l.bf16 %v31
  %v288 = vunpack.c.l.bf16 %v32
  %v289 = vunpack.c.l.bf16 %v33
  %v290 = vunpack.c.l.bf16 %v34
  %v291 = vunpack.c.l.bf16 %v35
  %v292 = vunpack.c.l.bf16 %v36
  %v293 = vunpack.c.l.bf16 %v37
  %v294 = vunpack.c.l.bf16 %v38
  %v295 = vunpack.c.l.bf16 %v39
  %v296 = vunpack.c.l.bf16 %v40
  %v297 = vunpack.c.l.bf16 %v41
  %v298 = vunpack.c.l.bf16 %v42
  %v299 = vunpack.c.l.bf16 %v43
  %v300 = vunpack.c.l.bf16 %v44
  %v301 = vunpack.c.l.bf16 %v45
  %v302 = vunpack.c.l.bf16 %v46
  %v303 = vunpack.c.l.bf16 %v47
  %v304 = vunpack.c.l.bf16 %v48
  %v305 = vunpack.c.l.bf16 %v49
  %v306 = vunpack.c.l.bf16 %v50
  %v307 = vunpack.c.l.bf16 %v51
  %v308 = vunpack.c.l.bf16 %v52
  %v309 = vunpack.c.l.bf16 %v53
  %v310 = vunpack.c.l.bf16 %v54
  %v311 = vunpack.c.l.bf16 %v55
  %v312 = vunpack.c.l.bf16 %v56
  %v313 = vunpack.c.l.bf16 %v57
  %v314 = vunpack.c.l.bf16 %v58
  %v315 = vunpack.c.l.bf16 %v59
  %v316 = vunpack.c.l.bf16 %v60
  %v317 = vunpack.c.l.bf16 %v61
  %v318 = vunpack.c.l.bf16 %v62
  %v319 = vunpack.c.l.bf16 %v63
  %v320 = vunpack.c.l.bf16 %v64
  %v321 = vunpack.c.l.bf16 %v65
  %v322 = vunpack.c.l.bf16 %v66
  %v323 = vunpack.c.l.bf16 %v67
  %v324 = vunpack.c.l.bf16 %v68
  %v325 = vunpack.c.l.bf16 %v69
  %v326 = vunpack.c.l.bf16 %v70
  %v327 = vunpack.c.l.bf16 %v71
  %v328 = vunpack.c.l.bf16 %v72
  %v329 = vunpack.c.l.bf16 %v73
  %v330 = vunpack.c.l.bf16 %v74
  %v331 = vunpack.c.l.bf16 %v75
  %v332 = vunpack.c.l.bf16 %v76
  %v333 = vunpack.c.l.bf16 %v77
  %v334 = vunpack.c.l.bf16 %v78
  %v335 = vunpack.c.l.bf16 %v79
  %v336 = vunpack.c.l.bf16 %v80
  %v337 = vunpack.c.l.bf16 %v81
  %v338 = vunpack.c.l.bf16 %v82
  %v339 = vunpack.c.l.bf16 %v83
  %v340 = vunpack.c.l.bf16 %v84
  %v341 = vunpack.c.l.bf16 %v85
  %v342 = vunpack.c.l.bf16 %v86
  %v343 = vunpack.c.l.bf16 %v87
  %v344 = vunpack.c.l.bf16 %v88
  %v345 = vunpack.c.l.bf16 %v89
  %v346 = vunpack.c.l.bf16 %v90
  %v347 = vunpack.c.l.bf16 %v91
  %v348 = vunpack.c.l.bf16 %v92
  %v349 = vunpack.c.l.bf16 %v93
  %v350 = vunpack.c.l.bf16 %v94
  %v351 = vunpack.c.l.bf16 %v95
  %v352 = vunpack.c.l.bf16 %v96
  %v353 = vunpack.c.l.bf16 %v97
  %v354 = vunpack.c.l.bf16 %v98
  %v355 = vunpack.c.l.bf16 %v99
  %v356 = vunpack.c.l.bf16 %v100
  %v357 = vunpack.c.l.bf16 %v101
  %v358 = vunpack.c.l.bf16 %v102
  %v359 = vunpack.c.l.bf16 %v103
  %v360 = vunpack.c.l.bf16 %v104
  %v361 = vunpack.c.l.bf16 %v105
  %v362 = vunpack.c.l.bf16 %v106
  %v363 = vunpack.c.l.bf16 %v107
  %v364 = vunpack.c.l.bf16 %v108
  %v365 = vunpack.c.l.bf16 %v109
  %v366 = vunpack.c.l.bf16 %v110
  %v367 = vunpack.c.l.bf16 %v111
  %v368 = vunpack.c.l.bf16 %v112
  %v369 = vunpack.c.l.bf16 %v113
  %v370 = vunpack.c.l.bf16 %v114
  %v371 = vunpack.c.l.bf16 %v115
  %v372 = vunpack.c.l.bf16 %v116
  %v373 = vunpack.c.l.bf16 %v117
  %v374 = vunpack.c.l.bf16 %v118
  %v375 = vunpack.c.l.bf16 %v119
  %v376 = vunpack.c.l.bf16 %v120
  %v377 = vunpack.c.l.bf16 %v121
  %v378 = vunpack.c.l.bf16 %v122
  %v379 = vunpack.c.l.bf16 %v123
  %v380 = vunpack.c.l.bf16 %v124
  %v381 = vunpack.c.l.bf16 %v125
  %v382 = vunpack.c.l.bf16 %v126
  %v383 = vunpack.c.l.bf16 %v127
  %v384 = vunpack.c.l.bf16 %v128
  %v385 = vunpack.c.l.bf16 %v129
  %v386 = vunpack.c.l.bf16 %v130
  %v387 = vunpack.c.l.bf16 %v131
  %v388 = vunpack.c.l.bf16 %v132
  %v389 = vunpack.c.l.bf16 %v133
  %v390 = vunpack.c.l.bf16 %v134
  %v391 = vunpack.c.l.bf16 %v135
  %v392 = vunpack.c.l.bf16 %v136
  %v393 = vunpack.c.l.bf16 %v137
  %v394 = vunpack.c.l.bf16 %v138
  %v395 = vunpack.c.l.bf16 %v139
  %v396 = vunpack.c.l.bf16 %v140
  %v397 = vunpack.c.l.bf16 %v141
  %v398 = vunpack.c.l.bf16 %v142
  %v399 = vunpack.c.l.bf16 %v143
  %v400 = vunpack.c.l.bf16 %v144
  %v401 = vunpack.c.l.bf16 %v145
  %v402 = vunpack.c.l.bf16 %v146
  %v403 = vunpack.c.l.bf16 %v147
  %v404 = vunpack.c.l.bf16 %v148
  %v405 = vunpack.c.l.bf16 %v149
  %v406 = vunpack.c.l.bf16 %v150
  %v407 = vunpack.c.l.bf16 %v151
  %v408 = vunpack.c.l.bf16 %v152
  %v409 = vunpack.c.l.bf16 %v153
  %v410 = vunpack.c.l.bf16 %v154
  %v411 = vunpack.c.l.bf16 %v155
  %v412 = vunpack.c.l.bf16 %v156
  %v413 = vunpack.c.l.bf16 %v157
  %v414 = vunpack.c.l.bf16 %v158
  %v415 = vunpack.c.l.bf16 %v159
  %v416 = vunpack.c.l.bf16 %v160
  %v417 = vunpack.c.l.bf16 %v161
  %v418 = vunpack.c.l.bf16 %v162
  %v419 = vunpack.c.l.bf16 %v163
  %v420 = vunpack.c.l.bf16 %v164
  %v421 = vunpack.c.l.bf16 %v165
  %v422 = vunpack.c.l.bf16 %v166
  %v423 = vunpack.c.l.bf16 %v167
  %v424 = vunpack.c.l.bf16 %v168
  %v425 = vunpack.c.l.bf16 %v169
  %v426 = vunpack.c.l.bf16 %v170
  %v427 = vunpack.c.l.bf16 %v171
  %v428 = vunpack.c.l.bf16 %v172
  %v429 = vunpack.c.l.bf16 %v173
  %v430 = vunpack.c.l.bf16 %v174
  %v431 = vunpack.c.l.bf16 %v175
  %v432 = vunpack.c.l.bf16 %v176
  %v433 = vunpack.c.l.bf16 %v177
  %v434 = vunpack.c.l.bf16 %v178
  %v435 = vunpack.c.l.bf16 %v179
  %v436 = vunpack.c.l.bf16 %v180
  %v437 = vunpack.c.l.bf16 %v181
  %v438 = vunpack.c.l.bf16 %v182
  %v439 = vunpack.c.l.bf16 %v183
  %v440 = vunpack.c.l.bf16 %v184
  %v441 = vunpack.c.l.bf16 %v185
  %v442 = vunpack.c.l.bf16 %v186
  %v443 = vunpack.c.l.bf16 %v187
  %v444 = vunpack.c.l.bf16 %v188
  %v445 = vunpack.c.l.bf16 %v189
  %v446 = vunpack.c.l.bf16 %v190
  %v447 = vunpack.c.l.bf16 %v191
  %v448 = vunpack.c.l.bf16 %v192
  %v449 = vunpack.c.l.bf16 %v193
  %v450 = vunpack.c.l.bf16 %v194
  %v451 = vunpack.c.l.bf16 %v195
  %v452 = vunpack.c.l.bf16 %v196
  %v453 = vunpack.c.l.bf16 %v197
  %v454 = vunpack.c.l.bf16 %v198
  %v455 = vunpack.c.l.bf16 %v199
  %v456 = vunpack.c.l.bf16 %v200
  %v457 = vunpack.c.l.bf16 %v201
  %v458 = vunpack.c.l.bf16 %v202
  %v459 = vunpack.c.l.bf16 %v203
  %v460 = vunpack.c.l.bf16 %v204
  %v461 = vunpack.c.l.bf16 %v205
  %v462 = vunpack.c.l.bf16 %v206
  %v463 = vunpack.c.l.bf16 %v207
  %v464 = vunpack.c.l.bf16 %v208
  %v465 = vunpack.c.l.bf16 %v209
  %v466 = vunpack.c.l.bf16 %v210
  %v467 = vunpack.c.l.bf16 %v211
  %v468 = vunpack.c.l.bf16 %v212
  %v469 = vunpack.c.l.bf16 %v213
  %v470 = vunpack.c.l.bf16 %v214
  %v471 = vunpack.c.l.bf16 %v215
  %v472 = vunpack.c.l.bf16 %v216
  %v473 = vunpack.c.l.bf16 %v217
  %v474 = vunpack.c.l.bf16 %v218
  %v475 = vunpack.c.l.bf16 %v219
  %v476 = vunpack.c.l.bf16 %v220
  %v477 = vunpack.c.l.bf16 %v221
  %v478 = vunpack.c.l.bf16 %v222
  %v479 = vunpack.c.l.bf16 %v223
  %v480 = vunpack.c.l.bf16 %v224
  %v481 = vunpack.c.l.bf16 %v225
  %v482 = vunpack.c.l.bf16 %v226
  %v483 = vunpack.c.l.bf16 %v227
  %v484 = vunpack.c.l.bf16 %v228
  %v485 = vunpack.c.l.bf16 %v229
  %v486 = vunpack.c.l.bf16 %v230
  %v487 = vunpack.c.l.bf16 %v231
  %v488 = vunpack.c.l.bf16 %v232
  %v489 = vunpack.c.l.bf16 %v233
  %v490 = vunpack.c.l.bf16 %v234
  %v491 = vunpack.c.l.bf16 %v235
  %v492 = vunpack.c.l.bf16 %v236
  %v493 = vunpack.c.l.bf16 %v237
  %v494 = vunpack.c.l.bf16 %v238
  %v495 = vunpack.c.l.bf16 %v239
  %v496 = vunpack.c.l.bf16 %v240
  %v497 = vunpack.c.l.bf16 %v241
  %v498 = vunpack.c.l.bf16 %v242
  %v499 = vunpack.c.l.bf16 %v243
  %v500 = vunpack.c.l.bf16 %v244
  %v501 = vunpack.c.l.bf16 %v245
  %v502 = vunpack.c.l.bf16 %v246
  %v503 = vunpack.c.l.bf16 %v247
  %v504 = vunpack.c.l.bf16 %v248
  %v505 = vunpack.c.l.bf16 %v249
  %v506 = vunpack.c.l.bf16 %v250
  %v507 = vunpack.c.l.bf16 %v251
  %v508 = vunpack.c.l.bf16 %v252
  %v509 = vunpack.c.l.bf16 %v253
  %v510 = vunpack.c.l.bf16 %v254
  %v511 = vunpack.c.l.bf16 %v255
  %v512 = vunpack.c.l.bf16 %v256
  %v513 = vunpack.c.l.bf16 %v257
  %v514 = vunpack.c.l.bf16 %v258
  %v515 = vunpack.c.l.bf16 %v259
  %v516 = vunpack.c.l.bf16 %v260
  %v517 = vunpack.c.l.bf16 %v261
  %v518 = vunpack.c.l.bf16 %v262
  %v519 = vunpack.c.l.bf16 %v263
  %v520 = vunpack.c.l.bf16 %v264
  %v521 = vunpack.c.l.bf16 %v265
  %v522 = vunpack.c.l.bf16 %v266
  %v523 = vunpack.c.l.bf16 %v267
  %v524 = vunpack.c.l.bf16 %v268
  %v525 = vunpack.c.l.bf16 %v269
  %v526 = vld [vmem:[%s1] sm:$0x1]
  %v528 = vperm.slane %v526, 0
  %v530 = vmul.f32 %v270, %v528
  %v531 = vmul.f32 %v271, %v528
  %v532 = vmul.f32 %v272, %v528
  %v533 = vmul.f32 %v273, %v528
  %v534 = vmul.f32 %v274, %v528
  %v535 = vmul.f32 %v275, %v528
  %v536 = vmul.f32 %v276, %v528
  %v537 = vmul.f32 %v277, %v528
  %v538 = vmul.f32 %v278, %v528
  %v539 = vmul.f32 %v279, %v528
  %v540 = vmul.f32 %v280, %v528
  %v541 = vmul.f32 %v281, %v528
  %v542 = vmul.f32 %v282, %v528
  %v543 = vmul.f32 %v283, %v528
  %v544 = vmul.f32 %v284, %v528
  %v545 = vmul.f32 %v285, %v528
  %v546 = vmul.f32 %v286, %v528
  %v547 = vmul.f32 %v287, %v528
  %v548 = vmul.f32 %v288, %v528
  %v549 = vmul.f32 %v289, %v528
  %v550 = vmul.f32 %v290, %v528
  %v551 = vmul.f32 %v291, %v528
  %v552 = vmul.f32 %v292, %v528
  %v553 = vmul.f32 %v293, %v528
  %v554 = vmul.f32 %v294, %v528
  %v555 = vmul.f32 %v295, %v528
  %v556 = vmul.f32 %v296, %v528
  %v557 = vmul.f32 %v297, %v528
  %v558 = vmul.f32 %v298, %v528
  %v559 = vmul.f32 %v299, %v528
  %v560 = vmul.f32 %v300, %v528
  %v561 = vmul.f32 %v301, %v528
  %v562 = vmul.f32 %v302, %v528
  %v563 = vmul.f32 %v303, %v528
  %v564 = vmul.f32 %v304, %v528
  %v565 = vmul.f32 %v305, %v528
  %v566 = vmul.f32 %v306, %v528
  %v567 = vmul.f32 %v307, %v528
  %v568 = vmul.f32 %v308, %v528
  %v569 = vmul.f32 %v309, %v528
  %v570 = vmul.f32 %v310, %v528
  %v571 = vmul.f32 %v311, %v528
  %v572 = vmul.f32 %v312, %v528
  %v573 = vmul.f32 %v313, %v528
  %v574 = vmul.f32 %v314, %v528
  %v575 = vmul.f32 %v315, %v528
  %v576 = vmul.f32 %v316, %v528
  %v577 = vmul.f32 %v317, %v528
  %v578 = vmul.f32 %v318, %v528
  %v579 = vmul.f32 %v319, %v528
  %v580 = vmul.f32 %v320, %v528
  %v581 = vmul.f32 %v321, %v528
  %v582 = vmul.f32 %v322, %v528
  %v583 = vmul.f32 %v323, %v528
  %v584 = vmul.f32 %v324, %v528
  %v585 = vmul.f32 %v325, %v528
  %v586 = vmul.f32 %v326, %v528
  %v587 = vmul.f32 %v327, %v528
  %v588 = vmul.f32 %v328, %v528
  %v589 = vmul.f32 %v329, %v528
  %v590 = vmul.f32 %v330, %v528
  %v591 = vmul.f32 %v331, %v528
  %v592 = vmul.f32 %v332, %v528
  %v593 = vmul.f32 %v333, %v528
  %v594 = vmul.f32 %v334, %v528
  %v595 = vmul.f32 %v335, %v528
  %v596 = vmul.f32 %v336, %v528
  %v597 = vmul.f32 %v337, %v528
  %v598 = vmul.f32 %v338, %v528
  %v599 = vmul.f32 %v339, %v528
  %v600 = vmul.f32 %v340, %v528
  %v601 = vmul.f32 %v341, %v528
  %v602 = vmul.f32 %v342, %v528
  %v603 = vmul.f32 %v343, %v528
  %v604 = vmul.f32 %v344, %v528
  %v605 = vmul.f32 %v345, %v528
  %v606 = vmul.f32 %v346, %v528
  %v607 = vmul.f32 %v347, %v528
  %v608 = vmul.f32 %v348, %v528
  %v609 = vmul.f32 %v349, %v528
  %v610 = vmul.f32 %v350, %v528
  %v611 = vmul.f32 %v351, %v528
  %v612 = vmul.f32 %v352, %v528
  %v613 = vmul.f32 %v353, %v528
  %v614 = vmul.f32 %v354, %v528
  %v615 = vmul.f32 %v355, %v528
  %v616 = vmul.f32 %v356, %v528
  %v617 = vmul.f32 %v357, %v528
  %v618 = vmul.f32 %v358, %v528
  %v619 = vmul.f32 %v359, %v528
  %v620 = vmul.f32 %v360, %v528
  %v621 = vmul.f32 %v361, %v528
  %v622 = vmul.f32 %v362, %v528
  %v623 = vmul.f32 %v363, %v528
  %v624 = vmul.f32 %v364, %v528
  %v625 = vmul.f32 %v365, %v528
  %v626 = vmul.f32 %v366, %v528
  %v627 = vmul.f32 %v367, %v528
  %v628 = vmul.f32 %v368, %v528
  %v629 = vmul.f32 %v369, %v528
  %v630 = vmul.f32 %v370, %v528
  %v631 = vmul.f32 %v371, %v528
  %v632 = vmul.f32 %v372, %v528
  %v633 = vmul.f32 %v373, %v528
  %v634 = vmul.f32 %v374, %v528
  %v635 = vmul.f32 %v375, %v528
  %v636 = vmul.f32 %v376, %v528
  %v637 = vmul.f32 %v377, %v528
  %v638 = vmul.f32 %v378, %v528
  %v639 = vmul.f32 %v379, %v528
  %v640 = vmul.f32 %v380, %v528
  %v641 = vmul.f32 %v381, %v528
  %v642 = vmul.f32 %v382, %v528
  %v643 = vmul.f32 %v383, %v528
  %v644 = vmul.f32 %v384, %v528
  %v645 = vmul.f32 %v385, %v528
  %v646 = vmul.f32 %v386, %v528
  %v647 = vmul.f32 %v387, %v528
  %v648 = vmul.f32 %v388, %v528
  %v649 = vmul.f32 %v389, %v528
  %v650 = vmul.f32 %v390, %v528
  %v651 = vmul.f32 %v391, %v528
  %v652 = vmul.f32 %v392, %v528
  %v653 = vmul.f32 %v393, %v528
  %v654 = vmul.f32 %v394, %v528
  %v655 = vmul.f32 %v395, %v528
  %v656 = vmul.f32 %v396, %v528
  %v657 = vmul.f32 %v397, %v528
  %v658 = vmul.f32 %v398, %v528
  %v659 = vmul.f32 %v399, %v528
  %v660 = vmul.f32 %v400, %v528
  %v661 = vmul.f32 %v401, %v528
  %v662 = vmul.f32 %v402, %v528
  %v663 = vmul.f32 %v403, %v528
  %v664 = vmul.f32 %v404, %v528
  %v665 = vmul.f32 %v405, %v528
  %v666 = vmul.f32 %v406, %v528
  %v667 = vmul.f32 %v407, %v528
  %v668 = vmul.f32 %v408, %v528
  %v669 = vmul.f32 %v409, %v528
  %v670 = vmul.f32 %v410, %v528
  %v671 = vmul.f32 %v411, %v528
  %v672 = vmul.f32 %v412, %v528
  %v673 = vmul.f32 %v413, %v528
  %v674 = vmul.f32 %v414, %v528
  %v675 = vmul.f32 %v415, %v528
  %v676 = vmul.f32 %v416, %v528
  %v677 = vmul.f32 %v417, %v528
  %v678 = vmul.f32 %v418, %v528
  %v679 = vmul.f32 %v419, %v528
  %v680 = vmul.f32 %v420, %v528
  %v681 = vmul.f32 %v421, %v528
  %v682 = vmul.f32 %v422, %v528
  %v683 = vmul.f32 %v423, %v528
  %v684 = vmul.f32 %v424, %v528
  %v685 = vmul.f32 %v425, %v528
  %v686 = vmul.f32 %v426, %v528
  %v687 = vmul.f32 %v427, %v528
  %v688 = vmul.f32 %v428, %v528
  %v689 = vmul.f32 %v429, %v528
  %v690 = vmul.f32 %v430, %v528
  %v691 = vmul.f32 %v431, %v528
  %v692 = vmul.f32 %v432, %v528
  %v693 = vmul.f32 %v433, %v528
  %v694 = vmul.f32 %v434, %v528
  %v695 = vmul.f32 %v435, %v528
  %v696 = vmul.f32 %v436, %v528
  %v697 = vmul.f32 %v437, %v528
  %v698 = vmul.f32 %v438, %v528
  %v699 = vmul.f32 %v439, %v528
  %v700 = vmul.f32 %v440, %v528
  %v701 = vmul.f32 %v441, %v528
  %v702 = vmul.f32 %v442, %v528
  %v703 = vmul.f32 %v443, %v528
  %v704 = vmul.f32 %v444, %v528
  %v705 = vmul.f32 %v445, %v528
  %v706 = vmul.f32 %v446, %v528
  %v707 = vmul.f32 %v447, %v528
  %v708 = vmul.f32 %v448, %v528
  %v709 = vmul.f32 %v449, %v528
  %v710 = vmul.f32 %v450, %v528
  %v711 = vmul.f32 %v451, %v528
  %v712 = vmul.f32 %v452, %v528
  %v713 = vmul.f32 %v453, %v528
  %v714 = vmul.f32 %v454, %v528
  %v715 = vmul.f32 %v455, %v528
  %v716 = vmul.f32 %v456, %v528
  %v717 = vmul.f32 %v457, %v528
  %v718 = vmul.f32 %v458, %v528
  %v719 = vmul.f32 %v459, %v528
  %v720 = vmul.f32 %v460, %v528
  %v721 = vmul.f32 %v461, %v528
  %v722 = vmul.f32 %v462, %v528
  %v723 = vmul.f32 %v463, %v528
  %v724 = vmul.f32 %v464, %v528
  %v725 = vmul.f32 %v465, %v528
  %v726 = vmul.f32 %v466, %v528
  %v727 = vmul.f32 %v467, %v528
  %v728 = vmul.f32 %v468, %v528
  %v729 = vmul.f32 %v469, %v528
  %v730 = vmul.f32 %v470, %v528
  %v731 = vmul.f32 %v471, %v528
  %v732 = vmul.f32 %v472, %v528
  %v733 = vmul.f32 %v473, %v528
  %v734 = vmul.f32 %v474, %v528
  %v735 = vmul.f32 %v475, %v528
  %v736 = vmul.f32 %v476, %v528
  %v737 = vmul.f32 %v477, %v528
  %v738 = vmul.f32 %v478, %v528
  %v739 = vmul.f32 %v479, %v528
  %v740 = vmul.f32 %v480, %v528
  %v741 = vmul.f32 %v481, %v528
  %v742 = vmul.f32 %v482, %v528
  %v743 = vmul.f32 %v483, %v528
  %v744 = vmul.f32 %v484, %v528
  %v745 = vmul.f32 %v485, %v528
  %v746 = vmul.f32 %v486, %v528
  %v747 = vmul.f32 %v487, %v528
  %v748 = vmul.f32 %v488, %v528
  %v749 = vmul.f32 %v489, %v528
  %v750 = vmul.f32 %v490, %v528
  %v751 = vmul.f32 %v491, %v528
  %v752 = vmul.f32 %v492, %v528
  %v753 = vmul.f32 %v493, %v528
  %v754 = vmul.f32 %v494, %v528
  %v755 = vmul.f32 %v495, %v528
  %v756 = vmul.f32 %v496, %v528
  %v757 = vmul.f32 %v497, %v528
  %v758 = vmul.f32 %v498, %v528
  %v759 = vmul.f32 %v499, %v528
  %v760 = vmul.f32 %v500, %v528
  %v761 = vmul.f32 %v501, %v528
  %v762 = vmul.f32 %v502, %v528
  %v763 = vmul.f32 %v503, %v528
  %v764 = vmul.f32 %v504, %v528
  %v765 = vmul.f32 %v505, %v528
  %v766 = vmul.f32 %v506, %v528
  %v767 = vmul.f32 %v507, %v528
  %v768 = vmul.f32 %v508, %v528
  %v769 = vmul.f32 %v509, %v528
  %v770 = vmul.f32 %v510, %v528
  %v771 = vmul.f32 %v511, %v528
  %v772 = vmul.f32 %v512, %v528
  %v773 = vmul.f32 %v513, %v528
  %v774 = vmul.f32 %v514, %v528
  %v775 = vmul.f32 %v515, %v528
  %v776 = vmul.f32 %v516, %v528
  %v777 = vmul.f32 %v517, %v528
  %v778 = vmul.f32 %v518, %v528
  %v779 = vmul.f32 %v519, %v528
  %v780 = vmul.f32 %v520, %v528
  %v781 = vmul.f32 %v521, %v528
  %v782 = vmul.f32 %v522, %v528
  %v783 = vmul.f32 %v523, %v528
  %v784 = vmul.f32 %v524, %v528
  %v785 = vmul.f32 %v525, %v528
  %v786 = vld [vmem:[%s2] sm:$0x1]
  %v788 = vperm.slane %v786, 0
  %v790 = vadd.f32 %v530, %v788
  %v791 = vadd.f32 %v531, %v788
  %v792 = vadd.f32 %v532, %v788
  %v793 = vadd.f32 %v533, %v788
  %v794 = vadd.f32 %v534, %v788
  %v795 = vadd.f32 %v535, %v788
  %v796 = vadd.f32 %v536, %v788
  %v797 = vadd.f32 %v537, %v788
  %v798 = vadd.f32 %v538, %v788
  %v799 = vadd.f32 %v539, %v788
  %v800 = vadd.f32 %v540, %v788
  %v801 = vadd.f32 %v541, %v788
  %v802 = vadd.f32 %v542, %v788
  %v803 = vadd.f32 %v543, %v788
  %v804 = vadd.f32 %v544, %v788
  %v805 = vadd.f32 %v545, %v788
  %v806 = vadd.f32 %v546, %v788
  %v807 = vadd.f32 %v547, %v788
  %v808 = vadd.f32 %v548, %v788
  %v809 = vadd.f32 %v549, %v788
  %v810 = vadd.f32 %v550, %v788
  %v811 = vadd.f32 %v551, %v788
  %v812 = vadd.f32 %v552, %v788
  %v813 = vadd.f32 %v553, %v788
  %v814 = vadd.f32 %v554, %v788
  %v815 = vadd.f32 %v555, %v788
  %v816 = vadd.f32 %v556, %v788
  %v817 = vadd.f32 %v557, %v788
  %v818 = vadd.f32 %v558, %v788
  %v819 = vadd.f32 %v559, %v788
  %v820 = vadd.f32 %v560, %v788
  %v821 = vadd.f32 %v561, %v788
  %v822 = vadd.f32 %v562, %v788
  %v823 = vadd.f32 %v563, %v788
  %v824 = vadd.f32 %v564, %v788
  %v825 = vadd.f32 %v565, %v788
  %v826 = vadd.f32 %v566, %v788
  %v827 = vadd.f32 %v567, %v788
  %v828 = vadd.f32 %v568, %v788
  %v829 = vadd.f32 %v569, %v788
  %v830 = vadd.f32 %v570, %v788
  %v831 = vadd.f32 %v571, %v788
  %v832 = vadd.f32 %v572, %v788
  %v833 = vadd.f32 %v573, %v788
  %v834 = vadd.f32 %v574, %v788
  %v835 = vadd.f32 %v575, %v788
  %v836 = vadd.f32 %v576, %v788
  %v837 = vadd.f32 %v577, %v788
  %v838 = vadd.f32 %v578, %v788
  %v839 = vadd.f32 %v579, %v788
  %v840 = vadd.f32 %v580, %v788
  %v841 = vadd.f32 %v581, %v788
  %v842 = vadd.f32 %v582, %v788
  %v843 = vadd.f32 %v583, %v788
  %v844 = vadd.f32 %v584, %v788
  %v845 = vadd.f32 %v585, %v788
  %v846 = vadd.f32 %v586, %v788
  %v847 = vadd.f32 %v587, %v788
  %v848 = vadd.f32 %v588, %v788
  %v849 = vadd.f32 %v589, %v788
  %v850 = vadd.f32 %v590, %v788
  %v851 = vadd.f32 %v591, %v788
  %v852 = vadd.f32 %v592, %v788
  %v853 = vadd.f32 %v593, %v788
  %v854 = vadd.f32 %v594, %v788
  %v855 = vadd.f32 %v595, %v788
  %v856 = vadd.f32 %v596, %v788
  %v857 = vadd.f32 %v597, %v788
  %v858 = vadd.f32 %v598, %v788
  %v859 = vadd.f32 %v599, %v788
  %v860 = vadd.f32 %v600, %v788
  %v861 = vadd.f32 %v601, %v788
  %v862 = vadd.f32 %v602, %v788
  %v863 = vadd.f32 %v603, %v788
  %v864 = vadd.f32 %v604, %v788
  %v865 = vadd.f32 %v605, %v788
  %v866 = vadd.f32 %v606, %v788
  %v867 = vadd.f32 %v607, %v788
  %v868 = vadd.f32 %v608, %v788
  %v869 = vadd.f32 %v609, %v788
  %v870 = vadd.f32 %v610, %v788
  %v871 = vadd.f32 %v611, %v788
  %v872 = vadd.f32 %v612, %v788
  %v873 = vadd.f32 %v613, %v788
  %v874 = vadd.f32 %v614, %v788
  %v875 = vadd.f32 %v615, %v788
  %v876 = vadd.f32 %v616, %v788
  %v877 = vadd.f32 %v617, %v788
  %v878 = vadd.f32 %v618, %v788
  %v879 = vadd.f32 %v619, %v788
  %v880 = vadd.f32 %v620, %v788
  %v881 = vadd.f32 %v621, %v788
  %v882 = vadd.f32 %v622, %v788
  %v883 = vadd.f32 %v623, %v788
  %v884 = vadd.f32 %v624, %v788
  %v885 = vadd.f32 %v625, %v788
  %v886 = vadd.f32 %v626, %v788
  %v887 = vadd.f32 %v627, %v788
  %v888 = vadd.f32 %v628, %v788
  %v889 = vadd.f32 %v629, %v788
  %v890 = vadd.f32 %v630, %v788
  %v891 = vadd.f32 %v631, %v788
  %v892 = vadd.f32 %v632, %v788
  %v893 = vadd.f32 %v633, %v788
  %v894 = vadd.f32 %v634, %v788
  %v895 = vadd.f32 %v635, %v788
  %v896 = vadd.f32 %v636, %v788
  %v897 = vadd.f32 %v637, %v788
  %v898 = vadd.f32 %v638, %v788
  %v899 = vadd.f32 %v639, %v788
  %v900 = vadd.f32 %v640, %v788
  %v901 = vadd.f32 %v641, %v788
  %v902 = vadd.f32 %v642, %v788
  %v903 = vadd.f32 %v643, %v788
  %v904 = vadd.f32 %v644, %v788
  %v905 = vadd.f32 %v645, %v788
  %v906 = vadd.f32 %v646, %v788
  %v907 = vadd.f32 %v647, %v788
  %v908 = vadd.f32 %v648, %v788
  %v909 = vadd.f32 %v649, %v788
  %v910 = vadd.f32 %v650, %v788
  %v911 = vadd.f32 %v651, %v788
  %v912 = vadd.f32 %v652, %v788
  %v913 = vadd.f32 %v653, %v788
  %v914 = vadd.f32 %v654, %v788
  %v915 = vadd.f32 %v655, %v788
  %v916 = vadd.f32 %v656, %v788
  %v917 = vadd.f32 %v657, %v788
  %v918 = vadd.f32 %v658, %v788
  %v919 = vadd.f32 %v659, %v788
  %v920 = vadd.f32 %v660, %v788
  %v921 = vadd.f32 %v661, %v788
  %v922 = vadd.f32 %v662, %v788
  %v923 = vadd.f32 %v663, %v788
  %v924 = vadd.f32 %v664, %v788
  %v925 = vadd.f32 %v665, %v788
  %v926 = vadd.f32 %v666, %v788
  %v927 = vadd.f32 %v667, %v788
  %v928 = vadd.f32 %v668, %v788
  %v929 = vadd.f32 %v669, %v788
  %v930 = vadd.f32 %v670, %v788
  %v931 = vadd.f32 %v671, %v788
  %v932 = vadd.f32 %v672, %v788
  %v933 = vadd.f32 %v673, %v788
  %v934 = vadd.f32 %v674, %v788
  %v935 = vadd.f32 %v675, %v788
  %v936 = vadd.f32 %v676, %v788
  %v937 = vadd.f32 %v677, %v788
  %v938 = vadd.f32 %v678, %v788
  %v939 = vadd.f32 %v679, %v788
  %v940 = vadd.f32 %v680, %v788
  %v941 = vadd.f32 %v681, %v788
  %v942 = vadd.f32 %v682, %v788
  %v943 = vadd.f32 %v683, %v788
  %v944 = vadd.f32 %v684, %v788
  %v945 = vadd.f32 %v685, %v788
  %v946 = vadd.f32 %v686, %v788
  %v947 = vadd.f32 %v687, %v788
  %v948 = vadd.f32 %v688, %v788
  %v949 = vadd.f32 %v689, %v788
  %v950 = vadd.f32 %v690, %v788
  %v951 = vadd.f32 %v691, %v788
  %v952 = vadd.f32 %v692, %v788
  %v953 = vadd.f32 %v693, %v788
  %v954 = vadd.f32 %v694, %v788
  %v955 = vadd.f32 %v695, %v788
  %v956 = vadd.f32 %v696, %v788
  %v957 = vadd.f32 %v697, %v788
  %v958 = vadd.f32 %v698, %v788
  %v959 = vadd.f32 %v699, %v788
  %v960 = vadd.f32 %v700, %v788
  %v961 = vadd.f32 %v701, %v788
  %v962 = vadd.f32 %v702, %v788
  %v963 = vadd.f32 %v703, %v788
  %v964 = vadd.f32 %v704, %v788
  %v965 = vadd.f32 %v705, %v788
  %v966 = vadd.f32 %v706, %v788
  %v967 = vadd.f32 %v707, %v788
  %v968 = vadd.f32 %v708, %v788
  %v969 = vadd.f32 %v709, %v788
  %v970 = vadd.f32 %v710, %v788
  %v971 = vadd.f32 %v711, %v788
  %v972 = vadd.f32 %v712, %v788
  %v973 = vadd.f32 %v713, %v788
  %v974 = vadd.f32 %v714, %v788
  %v975 = vadd.f32 %v715, %v788
  %v976 = vadd.f32 %v716, %v788
  %v977 = vadd.f32 %v717, %v788
  %v978 = vadd.f32 %v718, %v788
  %v979 = vadd.f32 %v719, %v788
  %v980 = vadd.f32 %v720, %v788
  %v981 = vadd.f32 %v721, %v788
  %v982 = vadd.f32 %v722, %v788
  %v983 = vadd.f32 %v723, %v788
  %v984 = vadd.f32 %v724, %v788
  %v985 = vadd.f32 %v725, %v788
  %v986 = vadd.f32 %v726, %v788
  %v987 = vadd.f32 %v727, %v788
  %v988 = vadd.f32 %v728, %v788
  %v989 = vadd.f32 %v729, %v788
  %v990 = vadd.f32 %v730, %v788
  %v991 = vadd.f32 %v731, %v788
  %v992 = vadd.f32 %v732, %v788
  %v993 = vadd.f32 %v733, %v788
  %v994 = vadd.f32 %v734, %v788
  %v995 = vadd.f32 %v735, %v788
  %v996 = vadd.f32 %v736, %v788
  %v997 = vadd.f32 %v737, %v788
  %v998 = vadd.f32 %v738, %v788
  %v999 = vadd.f32 %v739, %v788
  %v1000 = vadd.f32 %v740, %v788
  %v1001 = vadd.f32 %v741, %v788
  %v1002 = vadd.f32 %v742, %v788
  %v1003 = vadd.f32 %v743, %v788
  %v1004 = vadd.f32 %v744, %v788
  %v1005 = vadd.f32 %v745, %v788
  %v1006 = vadd.f32 %v746, %v788
  %v1007 = vadd.f32 %v747, %v788
  %v1008 = vadd.f32 %v748, %v788
  %v1009 = vadd.f32 %v749, %v788
  %v1010 = vadd.f32 %v750, %v788
  %v1011 = vadd.f32 %v751, %v788
  %v1012 = vadd.f32 %v752, %v788
  %v1013 = vadd.f32 %v753, %v788
  %v1014 = vadd.f32 %v754, %v788
  %v1015 = vadd.f32 %v755, %v788
  %v1016 = vadd.f32 %v756, %v788
  %v1017 = vadd.f32 %v757, %v788
  %v1018 = vadd.f32 %v758, %v788
  %v1019 = vadd.f32 %v759, %v788
  %v1020 = vadd.f32 %v760, %v788
  %v1021 = vadd.f32 %v761, %v788
  %v1022 = vadd.f32 %v762, %v788
  %v1023 = vadd.f32 %v763, %v788
  %v1024 = vadd.f32 %v764, %v788
  %v1025 = vadd.f32 %v765, %v788
  %v1026 = vadd.f32 %v766, %v788
  %v1027 = vadd.f32 %v767, %v788
  %v1028 = vadd.f32 %v768, %v788
  %v1029 = vadd.f32 %v769, %v788
  %v1030 = vadd.f32 %v770, %v788
  %v1031 = vadd.f32 %v771, %v788
  %v1032 = vadd.f32 %v772, %v788
  %v1033 = vadd.f32 %v773, %v788
  %v1034 = vadd.f32 %v774, %v788
  %v1035 = vadd.f32 %v775, %v788
  %v1036 = vadd.f32 %v776, %v788
  %v1037 = vadd.f32 %v777, %v788
  %v1038 = vadd.f32 %v778, %v788
  %v1039 = vadd.f32 %v779, %v788
  %v1040 = vadd.f32 %v780, %v788
  %v1041 = vadd.f32 %v781, %v788
  %v1042 = vadd.f32 %v782, %v788
  %v1043 = vadd.f32 %v783, %v788
  %v1044 = vadd.f32 %v784, %v788
  %v1045 = vadd.f32 %v785, %v788
  %v1046 = vmax.f32 %v790, 0.0
  %v1047 = vmax.f32 %v791, 0.0
  %v1048 = vmax.f32 %v792, 0.0
  %v1049 = vmax.f32 %v793, 0.0
  %v1050 = vmax.f32 %v794, 0.0
  %v1051 = vmax.f32 %v795, 0.0
  %v1052 = vmax.f32 %v796, 0.0
  %v1053 = vmax.f32 %v797, 0.0
  %v1054 = vmax.f32 %v798, 0.0
  %v1055 = vmax.f32 %v799, 0.0
  %v1056 = vmax.f32 %v800, 0.0
  %v1057 = vmax.f32 %v801, 0.0
  %v1058 = vmax.f32 %v802, 0.0
  %v1059 = vmax.f32 %v803, 0.0
  %v1060 = vmax.f32 %v804, 0.0
  %v1061 = vmax.f32 %v805, 0.0
  %v1062 = vmax.f32 %v806, 0.0
  %v1063 = vmax.f32 %v807, 0.0
  %v1064 = vmax.f32 %v808, 0.0
  %v1065 = vmax.f32 %v809, 0.0
  %v1066 = vmax.f32 %v810, 0.0
  %v1067 = vmax.f32 %v811, 0.0
  %v1068 = vmax.f32 %v812, 0.0
  %v1069 = vmax.f32 %v813, 0.0
  %v1070 = vmax.f32 %v814, 0.0
  %v1071 = vmax.f32 %v815, 0.0
  %v1072 = vmax.f32 %v816, 0.0
  %v1073 = vmax.f32 %v817, 0.0
  %v1074 = vmax.f32 %v818, 0.0
  %v1075 = vmax.f32 %v819, 0.0
  %v1076 = vmax.f32 %v820, 0.0
  %v1077 = vmax.f32 %v821, 0.0
  %v1078 = vmax.f32 %v822, 0.0
  %v1079 = vmax.f32 %v823, 0.0
  %v1080 = vmax.f32 %v824, 0.0
  %v1081 = vmax.f32 %v825, 0.0
  %v1082 = vmax.f32 %v826, 0.0
  %v1083 = vmax.f32 %v827, 0.0
  %v1084 = vmax.f32 %v828, 0.0
  %v1085 = vmax.f32 %v829, 0.0
  %v1086 = vmax.f32 %v830, 0.0
  %v1087 = vmax.f32 %v831, 0.0
  %v1088 = vmax.f32 %v832, 0.0
  %v1089 = vmax.f32 %v833, 0.0
  %v1090 = vmax.f32 %v834, 0.0
  %v1091 = vmax.f32 %v835, 0.0
  %v1092 = vmax.f32 %v836, 0.0
  %v1093 = vmax.f32 %v837, 0.0
  %v1094 = vmax.f32 %v838, 0.0
  %v1095 = vmax.f32 %v839, 0.0
  %v1096 = vmax.f32 %v840, 0.0
  %v1097 = vmax.f32 %v841, 0.0
  %v1098 = vmax.f32 %v842, 0.0
  %v1099 = vmax.f32 %v843, 0.0
  %v1100 = vmax.f32 %v844, 0.0
  %v1101 = vmax.f32 %v845, 0.0
  %v1102 = vmax.f32 %v846, 0.0
  %v1103 = vmax.f32 %v847, 0.0
  %v1104 = vmax.f32 %v848, 0.0
  %v1105 = vmax.f32 %v849, 0.0
  %v1106 = vmax.f32 %v850, 0.0
  %v1107 = vmax.f32 %v851, 0.0
  %v1108 = vmax.f32 %v852, 0.0
  %v1109 = vmax.f32 %v853, 0.0
  %v1110 = vmax.f32 %v854, 0.0
  %v1111 = vmax.f32 %v855, 0.0
  %v1112 = vmax.f32 %v856, 0.0
  %v1113 = vmax.f32 %v857, 0.0
  %v1114 = vmax.f32 %v858, 0.0
  %v1115 = vmax.f32 %v859, 0.0
  %v1116 = vmax.f32 %v860, 0.0
  %v1117 = vmax.f32 %v861, 0.0
  %v1118 = vmax.f32 %v862, 0.0
  %v1119 = vmax.f32 %v863, 0.0
  %v1120 = vmax.f32 %v864, 0.0
  %v1121 = vmax.f32 %v865, 0.0
  %v1122 = vmax.f32 %v866, 0.0
  %v1123 = vmax.f32 %v867, 0.0
  %v1124 = vmax.f32 %v868, 0.0
  %v1125 = vmax.f32 %v869, 0.0
  %v1126 = vmax.f32 %v870, 0.0
  %v1127 = vmax.f32 %v871, 0.0
  %v1128 = vmax.f32 %v872, 0.0
  %v1129 = vmax.f32 %v873, 0.0
  %v1130 = vmax.f32 %v874, 0.0
  %v1131 = vmax.f32 %v875, 0.0
  %v1132 = vmax.f32 %v876, 0.0
  %v1133 = vmax.f32 %v877, 0.0
  %v1134 = vmax.f32 %v878, 0.0
  %v1135 = vmax.f32 %v879, 0.0
  %v1136 = vmax.f32 %v880, 0.0
  %v1137 = vmax.f32 %v881, 0.0
  %v1138 = vmax.f32 %v882, 0.0
  %v1139 = vmax.f32 %v883, 0.0
  %v1140 = vmax.f32 %v884, 0.0
  %v1141 = vmax.f32 %v885, 0.0
  %v1142 = vmax.f32 %v886, 0.0
  %v1143 = vmax.f32 %v887, 0.0
  %v1144 = vmax.f32 %v888, 0.0
  %v1145 = vmax.f32 %v889, 0.0
  %v1146 = vmax.f32 %v890, 0.0
  %v1147 = vmax.f32 %v891, 0.0
  %v1148 = vmax.f32 %v892, 0.0
  %v1149 = vmax.f32 %v893, 0.0
  %v1150 = vmax.f32 %v894, 0.0
  %v1151 = vmax.f32 %v895, 0.0
  %v1152 = vmax.f32 %v896, 0.0
  %v1153 = vmax.f32 %v897, 0.0
  %v1154 = vmax.f32 %v898, 0.0
  %v1155 = vmax.f32 %v899, 0.0
  %v1156 = vmax.f32 %v900, 0.0
  %v1157 = vmax.f32 %v901, 0.0
  %v1158 = vmax.f32 %v902, 0.0
  %v1159 = vmax.f32 %v903, 0.0
  %v1160 = vmax.f32 %v904, 0.0
  %v1161 = vmax.f32 %v905, 0.0
  %v1162 = vmax.f32 %v906, 0.0
  %v1163 = vmax.f32 %v907, 0.0
  %v1164 = vmax.f32 %v908, 0.0
  %v1165 = vmax.f32 %v909, 0.0
  %v1166 = vmax.f32 %v910, 0.0
  %v1167 = vmax.f32 %v911, 0.0
  %v1168 = vmax.f32 %v912, 0.0
  %v1169 = vmax.f32 %v913, 0.0
  %v1170 = vmax.f32 %v914, 0.0
  %v1171 = vmax.f32 %v915, 0.0
  %v1172 = vmax.f32 %v916, 0.0
  %v1173 = vmax.f32 %v917, 0.0
  %v1174 = vmax.f32 %v918, 0.0
  %v1175 = vmax.f32 %v919, 0.0
  %v1176 = vmax.f32 %v920, 0.0
  %v1177 = vmax.f32 %v921, 0.0
  %v1178 = vmax.f32 %v922, 0.0
  %v1179 = vmax.f32 %v923, 0.0
  %v1180 = vmax.f32 %v924, 0.0
  %v1181 = vmax.f32 %v925, 0.0
  %v1182 = vmax.f32 %v926, 0.0
  %v1183 = vmax.f32 %v927, 0.0
  %v1184 = vmax.f32 %v928, 0.0
  %v1185 = vmax.f32 %v929, 0.0
  %v1186 = vmax.f32 %v930, 0.0
  %v1187 = vmax.f32 %v931, 0.0
  %v1188 = vmax.f32 %v932, 0.0
  %v1189 = vmax.f32 %v933, 0.0
  %v1190 = vmax.f32 %v934, 0.0
  %v1191 = vmax.f32 %v935, 0.0
  %v1192 = vmax.f32 %v936, 0.0
  %v1193 = vmax.f32 %v937, 0.0
  %v1194 = vmax.f32 %v938, 0.0
  %v1195 = vmax.f32 %v939, 0.0
  %v1196 = vmax.f32 %v940, 0.0
  %v1197 = vmax.f32 %v941, 0.0
  %v1198 = vmax.f32 %v942, 0.0
  %v1199 = vmax.f32 %v943, 0.0
  %v1200 = vmax.f32 %v944, 0.0
  %v1201 = vmax.f32 %v945, 0.0
  %v1202 = vmax.f32 %v946, 0.0
  %v1203 = vmax.f32 %v947, 0.0
  %v1204 = vmax.f32 %v948, 0.0
  %v1205 = vmax.f32 %v949, 0.0
  %v1206 = vmax.f32 %v950, 0.0
  %v1207 = vmax.f32 %v951, 0.0
  %v1208 = vmax.f32 %v952, 0.0
  %v1209 = vmax.f32 %v953, 0.0
  %v1210 = vmax.f32 %v954, 0.0
  %v1211 = vmax.f32 %v955, 0.0
  %v1212 = vmax.f32 %v956, 0.0
  %v1213 = vmax.f32 %v957, 0.0
  %v1214 = vmax.f32 %v958, 0.0
  %v1215 = vmax.f32 %v959, 0.0
  %v1216 = vmax.f32 %v960, 0.0
  %v1217 = vmax.f32 %v961, 0.0
  %v1218 = vmax.f32 %v962, 0.0
  %v1219 = vmax.f32 %v963, 0.0
  %v1220 = vmax.f32 %v964, 0.0
  %v1221 = vmax.f32 %v965, 0.0
  %v1222 = vmax.f32 %v966, 0.0
  %v1223 = vmax.f32 %v967, 0.0
  %v1224 = vmax.f32 %v968, 0.0
  %v1225 = vmax.f32 %v969, 0.0
  %v1226 = vmax.f32 %v970, 0.0
  %v1227 = vmax.f32 %v971, 0.0
  %v1228 = vmax.f32 %v972, 0.0
  %v1229 = vmax.f32 %v973, 0.0
  %v1230 = vmax.f32 %v974, 0.0
  %v1231 = vmax.f32 %v975, 0.0
  %v1232 = vmax.f32 %v976, 0.0
  %v1233 = vmax.f32 %v977, 0.0
  %v1234 = vmax.f32 %v978, 0.0
  %v1235 = vmax.f32 %v979, 0.0
  %v1236 = vmax.f32 %v980, 0.0
  %v1237 = vmax.f32 %v981, 0.0
  %v1238 = vmax.f32 %v982, 0.0
  %v1239 = vmax.f32 %v983, 0.0
  %v1240 = vmax.f32 %v984, 0.0
  %v1241 = vmax.f32 %v985, 0.0
  %v1242 = vmax.f32 %v986, 0.0
  %v1243 = vmax.f32 %v987, 0.0
  %v1244 = vmax.f32 %v988, 0.0
  %v1245 = vmax.f32 %v989, 0.0
  %v1246 = vmax.f32 %v990, 0.0
  %v1247 = vmax.f32 %v991, 0.0
  %v1248 = vmax.f32 %v992, 0.0
  %v1249 = vmax.f32 %v993, 0.0
  %v1250 = vmax.f32 %v994, 0.0
  %v1251 = vmax.f32 %v995, 0.0
  %v1252 = vmax.f32 %v996, 0.0
  %v1253 = vmax.f32 %v997, 0.0
  %v1254 = vmax.f32 %v998, 0.0
  %v1255 = vmax.f32 %v999, 0.0
  %v1256 = vmax.f32 %v1000, 0.0
  %v1257 = vmax.f32 %v1001, 0.0
  %v1258 = vmax.f32 %v1002, 0.0
  %v1259 = vmax.f32 %v1003, 0.0
  %v1260 = vmax.f32 %v1004, 0.0
  %v1261 = vmax.f32 %v1005, 0.0
  %v1262 = vmax.f32 %v1006, 0.0
  %v1263 = vmax.f32 %v1007, 0.0
  %v1264 = vmax.f32 %v1008, 0.0
  %v1265 = vmax.f32 %v1009, 0.0
  %v1266 = vmax.f32 %v1010, 0.0
  %v1267 = vmax.f32 %v1011, 0.0
  %v1268 = vmax.f32 %v1012, 0.0
  %v1269 = vmax.f32 %v1013, 0.0
  %v1270 = vmax.f32 %v1014, 0.0
  %v1271 = vmax.f32 %v1015, 0.0
  %v1272 = vmax.f32 %v1016, 0.0
  %v1273 = vmax.f32 %v1017, 0.0
  %v1274 = vmax.f32 %v1018, 0.0
  %v1275 = vmax.f32 %v1019, 0.0
  %v1276 = vmax.f32 %v1020, 0.0
  %v1277 = vmax.f32 %v1021, 0.0
  %v1278 = vmax.f32 %v1022, 0.0
  %v1279 = vmax.f32 %v1023, 0.0
  %v1280 = vmax.f32 %v1024, 0.0
  %v1281 = vmax.f32 %v1025, 0.0
  %v1282 = vmax.f32 %v1026, 0.0
  %v1283 = vmax.f32 %v1027, 0.0
  %v1284 = vmax.f32 %v1028, 0.0
  %v1285 = vmax.f32 %v1029, 0.0
  %v1286 = vmax.f32 %v1030, 0.0
  %v1287 = vmax.f32 %v1031, 0.0
  %v1288 = vmax.f32 %v1032, 0.0
  %v1289 = vmax.f32 %v1033, 0.0
  %v1290 = vmax.f32 %v1034, 0.0
  %v1291 = vmax.f32 %v1035, 0.0
  %v1292 = vmax.f32 %v1036, 0.0
  %v1293 = vmax.f32 %v1037, 0.0
  %v1294 = vmax.f32 %v1038, 0.0
  %v1295 = vmax.f32 %v1039, 0.0
  %v1296 = vmax.f32 %v1040, 0.0
  %v1297 = vmax.f32 %v1041, 0.0
  %v1298 = vmax.f32 %v1042, 0.0
  %v1299 = vmax.f32 %v1043, 0.0
  %v1300 = vmax.f32 %v1044, 0.0
  %v1301 = vmax.f32 %v1045, 0.0
  %1302 = vst [vmem:[%s3] sm:$0xff] %v1046
  %1303 = vst [vmem:[%s3 + $0x8] sm:$0xff] %v1047
  %1304 = vst [vmem:[%s3 + $0x10] sm:$0xff] %v1048
  %1305 = vst [vmem:[%s3 + $0x18] sm:$0xff] %v1049
  %1306 = vst [vmem:[%s3 + $0x20] sm:$0xff] %v1050
  %1307 = vst [vmem:[%s3 + $0x28] sm:$0xff] %v1051
  %1308 = vst [vmem:[%s3 + $0x30] sm:$0xff] %v1052
  %1309 = vst [vmem:[%s3 + $0x38] sm:$0xff] %v1053
  %1310 = vst [vmem:[%s3 + $0x40] sm:$0xff] %v1054
  %1311 = vst [vmem:[%s3 + $0x48] sm:$0xff] %v1055
  %1312 = vst [vmem:[%s3 + $0x50] sm:$0xff] %v1056
  %1313 = vst [vmem:[%s3 + $0x58] sm:$0xff] %v1057
  %1314 = vst [vmem:[%s3 + $0x60] sm:$0xff] %v1058
  %1315 = vst [vmem:[%s3 + $0x68] sm:$0xff] %v1059
  %1316 = vst [vmem:[%s3 + $0x70] sm:$0xff] %v1060
  %1317 = vst [vmem:[%s3 + $0x78] sm:$0xff] %v1061
  %1318 = vst [vmem:[%s3 + $0x80] sm:$0xff] %v1062
  %1319 = vst [vmem:[%s3 + $0x88] sm:$0xff] %v1063
  %1320 = vst [vmem:[%s3 + $0x90] sm:$0xff] %v1064
  %1321 = vst [vmem:[%s3 + $0x98] sm:$0xff] %v1065
  %1322 = vst [vmem:[%s3 + $0xa0] sm:$0xff] %v1066
  %1323 = vst [vmem:[%s3 + $0xa8] sm:$0xff] %v1067
  %1324 = vst [vmem:[%s3 + $0xb0] sm:$0xff] %v1068
  %1325 = vst [vmem:[%s3 + $0xb8] sm:$0xff] %v1069
  %1326 = vst [vmem:[%s3 + $0xc0] sm:$0xff] %v1070
  %1327 = vst [vmem:[%s3 + $0xc8] sm:$0xff] %v1071
  %1328 = vst [vmem:[%s3 + $0xd0] sm:$0xff] %v1072
  %1329 = vst [vmem:[%s3 + $0xd8] sm:$0xff] %v1073
  %1330 = vst [vmem:[%s3 + $0xe0] sm:$0xff] %v1074
  %1331 = vst [vmem:[%s3 + $0xe8] sm:$0xff] %v1075
  %1332 = vst [vmem:[%s3 + $0xf0] sm:$0xff] %v1076
  %1333 = vst [vmem:[%s3 + $0xf8] sm:$0xff] %v1077
  %1334 = vst [vmem:[%s3 + $0x100] sm:$0xff] %v1078
  %1335 = vst [vmem:[%s3 + $0x108] sm:$0xff] %v1079
  %1336 = vst [vmem:[%s3 + $0x110] sm:$0xff] %v1080
  %1337 = vst [vmem:[%s3 + $0x118] sm:$0xff] %v1081
  %1338 = vst [vmem:[%s3 + $0x120] sm:$0xff] %v1082
  %1339 = vst [vmem:[%s3 + $0x128] sm:$0xff] %v1083
  %1340 = vst [vmem:[%s3 + $0x130] sm:$0xff] %v1084
  %1341 = vst [vmem:[%s3 + $0x138] sm:$0xff] %v1085
  %1342 = vst [vmem:[%s3 + $0x140] sm:$0xff] %v1086
  %1343 = vst [vmem:[%s3 + $0x148] sm:$0xff] %v1087
  %1344 = vst [vmem:[%s3 + $0x150] sm:$0xff] %v1088
  %1345 = vst [vmem:[%s3 + $0x158] sm:$0xff] %v1089
  %1346 = vst [vmem:[%s3 + $0x160] sm:$0xff] %v1090
  %1347 = vst [vmem:[%s3 + $0x168] sm:$0xff] %v1091
  %1348 = vst [vmem:[%s3 + $0x170] sm:$0xff] %v1092
  %1349 = vst [vmem:[%s3 + $0x178] sm:$0xff] %v1093
  %1350 = vst [vmem:[%s3 + $0x180] sm:$0xff] %v1094
  %1351 = vst [vmem:[%s3 + $0x188] sm:$0xff] %v1095
  %1352 = vst [vmem:[%s3 + $0x190] sm:$0xff] %v1096
  %1353 = vst [vmem:[%s3 + $0x198] sm:$0xff] %v1097
  %1354 = vst [vmem:[%s3 + $0x1a0] sm:$0xff] %v1098
  %1355 = vst [vmem:[%s3 + $0x1a8] sm:$0xff] %v1099
  %1356 = vst [vmem:[%s3 + $0x1b0] sm:$0xff] %v1100
  %1357 = vst [vmem:[%s3 + $0x1b8] sm:$0xff] %v1101
  %1358 = vst [vmem:[%s3 + $0x1c0] sm:$0xff] %v1102
  %1359 = vst [vmem:[%s3 + $0x1c8] sm:$0xff] %v1103
  %1360 = vst [vmem:[%s3 + $0x1d0] sm:$0xff] %v1104
  %1361 = vst [vmem:[%s3 + $0x1d8] sm:$0xff] %v1105
  %1362 = vst [vmem:[%s3 + $0x1e0] sm:$0xff] %v1106
  %1363 = vst [vmem:[%s3 + $0x1e8] sm:$0xff] %v1107
  %1364 = vst [vmem:[%s3 + $0x1f0] sm:$0xff] %v1108
  %1365 = vst [vmem:[%s3 + $0x1f8] sm:$0xff] %v1109
  %1366 = vst [vmem:[%s3 + $0x200] sm:$0xff] %v1110
  %1367 = vst [vmem:[%s3 + $0x208] sm:$0xff] %v1111
  %1368 = vst [vmem:[%s3 + $0x210] sm:$0xff] %v1112
  %1369 = vst [vmem:[%s3 + $0x218] sm:$0xff] %v1113
  %1370 = vst [vmem:[%s3 + $0x220] sm:$0xff] %v1114
  %1371 = vst [vmem:[%s3 + $0x228] sm:$0xff] %v1115
  %1372 = vst [vmem:[%s3 + $0x230] sm:$0xff] %v1116
  %1373 = vst [vmem:[%s3 + $0x238] sm:$0xff] %v1117
  %1374 = vst [vmem:[%s3 + $0x240] sm:$0xff] %v1118
  %1375 = vst [vmem:[%s3 + $0x248] sm:$0xff] %v1119
  %1376 = vst [vmem:[%s3 + $0x250] sm:$0xff] %v1120
  %1377 = vst [vmem:[%s3 + $0x258] sm:$0xff] %v1121
  %1378 = vst [vmem:[%s3 + $0x260] sm:$0xff] %v1122
  %1379 = vst [vmem:[%s3 + $0x268] sm:$0xff] %v1123
  %1380 = vst [vmem:[%s3 + $0x270] sm:$0xff] %v1124
  %1381 = vst [vmem:[%s3 + $0x278] sm:$0xff] %v1125
  %1382 = vst [vmem:[%s3 + $0x280] sm:$0xff] %v1126
  %1383 = vst [vmem:[%s3 + $0x288] sm:$0xff] %v1127
  %1384 = vst [vmem:[%s3 + $0x290] sm:$0xff] %v1128
  %1385 = vst [vmem:[%s3 + $0x298] sm:$0xff] %v1129
  %1386 = vst [vmem:[%s3 + $0x2a0] sm:$0xff] %v1130
  %1387 = vst [vmem:[%s3 + $0x2a8] sm:$0xff] %v1131
  %1388 = vst [vmem:[%s3 + $0x2b0] sm:$0xff] %v1132
  %1389 = vst [vmem:[%s3 + $0x2b8] sm:$0xff] %v1133
  %1390 = vst [vmem:[%s3 + $0x2c0] sm:$0xff] %v1134
  %1391 = vst [vmem:[%s3 + $0x2c8] sm:$0xff] %v1135
  %1392 = vst [vmem:[%s3 + $0x2d0] sm:$0xff] %v1136
  %1393 = vst [vmem:[%s3 + $0x2d8] sm:$0xff] %v1137
  %1394 = vst [vmem:[%s3 + $0x2e0] sm:$0xff] %v1138
  %1395 = vst [vmem:[%s3 + $0x2e8] sm:$0xff] %v1139
  %1396 = vst [vmem:[%s3 + $0x2f0] sm:$0xff] %v1140
  %1397 = vst [vmem:[%s3 + $0x2f8] sm:$0xff] %v1141
  %1398 = vst [vmem:[%s3 + $0x300] sm:$0xff] %v1142
  %1399 = vst [vmem:[%s3 + $0x308] sm:$0xff] %v1143
  %1400 = vst [vmem:[%s3 + $0x310] sm:$0xff] %v1144
  %1401 = vst [vmem:[%s3 + $0x318] sm:$0xff] %v1145
  %1402 = vst [vmem:[%s3 + $0x320] sm:$0xff] %v1146
  %1403 = vst [vmem:[%s3 + $0x328] sm:$0xff] %v1147
  %1404 = vst [vmem:[%s3 + $0x330] sm:$0xff] %v1148
  %1405 = vst [vmem:[%s3 + $0x338] sm:$0xff] %v1149
  %1406 = vst [vmem:[%s3 + $0x340] sm:$0xff] %v1150
  %1407 = vst [vmem:[%s3 + $0x348] sm:$0xff] %v1151
  %1408 = vst [vmem:[%s3 + $0x350] sm:$0xff] %v1152
  %1409 = vst [vmem:[%s3 + $0x358] sm:$0xff] %v1153
  %1410 = vst [vmem:[%s3 + $0x360] sm:$0xff] %v1154
  %1411 = vst [vmem:[%s3 + $0x368] sm:$0xff] %v1155
  %1412 = vst [vmem:[%s3 + $0x370] sm:$0xff] %v1156
  %1413 = vst [vmem:[%s3 + $0x378] sm:$0xff] %v1157
  %1414 = vst [vmem:[%s3 + $0x380] sm:$0xff] %v1158
  %1415 = vst [vmem:[%s3 + $0x388] sm:$0xff] %v1159
  %1416 = vst [vmem:[%s3 + $0x390] sm:$0xff] %v1160
  %1417 = vst [vmem:[%s3 + $0x398] sm:$0xff] %v1161
  %1418 = vst [vmem:[%s3 + $0x3a0] sm:$0xff] %v1162
  %1419 = vst [vmem:[%s3 + $0x3a8] sm:$0xff] %v1163
  %1420 = vst [vmem:[%s3 + $0x3b0] sm:$0xff] %v1164
  %1421 = vst [vmem:[%s3 + $0x3b8] sm:$0xff] %v1165
  %1422 = vst [vmem:[%s3 + $0x3c0] sm:$0xff] %v1166
  %1423 = vst [vmem:[%s3 + $0x3c8] sm:$0xff] %v1167
  %1424 = vst [vmem:[%s3 + $0x3d0] sm:$0xff] %v1168
  %1425 = vst [vmem:[%s3 + $0x3d8] sm:$0xff] %v1169
  %1426 = vst [vmem:[%s3 + $0x3e0] sm:$0xff] %v1170
  %1427 = vst [vmem:[%s3 + $0x3e8] sm:$0xff] %v1171
  %1428 = vst [vmem:[%s3 + $0x3f0] sm:$0xff] %v1172
  %1429 = vst [vmem:[%s3 + $0x3f8] sm:$0xff] %v1173
  %1430 = vst [vmem:[%s3 + $0x400] sm:$0xff] %v1174
  %1431 = vst [vmem:[%s3 + $0x408] sm:$0xff] %v1175
  %1432 = vst [vmem:[%s3 + $0x410] sm:$0xff] %v1176
  %1433 = vst [vmem:[%s3 + $0x418] sm:$0xff] %v1177
  %1434 = vst [vmem:[%s3 + $0x420] sm:$0xff] %v1178
  %1435 = vst [vmem:[%s3 + $0x428] sm:$0xff] %v1179
  %1436 = vst [vmem:[%s3 + $0x430] sm:$0xff] %v1180
  %1437 = vst [vmem:[%s3 + $0x438] sm:$0xff] %v1181
  %1438 = vst [vmem:[%s3 + $0x440] sm:$0xff] %v1182
  %1439 = vst [vmem:[%s3 + $0x448] sm:$0xff] %v1183
  %1440 = vst [vmem:[%s3 + $0x450] sm:$0xff] %v1184
  %1441 = vst [vmem:[%s3 + $0x458] sm:$0xff] %v1185
  %1442 = vst [vmem:[%s3 + $0x460] sm:$0xff] %v1186
  %1443 = vst [vmem:[%s3 + $0x468] sm:$0xff] %v1187
  %1444 = vst [vmem:[%s3 + $0x470] sm:$0xff] %v1188
  %1445 = vst [vmem:[%s3 + $0x478] sm:$0xff] %v1189
  %1446 = vst [vmem:[%s3 + $0x480] sm:$0xff] %v1190
  %1447 = vst [vmem:[%s3 + $0x488] sm:$0xff] %v1191
  %1448 = vst [vmem:[%s3 + $0x490] sm:$0xff] %v1192
  %1449 = vst [vmem:[%s3 + $0x498] sm:$0xff] %v1193
  %1450 = vst [vmem:[%s3 + $0x4a0] sm:$0xff] %v1194
  %1451 = vst [vmem:[%s3 + $0x4a8] sm:$0xff] %v1195
  %1452 = vst [vmem:[%s3 + $0x4b0] sm:$0xff] %v1196
  %1453 = vst [vmem:[%s3 + $0x4b8] sm:$0xff] %v1197
  %1454 = vst [vmem:[%s3 + $0x4c0] sm:$0xff] %v1198
  %1455 = vst [vmem:[%s3 + $0x4c8] sm:$0xff] %v1199
  %1456 = vst [vmem:[%s3 + $0x4d0] sm:$0xff] %v1200
  %1457 = vst [vmem:[%s3 + $0x4d8] sm:$0xff] %v1201
  %1458 = vst [vmem:[%s3 + $0x4e0] sm:$0xff] %v1202
  %1459 = vst [vmem:[%s3 + $0x4e8] sm:$0xff] %v1203
  %1460 = vst [vmem:[%s3 + $0x4f0] sm:$0xff] %v1204
  %1461 = vst [vmem:[%s3 + $0x4f8] sm:$0xff] %v1205
  %1462 = vst [vmem:[%s3 + $0x500] sm:$0xff] %v1206
  %1463 = vst [vmem:[%s3 + $0x508] sm:$0xff] %v1207
  %1464 = vst [vmem:[%s3 + $0x510] sm:$0xff] %v1208
  %1465 = vst [vmem:[%s3 + $0x518] sm:$0xff] %v1209
  %1466 = vst [vmem:[%s3 + $0x520] sm:$0xff] %v1210
  %1467 = vst [vmem:[%s3 + $0x528] sm:$0xff] %v1211
  %1468 = vst [vmem:[%s3 + $0x530] sm:$0xff] %v1212
  %1469 = vst [vmem:[%s3 + $0x538] sm:$0xff] %v1213
  %1470 = vst [vmem:[%s3 + $0x540] sm:$0xff] %v1214
  %1471 = vst [vmem:[%s3 + $0x548] sm:$0xff] %v1215
  %1472 = vst [vmem:[%s3 + $0x550] sm:$0xff] %v1216
  %1473 = vst [vmem:[%s3 + $0x558] sm:$0xff] %v1217
  %1474 = vst [vmem:[%s3 + $0x560] sm:$0xff] %v1218
  %1475 = vst [vmem:[%s3 + $0x568] sm:$0xff] %v1219
  %1476 = vst [vmem:[%s3 + $0x570] sm:$0xff] %v1220
  %1477 = vst [vmem:[%s3 + $0x578] sm:$0xff] %v1221
  %1478 = vst [vmem:[%s3 + $0x580] sm:$0xff] %v1222
  %1479 = vst [vmem:[%s3 + $0x588] sm:$0xff] %v1223
  %1480 = vst [vmem:[%s3 + $0x590] sm:$0xff] %v1224
  %1481 = vst [vmem:[%s3 + $0x598] sm:$0xff] %v1225
  %1482 = vst [vmem:[%s3 + $0x5a0] sm:$0xff] %v1226
  %1483 = vst [vmem:[%s3 + $0x5a8] sm:$0xff] %v1227
  %1484 = vst [vmem:[%s3 + $0x5b0] sm:$0xff] %v1228
  %1485 = vst [vmem:[%s3 + $0x5b8] sm:$0xff] %v1229
  %1486 = vst [vmem:[%s3 + $0x5c0] sm:$0xff] %v1230
  %1487 = vst [vmem:[%s3 + $0x5c8] sm:$0xff] %v1231
  %1488 = vst [vmem:[%s3 + $0x5d0] sm:$0xff] %v1232
  %1489 = vst [vmem:[%s3 + $0x5d8] sm:$0xff] %v1233
  %1490 = vst [vmem:[%s3 + $0x5e0] sm:$0xff] %v1234
  %1491 = vst [vmem:[%s3 + $0x5e8] sm:$0xff] %v1235
  %1492 = vst [vmem:[%s3 + $0x5f0] sm:$0xff] %v1236
  %1493 = vst [vmem:[%s3 + $0x5f8] sm:$0xff] %v1237
  %1494 = vst [vmem:[%s3 + $0x600] sm:$0xff] %v1238
  %1495 = vst [vmem:[%s3 + $0x608] sm:$0xff] %v1239
  %1496 = vst [vmem:[%s3 + $0x610] sm:$0xff] %v1240
  %1497 = vst [vmem:[%s3 + $0x618] sm:$0xff] %v1241
  %1498 = vst [vmem:[%s3 + $0x620] sm:$0xff] %v1242
  %1499 = vst [vmem:[%s3 + $0x628] sm:$0xff] %v1243
  %1500 = vst [vmem:[%s3 + $0x630] sm:$0xff] %v1244
  %1501 = vst [vmem:[%s3 + $0x638] sm:$0xff] %v1245
  %1502 = vst [vmem:[%s3 + $0x640] sm:$0xff] %v1246
  %1503 = vst [vmem:[%s3 + $0x648] sm:$0xff] %v1247
  %1504 = vst [vmem:[%s3 + $0x650] sm:$0xff] %v1248
  %1505 = vst [vmem:[%s3 + $0x658] sm:$0xff] %v1249
  %1506 = vst [vmem:[%s3 + $0x660] sm:$0xff] %v1250
  %1507 = vst [vmem:[%s3 + $0x668] sm:$0xff] %v1251
  %1508 = vst [vmem:[%s3 + $0x670] sm:$0xff] %v1252
  %1509 = vst [vmem:[%s3 + $0x678] sm:$0xff] %v1253
  %1510 = vst [vmem:[%s3 + $0x680] sm:$0xff] %v1254
  %1511 = vst [vmem:[%s3 + $0x688] sm:$0xff] %v1255
  %1512 = vst [vmem:[%s3 + $0x690] sm:$0xff] %v1256
  %1513 = vst [vmem:[%s3 + $0x698] sm:$0xff] %v1257
  %1514 = vst [vmem:[%s3 + $0x6a0] sm:$0xff] %v1258
  %1515 = vst [vmem:[%s3 + $0x6a8] sm:$0xff] %v1259
  %1516 = vst [vmem:[%s3 + $0x6b0] sm:$0xff] %v1260
  %1517 = vst [vmem:[%s3 + $0x6b8] sm:$0xff] %v1261
  %1518 = vst [vmem:[%s3 + $0x6c0] sm:$0xff] %v1262
  %1519 = vst [vmem:[%s3 + $0x6c8] sm:$0xff] %v1263
  %1520 = vst [vmem:[%s3 + $0x6d0] sm:$0xff] %v1264
  %1521 = vst [vmem:[%s3 + $0x6d8] sm:$0xff] %v1265
  %1522 = vst [vmem:[%s3 + $0x6e0] sm:$0xff] %v1266
  %1523 = vst [vmem:[%s3 + $0x6e8] sm:$0xff] %v1267
  %1524 = vst [vmem:[%s3 + $0x6f0] sm:$0xff] %v1268
  %1525 = vst [vmem:[%s3 + $0x6f8] sm:$0xff] %v1269
  %1526 = vst [vmem:[%s3 + $0x700] sm:$0xff] %v1270
  %1527 = vst [vmem:[%s3 + $0x708] sm:$0xff] %v1271
  %1528 = vst [vmem:[%s3 + $0x710] sm:$0xff] %v1272
  %1529 = vst [vmem:[%s3 + $0x718] sm:$0xff] %v1273
  %1530 = vst [vmem:[%s3 + $0x720] sm:$0xff] %v1274
  %1531 = vst [vmem:[%s3 + $0x728] sm:$0xff] %v1275
  %1532 = vst [vmem:[%s3 + $0x730] sm:$0xff] %v1276
  %1533 = vst [vmem:[%s3 + $0x738] sm:$0xff] %v1277
  %1534 = vst [vmem:[%s3 + $0x740] sm:$0xff] %v1278
  %1535 = vst [vmem:[%s3 + $0x748] sm:$0xff] %v1279
  %1536 = vst [vmem:[%s3 + $0x750] sm:$0xff] %v1280
  %1537 = vst [vmem:[%s3 + $0x758] sm:$0xff] %v1281
  %1538 = vst [vmem:[%s3 + $0x760] sm:$0xff] %v1282
  %1539 = vst [vmem:[%s3 + $0x768] sm:$0xff] %v1283
  %1540 = vst [vmem:[%s3 + $0x770] sm:$0xff] %v1284
  %1541 = vst [vmem:[%s3 + $0x778] sm:$0xff] %v1285
  %1542 = vst [vmem:[%s3 + $0x780] sm:$0xff] %v1286
  %1543 = vst [vmem:[%s3 + $0x788] sm:$0xff] %v1287
  %1544 = vst [vmem:[%s3 + $0x790] sm:$0xff] %v1288
  %1545 = vst [vmem:[%s3 + $0x798] sm:$0xff] %v1289
  %1546 = vst [vmem:[%s3 + $0x7a0] sm:$0xff] %v1290
  %1547 = vst [vmem:[%s3 + $0x7a8] sm:$0xff] %v1291
  %1548 = vst [vmem:[%s3 + $0x7b0] sm:$0xff] %v1292
  %1549 = vst [vmem:[%s3 + $0x7b8] sm:$0xff] %v1293
  %1550 = vst [vmem:[%s3 + $0x7c0] sm:$0xff] %v1294
  %1551 = vst [vmem:[%s3 + $0x7c8] sm:$0xff] %v1295
  %1552 = vst [vmem:[%s3 + $0x7d0] sm:$0xff] %v1296
  %1553 = vst [vmem:[%s3 + $0x7d8] sm:$0xff] %v1297
  %1554 = vst [vmem:[%s3 + $0x7e0] sm:$0xff] %v1298
  %1555 = vst [vmem:[%s3 + $0x7e8] sm:$0xff] %v1299
  %1556 = vst [vmem:[%s3 + $0x7f0] sm:$0xff] %v1300
  %1557 = vst [vmem:[%s3 + $0x7f8] sm:$0xff] %v1301
  // Predicated region
  $region14: #{upblock2d_forward.3} parent=0 // pred_check
    _
  $region15: #{upblock2d_forward.3} parent=0 // pred_check_branch
    %1559 = sbr.rel (0) target = $region17
  $region16: #{upblock2d_forward.3} parent=0 // pred_region
    _
  $region17: #{upblock2d_forward.3} parent=0 // pred_fallthru
    _
  // Predicated region
  $region18: #{upblock2d_forward.3} parent=0 // pred_check
    _
  $region19: #{upblock2d_forward.3} parent=0 // pred_check_branch
    %1561 = sbr.rel (0) target = $region21
  $region20: #{upblock2d_forward.3} parent=0 // pred_region
    _
  $region21: #{upblock2d_forward.3} parent=0 // pred_fallthru
    _

// kernel: upblock2d_forward.2
$region0: #{upblock2d_forward.2}
  #allocation0 [shape = 'u32[]', space=smem, size = 0x4, offset = 0x4, fixed_abs, tag = 'smem constant byte address 0x4 - core index']
  #allocation1 [shape = 'u32[72,128]{1,0:T(1,128)}', space=vmem, size = 0x9000, scoped, tag = 'internal scratch']
  %s0 = inlined_call_operand.vmem [shape: bf16[2,18,18,4], index: 0, kind: input, shape index: {}]
  %s1 = inlined_call_operand.vmem [shape: bf16[16,4,128], index: 1, kind: input, shape index: {}]
  %s2 = inlined_call_operand.vmem [shape: bf16[32,2,16,256], index: 2, kind: output, shape index: {0}]
  %s3 = inlined_call_operand.vmem [shape: f32[2,1,1,128], index: 3, kind: output, shape index: {1}]
  %s4 = inlined_call_operand.vmem [shape: f32[2,1,1,128], index: 4, kind: output, shape index: {2}]
  %5 = xla_tuple %s2, %s3, %s4
  %s6 = sld [smem:[#allocation0]]
  $region57: #{upblock2d_forward.2} parent=0
    _
  %s8 = ssub.s32 1, %s6
  %s9 = scalar_select 0, %s8, %s6
  loop: start=0, step=1, limit=4
  $region2: #{upblock2d_forward.2} parent=0 // loop_pre_header
    _
  $region3: #{upblock2d_forward.2} parent=0 // loop_header
    %s11 = sphi 0, %s15
    %p12 = scmp.ge.s32.totalorder %s11, 4
    %s18 = sphi 0, %s30
    %s19 = sphi 0, %s26
    %s20 = sphi 0, %s18
    %s21 = sphi 0, %s19
    %s22 = sphi 0, %s20
    %s23 = sphi 0, %s21
    %s33 = sphi 0, %s35
    %s36 = sphi 0, %s33
    %s37 = sphi 0, %s36
    %s53 = sphi 0, %s37
    %s57 = sphi 0, %s57
    %s59 = sphi 0, %s57
    %s60 = sphi 0, %s59
    %s74 = sphi 0, %s60
    %s82 = sphi 0, %s84
    %s85 = sphi 0, %s82
    %s86 = sphi 0, %s85
    %s102 = sphi 0, %s86
    %s110 = sphi 0, %s112
    %s113 = sphi 0, %s110
    %s114 = sphi 0, %s113
    %s130 = sphi 0, %s114
    %s138 = sphi 0, %s140
    %s141 = sphi 0, %s138
    %s142 = sphi 0, %s141
    %s158 = sphi 0, %s142
  $region4: #{upblock2d_forward.2} parent=0 // loop_header_branch
    %14 = sbr.rel (%p12) target = $region8
  $region5: #{upblock2d_forward.2} parent=0 // loop_body
    %s16 = ssub.s32 %s11, 1
    %s17 = ssub.s32 %s11, 2
    %s24 = sadd.s32 1, %s19
    %p25 = scmp.ge.s32.totalorder %s24, 1
    %s26 = scalar_select %p25, 0, %s24
    %s27 = sadd.s32 1, %s18
    %s28 = scalar_select %p25, %s27, %s18
    %p29 = scmp.ge.s32.totalorder %s28, 2
    %s30 = scalar_select %p29, 0, %s28
    %s31 = ssub.s32 %s18, %s30
    %p32 = scmp.eq.s32.totalorder %s31, 0
    %s34 = sadd.s32 %s33, 1
    %s35 = scalar_select %p32, %s33, %s34
    %p38 = pneg %p32
    %p39 = scmp.eq.s32.totalorder %s11, 1
    %p40 = por %p38, %p39
    %p41 = scmp.ne.s32.totalorder %s33, %s36
    %p42 = scmp.eq.s32.totalorder %s11, 0
    %p43 = por %p41, %p42
    %p44 = scmp.ne.s32.totalorder %s33, %s36
    %p45 = scmp.eq.s32.totalorder %s16, 1
    %p46 = por %p44, %p45
    %p47 = scmp.ne.s32.totalorder %s36, %s37
    %p48 = scmp.eq.s32.totalorder %s16, 0
    %p49 = por %p47, %p48
    %p50 = scmp.ne.s32.totalorder %s36, %s37
    %p51 = scmp.eq.s32.totalorder %s17, 1
    %p52 = por %p50, %p51
    %p54 = scmp.ne.s32.totalorder %s37, %s53
    %p55 = scmp.eq.s32.totalorder %s17, 0
    %p56 = por %p54, %p55
    %s58 = sadd.s32 %s57, 1
    %p61 = scmp.eq.s32.totalorder %s11, 1
    %p62 = scmp.ne.s32.totalorder %s57, %s59
    %p63 = scmp.eq.s32.totalorder %s11, 0
    %p64 = por %p62, %p63
    %p65 = scmp.ne.s32.totalorder %s57, %s59
    %p66 = scmp.eq.s32.totalorder %s16, 1
    %p67 = por %p65, %p66
    %p68 = scmp.ne.s32.totalorder %s59, %s60
    %p69 = scmp.eq.s32.totalorder %s16, 0
    %p70 = por %p68, %p69
    %p71 = scmp.ne.s32.totalorder %s59, %s60
    %p72 = scmp.eq.s32.totalorder %s17, 1
    %p73 = por %p71, %p72
    %p75 = scmp.ne.s32.totalorder %s60, %s74
    %p76 = scmp.eq.s32.totalorder %s17, 0
    %p77 = por %p75, %p76
    %s78 = sadd.s32 %s18, %s19
    %s79 = sadd.s32 %s30, %s26
    %s80 = ssub.s32 %s78, %s79
    %p81 = scmp.eq.s32.totalorder %s80, 0
    %s83 = sadd.s32 %s82, 1
    %s84 = scalar_select %p81, %s82, %s83
    %p87 = pneg %p81
    %p88 = scmp.eq.s32.totalorder %s11, 1
    %p89 = por %p87, %p88
    %p90 = scmp.ne.s32.totalorder %s82, %s85
    %p91 = scmp.eq.s32.totalorder %s11, 0
    %p92 = por %p90, %p91
    %p93 = scmp.ne.s32.totalorder %s82, %s85
    %p94 = scmp.eq.s32.totalorder %s16, 1
    %p95 = por %p93, %p94
    %p96 = scmp.ne.s32.totalorder %s85, %s86
    %p97 = scmp.eq.s32.totalorder %s16, 0
    %p98 = por %p96, %p97
    %p99 = scmp.ne.s32.totalorder %s85, %s86
    %p100 = scmp.eq.s32.totalorder %s17, 1
    %p101 = por %p99, %p100
    %p103 = scmp.ne.s32.totalorder %s86, %s102
    %p104 = scmp.eq.s32.totalorder %s17, 0
    %p105 = por %p103, %p104
    %s106 = ssub.s32 %s18, %s30
    %s107 = ssub.s32 %s19, %s26
    %s108 = sor.u32 %s106, %s107
    %p109 = scmp.eq.s32.totalorder %s108, 0
    %s111 = sadd.s32 %s110, 1
    %s112 = scalar_select %p109, %s110, %s111
    %p115 = pneg %p109
    %p116 = scmp.eq.s32.totalorder %s11, 1
    %p117 = por %p115, %p116
    %p118 = scmp.ne.s32.totalorder %s110, %s113
    %p119 = scmp.eq.s32.totalorder %s11, 0
    %p120 = por %p118, %p119
    %p121 = scmp.ne.s32.totalorder %s110, %s113
    %p122 = scmp.eq.s32.totalorder %s16, 1
    %p123 = por %p121, %p122
    %p124 = scmp.ne.s32.totalorder %s113, %s114
    %p125 = scmp.eq.s32.totalorder %s16, 0
    %p126 = por %p124, %p125
    %p127 = scmp.ne.s32.totalorder %s113, %s114
    %p128 = scmp.eq.s32.totalorder %s17, 1
    %p129 = por %p127, %p128
    %p131 = scmp.ne.s32.totalorder %s114, %s130
    %p132 = scmp.eq.s32.totalorder %s17, 0
    %p133 = por %p131, %p132
    %s134 = ssub.s32 %s18, %s30
    %s135 = ssub.s32 %s19, %s26
    %s136 = sor.u32 %s134, %s135
    %p137 = scmp.eq.s32.totalorder %s136, 0
    %s139 = sadd.s32 %s138, 1
    %s140 = scalar_select %p137, %s138, %s139
    %p143 = pneg %p137
    %p144 = scmp.eq.s32.totalorder %s11, 1
    %p145 = por %p143, %p144
    %p146 = scmp.ne.s32.totalorder %s138, %s141
    %p147 = scmp.eq.s32.totalorder %s11, 0
    %p148 = por %p146, %p147
    %p149 = scmp.ne.s32.totalorder %s138, %s141
    %p150 = scmp.eq.s32.totalorder %s16, 1
    %p151 = por %p149, %p150
    %p152 = scmp.ne.s32.totalorder %s141, %s142
    %p153 = scmp.eq.s32.totalorder %s16, 0
    %p154 = por %p152, %p153
    %p155 = scmp.ne.s32.totalorder %s141, %s142
    %p156 = scmp.eq.s32.totalorder %s17, 1
    %p157 = por %p155, %p156
    %p159 = scmp.ne.s32.totalorder %s142, %s158
    %p160 = scmp.eq.s32.totalorder %s17, 0
    %p161 = por %p159, %p160
    %p162 = scmp.le.s32.totalorder 1, %s11
    %p163 = scmp.lt.s32.totalorder %s11, 3
    %p164 = pnand %p162, %p163
    %p165 = pneg %p164
    // Predicated region
    $region9: #{upblock2d_forward.2} parent=5 // pred_check
      _
    $region10: #{upblock2d_forward.2} parent=5 // pred_check_branch
      %167 = sbr.rel (%p164) target = $region12
    $region11: #{upblock2d_forward.2} parent=5 // pred_region
      %s168 = ssub.s32 %s11, 1
      // Predicated region
      $region13: #{upblock2d_forward.2} parent=11 // pred_check
        %p169 = pneg %p70
      $region14: #{upblock2d_forward.2} parent=11 // pred_check_branch
        %171 = sbr.rel (%p169) target = $region16
      $region15: #{upblock2d_forward.2} parent=11 // pred_region
        _
      $region16: #{upblock2d_forward.2} parent=11 // pred_fallthru
        _
    $region12: #{upblock2d_forward.2} parent=5 // pred_fallthru
      _
    %p172 = scmp.lt.s32.totalorder %s11, 2
    // Predicated region
    $region17: #{upblock2d_forward.2} parent=5 // pred_check
      %p173 = pneg %p172
    $region18: #{upblock2d_forward.2} parent=5 // pred_check_branch
      %175 = sbr.rel (%p173) target = $region20
    $region19: #{upblock2d_forward.2} parent=5 // pred_region
      // Predicated region
      $region21: #{upblock2d_forward.2} parent=19 // pred_check
        %p176 = pneg %p43
      $region22: #{upblock2d_forward.2} parent=19 // pred_check_branch
        %178 = sbr.rel (%p176) target = $region24
      $region23: #{upblock2d_forward.2} parent=19 // pred_region
        %p179 = scmp.lt.s32.totalorder %s18, 1
        %s180 = scalar_select %p179, %s18, 1
        %s181 = smul.addr %s180, 54
        %s182 = smul.addr %s181, 4
        %s183 = scalar_lea.vmem %s0, %s182
      $region24: #{upblock2d_forward.2} parent=19 // pred_fallthru
        _
    $region20: #{upblock2d_forward.2} parent=5 // pred_fallthru
      _
    %p184 = scmp.le.s32.totalorder 1, %s11
    %p185 = scmp.lt.s32.totalorder %s11, 3
    %p186 = pnand %p184, %p185
    %p187 = pneg %p186
    // Predicated region
    $region25: #{upblock2d_forward.2} parent=5 // pred_check
      _
    $region26: #{upblock2d_forward.2} parent=5 // pred_check_branch
      %189 = sbr.rel (%p186) target = $region28
    $region27: #{upblock2d_forward.2} parent=5 // pred_region
      %s190 = ssub.s32 %s11, 1
      %p191 = scmp.lt.s32.totalorder %s20, 1
      %s192 = scalar_select %p191, %s20, 1
      %s193 = smul.addr %s192, 54
      %s194 = smul.addr %s193, 4
      %s195 = scalar_lea.vmem %s0, %s194
      %p196 = pneg %p49
      %p197 = pneg %p46
      %p198 = pneg %p70
      %p199 = pneg %p67
      %p200 = pneg %p98
      %p201 = pneg %p95
      %s202 = sadd.s32 %s20, %s21
      %s203 = smul.u32 16, %s202
      %p204 = scmp.lt.s32.totalorder %s203, 31
      %s205 = scalar_select %p204, %s203, 31
      %s206 = smul.addr %s205, 8
      %s207 = smul.addr %s206, 4
      %s208 = scalar_lea.vmem %s2, %s207
      %p209 = pneg %p126
      %p210 = pneg %p123
      %p211 = scmp.lt.s32.totalorder %s20, 1
      %s212 = scalar_select %p211, %s20, 1
      %p213 = scmp.lt.s32.totalorder %s21, 0
      %s214 = scalar_select %p213, %s21, 0
      %s215 = sadd.s32 %s214, %s212
      %s216 = scalar_lea.vmem %s3, %s215
      %p217 = pneg %p154
      %p218 = pneg %p151
      %p219 = scmp.lt.s32.totalorder %s20, 1
      %s220 = scalar_select %p219, %s20, 1
      %p221 = scmp.lt.s32.totalorder %s21, 0
      %s222 = scalar_select %p221, %s21, 0
      %s223 = sadd.s32 %s222, %s220
      %s224 = scalar_lea.vmem %s4, %s223
      %p225 = scmp.lt.s32.totalorder %s20, 1
      %s226 = scalar_select %p225, %s20, 1
      %s227 = smul.addr %s226, 54
      %s228 = smul.addr %s227, 4
      %s229 = scalar_lea.vmem %s0, %s228
      %s230 = sadd.s32 %s20, %s21
      %s231 = smul.u32 16, %s230
      %p232 = scmp.lt.s32.totalorder %s231, 31
      %s233 = scalar_select %p232, %s231, 31
      %s234 = smul.addr %s233, 8
      %s235 = smul.addr %s234, 4
      %s236 = scalar_lea.vmem %s2, %s235
      %s237 = sadd.s32 %s20, %s21
      %s238 = smul.u32 16, %s237
      %p239 = scmp.lt.s32.totalorder %s20, 1
      %s240 = scalar_select %p239, %s20, 1
      %p241 = scmp.lt.s32.totalorder %s21, 0
      %s242 = scalar_select %p241, %s21, 0
      %s243 = sadd.s32 %s242, %s240
      %s244 = scalar_lea.vmem %s3, %s243
      %p245 = scmp.lt.s32.totalorder %s20, 1
      %s246 = scalar_select %p245, %s20, 1
      %p247 = scmp.lt.s32.totalorder %s21, 0
      %s248 = scalar_select %p247, %s21, 0
      %s249 = sadd.s32 %s248, %s246
      %s250 = scalar_lea.vmem %s4, %s249
      %s252 = smul.u32 %s21, 16
      %s253 = smul.u32 %s252, 3
      %s254 = smul.addr %s253, 4
      %s255 = scalar_lea.vmem %s229, %s254
      %v256 = vld [vmem:[%s255] sm:$0xf]
      %v257 = vld [vmem:[%s255 + $0x4] sm:$0xf]
      %v258 = vld [vmem:[%s255 + $0xc] sm:$0xf]
      %v259 = vld [vmem:[%s255 + $0x10] sm:$0xf]
      %v260 = vld [vmem:[%s255 + $0x18] sm:$0xf]
      %v261 = vld [vmem:[%s255 + $0x1c] sm:$0xf]
      %v262 = vld [vmem:[%s255 + $0x24] sm:$0xf]
      %v263 = vld [vmem:[%s255 + $0x28] sm:$0xf]
      %v264 = vld [vmem:[%s255 + $0x30] sm:$0xf]
      %v265 = vld [vmem:[%s255 + $0x34] sm:$0xf]
      %v266 = vld [vmem:[%s255 + $0x3c] sm:$0xf]
      %v267 = vld [vmem:[%s255 + $0x40] sm:$0xf]
      %v268 = vld [vmem:[%s255 + $0x48] sm:$0xf]
      %v269 = vld [vmem:[%s255 + $0x4c] sm:$0xf]
      %v270 = vld [vmem:[%s255 + $0x54] sm:$0xf]
      %v271 = vld [vmem:[%s255 + $0x58] sm:$0xf]
      %v272 = vld [vmem:[%s255 + $0x60] sm:$0xf]
      %v273 = vld [vmem:[%s255 + $0x64] sm:$0xf]
      %v274 = vld [vmem:[%s255 + $0x6c] sm:$0xf]
      %v275 = vld [vmem:[%s255 + $0x70] sm:$0xf]
      %v276 = vld [vmem:[%s255 + $0x78] sm:$0xf]
      %v277 = vld [vmem:[%s255 + $0x7c] sm:$0xf]
      %v278 = vld [vmem:[%s255 + $0x84] sm:$0xf]
      %v279 = vld [vmem:[%s255 + $0x88] sm:$0xf]
      %v280 = vld [vmem:[%s255 + $0x90] sm:$0xf]
      %v281 = vld [vmem:[%s255 + $0x94] sm:$0xf]
      %v282 = vld [vmem:[%s255 + $0x9c] sm:$0xf]
      %v283 = vld [vmem:[%s255 + $0xa0] sm:$0xf]
      %v284 = vld [vmem:[%s255 + $0xa8] sm:$0xf]
      %v285 = vld [vmem:[%s255 + $0xac] sm:$0xf]
      %v286 = vld [vmem:[%s255 + $0xb4] sm:$0xf]
      %v287 = vld [vmem:[%s255 + $0xb8] sm:$0xf]
      %v288 = vld [vmem:[%s255 + $0x8] sm:$0x1]
      %v289 = vld [vmem:[%s255 + $0x14] sm:$0x1]
      %v290 = vld [vmem:[%s255 + $0x20] sm:$0x1]
      %v291 = vld [vmem:[%s255 + $0x2c] sm:$0x1]
      %v292 = vld [vmem:[%s255 + $0x38] sm:$0x1]
      %v293 = vld [vmem:[%s255 + $0x44] sm:$0x1]
      %v294 = vld [vmem:[%s255 + $0x50] sm:$0x1]
      %v295 = vld [vmem:[%s255 + $0x5c] sm:$0x1]
      %v296 = vld [vmem:[%s255 + $0x68] sm:$0x1]
      %v297 = vld [vmem:[%s255 + $0x74] sm:$0x1]
      %v298 = vld [vmem:[%s255 + $0x80] sm:$0x1]
      %v299 = vld [vmem:[%s255 + $0x8c] sm:$0x1]
      %v300 = vld [vmem:[%s255 + $0x98] sm:$0x1]
      %v301 = vld [vmem:[%s255 + $0xa4] sm:$0x1]
      %v302 = vld [vmem:[%s255 + $0xb0] sm:$0x1]
      %v303 = vld [vmem:[%s255 + $0xbc] sm:$0x1]
      %vm304 = vsmask.f32 3328
      %vm305 = vsmask.f32 7440
      %vm306 = vmor %vm304, %vm305
      %v308 = vshrl.u32 %v256, 16
      %v310 = vrot.slane %v308, 4
      %v311 = vshll.u32 %v256, 16
      %v313 = vrot.slane %v311, 5
      %v314 = vor.u32 %v310, %v313
      %v315 = vrot.slane %v314, 4
      %v317 = vshll.u32 %v257, 16
      %v319 = vrot.slane %v317, 5
      %v320 = vsel %vm306, %v315, %v319
      %v321 = vshrl.u32 %v257, 16
      %v323 = vrot.slane %v321, 4
      %v324 = vor.u32 %v323, %v319
      %v325 = vrot.slane %v324, 4
      %v327 = vshll.u32 %v288, 16
      %v329 = vrot.slane %v327, 5
      %v330 = vsel %vm306, %v325, %v329
      %v332 = vshrl.u32 %v258, 16
      %v334 = vrot.slane %v332, 4
      %v335 = vshll.u32 %v258, 16
      %v337 = vrot.slane %v335, 5
      %v338 = vor.u32 %v334, %v337
      %v339 = vrot.slane %v338, 4
      %v341 = vshll.u32 %v259, 16
      %v343 = vrot.slane %v341, 5
      %v344 = vsel %vm306, %v339, %v343
      %v345 = vshrl.u32 %v259, 16
      %v347 = vrot.slane %v345, 4
      %v348 = vor.u32 %v347, %v343
      %v349 = vrot.slane %v348, 4
      %v351 = vshll.u32 %v289, 16
      %v353 = vrot.slane %v351, 5
      %v354 = vsel %vm306, %v349, %v353
      %v356 = vshrl.u32 %v260, 16
      %v358 = vrot.slane %v356, 4
      %v359 = vshll.u32 %v260, 16
      %v361 = vrot.slane %v359, 5
      %v362 = vor.u32 %v358, %v361
      %v363 = vrot.slane %v362, 4
      %v365 = vshll.u32 %v261, 16
      %v367 = vrot.slane %v365, 5
      %v368 = vsel %vm306, %v363, %v367
      %v369 = vshrl.u32 %v261, 16
      %v371 = vrot.slane %v369, 4
      %v372 = vor.u32 %v371, %v367
      %v373 = vrot.slane %v372, 4
      %v375 = vshll.u32 %v290, 16
      %v377 = vrot.slane %v375, 5
      %v378 = vsel %vm306, %v373, %v377
      %v380 = vshrl.u32 %v262, 16
      %v382 = vrot.slane %v380, 4
      %v383 = vshll.u32 %v262, 16
      %v385 = vrot.slane %v383, 5
      %v386 = vor.u32 %v382, %v385
      %v387 = vrot.slane %v386, 4
      %v389 = vshll.u32 %v263, 16
      %v391 = vrot.slane %v389, 5
      %v392 = vsel %vm306, %v387, %v391
      %v393 = vshrl.u32 %v263, 16
      %v395 = vrot.slane %v393, 4
      %v396 = vor.u32 %v395, %v391
      %v397 = vrot.slane %v396, 4
      %v399 = vshll.u32 %v291, 16
      %v401 = vrot.slane %v399, 5
      %v402 = vsel %vm306, %v397, %v401
      %v404 = vshrl.u32 %v264, 16
      %v406 = vrot.slane %v404, 4
      %v407 = vshll.u32 %v264, 16
      %v409 = vrot.slane %v407, 5
      %v410 = vor.u32 %v406, %v409
      %v411 = vrot.slane %v410, 4
      %v413 = vshll.u32 %v265, 16
      %v415 = vrot.slane %v413, 5
      %v416 = vsel %vm306, %v411, %v415
      %v417 = vshrl.u32 %v265, 16
      %v419 = vrot.slane %v417, 4
      %v420 = vor.u32 %v419, %v415
      %v421 = vrot.slane %v420, 4
      %v423 = vshll.u32 %v292, 16
      %v425 = vrot.slane %v423, 5
      %v426 = vsel %vm306, %v421, %v425
      %v428 = vshrl.u32 %v266, 16
      %v430 = vrot.slane %v428, 4
      %v431 = vshll.u32 %v266, 16
      %v433 = vrot.slane %v431, 5
      %v434 = vor.u32 %v430, %v433
      %v435 = vrot.slane %v434, 4
      %v437 = vshll.u32 %v267, 16
      %v439 = vrot.slane %v437, 5
      %v440 = vsel %vm306, %v435, %v439
      %v441 = vshrl.u32 %v267, 16
      %v443 = vrot.slane %v441, 4
      %v444 = vor.u32 %v443, %v439
      %v445 = vrot.slane %v444, 4
      %v447 = vshll.u32 %v293, 16
      %v449 = vrot.slane %v447, 5
      %v450 = vsel %vm306, %v445, %v449
      %v452 = vshrl.u32 %v268, 16
      %v454 = vrot.slane %v452, 4
      %v455 = vshll.u32 %v268, 16
      %v457 = vrot.slane %v455, 5
      %v458 = vor.u32 %v454, %v457
      %v459 = vrot.slane %v458, 4
      %v461 = vshll.u32 %v269, 16
      %v463 = vrot.slane %v461, 5
      %v464 = vsel %vm306, %v459, %v463
      %v465 = vshrl.u32 %v269, 16
      %v467 = vrot.slane %v465, 4
      %v468 = vor.u32 %v467, %v463
      %v469 = vrot.slane %v468, 4
      %v471 = vshll.u32 %v294, 16
      %v473 = vrot.slane %v471, 5
      %v474 = vsel %vm306, %v469, %v473
      %v476 = vshrl.u32 %v270, 16
      %v478 = vrot.slane %v476, 4
      %v479 = vshll.u32 %v270, 16
      %v481 = vrot.slane %v479, 5
      %v482 = vor.u32 %v478, %v481
      %v483 = vrot.slane %v482, 4
      %v485 = vshll.u32 %v271, 16
      %v487 = vrot.slane %v485, 5
      %v488 = vsel %vm306, %v483, %v487
      %v489 = vshrl.u32 %v271, 16
      %v491 = vrot.slane %v489, 4
      %v492 = vor.u32 %v491, %v487
      %v493 = vrot.slane %v492, 4
      %v495 = vshll.u32 %v295, 16
      %v497 = vrot.slane %v495, 5
      %v498 = vsel %vm306, %v493, %v497
      %v500 = vshrl.u32 %v272, 16
      %v502 = vrot.slane %v500, 4
      %v503 = vshll.u32 %v272, 16
      %v505 = vrot.slane %v503, 5
      %v506 = vor.u32 %v502, %v505
      %v507 = vrot.slane %v506, 4
      %v509 = vshll.u32 %v273, 16
      %v511 = vrot.slane %v509, 5
      %v512 = vsel %vm306, %v507, %v511
      %v513 = vshrl.u32 %v273, 16
      %v515 = vrot.slane %v513, 4
      %v516 = vor.u32 %v515, %v511
      %v517 = vrot.slane %v516, 4
      %v519 = vshll.u32 %v296, 16
      %v521 = vrot.slane %v519, 5
      %v522 = vsel %vm306, %v517, %v521
      %v524 = vshrl.u32 %v274, 16
      %v526 = vrot.slane %v524, 4
      %v527 = vshll.u32 %v274, 16
      %v529 = vrot.slane %v527, 5
      %v530 = vor.u32 %v526, %v529
      %v531 = vrot.slane %v530, 4
      %v533 = vshll.u32 %v275, 16
      %v535 = vrot.slane %v533, 5
      %v536 = vsel %vm306, %v531, %v535
      %v537 = vshrl.u32 %v275, 16
      %v539 = vrot.slane %v537, 4
      %v540 = vor.u32 %v539, %v535
      %v541 = vrot.slane %v540, 4
      %v543 = vshll.u32 %v297, 16
      %v545 = vrot.slane %v543, 5
      %v546 = vsel %vm306, %v541, %v545
      %v548 = vshrl.u32 %v276, 16
      %v550 = vrot.slane %v548, 4
      %v551 = vshll.u32 %v276, 16
      %v553 = vrot.slane %v551, 5
      %v554 = vor.u32 %v550, %v553
      %v555 = vrot.slane %v554, 4
      %v557 = vshll.u32 %v277, 16
      %v559 = vrot.slane %v557, 5
      %v560 = vsel %vm306, %v555, %v559
      %v561 = vshrl.u32 %v277, 16
      %v563 = vrot.slane %v561, 4
      %v564 = vor.u32 %v563, %v559
      %v565 = vrot.slane %v564, 4
      %v567 = vshll.u32 %v298, 16
      %v569 = vrot.slane %v567, 5
      %v570 = vsel %vm306, %v565, %v569
      %v572 = vshrl.u32 %v278, 16
      %v574 = vrot.slane %v572, 4
      %v575 = vshll.u32 %v278, 16
      %v577 = vrot.slane %v575, 5
      %v578 = vor.u32 %v574, %v577
      %v579 = vrot.slane %v578, 4
      %v581 = vshll.u32 %v279, 16
      %v583 = vrot.slane %v581, 5
      %v584 = vsel %vm306, %v579, %v583
      %v585 = vshrl.u32 %v279, 16
      %v587 = vrot.slane %v585, 4
      %v588 = vor.u32 %v587, %v583
      %v589 = vrot.slane %v588, 4
      %v591 = vshll.u32 %v299, 16
      %v593 = vrot.slane %v591, 5
      %v594 = vsel %vm306, %v589, %v593
      %v596 = vshrl.u32 %v280, 16
      %v598 = vrot.slane %v596, 4
      %v599 = vshll.u32 %v280, 16
      %v601 = vrot.slane %v599, 5
      %v602 = vor.u32 %v598, %v601
      %v603 = vrot.slane %v602, 4
      %v605 = vshll.u32 %v281, 16
      %v607 = vrot.slane %v605, 5
      %v608 = vsel %vm306, %v603, %v607
      %v609 = vshrl.u32 %v281, 16
      %v611 = vrot.slane %v609, 4
      %v612 = vor.u32 %v611, %v607
      %v613 = vrot.slane %v612, 4
      %v615 = vshll.u32 %v300, 16
      %v617 = vrot.slane %v615, 5
      %v618 = vsel %vm306, %v613, %v617
      %v620 = vshrl.u32 %v282, 16
      %v622 = vrot.slane %v620, 4
      %v623 = vshll.u32 %v282, 16
      %v625 = vrot.slane %v623, 5
      %v626 = vor.u32 %v622, %v625
      %v627 = vrot.slane %v626, 4
      %v629 = vshll.u32 %v283, 16
      %v631 = vrot.slane %v629, 5
      %v632 = vsel %vm306, %v627, %v631
      %v633 = vshrl.u32 %v283, 16
      %v635 = vrot.slane %v633, 4
      %v636 = vor.u32 %v635, %v631
      %v637 = vrot.slane %v636, 4
      %v639 = vshll.u32 %v301, 16
      %v641 = vrot.slane %v639, 5
      %v642 = vsel %vm306, %v637, %v641
      %v644 = vshrl.u32 %v284, 16
      %v646 = vrot.slane %v644, 4
      %v647 = vshll.u32 %v284, 16
      %v649 = vrot.slane %v647, 5
      %v650 = vor.u32 %v646, %v649
      %v651 = vrot.slane %v650, 4
      %v653 = vshll.u32 %v285, 16
      %v655 = vrot.slane %v653, 5
      %v656 = vsel %vm306, %v651, %v655
      %v657 = vshrl.u32 %v285, 16
      %v659 = vrot.slane %v657, 4
      %v660 = vor.u32 %v659, %v655
      %v661 = vrot.slane %v660, 4
      %v663 = vshll.u32 %v302, 16
      %v665 = vrot.slane %v663, 5
      %v666 = vsel %vm306, %v661, %v665
      %v668 = vshrl.u32 %v286, 16
      %v670 = vrot.slane %v668, 4
      %v671 = vshll.u32 %v286, 16
      %v673 = vrot.slane %v671, 5
      %v674 = vor.u32 %v670, %v673
      %v675 = vrot.slane %v674, 4
      %v677 = vshll.u32 %v287, 16
      %v679 = vrot.slane %v677, 5
      %v680 = vsel %vm306, %v675, %v679
      %v681 = vshrl.u32 %v287, 16
      %v683 = vrot.slane %v681, 4
      %v684 = vor.u32 %v683, %v679
      %v685 = vrot.slane %v684, 4
      %v687 = vshll.u32 %v303, 16
      %v689 = vrot.slane %v687, 5
      %v690 = vsel %vm306, %v685, %v689
      %v691 = vld [vmem:[%s255] sm:$0xe]
      %v692 = vld [vmem:[%s255 + $0xc] sm:$0xe]
      %v693 = vld [vmem:[%s255 + $0x18] sm:$0xe]
      %v694 = vld [vmem:[%s255 + $0x24] sm:$0xe]
      %v695 = vld [vmem:[%s255 + $0x30] sm:$0xe]
      %v696 = vld [vmem:[%s255 + $0x3c] sm:$0xe]
      %v697 = vld [vmem:[%s255 + $0x48] sm:$0xe]
      %v698 = vld [vmem:[%s255 + $0x54] sm:$0xe]
      %v699 = vld [vmem:[%s255 + $0x60] sm:$0xe]
      %v700 = vld [vmem:[%s255 + $0x6c] sm:$0xe]
      %v701 = vld [vmem:[%s255 + $0x78] sm:$0xe]
      %v702 = vld [vmem:[%s255 + $0x84] sm:$0xe]
      %v703 = vld [vmem:[%s255 + $0x90] sm:$0xe]
      %v704 = vld [vmem:[%s255 + $0x9c] sm:$0xe]
      %v705 = vld [vmem:[%s255 + $0xa8] sm:$0xe]
      %v706 = vld [vmem:[%s255 + $0xb4] sm:$0xe]
      %vm755 = vcmask 1042432
      %vm756 = vcmask 1046532
      %vm757 = vmor %vm755, %vm756
      %v758 = vrot.slane %v691, 5
      %v759 = vrot.slane %v758, 4
      %v760 = vrot.slane %v257, 5
      %v761 = vsel %vm757, %v759, %v760
      %v762 = vrot.slane %v760, 4
      %v763 = vrot.slane %v288, 5
      %v764 = vsel %vm757, %v762, %v763
      %v765 = vrot.slane %v692, 5
      %v766 = vrot.slane %v765, 4
      %v767 = vrot.slane %v259, 5
      %v768 = vsel %vm757, %v766, %v767
      %v769 = vrot.slane %v767, 4
      %v770 = vrot.slane %v289, 5
      %v771 = vsel %vm757, %v769, %v770
      %v772 = vrot.slane %v693, 5
      %v773 = vrot.slane %v772, 4
      %v774 = vrot.slane %v261, 5
      %v775 = vsel %vm757, %v773, %v774
      %v776 = vrot.slane %v774, 4
      %v777 = vrot.slane %v290, 5
      %v778 = vsel %vm757, %v776, %v777
      %v779 = vrot.slane %v694, 5
      %v780 = vrot.slane %v779, 4
      %v781 = vrot.slane %v263, 5
      %v782 = vsel %vm757, %v780, %v781
      %v783 = vrot.slane %v781, 4
      %v784 = vrot.slane %v291, 5
      %v785 = vsel %vm757, %v783, %v784
      %v786 = vrot.slane %v695, 5
      %v787 = vrot.slane %v786, 4
      %v788 = vrot.slane %v265, 5
      %v789 = vsel %vm757, %v787, %v788
      %v790 = vrot.slane %v788, 4
      %v791 = vrot.slane %v292, 5
      %v792 = vsel %vm757, %v790, %v791
      %v793 = vrot.slane %v696, 5
      %v794 = vrot.slane %v793, 4
      %v795 = vrot.slane %v267, 5
      %v796 = vsel %vm757, %v794, %v795
      %v797 = vrot.slane %v795, 4
      %v798 = vrot.slane %v293, 5
      %v799 = vsel %vm757, %v797, %v798
      %v800 = vrot.slane %v697, 5
      %v801 = vrot.slane %v800, 4
      %v802 = vrot.slane %v269, 5
      %v803 = vsel %vm757, %v801, %v802
      %v804 = vrot.slane %v802, 4
      %v805 = vrot.slane %v294, 5
      %v806 = vsel %vm757, %v804, %v805
      %v807 = vrot.slane %v698, 5
      %v808 = vrot.slane %v807, 4
      %v809 = vrot.slane %v271, 5
      %v810 = vsel %vm757, %v808, %v809
      %v811 = vrot.slane %v809, 4
      %v812 = vrot.slane %v295, 5
      %v813 = vsel %vm757, %v811, %v812
      %v814 = vrot.slane %v699, 5
      %v815 = vrot.slane %v814, 4
      %v816 = vrot.slane %v273, 5
      %v817 = vsel %vm757, %v815, %v816
      %v818 = vrot.slane %v816, 4
      %v819 = vrot.slane %v296, 5
      %v820 = vsel %vm757, %v818, %v819
      %v821 = vrot.slane %v700, 5
      %v822 = vrot.slane %v821, 4
      %v823 = vrot.slane %v275, 5
      %v824 = vsel %vm757, %v822, %v823
      %v825 = vrot.slane %v823, 4
      %v826 = vrot.slane %v297, 5
      %v827 = vsel %vm757, %v825, %v826
      %v828 = vrot.slane %v701, 5
      %v829 = vrot.slane %v828, 4
      %v830 = vrot.slane %v277, 5
      %v831 = vsel %vm757, %v829, %v830
      %v832 = vrot.slane %v830, 4
      %v833 = vrot.slane %v298, 5
      %v834 = vsel %vm757, %v832, %v833
      %v835 = vrot.slane %v702, 5
      %v836 = vrot.slane %v835, 4
      %v837 = vrot.slane %v279, 5
      %v838 = vsel %vm757, %v836, %v837
      %v839 = vrot.slane %v837, 4
      %v840 = vrot.slane %v299, 5
      %v841 = vsel %vm757, %v839, %v840
      %v842 = vrot.slane %v703, 5
      %v843 = vrot.slane %v842, 4
      %v844 = vrot.slane %v281, 5
      %v845 = vsel %vm757, %v843, %v844
      %v846 = vrot.slane %v844, 4
      %v847 = vrot.slane %v300, 5
      %v848 = vsel %vm757, %v846, %v847
      %v849 = vrot.slane %v704, 5
      %v850 = vrot.slane %v849, 4
      %v851 = vrot.slane %v283, 5
      %v852 = vsel %vm757, %v850, %v851
      %v853 = vrot.slane %v851, 4
      %v854 = vrot.slane %v301, 5
      %v855 = vsel %vm757, %v853, %v854
      %v856 = vrot.slane %v705, 5
      %v857 = vrot.slane %v856, 4
      %v858 = vrot.slane %v285, 5
      %v859 = vsel %vm757, %v857, %v858
      %v860 = vrot.slane %v858, 4
      %v861 = vrot.slane %v302, 5
      %v862 = vsel %vm757, %v860, %v861
      %v863 = vrot.slane %v706, 5
      %v864 = vrot.slane %v863, 4
      %v865 = vrot.slane %v287, 5
      %v866 = vsel %vm757, %v864, %v865
      %v867 = vrot.slane %v865, 4
      %v868 = vrot.slane %v303, 5
      %v869 = vsel %vm757, %v867, %v868
      %s870 = sadd.s32 %s252, 1
      %s871 = smul.u32 %s870, 3
      %s872 = smul.addr %s871, 4
      %s873 = scalar_lea.vmem %s229, %s872
      %v874 = vld [vmem:[%s873] sm:$0xf]
      %v875 = vld [vmem:[%s873 + $0x4] sm:$0xf]
      %v876 = vld [vmem:[%s873 + $0xc] sm:$0xf]
      %v877 = vld [vmem:[%s873 + $0x10] sm:$0xf]
      %v878 = vld [vmem:[%s873 + $0x18] sm:$0xf]
      %v879 = vld [vmem:[%s873 + $0x1c] sm:$0xf]
      %v880 = vld [vmem:[%s873 + $0x24] sm:$0xf]
      %v881 = vld [vmem:[%s873 + $0x28] sm:$0xf]
      %v882 = vld [vmem:[%s873 + $0x30] sm:$0xf]
      %v883 = vld [vmem:[%s873 + $0x34] sm:$0xf]
      %v884 = vld [vmem:[%s873 + $0x3c] sm:$0xf]
      %v885 = vld [vmem:[%s873 + $0x40] sm:$0xf]
      %v886 = vld [vmem:[%s873 + $0x48] sm:$0xf]
      %v887 = vld [vmem:[%s873 + $0x4c] sm:$0xf]
      %v888 = vld [vmem:[%s873 + $0x54] sm:$0xf]
      %v889 = vld [vmem:[%s873 + $0x58] sm:$0xf]
      %v890 = vld [vmem:[%s873 + $0x60] sm:$0xf]
      %v891 = vld [vmem:[%s873 + $0x64] sm:$0xf]
      %v892 = vld [vmem:[%s873 + $0x6c] sm:$0xf]
      %v893 = vld [vmem:[%s873 + $0x70] sm:$0xf]
      %v894 = vld [vmem:[%s873 + $0x78] sm:$0xf]
      %v895 = vld [vmem:[%s873 + $0x7c] sm:$0xf]
      %v896 = vld [vmem:[%s873 + $0x84] sm:$0xf]
      %v897 = vld [vmem:[%s873 + $0x88] sm:$0xf]
      %v898 = vld [vmem:[%s873 + $0x90] sm:$0xf]
      %v899 = vld [vmem:[%s873 + $0x94] sm:$0xf]
      %v900 = vld [vmem:[%s873 + $0x9c] sm:$0xf]
      %v901 = vld [vmem:[%s873 + $0xa0] sm:$0xf]
      %v902 = vld [vmem:[%s873 + $0xa8] sm:$0xf]
      %v903 = vld [vmem:[%s873 + $0xac] sm:$0xf]
      %v904 = vld [vmem:[%s873 + $0xb4] sm:$0xf]
      %v905 = vld [vmem:[%s873 + $0xb8] sm:$0xf]
      %v906 = vld [vmem:[%s873 + $0x8] sm:$0x1]
      %v907 = vld [vmem:[%s873 + $0x14] sm:$0x1]
      %v908 = vld [vmem:[%s873 + $0x20] sm:$0x1]
      %v909 = vld [vmem:[%s873 + $0x2c] sm:$0x1]
      %v910 = vld [vmem:[%s873 + $0x38] sm:$0x1]
      %v911 = vld [vmem:[%s873 + $0x44] sm:$0x1]
      %v912 = vld [vmem:[%s873 + $0x50] sm:$0x1]
      %v913 = vld [vmem:[%s873 + $0x5c] sm:$0x1]
      %v914 = vld [vmem:[%s873 + $0x68] sm:$0x1]
      %v915 = vld [vmem:[%s873 + $0x74] sm:$0x1]
      %v916 = vld [vmem:[%s873 + $0x80] sm:$0x1]
      %v917 = vld [vmem:[%s873 + $0x8c] sm:$0x1]
      %v918 = vld [vmem:[%s873 + $0x98] sm:$0x1]
      %v919 = vld [vmem:[%s873 + $0xa4] sm:$0x1]
      %v920 = vld [vmem:[%s873 + $0xb0] sm:$0x1]
      %v921 = vld [vmem:[%s873 + $0xbc] sm:$0x1]
      %v923 = vshrl.u32 %v874, 16
      %v925 = vrot.slane %v923, 4
      %v926 = vshll.u32 %v874, 16
      %v928 = vrot.slane %v926, 5
      %v929 = vor.u32 %v925, %v928
      %v930 = vrot.slane %v929, 4
      %v932 = vshll.u32 %v875, 16
      %v934 = vrot.slane %v932, 5
      %v935 = vsel %vm306, %v930, %v934
      %v936 = vshrl.u32 %v875, 16
      %v938 = vrot.slane %v936, 4
      %v939 = vor.u32 %v938, %v934
      %v940 = vrot.slane %v939, 4
      %v942 = vshll.u32 %v906, 16
      %v944 = vrot.slane %v942, 5
      %v945 = vsel %vm306, %v940, %v944
      %v947 = vshrl.u32 %v876, 16
      %v949 = vrot.slane %v947, 4
      %v950 = vshll.u32 %v876, 16
      %v952 = vrot.slane %v950, 5
      %v953 = vor.u32 %v949, %v952
      %v954 = vrot.slane %v953, 4
      %v956 = vshll.u32 %v877, 16
      %v958 = vrot.slane %v956, 5
      %v959 = vsel %vm306, %v954, %v958
      %v960 = vshrl.u32 %v877, 16
      %v962 = vrot.slane %v960, 4
      %v963 = vor.u32 %v962, %v958
      %v964 = vrot.slane %v963, 4
      %v966 = vshll.u32 %v907, 16
      %v968 = vrot.slane %v966, 5
      %v969 = vsel %vm306, %v964, %v968
      %v971 = vshrl.u32 %v878, 16
      %v973 = vrot.slane %v971, 4
      %v974 = vshll.u32 %v878, 16
      %v976 = vrot.slane %v974, 5
      %v977 = vor.u32 %v973, %v976
      %v978 = vrot.slane %v977, 4
      %v980 = vshll.u32 %v879, 16
      %v982 = vrot.slane %v980, 5
      %v983 = vsel %vm306, %v978, %v982
      %v984 = vshrl.u32 %v879, 16
      %v986 = vrot.slane %v984, 4
      %v987 = vor.u32 %v986, %v982
      %v988 = vrot.slane %v987, 4
      %v990 = vshll.u32 %v908, 16
      %v992 = vrot.slane %v990, 5
      %v993 = vsel %vm306, %v988, %v992
      %v995 = vshrl.u32 %v880, 16
      %v997 = vrot.slane %v995, 4
      %v998 = vshll.u32 %v880, 16
      %v1000 = vrot.slane %v998, 5
      %v1001 = vor.u32 %v997, %v1000
      %v1002 = vrot.slane %v1001, 4
      %v1004 = vshll.u32 %v881, 16
      %v1006 = vrot.slane %v1004, 5
      %v1007 = vsel %vm306, %v1002, %v1006
      %v1008 = vshrl.u32 %v881, 16
      %v1010 = vrot.slane %v1008, 4
      %v1011 = vor.u32 %v1010, %v1006
      %v1012 = vrot.slane %v1011, 4
      %v1014 = vshll.u32 %v909, 16
      %v1016 = vrot.slane %v1014, 5
      %v1017 = vsel %vm306, %v1012, %v1016
      %v1019 = vshrl.u32 %v882, 16
      %v1021 = vrot.slane %v1019, 4
      %v1022 = vshll.u32 %v882, 16
      %v1024 = vrot.slane %v1022, 5
      %v1025 = vor.u32 %v1021, %v1024
      %v1026 = vrot.slane %v1025, 4
      %v1028 = vshll.u32 %v883, 16
      %v1030 = vrot.slane %v1028, 5
      %v1031 = vsel %vm306, %v1026, %v1030
      %v1032 = vshrl.u32 %v883, 16
      %v1034 = vrot.slane %v1032, 4
      %v1035 = vor.u32 %v1034, %v1030
      %v1036 = vrot.slane %v1035, 4
      %v1038 = vshll.u32 %v910, 16
      %v1040 = vrot.slane %v1038, 5
      %v1041 = vsel %vm306, %v1036, %v1040
      %v1043 = vshrl.u32 %v884, 16
      %v1045 = vrot.slane %v1043, 4
      %v1046 = vshll.u32 %v884, 16
      %v1048 = vrot.slane %v1046, 5
      %v1049 = vor.u32 %v1045, %v1048
      %v1050 = vrot.slane %v1049, 4
      %v1052 = vshll.u32 %v885, 16
      %v1054 = vrot.slane %v1052, 5
      %v1055 = vsel %vm306, %v1050, %v1054
      %v1056 = vshrl.u32 %v885, 16
      %v1058 = vrot.slane %v1056, 4
      %v1059 = vor.u32 %v1058, %v1054
      %v1060 = vrot.slane %v1059, 4
      %v1062 = vshll.u32 %v911, 16
      %v1064 = vrot.slane %v1062, 5
      %v1065 = vsel %vm306, %v1060, %v1064
      %v1067 = vshrl.u32 %v886, 16
      %v1069 = vrot.slane %v1067, 4
      %v1070 = vshll.u32 %v886, 16
      %v1072 = vrot.slane %v1070, 5
      %v1073 = vor.u32 %v1069, %v1072
      %v1074 = vrot.slane %v1073, 4
      %v1076 = vshll.u32 %v887, 16
      %v1078 = vrot.slane %v1076, 5
      %v1079 = vsel %vm306, %v1074, %v1078
      %v1080 = vshrl.u32 %v887, 16
      %v1082 = vrot.slane %v1080, 4
      %v1083 = vor.u32 %v1082, %v1078
      %v1084 = vrot.slane %v1083, 4
      %v1086 = vshll.u32 %v912, 16
      %v1088 = vrot.slane %v1086, 5
      %v1089 = vsel %vm306, %v1084, %v1088
      %v1091 = vshrl.u32 %v888, 16
      %v1093 = vrot.slane %v1091, 4
      %v1094 = vshll.u32 %v888, 16
      %v1096 = vrot.slane %v1094, 5
      %v1097 = vor.u32 %v1093, %v1096
      %v1098 = vrot.slane %v1097, 4
      %v1100 = vshll.u32 %v889, 16
      %v1102 = vrot.slane %v1100, 5
      %v1103 = vsel %vm306, %v1098, %v1102
      %v1104 = vshrl.u32 %v889, 16
      %v1106 = vrot.slane %v1104, 4
      %v1107 = vor.u32 %v1106, %v1102
      %v1108 = vrot.slane %v1107, 4
      %v1110 = vshll.u32 %v913, 16
      %v1112 = vrot.slane %v1110, 5
      %v1113 = vsel %vm306, %v1108, %v1112
      %v1115 = vshrl.u32 %v890, 16
      %v1117 = vrot.slane %v1115, 4
      %v1118 = vshll.u32 %v890, 16
      %v1120 = vrot.slane %v1118, 5
      %v1121 = vor.u32 %v1117, %v1120
      %v1122 = vrot.slane %v1121, 4
      %v1124 = vshll.u32 %v891, 16
      %v1126 = vrot.slane %v1124, 5
      %v1127 = vsel %vm306, %v1122, %v1126
      %v1128 = vshrl.u32 %v891, 16
      %v1130 = vrot.slane %v1128, 4
      %v1131 = vor.u32 %v1130, %v1126
      %v1132 = vrot.slane %v1131, 4
      %v1134 = vshll.u32 %v914, 16
      %v1136 = vrot.slane %v1134, 5
      %v1137 = vsel %vm306, %v1132, %v1136
      %v1139 = vshrl.u32 %v892, 16
      %v1141 = vrot.slane %v1139, 4
      %v1142 = vshll.u32 %v892, 16
      %v1144 = vrot.slane %v1142, 5
      %v1145 = vor.u32 %v1141, %v1144
      %v1146 = vrot.slane %v1145, 4
      %v1148 = vshll.u32 %v893, 16
      %v1150 = vrot.slane %v1148, 5
      %v1151 = vsel %vm306, %v1146, %v1150
      %v1152 = vshrl.u32 %v893, 16
      %v1154 = vrot.slane %v1152, 4
      %v1155 = vor.u32 %v1154, %v1150
      %v1156 = vrot.slane %v1155, 4
      %v1158 = vshll.u32 %v915, 16
      %v1160 = vrot.slane %v1158, 5
      %v1161 = vsel %vm306, %v1156, %v1160
      %v1163 = vshrl.u32 %v894, 16
      %v1165 = vrot.slane %v1163, 4
      %v1166 = vshll.u32 %v894, 16
      %v1168 = vrot.slane %v1166, 5
      %v1169 = vor.u32 %v1165, %v1168
      %v1170 = vrot.slane %v1169, 4
      %v1172 = vshll.u32 %v895, 16
      %v1174 = vrot.slane %v1172, 5
      %v1175 = vsel %vm306, %v1170, %v1174
      %v1176 = vshrl.u32 %v895, 16
      %v1178 = vrot.slane %v1176, 4
      %v1179 = vor.u32 %v1178, %v1174
      %v1180 = vrot.slane %v1179, 4
      %v1182 = vshll.u32 %v916, 16
      %v1184 = vrot.slane %v1182, 5
      %v1185 = vsel %vm306, %v1180, %v1184
      %v1187 = vshrl.u32 %v896, 16
      %v1189 = vrot.slane %v1187, 4
      %v1190 = vshll.u32 %v896, 16
      %v1192 = vrot.slane %v1190, 5
      %v1193 = vor.u32 %v1189, %v1192
      %v1194 = vrot.slane %v1193, 4
      %v1196 = vshll.u32 %v897, 16
      %v1198 = vrot.slane %v1196, 5
      %v1199 = vsel %vm306, %v1194, %v1198
      %v1200 = vshrl.u32 %v897, 16
      %v1202 = vrot.slane %v1200, 4
      %v1203 = vor.u32 %v1202, %v1198
      %v1204 = vrot.slane %v1203, 4
      %v1206 = vshll.u32 %v917, 16
      %v1208 = vrot.slane %v1206, 5
      %v1209 = vsel %vm306, %v1204, %v1208
      %v1211 = vshrl.u32 %v898, 16
      %v1213 = vrot.slane %v1211, 4
      %v1214 = vshll.u32 %v898, 16
      %v1216 = vrot.slane %v1214, 5
      %v1217 = vor.u32 %v1213, %v1216
      %v1218 = vrot.slane %v1217, 4
      %v1220 = vshll.u32 %v899, 16
      %v1222 = vrot.slane %v1220, 5
      %v1223 = vsel %vm306, %v1218, %v1222
      %v1224 = vshrl.u32 %v899, 16
      %v1226 = vrot.slane %v1224, 4
      %v1227 = vor.u32 %v1226, %v1222
      %v1228 = vrot.slane %v1227, 4
      %v1230 = vshll.u32 %v918, 16
      %v1232 = vrot.slane %v1230, 5
      %v1233 = vsel %vm306, %v1228, %v1232
      %v1235 = vshrl.u32 %v900, 16
      %v1237 = vrot.slane %v1235, 4
      %v1238 = vshll.u32 %v900, 16
      %v1240 = vrot.slane %v1238, 5
      %v1241 = vor.u32 %v1237, %v1240
      %v1242 = vrot.slane %v1241, 4
      %v1244 = vshll.u32 %v901, 16
      %v1246 = vrot.slane %v1244, 5
      %v1247 = vsel %vm306, %v1242, %v1246
      %v1248 = vshrl.u32 %v901, 16
      %v1250 = vrot.slane %v1248, 4
      %v1251 = vor.u32 %v1250, %v1246
      %v1252 = vrot.slane %v1251, 4
      %v1254 = vshll.u32 %v919, 16
      %v1256 = vrot.slane %v1254, 5
      %v1257 = vsel %vm306, %v1252, %v1256
      %v1259 = vshrl.u32 %v902, 16
      %v1261 = vrot.slane %v1259, 4
      %v1262 = vshll.u32 %v902, 16
      %v1264 = vrot.slane %v1262, 5
      %v1265 = vor.u32 %v1261, %v1264
      %v1266 = vrot.slane %v1265, 4
      %v1268 = vshll.u32 %v903, 16
      %v1270 = vrot.slane %v1268, 5
      %v1271 = vsel %vm306, %v1266, %v1270
      %v1272 = vshrl.u32 %v903, 16
      %v1274 = vrot.slane %v1272, 4
      %v1275 = vor.u32 %v1274, %v1270
      %v1276 = vrot.slane %v1275, 4
      %v1278 = vshll.u32 %v920, 16
      %v1280 = vrot.slane %v1278, 5
      %v1281 = vsel %vm306, %v1276, %v1280
      %v1283 = vshrl.u32 %v904, 16
      %v1285 = vrot.slane %v1283, 4
      %v1286 = vshll.u32 %v904, 16
      %v1288 = vrot.slane %v1286, 5
      %v1289 = vor.u32 %v1285, %v1288
      %v1290 = vrot.slane %v1289, 4
      %v1292 = vshll.u32 %v905, 16
      %v1294 = vrot.slane %v1292, 5
      %v1295 = vsel %vm306, %v1290, %v1294
      %v1296 = vshrl.u32 %v905, 16
      %v1298 = vrot.slane %v1296, 4
      %v1299 = vor.u32 %v1298, %v1294
      %v1300 = vrot.slane %v1299, 4
      %v1302 = vshll.u32 %v921, 16
      %v1304 = vrot.slane %v1302, 5
      %v1305 = vsel %vm306, %v1300, %v1304
      %v1306 = vld [vmem:[%s873] sm:$0xe]
      %v1307 = vld [vmem:[%s873 + $0xc] sm:$0xe]
      %v1308 = vld [vmem:[%s873 + $0x18] sm:$0xe]
      %v1309 = vld [vmem:[%s873 + $0x24] sm:$0xe]
      %v1310 = vld [vmem:[%s873 + $0x30] sm:$0xe]
      %v1311 = vld [vmem:[%s873 + $0x3c] sm:$0xe]
      %v1312 = vld [vmem:[%s873 + $0x48] sm:$0xe]
      %v1313 = vld [vmem:[%s873 + $0x54] sm:$0xe]
      %v1314 = vld [vmem:[%s873 + $0x60] sm:$0xe]
      %v1315 = vld [vmem:[%s873 + $0x6c] sm:$0xe]
      %v1316 = vld [vmem:[%s873 + $0x78] sm:$0xe]
      %v1317 = vld [vmem:[%s873 + $0x84] sm:$0xe]
      %v1318 = vld [vmem:[%s873 + $0x90] sm:$0xe]
      %v1319 = vld [vmem:[%s873 + $0x9c] sm:$0xe]
      %v1320 = vld [vmem:[%s873 + $0xa8] sm:$0xe]
      %v1321 = vld [vmem:[%s873 + $0xb4] sm:$0xe]
      %v1370 = vrot.slane %v1306, 5
      %v1371 = vrot.slane %v1370, 4
      %v1372 = vrot.slane %v875, 5
      %v1373 = vsel %vm757, %v1371, %v1372
      %v1374 = vrot.slane %v1372, 4
      %v1375 = vrot.slane %v906, 5
      %v1376 = vsel %vm757, %v1374, %v1375
      %v1377 = vrot.slane %v1307, 5
      %v1378 = vrot.slane %v1377, 4
      %v1379 = vrot.slane %v877, 5
      %v1380 = vsel %vm757, %v1378, %v1379
      %v1381 = vrot.slane %v1379, 4
      %v1382 = vrot.slane %v907, 5
      %v1383 = vsel %vm757, %v1381, %v1382
      %v1384 = vrot.slane %v1308, 5
      %v1385 = vrot.slane %v1384, 4
      %v1386 = vrot.slane %v879, 5
      %v1387 = vsel %vm757, %v1385, %v1386
      %v1388 = vrot.slane %v1386, 4
      %v1389 = vrot.slane %v908, 5
      %v1390 = vsel %vm757, %v1388, %v1389
      %v1391 = vrot.slane %v1309, 5
      %v1392 = vrot.slane %v1391, 4
      %v1393 = vrot.slane %v881, 5
      %v1394 = vsel %vm757, %v1392, %v1393
      %v1395 = vrot.slane %v1393, 4
      %v1396 = vrot.slane %v909, 5
      %v1397 = vsel %vm757, %v1395, %v1396
      %v1398 = vrot.slane %v1310, 5
      %v1399 = vrot.slane %v1398, 4
      %v1400 = vrot.slane %v883, 5
      %v1401 = vsel %vm757, %v1399, %v1400
      %v1402 = vrot.slane %v1400, 4
      %v1403 = vrot.slane %v910, 5
      %v1404 = vsel %vm757, %v1402, %v1403
      %v1405 = vrot.slane %v1311, 5
      %v1406 = vrot.slane %v1405, 4
      %v1407 = vrot.slane %v885, 5
      %v1408 = vsel %vm757, %v1406, %v1407
      %v1409 = vrot.slane %v1407, 4
      %v1410 = vrot.slane %v911, 5
      %v1411 = vsel %vm757, %v1409, %v1410
      %v1412 = vrot.slane %v1312, 5
      %v1413 = vrot.slane %v1412, 4
      %v1414 = vrot.slane %v887, 5
      %v1415 = vsel %vm757, %v1413, %v1414
      %v1416 = vrot.slane %v1414, 4
      %v1417 = vrot.slane %v912, 5
      %v1418 = vsel %vm757, %v1416, %v1417
      %v1419 = vrot.slane %v1313, 5
      %v1420 = vrot.slane %v1419, 4
      %v1421 = vrot.slane %v889, 5
      %v1422 = vsel %vm757, %v1420, %v1421
      %v1423 = vrot.slane %v1421, 4
      %v1424 = vrot.slane %v913, 5
      %v1425 = vsel %vm757, %v1423, %v1424
      %v1426 = vrot.slane %v1314, 5
      %v1427 = vrot.slane %v1426, 4
      %v1428 = vrot.slane %v891, 5
      %v1429 = vsel %vm757, %v1427, %v1428
      %v1430 = vrot.slane %v1428, 4
      %v1431 = vrot.slane %v914, 5
      %v1432 = vsel %vm757, %v1430, %v1431
      %v1433 = vrot.slane %v1315, 5
      %v1434 = vrot.slane %v1433, 4
      %v1435 = vrot.slane %v893, 5
      %v1436 = vsel %vm757, %v1434, %v1435
      %v1437 = vrot.slane %v1435, 4
      %v1438 = vrot.slane %v915, 5
      %v1439 = vsel %vm757, %v1437, %v1438
      %v1440 = vrot.slane %v1316, 5
      %v1441 = vrot.slane %v1440, 4
      %v1442 = vrot.slane %v895, 5
      %v1443 = vsel %vm757, %v1441, %v1442
      %v1444 = vrot.slane %v1442, 4
      %v1445 = vrot.slane %v916, 5
      %v1446 = vsel %vm757, %v1444, %v1445
      %v1447 = vrot.slane %v1317, 5
      %v1448 = vrot.slane %v1447, 4
      %v1449 = vrot.slane %v897, 5
      %v1450 = vsel %vm757, %v1448, %v1449
      %v1451 = vrot.slane %v1449, 4
      %v1452 = vrot.slane %v917, 5
      %v1453 = vsel %vm757, %v1451, %v1452
      %v1454 = vrot.slane %v1318, 5
      %v1455 = vrot.slane %v1454, 4
      %v1456 = vrot.slane %v899, 5
      %v1457 = vsel %vm757, %v1455, %v1456
      %v1458 = vrot.slane %v1456, 4
      %v1459 = vrot.slane %v918, 5
      %v1460 = vsel %vm757, %v1458, %v1459
      %v1461 = vrot.slane %v1319, 5
      %v1462 = vrot.slane %v1461, 4
      %v1463 = vrot.slane %v901, 5
      %v1464 = vsel %vm757, %v1462, %v1463
      %v1465 = vrot.slane %v1463, 4
      %v1466 = vrot.slane %v919, 5
      %v1467 = vsel %vm757, %v1465, %v1466
      %v1468 = vrot.slane %v1320, 5
      %v1469 = vrot.slane %v1468, 4
      %v1470 = vrot.slane %v903, 5
      %v1471 = vsel %vm757, %v1469, %v1470
      %v1472 = vrot.slane %v1470, 4
      %v1473 = vrot.slane %v920, 5
      %v1474 = vsel %vm757, %v1472, %v1473
      %v1475 = vrot.slane %v1321, 5
      %v1476 = vrot.slane %v1475, 4
      %v1477 = vrot.slane %v905, 5
      %v1478 = vsel %vm757, %v1476, %v1477
      %v1479 = vrot.slane %v1477, 4
      %v1480 = vrot.slane %v921, 5
      %v1481 = vsel %vm757, %v1479, %v1480
      %s1482 = sadd.s32 %s252, 2
      %s1483 = smul.u32 %s1482, 3
      %s1484 = smul.addr %s1483, 4
      %s1485 = scalar_lea.vmem %s229, %s1484
      %v1486 = vld [vmem:[%s1485] sm:$0xf]
      %v1487 = vld [vmem:[%s1485 + $0x4] sm:$0xf]
      %v1488 = vld [vmem:[%s1485 + $0xc] sm:$0xf]
      %v1489 = vld [vmem:[%s1485 + $0x10] sm:$0xf]
      %v1490 = vld [vmem:[%s1485 + $0x18] sm:$0xf]
      %v1491 = vld [vmem:[%s1485 + $0x1c] sm:$0xf]
      %v1492 = vld [vmem:[%s1485 + $0x24] sm:$0xf]
      %v1493 = vld [vmem:[%s1485 + $0x28] sm:$0xf]
      %v1494 = vld [vmem:[%s1485 + $0x30] sm:$0xf]
      %v1495 = vld [vmem:[%s1485 + $0x34] sm:$0xf]
      %v1496 = vld [vmem:[%s1485 + $0x3c] sm:$0xf]
      %v1497 = vld [vmem:[%s1485 + $0x40] sm:$0xf]
      %v1498 = vld [vmem:[%s1485 + $0x48] sm:$0xf]
      %v1499 = vld [vmem:[%s1485 + $0x4c] sm:$0xf]
      %v1500 = vld [vmem:[%s1485 + $0x54] sm:$0xf]
      %v1501 = vld [vmem:[%s1485 + $0x58] sm:$0xf]
      %v1502 = vld [vmem:[%s1485 + $0x60] sm:$0xf]
      %v1503 = vld [vmem:[%s1485 + $0x64] sm:$0xf]
      %v1504 = vld [vmem:[%s1485 + $0x6c] sm:$0xf]
      %v1505 = vld [vmem:[%s1485 + $0x70] sm:$0xf]
      %v1506 = vld [vmem:[%s1485 + $0x78] sm:$0xf]
      %v1507 = vld [vmem:[%s1485 + $0x7c] sm:$0xf]
      %v1508 = vld [vmem:[%s1485 + $0x84] sm:$0xf]
      %v1509 = vld [vmem:[%s1485 + $0x88] sm:$0xf]
      %v1510 = vld [vmem:[%s1485 + $0x90] sm:$0xf]
      %v1511 = vld [vmem:[%s1485 + $0x94] sm:$0xf]
      %v1512 = vld [vmem:[%s1485 + $0x9c] sm:$0xf]
      %v1513 = vld [vmem:[%s1485 + $0xa0] sm:$0xf]
      %v1514 = vld [vmem:[%s1485 + $0xa8] sm:$0xf]
      %v1515 = vld [vmem:[%s1485 + $0xac] sm:$0xf]
      %v1516 = vld [vmem:[%s1485 + $0xb4] sm:$0xf]
      %v1517 = vld [vmem:[%s1485 + $0xb8] sm:$0xf]
      %v1518 = vld [vmem:[%s1485 + $0x8] sm:$0x1]
      %v1519 = vld [vmem:[%s1485 + $0x14] sm:$0x1]
      %v1520 = vld [vmem:[%s1485 + $0x20] sm:$0x1]
      %v1521 = vld [vmem:[%s1485 + $0x2c] sm:$0x1]
      %v1522 = vld [vmem:[%s1485 + $0x38] sm:$0x1]
      %v1523 = vld [vmem:[%s1485 + $0x44] sm:$0x1]
      %v1524 = vld [vmem:[%s1485 + $0x50] sm:$0x1]
      %v1525 = vld [vmem:[%s1485 + $0x5c] sm:$0x1]
      %v1526 = vld [vmem:[%s1485 + $0x68] sm:$0x1]
      %v1527 = vld [vmem:[%s1485 + $0x74] sm:$0x1]
      %v1528 = vld [vmem:[%s1485 + $0x80] sm:$0x1]
      %v1529 = vld [vmem:[%s1485 + $0x8c] sm:$0x1]
      %v1530 = vld [vmem:[%s1485 + $0x98] sm:$0x1]
      %v1531 = vld [vmem:[%s1485 + $0xa4] sm:$0x1]
      %v1532 = vld [vmem:[%s1485 + $0xb0] sm:$0x1]
      %v1533 = vld [vmem:[%s1485 + $0xbc] sm:$0x1]
      %v1535 = vshrl.u32 %v1486, 16
      %v1537 = vrot.slane %v1535, 4
      %v1538 = vshll.u32 %v1486, 16
      %v1540 = vrot.slane %v1538, 5
      %v1541 = vor.u32 %v1537, %v1540
      %v1542 = vrot.slane %v1541, 4
      %v1544 = vshll.u32 %v1487, 16
      %v1546 = vrot.slane %v1544, 5
      %v1547 = vsel %vm306, %v1542, %v1546
      %v1548 = vshrl.u32 %v1487, 16
      %v1550 = vrot.slane %v1548, 4
      %v1551 = vor.u32 %v1550, %v1546
      %v1552 = vrot.slane %v1551, 4
      %v1554 = vshll.u32 %v1518, 16
      %v1556 = vrot.slane %v1554, 5
      %v1557 = vsel %vm306, %v1552, %v1556
      %v1559 = vshrl.u32 %v1488, 16
      %v1561 = vrot.slane %v1559, 4
      %v1562 = vshll.u32 %v1488, 16
      %v1564 = vrot.slane %v1562, 5
      %v1565 = vor.u32 %v1561, %v1564
      %v1566 = vrot.slane %v1565, 4
      %v1568 = vshll.u32 %v1489, 16
      %v1570 = vrot.slane %v1568, 5
      %v1571 = vsel %vm306, %v1566, %v1570
      %v1572 = vshrl.u32 %v1489, 16
      %v1574 = vrot.slane %v1572, 4
      %v1575 = vor.u32 %v1574, %v1570
      %v1576 = vrot.slane %v1575, 4
      %v1578 = vshll.u32 %v1519, 16
      %v1580 = vrot.slane %v1578, 5
      %v1581 = vsel %vm306, %v1576, %v1580
      %v1583 = vshrl.u32 %v1490, 16
      %v1585 = vrot.slane %v1583, 4
      %v1586 = vshll.u32 %v1490, 16
      %v1588 = vrot.slane %v1586, 5
      %v1589 = vor.u32 %v1585, %v1588
      %v1590 = vrot.slane %v1589, 4
      %v1592 = vshll.u32 %v1491, 16
      %v1594 = vrot.slane %v1592, 5
      %v1595 = vsel %vm306, %v1590, %v1594
      %v1596 = vshrl.u32 %v1491, 16
      %v1598 = vrot.slane %v1596, 4
      %v1599 = vor.u32 %v1598, %v1594
      %v1600 = vrot.slane %v1599, 4
      %v1602 = vshll.u32 %v1520, 16
      %v1604 = vrot.slane %v1602, 5
      %v1605 = vsel %vm306, %v1600, %v1604
      %v1607 = vshrl.u32 %v1492, 16
      %v1609 = vrot.slane %v1607, 4
      %v1610 = vshll.u32 %v1492, 16
      %v1612 = vrot.slane %v1610, 5
      %v1613 = vor.u32 %v1609, %v1612
      %v1614 = vrot.slane %v1613, 4
      %v1616 = vshll.u32 %v1493, 16
      %v1618 = vrot.slane %v1616, 5
      %v1619 = vsel %vm306, %v1614, %v1618
      %v1620 = vshrl.u32 %v1493, 16
      %v1622 = vrot.slane %v1620, 4
      %v1623 = vor.u32 %v1622, %v1618
      %v1624 = vrot.slane %v1623, 4
      %v1626 = vshll.u32 %v1521, 16
      %v1628 = vrot.slane %v1626, 5
      %v1629 = vsel %vm306, %v1624, %v1628
      %v1631 = vshrl.u32 %v1494, 16
      %v1633 = vrot.slane %v1631, 4
      %v1634 = vshll.u32 %v1494, 16
      %v1636 = vrot.slane %v1634, 5
      %v1637 = vor.u32 %v1633, %v1636
      %v1638 = vrot.slane %v1637, 4
      %v1640 = vshll.u32 %v1495, 16
      %v1642 = vrot.slane %v1640, 5
      %v1643 = vsel %vm306, %v1638, %v1642
      %v1644 = vshrl.u32 %v1495, 16
      %v1646 = vrot.slane %v1644, 4
      %v1647 = vor.u32 %v1646, %v1642
      %v1648 = vrot.slane %v1647, 4
      %v1650 = vshll.u32 %v1522, 16
      %v1652 = vrot.slane %v1650, 5
      %v1653 = vsel %vm306, %v1648, %v1652
      %v1655 = vshrl.u32 %v1496, 16
      %v1657 = vrot.slane %v1655, 4
      %v1658 = vshll.u32 %v1496, 16
      %v1660 = vrot.slane %v1658, 5
      %v1661 = vor.u32 %v1657, %v1660
      %v1662 = vrot.slane %v1661, 4
      %v1664 = vshll.u32 %v1497, 16
      %v1666 = vrot.slane %v1664, 5
      %v1667 = vsel %vm306, %v1662, %v1666
      %v1668 = vshrl.u32 %v1497, 16
      %v1670 = vrot.slane %v1668, 4
      %v1671 = vor.u32 %v1670, %v1666
      %v1672 = vrot.slane %v1671, 4
      %v1674 = vshll.u32 %v1523, 16
      %v1676 = vrot.slane %v1674, 5
      %v1677 = vsel %vm306, %v1672, %v1676
      %v1679 = vshrl.u32 %v1498, 16
      %v1681 = vrot.slane %v1679, 4
      %v1682 = vshll.u32 %v1498, 16
      %v1684 = vrot.slane %v1682, 5
      %v1685 = vor.u32 %v1681, %v1684
      %v1686 = vrot.slane %v1685, 4
      %v1688 = vshll.u32 %v1499, 16
      %v1690 = vrot.slane %v1688, 5
      %v1691 = vsel %vm306, %v1686, %v1690
      %v1692 = vshrl.u32 %v1499, 16
      %v1694 = vrot.slane %v1692, 4
      %v1695 = vor.u32 %v1694, %v1690
      %v1696 = vrot.slane %v1695, 4
      %v1698 = vshll.u32 %v1524, 16
      %v1700 = vrot.slane %v1698, 5
      %v1701 = vsel %vm306, %v1696, %v1700
      %v1703 = vshrl.u32 %v1500, 16
      %v1705 = vrot.slane %v1703, 4
      %v1706 = vshll.u32 %v1500, 16
      %v1708 = vrot.slane %v1706, 5
      %v1709 = vor.u32 %v1705, %v1708
      %v1710 = vrot.slane %v1709, 4
      %v1712 = vshll.u32 %v1501, 16
      %v1714 = vrot.slane %v1712, 5
      %v1715 = vsel %vm306, %v1710, %v1714
      %v1716 = vshrl.u32 %v1501, 16
      %v1718 = vrot.slane %v1716, 4
      %v1719 = vor.u32 %v1718, %v1714
      %v1720 = vrot.slane %v1719, 4
      %v1722 = vshll.u32 %v1525, 16
      %v1724 = vrot.slane %v1722, 5
      %v1725 = vsel %vm306, %v1720, %v1724
      %v1727 = vshrl.u32 %v1502, 16
      %v1729 = vrot.slane %v1727, 4
      %v1730 = vshll.u32 %v1502, 16
      %v1732 = vrot.slane %v1730, 5
      %v1733 = vor.u32 %v1729, %v1732
      %v1734 = vrot.slane %v1733, 4
      %v1736 = vshll.u32 %v1503, 16
      %v1738 = vrot.slane %v1736, 5
      %v1739 = vsel %vm306, %v1734, %v1738
      %v1740 = vshrl.u32 %v1503, 16
      %v1742 = vrot.slane %v1740, 4
      %v1743 = vor.u32 %v1742, %v1738
      %v1744 = vrot.slane %v1743, 4
      %v1746 = vshll.u32 %v1526, 16
      %v1748 = vrot.slane %v1746, 5
      %v1749 = vsel %vm306, %v1744, %v1748
      %v1751 = vshrl.u32 %v1504, 16
      %v1753 = vrot.slane %v1751, 4
      %v1754 = vshll.u32 %v1504, 16
      %v1756 = vrot.slane %v1754, 5
      %v1757 = vor.u32 %v1753, %v1756
      %v1758 = vrot.slane %v1757, 4
      %v1760 = vshll.u32 %v1505, 16
      %v1762 = vrot.slane %v1760, 5
      %v1763 = vsel %vm306, %v1758, %v1762
      %v1764 = vshrl.u32 %v1505, 16
      %v1766 = vrot.slane %v1764, 4
      %v1767 = vor.u32 %v1766, %v1762
      %v1768 = vrot.slane %v1767, 4
      %v1770 = vshll.u32 %v1527, 16
      %v1772 = vrot.slane %v1770, 5
      %v1773 = vsel %vm306, %v1768, %v1772
      %v1775 = vshrl.u32 %v1506, 16
      %v1777 = vrot.slane %v1775, 4
      %v1778 = vshll.u32 %v1506, 16
      %v1780 = vrot.slane %v1778, 5
      %v1781 = vor.u32 %v1777, %v1780
      %v1782 = vrot.slane %v1781, 4
      %v1784 = vshll.u32 %v1507, 16
      %v1786 = vrot.slane %v1784, 5
      %v1787 = vsel %vm306, %v1782, %v1786
      %v1788 = vshrl.u32 %v1507, 16
      %v1790 = vrot.slane %v1788, 4
      %v1791 = vor.u32 %v1790, %v1786
      %v1792 = vrot.slane %v1791, 4
      %v1794 = vshll.u32 %v1528, 16
      %v1796 = vrot.slane %v1794, 5
      %v1797 = vsel %vm306, %v1792, %v1796
      %v1799 = vshrl.u32 %v1508, 16
      %v1801 = vrot.slane %v1799, 4
      %v1802 = vshll.u32 %v1508, 16
      %v1804 = vrot.slane %v1802, 5
      %v1805 = vor.u32 %v1801, %v1804
      %v1806 = vrot.slane %v1805, 4
      %v1808 = vshll.u32 %v1509, 16
      %v1810 = vrot.slane %v1808, 5
      %v1811 = vsel %vm306, %v1806, %v1810
      %v1812 = vshrl.u32 %v1509, 16
      %v1814 = vrot.slane %v1812, 4
      %v1815 = vor.u32 %v1814, %v1810
      %v1816 = vrot.slane %v1815, 4
      %v1818 = vshll.u32 %v1529, 16
      %v1820 = vrot.slane %v1818, 5
      %v1821 = vsel %vm306, %v1816, %v1820
      %v1823 = vshrl.u32 %v1510, 16
      %v1825 = vrot.slane %v1823, 4
      %v1826 = vshll.u32 %v1510, 16
      %v1828 = vrot.slane %v1826, 5
      %v1829 = vor.u32 %v1825, %v1828
      %v1830 = vrot.slane %v1829, 4
      %v1832 = vshll.u32 %v1511, 16
      %v1834 = vrot.slane %v1832, 5
      %v1835 = vsel %vm306, %v1830, %v1834
      %v1836 = vshrl.u32 %v1511, 16
      %v1838 = vrot.slane %v1836, 4
      %v1839 = vor.u32 %v1838, %v1834
      %v1840 = vrot.slane %v1839, 4
      %v1842 = vshll.u32 %v1530, 16
      %v1844 = vrot.slane %v1842, 5
      %v1845 = vsel %vm306, %v1840, %v1844
      %v1847 = vshrl.u32 %v1512, 16
      %v1849 = vrot.slane %v1847, 4
      %v1850 = vshll.u32 %v1512, 16
      %v1852 = vrot.slane %v1850, 5
      %v1853 = vor.u32 %v1849, %v1852
      %v1854 = vrot.slane %v1853, 4
      %v1856 = vshll.u32 %v1513, 16
      %v1858 = vrot.slane %v1856, 5
      %v1859 = vsel %vm306, %v1854, %v1858
      %v1860 = vshrl.u32 %v1513, 16
      %v1862 = vrot.slane %v1860, 4
      %v1863 = vor.u32 %v1862, %v1858
      %v1864 = vrot.slane %v1863, 4
      %v1866 = vshll.u32 %v1531, 16
      %v1868 = vrot.slane %v1866, 5
      %v1869 = vsel %vm306, %v1864, %v1868
      %v1871 = vshrl.u32 %v1514, 16
      %v1873 = vrot.slane %v1871, 4
      %v1874 = vshll.u32 %v1514, 16
      %v1876 = vrot.slane %v1874, 5
      %v1877 = vor.u32 %v1873, %v1876
      %v1878 = vrot.slane %v1877, 4
      %v1880 = vshll.u32 %v1515, 16
      %v1882 = vrot.slane %v1880, 5
      %v1883 = vsel %vm306, %v1878, %v1882
      %v1884 = vshrl.u32 %v1515, 16
      %v1886 = vrot.slane %v1884, 4
      %v1887 = vor.u32 %v1886, %v1882
      %v1888 = vrot.slane %v1887, 4
      %v1890 = vshll.u32 %v1532, 16
      %v1892 = vrot.slane %v1890, 5
      %v1893 = vsel %vm306, %v1888, %v1892
      %v1895 = vshrl.u32 %v1516, 16
      %v1897 = vrot.slane %v1895, 4
      %v1898 = vshll.u32 %v1516, 16
      %v1900 = vrot.slane %v1898, 5
      %v1901 = vor.u32 %v1897, %v1900
      %v1902 = vrot.slane %v1901, 4
      %v1904 = vshll.u32 %v1517, 16
      %v1906 = vrot.slane %v1904, 5
      %v1907 = vsel %vm306, %v1902, %v1906
      %v1908 = vshrl.u32 %v1517, 16
      %v1910 = vrot.slane %v1908, 4
      %v1911 = vor.u32 %v1910, %v1906
      %v1912 = vrot.slane %v1911, 4
      %v1914 = vshll.u32 %v1533, 16
      %v1916 = vrot.slane %v1914, 5
      %v1917 = vsel %vm306, %v1912, %v1916
      %v1918 = vld [vmem:[%s1485] sm:$0xe]
      %v1919 = vld [vmem:[%s1485 + $0xc] sm:$0xe]
      %v1920 = vld [vmem:[%s1485 + $0x18] sm:$0xe]
      %v1921 = vld [vmem:[%s1485 + $0x24] sm:$0xe]
      %v1922 = vld [vmem:[%s1485 + $0x30] sm:$0xe]
      %v1923 = vld [vmem:[%s1485 + $0x3c] sm:$0xe]
      %v1924 = vld [vmem:[%s1485 + $0x48] sm:$0xe]
      %v1925 = vld [vmem:[%s1485 + $0x54] sm:$0xe]
      %v1926 = vld [vmem:[%s1485 + $0x60] sm:$0xe]
      %v1927 = vld [vmem:[%s1485 + $0x6c] sm:$0xe]
      %v1928 = vld [vmem:[%s1485 + $0x78] sm:$0xe]
      %v1929 = vld [vmem:[%s1485 + $0x84] sm:$0xe]
      %v1930 = vld [vmem:[%s1485 + $0x90] sm:$0xe]
      %v1931 = vld [vmem:[%s1485 + $0x9c] sm:$0xe]
      %v1932 = vld [vmem:[%s1485 + $0xa8] sm:$0xe]
      %v1933 = vld [vmem:[%s1485 + $0xb4] sm:$0xe]
      %v1982 = vrot.slane %v1918, 5
      %v1983 = vrot.slane %v1982, 4
      %v1984 = vrot.slane %v1487, 5
      %v1985 = vsel %vm757, %v1983, %v1984
      %v1986 = vrot.slane %v1984, 4
      %v1987 = vrot.slane %v1518, 5
      %v1988 = vsel %vm757, %v1986, %v1987
      %v1989 = vrot.slane %v1919, 5
      %v1990 = vrot.slane %v1989, 4
      %v1991 = vrot.slane %v1489, 5
      %v1992 = vsel %vm757, %v1990, %v1991
      %v1993 = vrot.slane %v1991, 4
      %v1994 = vrot.slane %v1519, 5
      %v1995 = vsel %vm757, %v1993, %v1994
      %v1996 = vrot.slane %v1920, 5
      %v1997 = vrot.slane %v1996, 4
      %v1998 = vrot.slane %v1491, 5
      %v1999 = vsel %vm757, %v1997, %v1998
      %v2000 = vrot.slane %v1998, 4
      %v2001 = vrot.slane %v1520, 5
      %v2002 = vsel %vm757, %v2000, %v2001
      %v2003 = vrot.slane %v1921, 5
      %v2004 = vrot.slane %v2003, 4
      %v2005 = vrot.slane %v1493, 5
      %v2006 = vsel %vm757, %v2004, %v2005
      %v2007 = vrot.slane %v2005, 4
      %v2008 = vrot.slane %v1521, 5
      %v2009 = vsel %vm757, %v2007, %v2008
      %v2010 = vrot.slane %v1922, 5
      %v2011 = vrot.slane %v2010, 4
      %v2012 = vrot.slane %v1495, 5
      %v2013 = vsel %vm757, %v2011, %v2012
      %v2014 = vrot.slane %v2012, 4
      %v2015 = vrot.slane %v1522, 5
      %v2016 = vsel %vm757, %v2014, %v2015
      %v2017 = vrot.slane %v1923, 5
      %v2018 = vrot.slane %v2017, 4
      %v2019 = vrot.slane %v1497, 5
      %v2020 = vsel %vm757, %v2018, %v2019
      %v2021 = vrot.slane %v2019, 4
      %v2022 = vrot.slane %v1523, 5
      %v2023 = vsel %vm757, %v2021, %v2022
      %v2024 = vrot.slane %v1924, 5
      %v2025 = vrot.slane %v2024, 4
      %v2026 = vrot.slane %v1499, 5
      %v2027 = vsel %vm757, %v2025, %v2026
      %v2028 = vrot.slane %v2026, 4
      %v2029 = vrot.slane %v1524, 5
      %v2030 = vsel %vm757, %v2028, %v2029
      %v2031 = vrot.slane %v1925, 5
      %v2032 = vrot.slane %v2031, 4
      %v2033 = vrot.slane %v1501, 5
      %v2034 = vsel %vm757, %v2032, %v2033
      %v2035 = vrot.slane %v2033, 4
      %v2036 = vrot.slane %v1525, 5
      %v2037 = vsel %vm757, %v2035, %v2036
      %v2038 = vrot.slane %v1926, 5
      %v2039 = vrot.slane %v2038, 4
      %v2040 = vrot.slane %v1503, 5
      %v2041 = vsel %vm757, %v2039, %v2040
      %v2042 = vrot.slane %v2040, 4
      %v2043 = vrot.slane %v1526, 5
      %v2044 = vsel %vm757, %v2042, %v2043
      %v2045 = vrot.slane %v1927, 5
      %v2046 = vrot.slane %v2045, 4
      %v2047 = vrot.slane %v1505, 5
      %v2048 = vsel %vm757, %v2046, %v2047
      %v2049 = vrot.slane %v2047, 4
      %v2050 = vrot.slane %v1527, 5
      %v2051 = vsel %vm757, %v2049, %v2050
      %v2052 = vrot.slane %v1928, 5
      %v2053 = vrot.slane %v2052, 4
      %v2054 = vrot.slane %v1507, 5
      %v2055 = vsel %vm757, %v2053, %v2054
      %v2056 = vrot.slane %v2054, 4
      %v2057 = vrot.slane %v1528, 5
      %v2058 = vsel %vm757, %v2056, %v2057
      %v2059 = vrot.slane %v1929, 5
      %v2060 = vrot.slane %v2059, 4
      %v2061 = vrot.slane %v1509, 5
      %v2062 = vsel %vm757, %v2060, %v2061
      %v2063 = vrot.slane %v2061, 4
      %v2064 = vrot.slane %v1529, 5
      %v2065 = vsel %vm757, %v2063, %v2064
      %v2066 = vrot.slane %v1930, 5
      %v2067 = vrot.slane %v2066, 4
      %v2068 = vrot.slane %v1511, 5
      %v2069 = vsel %vm757, %v2067, %v2068
      %v2070 = vrot.slane %v2068, 4
      %v2071 = vrot.slane %v1530, 5
      %v2072 = vsel %vm757, %v2070, %v2071
      %v2073 = vrot.slane %v1931, 5
      %v2074 = vrot.slane %v2073, 4
      %v2075 = vrot.slane %v1513, 5
      %v2076 = vsel %vm757, %v2074, %v2075
      %v2077 = vrot.slane %v2075, 4
      %v2078 = vrot.slane %v1531, 5
      %v2079 = vsel %vm757, %v2077, %v2078
      %v2080 = vrot.slane %v1932, 5
      %v2081 = vrot.slane %v2080, 4
      %v2082 = vrot.slane %v1515, 5
      %v2083 = vsel %vm757, %v2081, %v2082
      %v2084 = vrot.slane %v2082, 4
      %v2085 = vrot.slane %v1532, 5
      %v2086 = vsel %vm757, %v2084, %v2085
      %v2087 = vrot.slane %v1933, 5
      %v2088 = vrot.slane %v2087, 4
      %v2089 = vrot.slane %v1517, 5
      %v2090 = vsel %vm757, %v2088, %v2089
      %v2091 = vrot.slane %v2089, 4
      %v2092 = vrot.slane %v1533, 5
      %v2093 = vsel %vm757, %v2091, %v2092
      %v2094 = vld [vmem:[%s1] sm:$0x3]
      %s2095 = scalar_lea.vmem %s1, 2
      %v2096 = vld [vmem:[%s2095] sm:$0x3]
      %v2097 = vunpack.c.l.b16 %v320
      %v2098 = vunpack.c.l.b16 %v330
      %v2099 = vunpack.c.l.b16 %v344
      %v2100 = vunpack.c.l.b16 %v354
      %v2101 = vunpack.c.l.b16 %v368
      %v2102 = vunpack.c.l.b16 %v378
      %v2103 = vunpack.c.l.b16 %v392
      %v2104 = vunpack.c.l.b16 %v402
      %v2105 = vunpack.c.l.b16 %v416
      %v2106 = vunpack.c.l.b16 %v426
      %v2107 = vunpack.c.l.b16 %v440
      %v2108 = vunpack.c.l.b16 %v450
      %v2109 = vunpack.c.l.b16 %v464
      %v2110 = vunpack.c.l.b16 %v474
      %v2111 = vunpack.c.l.b16 %v488
      %v2112 = vunpack.c.l.b16 %v498
      %v2113 = vunpack.c.l.b16 %v512
      %v2114 = vunpack.c.l.b16 %v522
      %v2115 = vunpack.c.l.b16 %v536
      %v2116 = vunpack.c.l.b16 %v546
      %v2117 = vunpack.c.l.b16 %v560
      %v2118 = vunpack.c.l.b16 %v570
      %v2119 = vunpack.c.l.b16 %v584
      %v2120 = vunpack.c.l.b16 %v594
      %v2121 = vunpack.c.l.b16 %v608
      %v2122 = vunpack.c.l.b16 %v618
      %v2123 = vunpack.c.l.b16 %v632
      %v2124 = vunpack.c.l.b16 %v642
      %v2125 = vunpack.c.l.b16 %v656
      %v2126 = vunpack.c.l.b16 %v666
      %v2127 = vunpack.c.l.b16 %v680
      %v2128 = vunpack.c.l.b16 %v690
      %v2129 = vpack.c.b16 %v2098, %v2097
      %v2130 = vpack.c.b16 %v2100, %v2099
      %v2131 = vpack.c.b16 %v2102, %v2101
      %v2132 = vpack.c.b16 %v2104, %v2103
      %v2133 = vpack.c.b16 %v2106, %v2105
      %v2134 = vpack.c.b16 %v2108, %v2107
      %v2135 = vpack.c.b16 %v2110, %v2109
      %v2136 = vpack.c.b16 %v2112, %v2111
      %v2137 = vpack.c.b16 %v2114, %v2113
      %v2138 = vpack.c.b16 %v2116, %v2115
      %v2139 = vpack.c.b16 %v2118, %v2117
      %v2140 = vpack.c.b16 %v2120, %v2119
      %v2141 = vpack.c.b16 %v2122, %v2121
      %v2142 = vpack.c.b16 %v2124, %v2123
      %v2143 = vpack.c.b16 %v2126, %v2125
      %v2144 = vpack.c.b16 %v2128, %v2127
      %vm2145 = vcmask 31744
      %v2147 = vsel %vm2145, %v2129, 0
      %v2150 = vsel %vm2145, %v2130, 0
      %v2153 = vsel %vm2145, %v2131, 0
      %v2156 = vsel %vm2145, %v2132, 0
      %v2159 = vsel %vm2145, %v2133, 0
      %v2162 = vsel %vm2145, %v2134, 0
      %v2165 = vsel %vm2145, %v2135, 0
      %v2168 = vsel %vm2145, %v2136, 0
      %v2171 = vsel %vm2145, %v2137, 0
      %v2174 = vsel %vm2145, %v2138, 0
      %v2177 = vsel %vm2145, %v2139, 0
      %v2180 = vsel %vm2145, %v2140, 0
      %v2183 = vsel %vm2145, %v2141, 0
      %v2186 = vsel %vm2145, %v2142, 0
      %v2189 = vsel %vm2145, %v2143, 0
      %v2192 = vsel %vm2145, %v2144, 0
      %vm2194 = vcmask 1041408
      %v2196 = vsel %vm2194, %v2096, 0
      %2198 = vmatpush.bf16.msra.mxu0 0
      %2199 = vmatpush.bf16.msra.mxu0 0
      %2200 = vmatpush.bf16.msra.mxu0 0
      %2201 = vmatpush.bf16.msra.mxu0 0
      %2202 = vmatpush.bf16.msra.mxu0 0
      %2203 = vmatpush.bf16.msra.mxu0 0
      %2204 = vmatpush.bf16.msra.mxu0 0
      %2205 = vmatpush.bf16.msra.mxu0 %v2196
      %2206 = vmatmul.bf16.gmra.mxu0 %v2147
      %v2207 = vpop.f32.mrf.mxu0
      %v2208 = vadd.f32 0.0, %v2207
      %v2209 = vpop.f32.mrf.mxu0
      %v2210 = vadd.f32 0.0, %v2209
      %2211 = vmatmul.bf16.gmra.mxu0 %v2150
      %v2212 = vpop.f32.mrf.mxu0
      %v2213 = vadd.f32 0.0, %v2212
      %v2214 = vpop.f32.mrf.mxu0
      %v2215 = vadd.f32 0.0, %v2214
      %2216 = vmatmul.bf16.gmra.mxu0 %v2153
      %v2217 = vpop.f32.mrf.mxu0
      %v2218 = vadd.f32 0.0, %v2217
      %v2219 = vpop.f32.mrf.mxu0
      %v2220 = vadd.f32 0.0, %v2219
      %2221 = vmatmul.bf16.gmra.mxu0 %v2156
      %v2222 = vpop.f32.mrf.mxu0
      %v2223 = vadd.f32 0.0, %v2222
      %v2224 = vpop.f32.mrf.mxu0
      %v2225 = vadd.f32 0.0, %v2224
      %2226 = vmatmul.bf16.gmra.mxu0 %v2159
      %v2227 = vpop.f32.mrf.mxu0
      %v2228 = vadd.f32 0.0, %v2227
      %v2229 = vpop.f32.mrf.mxu0
      %v2230 = vadd.f32 0.0, %v2229
      %2231 = vmatmul.bf16.gmra.mxu0 %v2162
      %v2232 = vpop.f32.mrf.mxu0
      %v2233 = vadd.f32 0.0, %v2232
      %v2234 = vpop.f32.mrf.mxu0
      %v2235 = vadd.f32 0.0, %v2234
      %2236 = vmatmul.bf16.gmra.mxu0 %v2165
      %v2237 = vpop.f32.mrf.mxu0
      %v2238 = vadd.f32 0.0, %v2237
      %v2239 = vpop.f32.mrf.mxu0
      %v2240 = vadd.f32 0.0, %v2239
      %2241 = vmatmul.bf16.gmra.mxu0 %v2168
      %v2242 = vpop.f32.mrf.mxu0
      %v2243 = vadd.f32 0.0, %v2242
      %v2244 = vpop.f32.mrf.mxu0
      %v2245 = vadd.f32 0.0, %v2244
      %2246 = vmatmul.bf16.gmra.mxu0 %v2171
      %v2247 = vpop.f32.mrf.mxu0
      %v2248 = vadd.f32 0.0, %v2247
      %v2249 = vpop.f32.mrf.mxu0
      %v2250 = vadd.f32 0.0, %v2249
      %2251 = vmatmul.bf16.gmra.mxu0 %v2174
      %v2252 = vpop.f32.mrf.mxu0
      %v2253 = vadd.f32 0.0, %v2252
      %v2254 = vpop.f32.mrf.mxu0
      %v2255 = vadd.f32 0.0, %v2254
      %2256 = vmatmul.bf16.gmra.mxu0 %v2177
      %v2257 = vpop.f32.mrf.mxu0
      %v2258 = vadd.f32 0.0, %v2257
      %v2259 = vpop.f32.mrf.mxu0
      %v2260 = vadd.f32 0.0, %v2259
      %2261 = vmatmul.bf16.gmra.mxu0 %v2180
      %v2262 = vpop.f32.mrf.mxu0
      %v2263 = vadd.f32 0.0, %v2262
      %v2264 = vpop.f32.mrf.mxu0
      %v2265 = vadd.f32 0.0, %v2264
      %2266 = vmatmul.bf16.gmra.mxu0 %v2183
      %v2267 = vpop.f32.mrf.mxu0
      %v2268 = vadd.f32 0.0, %v2267
      %v2269 = vpop.f32.mrf.mxu0
      %v2270 = vadd.f32 0.0, %v2269
      %2271 = vmatmul.bf16.gmra.mxu0 %v2186
      %v2272 = vpop.f32.mrf.mxu0
      %v2273 = vadd.f32 0.0, %v2272
      %v2274 = vpop.f32.mrf.mxu0
      %v2275 = vadd.f32 0.0, %v2274
      %2276 = vmatmul.bf16.gmra.mxu0 %v2189
      %v2277 = vpop.f32.mrf.mxu0
      %v2278 = vadd.f32 0.0, %v2277
      %v2279 = vpop.f32.mrf.mxu0
      %v2280 = vadd.f32 0.0, %v2279
      %2281 = vmatmul.bf16.gmra.mxu0 %v2192
      %v2282 = vpop.f32.mrf.mxu0
      %v2283 = vadd.f32 0.0, %v2282
      %v2284 = vpop.f32.mrf.mxu0
      %v2285 = vadd.f32 0.0, %v2284
      %2286 = vdwg.mxu0
      %v2303 = vunpack.c.l.b16 %v256
      %v2304 = vunpack.c.l.b16 %v257
      %v2305 = vunpack.c.l.b16 %v258
      %v2306 = vunpack.c.l.b16 %v259
      %v2307 = vunpack.c.l.b16 %v260
      %v2308 = vunpack.c.l.b16 %v261
      %v2309 = vunpack.c.l.b16 %v262
      %v2310 = vunpack.c.l.b16 %v263
      %v2311 = vunpack.c.l.b16 %v264
      %v2312 = vunpack.c.l.b16 %v265
      %v2313 = vunpack.c.l.b16 %v266
      %v2314 = vunpack.c.l.b16 %v267
      %v2315 = vunpack.c.l.b16 %v268
      %v2316 = vunpack.c.l.b16 %v269
      %v2317 = vunpack.c.l.b16 %v270
      %v2318 = vunpack.c.l.b16 %v271
      %v2319 = vunpack.c.l.b16 %v272
      %v2320 = vunpack.c.l.b16 %v273
      %v2321 = vunpack.c.l.b16 %v274
      %v2322 = vunpack.c.l.b16 %v275
      %v2323 = vunpack.c.l.b16 %v276
      %v2324 = vunpack.c.l.b16 %v277
      %v2325 = vunpack.c.l.b16 %v278
      %v2326 = vunpack.c.l.b16 %v279
      %v2327 = vunpack.c.l.b16 %v280
      %v2328 = vunpack.c.l.b16 %v281
      %v2329 = vunpack.c.l.b16 %v282
      %v2330 = vunpack.c.l.b16 %v283
      %v2331 = vunpack.c.l.b16 %v284
      %v2332 = vunpack.c.l.b16 %v285
      %v2333 = vunpack.c.l.b16 %v286
      %v2334 = vunpack.c.l.b16 %v287
      %v2335 = vpack.c.b16 %v2304, %v2303
      %v2336 = vpack.c.b16 %v2306, %v2305
      %v2337 = vpack.c.b16 %v2308, %v2307
      %v2338 = vpack.c.b16 %v2310, %v2309
      %v2339 = vpack.c.b16 %v2312, %v2311
      %v2340 = vpack.c.b16 %v2314, %v2313
      %v2341 = vpack.c.b16 %v2316, %v2315
      %v2342 = vpack.c.b16 %v2318, %v2317
      %v2343 = vpack.c.b16 %v2320, %v2319
      %v2344 = vpack.c.b16 %v2322, %v2321
      %v2345 = vpack.c.b16 %v2324, %v2323
      %v2346 = vpack.c.b16 %v2326, %v2325
      %v2347 = vpack.c.b16 %v2328, %v2327
      %v2348 = vpack.c.b16 %v2330, %v2329
      %v2349 = vpack.c.b16 %v2332, %v2331
      %v2350 = vpack.c.b16 %v2334, %v2333
      %v2352 = vsel %vm2145, %v2335, 0
      %v2355 = vsel %vm2145, %v2336, 0
      %v2358 = vsel %vm2145, %v2337, 0
      %v2361 = vsel %vm2145, %v2338, 0
      %v2364 = vsel %vm2145, %v2339, 0
      %v2367 = vsel %vm2145, %v2340, 0
      %v2370 = vsel %vm2145, %v2341, 0
      %v2373 = vsel %vm2145, %v2342, 0
      %v2376 = vsel %vm2145, %v2343, 0
      %v2379 = vsel %vm2145, %v2344, 0
      %v2382 = vsel %vm2145, %v2345, 0
      %v2385 = vsel %vm2145, %v2346, 0
      %v2388 = vsel %vm2145, %v2347, 0
      %v2391 = vsel %vm2145, %v2348, 0
      %v2394 = vsel %vm2145, %v2349, 0
      %v2397 = vsel %vm2145, %v2350, 0
      %v2400 = vsel %vm2194, %v2094, 0
      %2402 = vmatpush.bf16.msra.mxu0 0
      %2403 = vmatpush.bf16.msra.mxu0 0
      %2404 = vmatpush.bf16.msra.mxu0 0
      %2405 = vmatpush.bf16.msra.mxu0 0
      %2406 = vmatpush.bf16.msra.mxu0 0
      %2407 = vmatpush.bf16.msra.mxu0 0
      %2408 = vmatpush.bf16.msra.mxu0 0
      %2409 = vmatpush.bf16.msra.mxu0 %v2400
      %2410 = vmatmul.bf16.gmra.mxu0 %v2352
      %v2411 = vpop.f32.mrf.mxu0
      %v2412 = vadd.f32 %v2208, %v2411
      %v2413 = vpop.f32.mrf.mxu0
      %v2414 = vadd.f32 %v2210, %v2413
      %2415 = vmatmul.bf16.gmra.mxu0 %v2355
      %v2416 = vpop.f32.mrf.mxu0
      %v2417 = vadd.f32 %v2213, %v2416
      %v2418 = vpop.f32.mrf.mxu0
      %v2419 = vadd.f32 %v2215, %v2418
      %2420 = vmatmul.bf16.gmra.mxu0 %v2358
      %v2421 = vpop.f32.mrf.mxu0
      %v2422 = vadd.f32 %v2218, %v2421
      %v2423 = vpop.f32.mrf.mxu0
      %v2424 = vadd.f32 %v2220, %v2423
      %2425 = vmatmul.bf16.gmra.mxu0 %v2361
      %v2426 = vpop.f32.mrf.mxu0
      %v2427 = vadd.f32 %v2223, %v2426
      %v2428 = vpop.f32.mrf.mxu0
      %v2429 = vadd.f32 %v2225, %v2428
      %2430 = vmatmul.bf16.gmra.mxu0 %v2364
      %v2431 = vpop.f32.mrf.mxu0
      %v2432 = vadd.f32 %v2228, %v2431
      %v2433 = vpop.f32.mrf.mxu0
      %v2434 = vadd.f32 %v2230, %v2433
      %2435 = vmatmul.bf16.gmra.mxu0 %v2367
      %v2436 = vpop.f32.mrf.mxu0
      %v2437 = vadd.f32 %v2233, %v2436
      %v2438 = vpop.f32.mrf.mxu0
      %v2439 = vadd.f32 %v2235, %v2438
      %2440 = vmatmul.bf16.gmra.mxu0 %v2370
      %v2441 = vpop.f32.mrf.mxu0
      %v2442 = vadd.f32 %v2238, %v2441
      %v2443 = vpop.f32.mrf.mxu0
      %v2444 = vadd.f32 %v2240, %v2443
      %2445 = vmatmul.bf16.gmra.mxu0 %v2373
      %v2446 = vpop.f32.mrf.mxu0
      %v2447 = vadd.f32 %v2243, %v2446
      %v2448 = vpop.f32.mrf.mxu0
      %v2449 = vadd.f32 %v2245, %v2448
      %2450 = vmatmul.bf16.gmra.mxu0 %v2376
      %v2451 = vpop.f32.mrf.mxu0
      %v2452 = vadd.f32 %v2248, %v2451
      %v2453 = vpop.f32.mrf.mxu0
      %v2454 = vadd.f32 %v2250, %v2453
      %2455 = vmatmul.bf16.gmra.mxu0 %v2379
      %v2456 = vpop.f32.mrf.mxu0
      %v2457 = vadd.f32 %v2253, %v2456
      %v2458 = vpop.f32.mrf.mxu0
      %v2459 = vadd.f32 %v2255, %v2458
      %2460 = vmatmul.bf16.gmra.mxu0 %v2382
      %v2461 = vpop.f32.mrf.mxu0
      %v2462 = vadd.f32 %v2258, %v2461
      %v2463 = vpop.f32.mrf.mxu0
      %v2464 = vadd.f32 %v2260, %v2463
      %2465 = vmatmul.bf16.gmra.mxu0 %v2385
      %v2466 = vpop.f32.mrf.mxu0
      %v2467 = vadd.f32 %v2263, %v2466
      %v2468 = vpop.f32.mrf.mxu0
      %v2469 = vadd.f32 %v2265, %v2468
      %2470 = vmatmul.bf16.gmra.mxu0 %v2388
      %v2471 = vpop.f32.mrf.mxu0
      %v2472 = vadd.f32 %v2268, %v2471
      %v2473 = vpop.f32.mrf.mxu0
      %v2474 = vadd.f32 %v2270, %v2473
      %2475 = vmatmul.bf16.gmra.mxu0 %v2391
      %v2476 = vpop.f32.mrf.mxu0
      %v2477 = vadd.f32 %v2273, %v2476
      %v2478 = vpop.f32.mrf.mxu0
      %v2479 = vadd.f32 %v2275, %v2478
      %2480 = vmatmul.bf16.gmra.mxu0 %v2394
      %v2481 = vpop.f32.mrf.mxu0
      %v2482 = vadd.f32 %v2278, %v2481
      %v2483 = vpop.f32.mrf.mxu0
      %v2484 = vadd.f32 %v2280, %v2483
      %2485 = vmatmul.bf16.gmra.mxu0 %v2397
      %v2486 = vpop.f32.mrf.mxu0
      %v2487 = vadd.f32 %v2283, %v2486
      %v2488 = vpop.f32.mrf.mxu0
      %v2489 = vadd.f32 %v2285, %v2488
      %2490 = vdwg.mxu0
      %s2491 = scalar_lea.vmem %s1, 4
      %v2492 = vld [vmem:[%s2491] sm:$0x3]
      %v2509 = vunpack.c.l.b16 %v874
      %v2510 = vunpack.c.l.b16 %v875
      %v2511 = vunpack.c.l.b16 %v876
      %v2512 = vunpack.c.l.b16 %v877
      %v2513 = vunpack.c.l.b16 %v878
      %v2514 = vunpack.c.l.b16 %v879
      %v2515 = vunpack.c.l.b16 %v880
      %v2516 = vunpack.c.l.b16 %v881
      %v2517 = vunpack.c.l.b16 %v882
      %v2518 = vunpack.c.l.b16 %v883
      %v2519 = vunpack.c.l.b16 %v884
      %v2520 = vunpack.c.l.b16 %v885
      %v2521 = vunpack.c.l.b16 %v886
      %v2522 = vunpack.c.l.b16 %v887
      %v2523 = vunpack.c.l.b16 %v888
      %v2524 = vunpack.c.l.b16 %v889
      %v2525 = vunpack.c.l.b16 %v890
      %v2526 = vunpack.c.l.b16 %v891
      %v2527 = vunpack.c.l.b16 %v892
      %v2528 = vunpack.c.l.b16 %v893
      %v2529 = vunpack.c.l.b16 %v894
      %v2530 = vunpack.c.l.b16 %v895
      %v2531 = vunpack.c.l.b16 %v896
      %v2532 = vunpack.c.l.b16 %v897
      %v2533 = vunpack.c.l.b16 %v898
      %v2534 = vunpack.c.l.b16 %v899
      %v2535 = vunpack.c.l.b16 %v900
      %v2536 = vunpack.c.l.b16 %v901
      %v2537 = vunpack.c.l.b16 %v902
      %v2538 = vunpack.c.l.b16 %v903
      %v2539 = vunpack.c.l.b16 %v904
      %v2540 = vunpack.c.l.b16 %v905
      %v2541 = vpack.c.b16 %v2510, %v2509
      %v2542 = vpack.c.b16 %v2512, %v2511
      %v2543 = vpack.c.b16 %v2514, %v2513
      %v2544 = vpack.c.b16 %v2516, %v2515
      %v2545 = vpack.c.b16 %v2518, %v2517
      %v2546 = vpack.c.b16 %v2520, %v2519
      %v2547 = vpack.c.b16 %v2522, %v2521
      %v2548 = vpack.c.b16 %v2524, %v2523
      %v2549 = vpack.c.b16 %v2526, %v2525
      %v2550 = vpack.c.b16 %v2528, %v2527
      %v2551 = vpack.c.b16 %v2530, %v2529
      %v2552 = vpack.c.b16 %v2532, %v2531
      %v2553 = vpack.c.b16 %v2534, %v2533
      %v2554 = vpack.c.b16 %v2536, %v2535
      %v2555 = vpack.c.b16 %v2538, %v2537
      %v2556 = vpack.c.b16 %v2540, %v2539
      %v2558 = vsel %vm2145, %v2541, 0
      %v2561 = vsel %vm2145, %v2542, 0
      %v2564 = vsel %vm2145, %v2543, 0
      %v2567 = vsel %vm2145, %v2544, 0
      %v2570 = vsel %vm2145, %v2545, 0
      %v2573 = vsel %vm2145, %v2546, 0
      %v2576 = vsel %vm2145, %v2547, 0
      %v2579 = vsel %vm2145, %v2548, 0
      %v2582 = vsel %vm2145, %v2549, 0
      %v2585 = vsel %vm2145, %v2550, 0
      %v2588 = vsel %vm2145, %v2551, 0
      %v2591 = vsel %vm2145, %v2552, 0
      %v2594 = vsel %vm2145, %v2553, 0
      %v2597 = vsel %vm2145, %v2554, 0
      %v2600 = vsel %vm2145, %v2555, 0
      %v2603 = vsel %vm2145, %v2556, 0
      %v2606 = vsel %vm2194, %v2492, 0
      %2608 = vmatpush.bf16.msra.mxu0 0
      %2609 = vmatpush.bf16.msra.mxu0 0
      %2610 = vmatpush.bf16.msra.mxu0 0
      %2611 = vmatpush.bf16.msra.mxu0 0
      %2612 = vmatpush.bf16.msra.mxu0 0
      %2613 = vmatpush.bf16.msra.mxu0 0
      %2614 = vmatpush.bf16.msra.mxu0 0
      %2615 = vmatpush.bf16.msra.mxu0 %v2606
      %2616 = vmatmul.bf16.gmra.mxu0 %v2558
      %v2617 = vpop.f32.mrf.mxu0
      %v2618 = vadd.f32 0.0, %v2617
      %v2619 = vpop.f32.mrf.mxu0
      %v2620 = vadd.f32 0.0, %v2619
      %2621 = vmatmul.bf16.gmra.mxu0 %v2561
      %v2622 = vpop.f32.mrf.mxu0
      %v2623 = vadd.f32 0.0, %v2622
      %v2624 = vpop.f32.mrf.mxu0
      %v2625 = vadd.f32 0.0, %v2624
      %2626 = vmatmul.bf16.gmra.mxu0 %v2564
      %v2627 = vpop.f32.mrf.mxu0
      %v2628 = vadd.f32 0.0, %v2627
      %v2629 = vpop.f32.mrf.mxu0
      %v2630 = vadd.f32 0.0, %v2629
      %2631 = vmatmul.bf16.gmra.mxu0 %v2567
      %v2632 = vpop.f32.mrf.mxu0
      %v2633 = vadd.f32 0.0, %v2632
      %v2634 = vpop.f32.mrf.mxu0
      %v2635 = vadd.f32 0.0, %v2634
      %2636 = vmatmul.bf16.gmra.mxu0 %v2570
      %v2637 = vpop.f32.mrf.mxu0
      %v2638 = vadd.f32 0.0, %v2637
      %v2639 = vpop.f32.mrf.mxu0
      %v2640 = vadd.f32 0.0, %v2639
      %2641 = vmatmul.bf16.gmra.mxu0 %v2573
      %v2642 = vpop.f32.mrf.mxu0
      %v2643 = vadd.f32 0.0, %v2642
      %v2644 = vpop.f32.mrf.mxu0
      %v2645 = vadd.f32 0.0, %v2644
      %2646 = vmatmul.bf16.gmra.mxu0 %v2576
      %v2647 = vpop.f32.mrf.mxu0
      %v2648 = vadd.f32 0.0, %v2647
      %v2649 = vpop.f32.mrf.mxu0
      %v2650 = vadd.f32 0.0, %v2649
      %2651 = vmatmul.bf16.gmra.mxu0 %v2579
      %v2652 = vpop.f32.mrf.mxu0
      %v2653 = vadd.f32 0.0, %v2652
      %v2654 = vpop.f32.mrf.mxu0
      %v2655 = vadd.f32 0.0, %v2654
      %2656 = vmatmul.bf16.gmra.mxu0 %v2582
      %v2657 = vpop.f32.mrf.mxu0
      %v2658 = vadd.f32 0.0, %v2657
      %v2659 = vpop.f32.mrf.mxu0
      %v2660 = vadd.f32 0.0, %v2659
      %2661 = vmatmul.bf16.gmra.mxu0 %v2585
      %v2662 = vpop.f32.mrf.mxu0
      %v2663 = vadd.f32 0.0, %v2662
      %v2664 = vpop.f32.mrf.mxu0
      %v2665 = vadd.f32 0.0, %v2664
      %2666 = vmatmul.bf16.gmra.mxu0 %v2588
      %v2667 = vpop.f32.mrf.mxu0
      %v2668 = vadd.f32 0.0, %v2667
      %v2669 = vpop.f32.mrf.mxu0
      %v2670 = vadd.f32 0.0, %v2669
      %2671 = vmatmul.bf16.gmra.mxu0 %v2591
      %v2672 = vpop.f32.mrf.mxu0
      %v2673 = vadd.f32 0.0, %v2672
      %v2674 = vpop.f32.mrf.mxu0
      %v2675 = vadd.f32 0.0, %v2674
      %2676 = vmatmul.bf16.gmra.mxu0 %v2594
      %v2677 = vpop.f32.mrf.mxu0
      %v2678 = vadd.f32 0.0, %v2677
      %v2679 = vpop.f32.mrf.mxu0
      %v2680 = vadd.f32 0.0, %v2679
      %2681 = vmatmul.bf16.gmra.mxu0 %v2597
      %v2682 = vpop.f32.mrf.mxu0
      %v2683 = vadd.f32 0.0, %v2682
      %v2684 = vpop.f32.mrf.mxu0
      %v2685 = vadd.f32 0.0, %v2684
      %2686 = vmatmul.bf16.gmra.mxu0 %v2600
      %v2687 = vpop.f32.mrf.mxu0
      %v2688 = vadd.f32 0.0, %v2687
      %v2689 = vpop.f32.mrf.mxu0
      %v2690 = vadd.f32 0.0, %v2689
      %2691 = vmatmul.bf16.gmra.mxu0 %v2603
      %v2692 = vpop.f32.mrf.mxu0
      %v2693 = vadd.f32 0.0, %v2692
      %v2694 = vpop.f32.mrf.mxu0
      %v2695 = vadd.f32 0.0, %v2694
      %2696 = vdwg.mxu0
      %v2697 = vadd.f32 %v2412, %v2618
      %v2698 = vadd.f32 %v2414, %v2620
      %v2699 = vadd.f32 %v2417, %v2623
      %v2700 = vadd.f32 %v2419, %v2625
      %v2701 = vadd.f32 %v2422, %v2628
      %v2702 = vadd.f32 %v2424, %v2630
      %v2703 = vadd.f32 %v2427, %v2633
      %v2704 = vadd.f32 %v2429, %v2635
      %v2705 = vadd.f32 %v2432, %v2638
      %v2706 = vadd.f32 %v2434, %v2640
      %v2707 = vadd.f32 %v2437, %v2643
      %v2708 = vadd.f32 %v2439, %v2645
      %v2709 = vadd.f32 %v2442, %v2648
      %v2710 = vadd.f32 %v2444, %v2650
      %v2711 = vadd.f32 %v2447, %v2653
      %v2712 = vadd.f32 %v2449, %v2655
      %v2713 = vadd.f32 %v2452, %v2658
      %v2714 = vadd.f32 %v2454, %v2660
      %v2715 = vadd.f32 %v2457, %v2663
      %v2716 = vadd.f32 %v2459, %v2665
      %v2717 = vadd.f32 %v2462, %v2668
      %v2718 = vadd.f32 %v2464, %v2670
      %v2719 = vadd.f32 %v2467, %v2673
      %v2720 = vadd.f32 %v2469, %v2675
      %v2721 = vadd.f32 %v2472, %v2678
      %v2722 = vadd.f32 %v2474, %v2680
      %v2723 = vadd.f32 %v2477, %v2683
      %v2724 = vadd.f32 %v2479, %v2685
      %v2725 = vadd.f32 %v2482, %v2688
      %v2726 = vadd.f32 %v2484, %v2690
      %v2727 = vadd.f32 %v2487, %v2693
      %v2728 = vadd.f32 %v2489, %v2695
      %s2729 = scalar_lea.vmem %s1, 6
      %v2730 = vld [vmem:[%s2729] sm:$0x3]
      %v2731 = vunpack.c.l.b16 %v935
      %v2732 = vunpack.c.l.b16 %v945
      %v2733 = vunpack.c.l.b16 %v959
      %v2734 = vunpack.c.l.b16 %v969
      %v2735 = vunpack.c.l.b16 %v983
      %v2736 = vunpack.c.l.b16 %v993
      %v2737 = vunpack.c.l.b16 %v1007
      %v2738 = vunpack.c.l.b16 %v1017
      %v2739 = vunpack.c.l.b16 %v1031
      %v2740 = vunpack.c.l.b16 %v1041
      %v2741 = vunpack.c.l.b16 %v1055
      %v2742 = vunpack.c.l.b16 %v1065
      %v2743 = vunpack.c.l.b16 %v1079
      %v2744 = vunpack.c.l.b16 %v1089
      %v2745 = vunpack.c.l.b16 %v1103
      %v2746 = vunpack.c.l.b16 %v1113
      %v2747 = vunpack.c.l.b16 %v1127
      %v2748 = vunpack.c.l.b16 %v1137
      %v2749 = vunpack.c.l.b16 %v1151
      %v2750 = vunpack.c.l.b16 %v1161
      %v2751 = vunpack.c.l.b16 %v1175
      %v2752 = vunpack.c.l.b16 %v1185
      %v2753 = vunpack.c.l.b16 %v1199
      %v2754 = vunpack.c.l.b16 %v1209
      %v2755 = vunpack.c.l.b16 %v1223
      %v2756 = vunpack.c.l.b16 %v1233
      %v2757 = vunpack.c.l.b16 %v1247
      %v2758 = vunpack.c.l.b16 %v1257
      %v2759 = vunpack.c.l.b16 %v1271
      %v2760 = vunpack.c.l.b16 %v1281
      %v2761 = vunpack.c.l.b16 %v1295
      %v2762 = vunpack.c.l.b16 %v1305
      %v2763 = vpack.c.b16 %v2732, %v2731
      %v2764 = vpack.c.b16 %v2734, %v2733
      %v2765 = vpack.c.b16 %v2736, %v2735
      %v2766 = vpack.c.b16 %v2738, %v2737
      %v2767 = vpack.c.b16 %v2740, %v2739
      %v2768 = vpack.c.b16 %v2742, %v2741
      %v2769 = vpack.c.b16 %v2744, %v2743
      %v2770 = vpack.c.b16 %v2746, %v2745
      %v2771 = vpack.c.b16 %v2748, %v2747
      %v2772 = vpack.c.b16 %v2750, %v2749
      %v2773 = vpack.c.b16 %v2752, %v2751
      %v2774 = vpack.c.b16 %v2754, %v2753
      %v2775 = vpack.c.b16 %v2756, %v2755
      %v2776 = vpack.c.b16 %v2758, %v2757
      %v2777 = vpack.c.b16 %v2760, %v2759
      %v2778 = vpack.c.b16 %v2762, %v2761
      %v2780 = vsel %vm2145, %v2763, 0
      %v2783 = vsel %vm2145, %v2764, 0
      %v2786 = vsel %vm2145, %v2765, 0
      %v2789 = vsel %vm2145, %v2766, 0
      %v2792 = vsel %vm2145, %v2767, 0
      %v2795 = vsel %vm2145, %v2768, 0
      %v2798 = vsel %vm2145, %v2769, 0
      %v2801 = vsel %vm2145, %v2770, 0
      %v2804 = vsel %vm2145, %v2771, 0
      %v2807 = vsel %vm2145, %v2772, 0
      %v2810 = vsel %vm2145, %v2773, 0
      %v2813 = vsel %vm2145, %v2774, 0
      %v2816 = vsel %vm2145, %v2775, 0
      %v2819 = vsel %vm2145, %v2776, 0
      %v2822 = vsel %vm2145, %v2777, 0
      %v2825 = vsel %vm2145, %v2778, 0
      %v2828 = vsel %vm2194, %v2730, 0
      %2830 = vmatpush.bf16.msra.mxu0 0
      %2831 = vmatpush.bf16.msra.mxu0 0
      %2832 = vmatpush.bf16.msra.mxu0 0
      %2833 = vmatpush.bf16.msra.mxu0 0
      %2834 = vmatpush.bf16.msra.mxu0 0
      %2835 = vmatpush.bf16.msra.mxu0 0
      %2836 = vmatpush.bf16.msra.mxu0 0
      %2837 = vmatpush.bf16.msra.mxu0 %v2828
      %2838 = vmatmul.bf16.gmra.mxu0 %v2780
      %v2839 = vpop.f32.mrf.mxu0
      %v2840 = vadd.f32 0.0, %v2839
      %v2841 = vpop.f32.mrf.mxu0
      %v2842 = vadd.f32 0.0, %v2841
      %2843 = vmatmul.bf16.gmra.mxu0 %v2783
      %v2844 = vpop.f32.mrf.mxu0
      %v2845 = vadd.f32 0.0, %v2844
      %v2846 = vpop.f32.mrf.mxu0
      %v2847 = vadd.f32 0.0, %v2846
      %2848 = vmatmul.bf16.gmra.mxu0 %v2786
      %v2849 = vpop.f32.mrf.mxu0
      %v2850 = vadd.f32 0.0, %v2849
      %v2851 = vpop.f32.mrf.mxu0
      %v2852 = vadd.f32 0.0, %v2851
      %2853 = vmatmul.bf16.gmra.mxu0 %v2789
      %v2854 = vpop.f32.mrf.mxu0
      %v2855 = vadd.f32 0.0, %v2854
      %v2856 = vpop.f32.mrf.mxu0
      %v2857 = vadd.f32 0.0, %v2856
      %2858 = vmatmul.bf16.gmra.mxu0 %v2792
      %v2859 = vpop.f32.mrf.mxu0
      %v2860 = vadd.f32 0.0, %v2859
      %v2861 = vpop.f32.mrf.mxu0
      %v2862 = vadd.f32 0.0, %v2861
      %2863 = vmatmul.bf16.gmra.mxu0 %v2795
      %v2864 = vpop.f32.mrf.mxu0
      %v2865 = vadd.f32 0.0, %v2864
      %v2866 = vpop.f32.mrf.mxu0
      %v2867 = vadd.f32 0.0, %v2866
      %2868 = vmatmul.bf16.gmra.mxu0 %v2798
      %v2869 = vpop.f32.mrf.mxu0
      %v2870 = vadd.f32 0.0, %v2869
      %v2871 = vpop.f32.mrf.mxu0
      %v2872 = vadd.f32 0.0, %v2871
      %2873 = vmatmul.bf16.gmra.mxu0 %v2801
      %v2874 = vpop.f32.mrf.mxu0
      %v2875 = vadd.f32 0.0, %v2874
      %v2876 = vpop.f32.mrf.mxu0
      %v2877 = vadd.f32 0.0, %v2876
      %2878 = vmatmul.bf16.gmra.mxu0 %v2804
      %v2879 = vpop.f32.mrf.mxu0
      %v2880 = vadd.f32 0.0, %v2879
      %v2881 = vpop.f32.mrf.mxu0
      %v2882 = vadd.f32 0.0, %v2881
      %2883 = vmatmul.bf16.gmra.mxu0 %v2807
      %v2884 = vpop.f32.mrf.mxu0
      %v2885 = vadd.f32 0.0, %v2884
      %v2886 = vpop.f32.mrf.mxu0
      %v2887 = vadd.f32 0.0, %v2886
      %2888 = vmatmul.bf16.gmra.mxu0 %v2810
      %v2889 = vpop.f32.mrf.mxu0
      %v2890 = vadd.f32 0.0, %v2889
      %v2891 = vpop.f32.mrf.mxu0
      %v2892 = vadd.f32 0.0, %v2891
      %2893 = vmatmul.bf16.gmra.mxu0 %v2813
      %v2894 = vpop.f32.mrf.mxu0
      %v2895 = vadd.f32 0.0, %v2894
      %v2896 = vpop.f32.mrf.mxu0
      %v2897 = vadd.f32 0.0, %v2896
      %2898 = vmatmul.bf16.gmra.mxu0 %v2816
      %v2899 = vpop.f32.mrf.mxu0
      %v2900 = vadd.f32 0.0, %v2899
      %v2901 = vpop.f32.mrf.mxu0
      %v2902 = vadd.f32 0.0, %v2901
      %2903 = vmatmul.bf16.gmra.mxu0 %v2819
      %v2904 = vpop.f32.mrf.mxu0
      %v2905 = vadd.f32 0.0, %v2904
      %v2906 = vpop.f32.mrf.mxu0
      %v2907 = vadd.f32 0.0, %v2906
      %2908 = vmatmul.bf16.gmra.mxu0 %v2822
      %v2909 = vpop.f32.mrf.mxu0
      %v2910 = vadd.f32 0.0, %v2909
      %v2911 = vpop.f32.mrf.mxu0
      %v2912 = vadd.f32 0.0, %v2911
      %2913 = vmatmul.bf16.gmra.mxu0 %v2825
      %v2914 = vpop.f32.mrf.mxu0
      %v2915 = vadd.f32 0.0, %v2914
      %v2916 = vpop.f32.mrf.mxu0
      %v2917 = vadd.f32 0.0, %v2916
      %2918 = vdwg.mxu0
      %v2919 = vadd.f32 %v2697, %v2840
      %v2920 = vadd.f32 %v2698, %v2842
      %v2921 = vadd.f32 %v2699, %v2845
      %v2922 = vadd.f32 %v2700, %v2847
      %v2923 = vadd.f32 %v2701, %v2850
      %v2924 = vadd.f32 %v2702, %v2852
      %v2925 = vadd.f32 %v2703, %v2855
      %v2926 = vadd.f32 %v2704, %v2857
      %v2927 = vadd.f32 %v2705, %v2860
      %v2928 = vadd.f32 %v2706, %v2862
      %v2929 = vadd.f32 %v2707, %v2865
      %v2930 = vadd.f32 %v2708, %v2867
      %v2931 = vadd.f32 %v2709, %v2870
      %v2932 = vadd.f32 %v2710, %v2872
      %v2933 = vadd.f32 %v2711, %v2875
      %v2934 = vadd.f32 %v2712, %v2877
      %v2935 = vadd.f32 %v2713, %v2880
      %v2936 = vadd.f32 %v2714, %v2882
      %v2937 = vadd.f32 %v2715, %v2885
      %v2938 = vadd.f32 %v2716, %v2887
      %v2939 = vadd.f32 %v2717, %v2890
      %v2940 = vadd.f32 %v2718, %v2892
      %v2941 = vadd.f32 %v2719, %v2895
      %v2942 = vadd.f32 %v2720, %v2897
      %v2943 = vadd.f32 %v2721, %v2900
      %v2944 = vadd.f32 %v2722, %v2902
      %v2945 = vadd.f32 %v2723, %v2905
      %v2946 = vadd.f32 %v2724, %v2907
      %v2947 = vadd.f32 %v2725, %v2910
      %v2948 = vadd.f32 %v2726, %v2912
      %v2949 = vadd.f32 %v2727, %v2915
      %v2950 = vadd.f32 %v2728, %v2917
      %v2951 = vadd.f32 %v2919, %v2920
      %v2952 = vadd.f32 %v2951, %v2921
      %v2953 = vadd.f32 %v2952, %v2922
      %v2954 = vadd.f32 %v2953, %v2923
      %v2955 = vadd.f32 %v2954, %v2924
      %v2956 = vadd.f32 %v2955, %v2925
      %v2957 = vadd.f32 %v2956, %v2926
      %v2958 = vadd.f32 %v2957, %v2927
      %v2959 = vadd.f32 %v2958, %v2928
      %v2960 = vadd.f32 %v2959, %v2929
      %v2961 = vadd.f32 %v2960, %v2930
      %v2962 = vadd.f32 %v2961, %v2931
      %v2963 = vadd.f32 %v2962, %v2932
      %v2964 = vadd.f32 %v2963, %v2933
      %v2965 = vadd.f32 %v2964, %v2934
      %v2966 = vadd.f32 %v2965, %v2935
      %v2967 = vadd.f32 %v2966, %v2936
      %v2968 = vadd.f32 %v2967, %v2937
      %v2969 = vadd.f32 %v2968, %v2938
      %v2970 = vadd.f32 %v2969, %v2939
      %v2971 = vadd.f32 %v2970, %v2940
      %v2972 = vadd.f32 %v2971, %v2941
      %v2973 = vadd.f32 %v2972, %v2942
      %v2974 = vadd.f32 %v2973, %v2943
      %v2975 = vadd.f32 %v2974, %v2944
      %v2976 = vadd.f32 %v2975, %v2945
      %v2977 = vadd.f32 %v2976, %v2946
      %v2978 = vadd.f32 %v2977, %v2947
      %v2979 = vadd.f32 %v2978, %v2948
      %v2980 = vadd.f32 %v2979, %v2949
      %v2981 = vadd.f32 %v2980, %v2950
      %v2982 = vrot.slane %v2981, 4
      %v2983 = vadd.f32 %v2981, %v2982
      %v2984 = vrot.slane %v2983, 2
      %v2985 = vadd.f32 %v2983, %v2984
      %v2986 = vrot.slane %v2985, 1
      %v2987 = vadd.f32 %v2985, %v2986
      %v2988 = vadd.f32 %v2987, 0.0
      %v2989 = vmul.f32 %v2919, %v2919
      %v2990 = vmul.f32 %v2920, %v2920
      %v2991 = vmul.f32 %v2921, %v2921
      %v2992 = vmul.f32 %v2922, %v2922
      %v2993 = vmul.f32 %v2923, %v2923
      %v2994 = vmul.f32 %v2924, %v2924
      %v2995 = vmul.f32 %v2925, %v2925
      %v2996 = vmul.f32 %v2926, %v2926
      %v2997 = vmul.f32 %v2927, %v2927
      %v2998 = vmul.f32 %v2928, %v2928
      %v2999 = vmul.f32 %v2929, %v2929
      %v3000 = vmul.f32 %v2930, %v2930
      %v3001 = vmul.f32 %v2931, %v2931
      %v3002 = vmul.f32 %v2932, %v2932
      %v3003 = vmul.f32 %v2933, %v2933
      %v3004 = vmul.f32 %v2934, %v2934
      %v3005 = vmul.f32 %v2935, %v2935
      %v3006 = vmul.f32 %v2936, %v2936
      %v3007 = vmul.f32 %v2937, %v2937
      %v3008 = vmul.f32 %v2938, %v2938
      %v3009 = vmul.f32 %v2939, %v2939
      %v3010 = vmul.f32 %v2940, %v2940
      %v3011 = vmul.f32 %v2941, %v2941
      %v3012 = vmul.f32 %v2942, %v2942
      %v3013 = vmul.f32 %v2943, %v2943
      %v3014 = vmul.f32 %v2944, %v2944
      %v3015 = vmul.f32 %v2945, %v2945
      %v3016 = vmul.f32 %v2946, %v2946
      %v3017 = vmul.f32 %v2947, %v2947
      %v3018 = vmul.f32 %v2948, %v2948
      %v3019 = vmul.f32 %v2949, %v2949
      %v3020 = vmul.f32 %v2950, %v2950
      %v3021 = vadd.f32 %v2989, %v2990
      %v3022 = vadd.f32 %v3021, %v2991
      %v3023 = vadd.f32 %v3022, %v2992
      %v3024 = vadd.f32 %v3023, %v2993
      %v3025 = vadd.f32 %v3024, %v2994
      %v3026 = vadd.f32 %v3025, %v2995
      %v3027 = vadd.f32 %v3026, %v2996
      %v3028 = vadd.f32 %v3027, %v2997
      %v3029 = vadd.f32 %v3028, %v2998
      %v3030 = vadd.f32 %v3029, %v2999
      %v3031 = vadd.f32 %v3030, %v3000
      %v3032 = vadd.f32 %v3031, %v3001
      %v3033 = vadd.f32 %v3032, %v3002
      %v3034 = vadd.f32 %v3033, %v3003
      %v3035 = vadd.f32 %v3034, %v3004
      %v3036 = vadd.f32 %v3035, %v3005
      %v3037 = vadd.f32 %v3036, %v3006
      %v3038 = vadd.f32 %v3037, %v3007
      %v3039 = vadd.f32 %v3038, %v3008
      %v3040 = vadd.f32 %v3039, %v3009
      %v3041 = vadd.f32 %v3040, %v3010
      %v3042 = vadd.f32 %v3041, %v3011
      %v3043 = vadd.f32 %v3042, %v3012
      %v3044 = vadd.f32 %v3043, %v3013
      %v3045 = vadd.f32 %v3044, %v3014
      %v3046 = vadd.f32 %v3045, %v3015
      %v3047 = vadd.f32 %v3046, %v3016
      %v3048 = vadd.f32 %v3047, %v3017
      %v3049 = vadd.f32 %v3048, %v3018
      %v3050 = vadd.f32 %v3049, %v3019
      %v3051 = vadd.f32 %v3050, %v3020
      %v3052 = vrot.slane %v3051, 4
      %v3053 = vadd.f32 %v3051, %v3052
      %v3054 = vrot.slane %v3053, 2
      %v3055 = vadd.f32 %v3053, %v3054
      %v3056 = vrot.slane %v3055, 1
      %v3057 = vadd.f32 %v3055, %v3056
      %v3058 = vadd.f32 %v3057, 0.0
      %v3059 = vpack.c.bf16 %v2919, %v2919
      %v3060 = vpack.c.bf16 %v2920, %v2920
      %v3061 = vpack.c.bf16 %v2921, %v2921
      %v3062 = vpack.c.bf16 %v2922, %v2922
      %v3063 = vpack.c.bf16 %v2923, %v2923
      %v3064 = vpack.c.bf16 %v2924, %v2924
      %v3065 = vpack.c.bf16 %v2925, %v2925
      %v3066 = vpack.c.bf16 %v2926, %v2926
      %v3067 = vpack.c.bf16 %v2927, %v2927
      %v3068 = vpack.c.bf16 %v2928, %v2928
      %v3069 = vpack.c.bf16 %v2929, %v2929
      %v3070 = vpack.c.bf16 %v2930, %v2930
      %v3071 = vpack.c.bf16 %v2931, %v2931
      %v3072 = vpack.c.bf16 %v2932, %v2932
      %v3073 = vpack.c.bf16 %v2933, %v2933
      %v3074 = vpack.c.bf16 %v2934, %v2934
      %v3075 = vpack.c.bf16 %v2935, %v2935
      %v3076 = vpack.c.bf16 %v2936, %v2936
      %v3077 = vpack.c.bf16 %v2937, %v2937
      %v3078 = vpack.c.bf16 %v2938, %v2938
      %v3079 = vpack.c.bf16 %v2939, %v2939
      %v3080 = vpack.c.bf16 %v2940, %v2940
      %v3081 = vpack.c.bf16 %v2941, %v2941
      %v3082 = vpack.c.bf16 %v2942, %v2942
      %v3083 = vpack.c.bf16 %v2943, %v2943
      %v3084 = vpack.c.bf16 %v2944, %v2944
      %v3085 = vpack.c.bf16 %v2945, %v2945
      %v3086 = vpack.c.bf16 %v2946, %v2946
      %v3087 = vpack.c.bf16 %v2947, %v2947
      %v3088 = vpack.c.bf16 %v2948, %v2948
      %v3089 = vpack.c.bf16 %v2949, %v2949
      %v3090 = vpack.c.bf16 %v2950, %v2950
      %3091 = vst [vmem:[%s236] sm:$0xf] %v3059
      %3092 = vst [vmem:[%s236 + $0x8] sm:$0xf] %v3060
      %3093 = vst [vmem:[%s236 + $0x20] sm:$0xf] %v3061
      %3094 = vst [vmem:[%s236 + $0x28] sm:$0xf] %v3062
      %3095 = vst [vmem:[%s236 + $0x40] sm:$0xf] %v3063
      %3096 = vst [vmem:[%s236 + $0x48] sm:$0xf] %v3064
      %3097 = vst [vmem:[%s236 + $0x60] sm:$0xf] %v3065
      %3098 = vst [vmem:[%s236 + $0x68] sm:$0xf] %v3066
      %3099 = vst [vmem:[%s236 + $0x80] sm:$0xf] %v3067
      %3100 = vst [vmem:[%s236 + $0x88] sm:$0xf] %v3068
      %3101 = vst [vmem:[%s236 + $0xa0] sm:$0xf] %v3069
      %3102 = vst [vmem:[%s236 + $0xa8] sm:$0xf] %v3070
      %3103 = vst [vmem:[%s236 + $0xc0] sm:$0xf] %v3071
      %3104 = vst [vmem:[%s236 + $0xc8] sm:$0xf] %v3072
      %3105 = vst [vmem:[%s236 + $0xe0] sm:$0xf] %v3073
      %3106 = vst [vmem:[%s236 + $0xe8] sm:$0xf] %v3074
      %3107 = vst [vmem:[%s236 + $0x100] sm:$0xf] %v3075
      %3108 = vst [vmem:[%s236 + $0x108] sm:$0xf] %v3076
      %3109 = vst [vmem:[%s236 + $0x120] sm:$0xf] %v3077
      %3110 = vst [vmem:[%s236 + $0x128] sm:$0xf] %v3078
      %3111 = vst [vmem:[%s236 + $0x140] sm:$0xf] %v3079
      %3112 = vst [vmem:[%s236 + $0x148] sm:$0xf] %v3080
      %3113 = vst [vmem:[%s236 + $0x160] sm:$0xf] %v3081
      %3114 = vst [vmem:[%s236 + $0x168] sm:$0xf] %v3082
      %3115 = vst [vmem:[%s236 + $0x180] sm:$0xf] %v3083
      %3116 = vst [vmem:[%s236 + $0x188] sm:$0xf] %v3084
      %3117 = vst [vmem:[%s236 + $0x1a0] sm:$0xf] %v3085
      %3118 = vst [vmem:[%s236 + $0x1a8] sm:$0xf] %v3086
      %3119 = vst [vmem:[%s236 + $0x1c0] sm:$0xf] %v3087
      %3120 = vst [vmem:[%s236 + $0x1c8] sm:$0xf] %v3088
      %3121 = vst [vmem:[%s236 + $0x1e0] sm:$0xf] %v3089
      %3122 = vst [vmem:[%s236 + $0x1e8] sm:$0xf] %v3090
      %s3123 = scalar_lea.vmem %s1, 8
      %v3124 = vld [vmem:[%s3123] sm:$0x3]
      %s3125 = scalar_lea.vmem %s1, 10
      %v3126 = vld [vmem:[%s3125] sm:$0x3]
      %v3127 = vunpack.c.l.b16 %v761
      %v3128 = vunpack.c.l.b16 %v764
      %v3129 = vunpack.c.l.b16 %v768
      %v3130 = vunpack.c.l.b16 %v771
      %v3131 = vunpack.c.l.b16 %v775
      %v3132 = vunpack.c.l.b16 %v778
      %v3133 = vunpack.c.l.b16 %v782
      %v3134 = vunpack.c.l.b16 %v785
      %v3135 = vunpack.c.l.b16 %v789
      %v3136 = vunpack.c.l.b16 %v792
      %v3137 = vunpack.c.l.b16 %v796
      %v3138 = vunpack.c.l.b16 %v799
      %v3139 = vunpack.c.l.b16 %v803
      %v3140 = vunpack.c.l.b16 %v806
      %v3141 = vunpack.c.l.b16 %v810
      %v3142 = vunpack.c.l.b16 %v813
      %v3143 = vunpack.c.l.b16 %v817
      %v3144 = vunpack.c.l.b16 %v820
      %v3145 = vunpack.c.l.b16 %v824
      %v3146 = vunpack.c.l.b16 %v827
      %v3147 = vunpack.c.l.b16 %v831
      %v3148 = vunpack.c.l.b16 %v834
      %v3149 = vunpack.c.l.b16 %v838
      %v3150 = vunpack.c.l.b16 %v841
      %v3151 = vunpack.c.l.b16 %v845
      %v3152 = vunpack.c.l.b16 %v848
      %v3153 = vunpack.c.l.b16 %v852
      %v3154 = vunpack.c.l.b16 %v855
      %v3155 = vunpack.c.l.b16 %v859
      %v3156 = vunpack.c.l.b16 %v862
      %v3157 = vunpack.c.l.b16 %v866
      %v3158 = vunpack.c.l.b16 %v869
      %v3159 = vpack.c.b16 %v3128, %v3127
      %v3160 = vpack.c.b16 %v3130, %v3129
      %v3161 = vpack.c.b16 %v3132, %v3131
      %v3162 = vpack.c.b16 %v3134, %v3133
      %v3163 = vpack.c.b16 %v3136, %v3135
      %v3164 = vpack.c.b16 %v3138, %v3137
      %v3165 = vpack.c.b16 %v3140, %v3139
      %v3166 = vpack.c.b16 %v3142, %v3141
      %v3167 = vpack.c.b16 %v3144, %v3143
      %v3168 = vpack.c.b16 %v3146, %v3145
      %v3169 = vpack.c.b16 %v3148, %v3147
      %v3170 = vpack.c.b16 %v3150, %v3149
      %v3171 = vpack.c.b16 %v3152, %v3151
      %v3172 = vpack.c.b16 %v3154, %v3153
      %v3173 = vpack.c.b16 %v3156, %v3155
      %v3174 = vpack.c.b16 %v3158, %v3157
      %v3176 = vsel %vm2145, %v3159, 0
      %v3179 = vsel %vm2145, %v3160, 0
      %v3182 = vsel %vm2145, %v3161, 0
      %v3185 = vsel %vm2145, %v3162, 0
      %v3188 = vsel %vm2145, %v3163, 0
      %v3191 = vsel %vm2145, %v3164, 0
      %v3194 = vsel %vm2145, %v3165, 0
      %v3197 = vsel %vm2145, %v3166, 0
      %v3200 = vsel %vm2145, %v3167, 0
      %v3203 = vsel %vm2145, %v3168, 0
      %v3206 = vsel %vm2145, %v3169, 0
      %v3209 = vsel %vm2145, %v3170, 0
      %v3212 = vsel %vm2145, %v3171, 0
      %v3215 = vsel %vm2145, %v3172, 0
      %v3218 = vsel %vm2145, %v3173, 0
      %v3221 = vsel %vm2145, %v3174, 0
      %v3224 = vsel %vm2194, %v3126, 0
      %3226 = vmatpush.bf16.msra.mxu0 0
      %3227 = vmatpush.bf16.msra.mxu0 0
      %3228 = vmatpush.bf16.msra.mxu0 0
      %3229 = vmatpush.bf16.msra.mxu0 0
      %3230 = vmatpush.bf16.msra.mxu0 0
      %3231 = vmatpush.bf16.msra.mxu0 0
      %3232 = vmatpush.bf16.msra.mxu0 0
      %3233 = vmatpush.bf16.msra.mxu0 %v3224
      %3234 = vmatmul.bf16.gmra.mxu0 %v3176
      %v3235 = vpop.f32.mrf.mxu0
      %v3236 = vadd.f32 0.0, %v3235
      %v3237 = vpop.f32.mrf.mxu0
      %v3238 = vadd.f32 0.0, %v3237
      %3239 = vmatmul.bf16.gmra.mxu0 %v3179
      %v3240 = vpop.f32.mrf.mxu0
      %v3241 = vadd.f32 0.0, %v3240
      %v3242 = vpop.f32.mrf.mxu0
      %v3243 = vadd.f32 0.0, %v3242
      %3244 = vmatmul.bf16.gmra.mxu0 %v3182
      %v3245 = vpop.f32.mrf.mxu0
      %v3246 = vadd.f32 0.0, %v3245
      %v3247 = vpop.f32.mrf.mxu0
      %v3248 = vadd.f32 0.0, %v3247
      %3249 = vmatmul.bf16.gmra.mxu0 %v3185
      %v3250 = vpop.f32.mrf.mxu0
      %v3251 = vadd.f32 0.0, %v3250
      %v3252 = vpop.f32.mrf.mxu0
      %v3253 = vadd.f32 0.0, %v3252
      %3254 = vmatmul.bf16.gmra.mxu0 %v3188
      %v3255 = vpop.f32.mrf.mxu0
      %v3256 = vadd.f32 0.0, %v3255
      %v3257 = vpop.f32.mrf.mxu0
      %v3258 = vadd.f32 0.0, %v3257
      %3259 = vmatmul.bf16.gmra.mxu0 %v3191
      %v3260 = vpop.f32.mrf.mxu0
      %v3261 = vadd.f32 0.0, %v3260
      %v3262 = vpop.f32.mrf.mxu0
      %v3263 = vadd.f32 0.0, %v3262
      %3264 = vmatmul.bf16.gmra.mxu0 %v3194
      %v3265 = vpop.f32.mrf.mxu0
      %v3266 = vadd.f32 0.0, %v3265
      %v3267 = vpop.f32.mrf.mxu0
      %v3268 = vadd.f32 0.0, %v3267
      %3269 = vmatmul.bf16.gmra.mxu0 %v3197
      %v3270 = vpop.f32.mrf.mxu0
      %v3271 = vadd.f32 0.0, %v3270
      %v3272 = vpop.f32.mrf.mxu0
      %v3273 = vadd.f32 0.0, %v3272
      %3274 = vmatmul.bf16.gmra.mxu0 %v3200
      %v3275 = vpop.f32.mrf.mxu0
      %v3276 = vadd.f32 0.0, %v3275
      %v3277 = vpop.f32.mrf.mxu0
      %v3278 = vadd.f32 0.0, %v3277
      %3279 = vmatmul.bf16.gmra.mxu0 %v3203
      %v3280 = vpop.f32.mrf.mxu0
      %v3281 = vadd.f32 0.0, %v3280
      %v3282 = vpop.f32.mrf.mxu0
      %v3283 = vadd.f32 0.0, %v3282
      %3284 = vmatmul.bf16.gmra.mxu0 %v3206
      %v3285 = vpop.f32.mrf.mxu0
      %v3286 = vadd.f32 0.0, %v3285
      %v3287 = vpop.f32.mrf.mxu0
      %v3288 = vadd.f32 0.0, %v3287
      %3289 = vmatmul.bf16.gmra.mxu0 %v3209
      %v3290 = vpop.f32.mrf.mxu0
      %v3291 = vadd.f32 0.0, %v3290
      %v3292 = vpop.f32.mrf.mxu0
      %v3293 = vadd.f32 0.0, %v3292
      %3294 = vmatmul.bf16.gmra.mxu0 %v3212
      %v3295 = vpop.f32.mrf.mxu0
      %v3296 = vadd.f32 0.0, %v3295
      %v3297 = vpop.f32.mrf.mxu0
      %v3298 = vadd.f32 0.0, %v3297
      %3299 = vmatmul.bf16.gmra.mxu0 %v3215
      %v3300 = vpop.f32.mrf.mxu0
      %v3301 = vadd.f32 0.0, %v3300
      %v3302 = vpop.f32.mrf.mxu0
      %v3303 = vadd.f32 0.0, %v3302
      %3304 = vmatmul.bf16.gmra.mxu0 %v3218
      %v3305 = vpop.f32.mrf.mxu0
      %v3306 = vadd.f32 0.0, %v3305
      %v3307 = vpop.f32.mrf.mxu0
      %v3308 = vadd.f32 0.0, %v3307
      %3309 = vmatmul.bf16.gmra.mxu0 %v3221
      %v3310 = vpop.f32.mrf.mxu0
      %v3311 = vadd.f32 0.0, %v3310
      %v3312 = vpop.f32.mrf.mxu0
      %v3313 = vadd.f32 0.0, %v3312
      %3314 = vdwg.mxu0
      %v3316 = vsel %vm2194, %v3124, 0
      %3318 = vmatpush.bf16.msra.mxu0 0
      %3319 = vmatpush.bf16.msra.mxu0 0
      %3320 = vmatpush.bf16.msra.mxu0 0
      %3321 = vmatpush.bf16.msra.mxu0 0
      %3322 = vmatpush.bf16.msra.mxu0 0
      %3323 = vmatpush.bf16.msra.mxu0 0
      %3324 = vmatpush.bf16.msra.mxu0 0
      %3325 = vmatpush.bf16.msra.mxu0 %v3316
      %3326 = vmatmul.bf16.gmra.mxu0 %v2147
      %v3327 = vpop.f32.mrf.mxu0
      %v3328 = vadd.f32 %v3236, %v3327
      %v3329 = vpop.f32.mrf.mxu0
      %v3330 = vadd.f32 %v3238, %v3329
      %3331 = vmatmul.bf16.gmra.mxu0 %v2150
      %v3332 = vpop.f32.mrf.mxu0
      %v3333 = vadd.f32 %v3241, %v3332
      %v3334 = vpop.f32.mrf.mxu0
      %v3335 = vadd.f32 %v3243, %v3334
      %3336 = vmatmul.bf16.gmra.mxu0 %v2153
      %v3337 = vpop.f32.mrf.mxu0
      %v3338 = vadd.f32 %v3246, %v3337
      %v3339 = vpop.f32.mrf.mxu0
      %v3340 = vadd.f32 %v3248, %v3339
      %3341 = vmatmul.bf16.gmra.mxu0 %v2156
      %v3342 = vpop.f32.mrf.mxu0
      %v3343 = vadd.f32 %v3251, %v3342
      %v3344 = vpop.f32.mrf.mxu0
      %v3345 = vadd.f32 %v3253, %v3344
      %3346 = vmatmul.bf16.gmra.mxu0 %v2159
      %v3347 = vpop.f32.mrf.mxu0
      %v3348 = vadd.f32 %v3256, %v3347
      %v3349 = vpop.f32.mrf.mxu0
      %v3350 = vadd.f32 %v3258, %v3349
      %3351 = vmatmul.bf16.gmra.mxu0 %v2162
      %v3352 = vpop.f32.mrf.mxu0
      %v3353 = vadd.f32 %v3261, %v3352
      %v3354 = vpop.f32.mrf.mxu0
      %v3355 = vadd.f32 %v3263, %v3354
      %3356 = vmatmul.bf16.gmra.mxu0 %v2165
      %v3357 = vpop.f32.mrf.mxu0
      %v3358 = vadd.f32 %v3266, %v3357
      %v3359 = vpop.f32.mrf.mxu0
      %v3360 = vadd.f32 %v3268, %v3359
      %3361 = vmatmul.bf16.gmra.mxu0 %v2168
      %v3362 = vpop.f32.mrf.mxu0
      %v3363 = vadd.f32 %v3271, %v3362
      %v3364 = vpop.f32.mrf.mxu0
      %v3365 = vadd.f32 %v3273, %v3364
      %3366 = vmatmul.bf16.gmra.mxu0 %v2171
      %v3367 = vpop.f32.mrf.mxu0
      %v3368 = vadd.f32 %v3276, %v3367
      %v3369 = vpop.f32.mrf.mxu0
      %v3370 = vadd.f32 %v3278, %v3369
      %3371 = vmatmul.bf16.gmra.mxu0 %v2174
      %v3372 = vpop.f32.mrf.mxu0
      %v3373 = vadd.f32 %v3281, %v3372
      %v3374 = vpop.f32.mrf.mxu0
      %v3375 = vadd.f32 %v3283, %v3374
      %3376 = vmatmul.bf16.gmra.mxu0 %v2177
      %v3377 = vpop.f32.mrf.mxu0
      %v3378 = vadd.f32 %v3286, %v3377
      %v3379 = vpop.f32.mrf.mxu0
      %v3380 = vadd.f32 %v3288, %v3379
      %3381 = vmatmul.bf16.gmra.mxu0 %v2180
      %v3382 = vpop.f32.mrf.mxu0
      %v3383 = vadd.f32 %v3291, %v3382
      %v3384 = vpop.f32.mrf.mxu0
      %v3385 = vadd.f32 %v3293, %v3384
      %3386 = vmatmul.bf16.gmra.mxu0 %v2183
      %v3387 = vpop.f32.mrf.mxu0
      %v3388 = vadd.f32 %v3296, %v3387
      %v3389 = vpop.f32.mrf.mxu0
      %v3390 = vadd.f32 %v3298, %v3389
      %3391 = vmatmul.bf16.gmra.mxu0 %v2186
      %v3392 = vpop.f32.mrf.mxu0
      %v3393 = vadd.f32 %v3301, %v3392
      %v3394 = vpop.f32.mrf.mxu0
      %v3395 = vadd.f32 %v3303, %v3394
      %3396 = vmatmul.bf16.gmra.mxu0 %v2189
      %v3397 = vpop.f32.mrf.mxu0
      %v3398 = vadd.f32 %v3306, %v3397
      %v3399 = vpop.f32.mrf.mxu0
      %v3400 = vadd.f32 %v3308, %v3399
      %3401 = vmatmul.bf16.gmra.mxu0 %v2192
      %v3402 = vpop.f32.mrf.mxu0
      %v3403 = vadd.f32 %v3311, %v3402
      %v3404 = vpop.f32.mrf.mxu0
      %v3405 = vadd.f32 %v3313, %v3404
      %3406 = vdwg.mxu0
      %s3407 = scalar_lea.vmem %s1, 12
      %v3408 = vld [vmem:[%s3407] sm:$0x3]
      %v3410 = vsel %vm2194, %v3408, 0
      %3412 = vmatpush.bf16.msra.mxu0 0
      %3413 = vmatpush.bf16.msra.mxu0 0
      %3414 = vmatpush.bf16.msra.mxu0 0
      %3415 = vmatpush.bf16.msra.mxu0 0
      %3416 = vmatpush.bf16.msra.mxu0 0
      %3417 = vmatpush.bf16.msra.mxu0 0
      %3418 = vmatpush.bf16.msra.mxu0 0
      %3419 = vmatpush.bf16.msra.mxu0 %v3410
      %3420 = vmatmul.bf16.gmra.mxu0 %v2780
      %v3421 = vpop.f32.mrf.mxu0
      %v3422 = vadd.f32 0.0, %v3421
      %v3423 = vpop.f32.mrf.mxu0
      %v3424 = vadd.f32 0.0, %v3423
      %3425 = vmatmul.bf16.gmra.mxu0 %v2783
      %v3426 = vpop.f32.mrf.mxu0
      %v3427 = vadd.f32 0.0, %v3426
      %v3428 = vpop.f32.mrf.mxu0
      %v3429 = vadd.f32 0.0, %v3428
      %3430 = vmatmul.bf16.gmra.mxu0 %v2786
      %v3431 = vpop.f32.mrf.mxu0
      %v3432 = vadd.f32 0.0, %v3431
      %v3433 = vpop.f32.mrf.mxu0
      %v3434 = vadd.f32 0.0, %v3433
      %3435 = vmatmul.bf16.gmra.mxu0 %v2789
      %v3436 = vpop.f32.mrf.mxu0
      %v3437 = vadd.f32 0.0, %v3436
      %v3438 = vpop.f32.mrf.mxu0
      %v3439 = vadd.f32 0.0, %v3438
      %3440 = vmatmul.bf16.gmra.mxu0 %v2792
      %v3441 = vpop.f32.mrf.mxu0
      %v3442 = vadd.f32 0.0, %v3441
      %v3443 = vpop.f32.mrf.mxu0
      %v3444 = vadd.f32 0.0, %v3443
      %3445 = vmatmul.bf16.gmra.mxu0 %v2795
      %v3446 = vpop.f32.mrf.mxu0
      %v3447 = vadd.f32 0.0, %v3446
      %v3448 = vpop.f32.mrf.mxu0
      %v3449 = vadd.f32 0.0, %v3448
      %3450 = vmatmul.bf16.gmra.mxu0 %v2798
      %v3451 = vpop.f32.mrf.mxu0
      %v3452 = vadd.f32 0.0, %v3451
      %v3453 = vpop.f32.mrf.mxu0
      %v3454 = vadd.f32 0.0, %v3453
      %3455 = vmatmul.bf16.gmra.mxu0 %v2801
      %v3456 = vpop.f32.mrf.mxu0
      %v3457 = vadd.f32 0.0, %v3456
      %v3458 = vpop.f32.mrf.mxu0
      %v3459 = vadd.f32 0.0, %v3458
      %3460 = vmatmul.bf16.gmra.mxu0 %v2804
      %v3461 = vpop.f32.mrf.mxu0
      %v3462 = vadd.f32 0.0, %v3461
      %v3463 = vpop.f32.mrf.mxu0
      %v3464 = vadd.f32 0.0, %v3463
      %3465 = vmatmul.bf16.gmra.mxu0 %v2807
      %v3466 = vpop.f32.mrf.mxu0
      %v3467 = vadd.f32 0.0, %v3466
      %v3468 = vpop.f32.mrf.mxu0
      %v3469 = vadd.f32 0.0, %v3468
      %3470 = vmatmul.bf16.gmra.mxu0 %v2810
      %v3471 = vpop.f32.mrf.mxu0
      %v3472 = vadd.f32 0.0, %v3471
      %v3473 = vpop.f32.mrf.mxu0
      %v3474 = vadd.f32 0.0, %v3473
      %3475 = vmatmul.bf16.gmra.mxu0 %v2813
      %v3476 = vpop.f32.mrf.mxu0
      %v3477 = vadd.f32 0.0, %v3476
      %v3478 = vpop.f32.mrf.mxu0
      %v3479 = vadd.f32 0.0, %v3478
      %3480 = vmatmul.bf16.gmra.mxu0 %v2816
      %v3481 = vpop.f32.mrf.mxu0
      %v3482 = vadd.f32 0.0, %v3481
      %v3483 = vpop.f32.mrf.mxu0
      %v3484 = vadd.f32 0.0, %v3483
      %3485 = vmatmul.bf16.gmra.mxu0 %v2819
      %v3486 = vpop.f32.mrf.mxu0
      %v3487 = vadd.f32 0.0, %v3486
      %v3488 = vpop.f32.mrf.mxu0
      %v3489 = vadd.f32 0.0, %v3488
      %3490 = vmatmul.bf16.gmra.mxu0 %v2822
      %v3491 = vpop.f32.mrf.mxu0
      %v3492 = vadd.f32 0.0, %v3491
      %v3493 = vpop.f32.mrf.mxu0
      %v3494 = vadd.f32 0.0, %v3493
      %3495 = vmatmul.bf16.gmra.mxu0 %v2825
      %v3496 = vpop.f32.mrf.mxu0
      %v3497 = vadd.f32 0.0, %v3496
      %v3498 = vpop.f32.mrf.mxu0
      %v3499 = vadd.f32 0.0, %v3498
      %3500 = vdwg.mxu0
      %v3501 = vadd.f32 %v3328, %v3422
      %v3502 = vadd.f32 %v3330, %v3424
      %v3503 = vadd.f32 %v3333, %v3427
      %v3504 = vadd.f32 %v3335, %v3429
      %v3505 = vadd.f32 %v3338, %v3432
      %v3506 = vadd.f32 %v3340, %v3434
      %v3507 = vadd.f32 %v3343, %v3437
      %v3508 = vadd.f32 %v3345, %v3439
      %v3509 = vadd.f32 %v3348, %v3442
      %v3510 = vadd.f32 %v3350, %v3444
      %v3511 = vadd.f32 %v3353, %v3447
      %v3512 = vadd.f32 %v3355, %v3449
      %v3513 = vadd.f32 %v3358, %v3452
      %v3514 = vadd.f32 %v3360, %v3454
      %v3515 = vadd.f32 %v3363, %v3457
      %v3516 = vadd.f32 %v3365, %v3459
      %v3517 = vadd.f32 %v3368, %v3462
      %v3518 = vadd.f32 %v3370, %v3464
      %v3519 = vadd.f32 %v3373, %v3467
      %v3520 = vadd.f32 %v3375, %v3469
      %v3521 = vadd.f32 %v3378, %v3472
      %v3522 = vadd.f32 %v3380, %v3474
      %v3523 = vadd.f32 %v3383, %v3477
      %v3524 = vadd.f32 %v3385, %v3479
      %v3525 = vadd.f32 %v3388, %v3482
      %v3526 = vadd.f32 %v3390, %v3484
      %v3527 = vadd.f32 %v3393, %v3487
      %v3528 = vadd.f32 %v3395, %v3489
      %v3529 = vadd.f32 %v3398, %v3492
      %v3530 = vadd.f32 %v3400, %v3494
      %v3531 = vadd.f32 %v3403, %v3497
      %v3532 = vadd.f32 %v3405, %v3499
      %s3533 = scalar_lea.vmem %s1, 14
      %v3534 = vld [vmem:[%s3533] sm:$0x3]
      %v3535 = vunpack.c.l.b16 %v1373
      %v3536 = vunpack.c.l.b16 %v1376
      %v3537 = vunpack.c.l.b16 %v1380
      %v3538 = vunpack.c.l.b16 %v1383
      %v3539 = vunpack.c.l.b16 %v1387
      %v3540 = vunpack.c.l.b16 %v1390
      %v3541 = vunpack.c.l.b16 %v1394
      %v3542 = vunpack.c.l.b16 %v1397
      %v3543 = vunpack.c.l.b16 %v1401
      %v3544 = vunpack.c.l.b16 %v1404
      %v3545 = vunpack.c.l.b16 %v1408
      %v3546 = vunpack.c.l.b16 %v1411
      %v3547 = vunpack.c.l.b16 %v1415
      %v3548 = vunpack.c.l.b16 %v1418
      %v3549 = vunpack.c.l.b16 %v1422
      %v3550 = vunpack.c.l.b16 %v1425
      %v3551 = vunpack.c.l.b16 %v1429
      %v3552 = vunpack.c.l.b16 %v1432
      %v3553 = vunpack.c.l.b16 %v1436
      %v3554 = vunpack.c.l.b16 %v1439
      %v3555 = vunpack.c.l.b16 %v1443
      %v3556 = vunpack.c.l.b16 %v1446
      %v3557 = vunpack.c.l.b16 %v1450
      %v3558 = vunpack.c.l.b16 %v1453
      %v3559 = vunpack.c.l.b16 %v1457
      %v3560 = vunpack.c.l.b16 %v1460
      %v3561 = vunpack.c.l.b16 %v1464
      %v3562 = vunpack.c.l.b16 %v1467
      %v3563 = vunpack.c.l.b16 %v1471
      %v3564 = vunpack.c.l.b16 %v1474
      %v3565 = vunpack.c.l.b16 %v1478
      %v3566 = vunpack.c.l.b16 %v1481
      %v3567 = vpack.c.b16 %v3536, %v3535
      %v3568 = vpack.c.b16 %v3538, %v3537
      %v3569 = vpack.c.b16 %v3540, %v3539
      %v3570 = vpack.c.b16 %v3542, %v3541
      %v3571 = vpack.c.b16 %v3544, %v3543
      %v3572 = vpack.c.b16 %v3546, %v3545
      %v3573 = vpack.c.b16 %v3548, %v3547
      %v3574 = vpack.c.b16 %v3550, %v3549
      %v3575 = vpack.c.b16 %v3552, %v3551
      %v3576 = vpack.c.b16 %v3554, %v3553
      %v3577 = vpack.c.b16 %v3556, %v3555
      %v3578 = vpack.c.b16 %v3558, %v3557
      %v3579 = vpack.c.b16 %v3560, %v3559
      %v3580 = vpack.c.b16 %v3562, %v3561
      %v3581 = vpack.c.b16 %v3564, %v3563
      %v3582 = vpack.c.b16 %v3566, %v3565
      %v3584 = vsel %vm2145, %v3567, 0
      %v3587 = vsel %vm2145, %v3568, 0
      %v3590 = vsel %vm2145, %v3569, 0
      %v3593 = vsel %vm2145, %v3570, 0
      %v3596 = vsel %vm2145, %v3571, 0
      %v3599 = vsel %vm2145, %v3572, 0
      %v3602 = vsel %vm2145, %v3573, 0
      %v3605 = vsel %vm2145, %v3574, 0
      %v3608 = vsel %vm2145, %v3575, 0
      %v3611 = vsel %vm2145, %v3576, 0
      %v3614 = vsel %vm2145, %v3577, 0
      %v3617 = vsel %vm2145, %v3578, 0
      %v3620 = vsel %vm2145, %v3579, 0
      %v3623 = vsel %vm2145, %v3580, 0
      %v3626 = vsel %vm2145, %v3581, 0
      %v3629 = vsel %vm2145, %v3582, 0
      %v3632 = vsel %vm2194, %v3534, 0
      %3634 = vmatpush.bf16.msra.mxu0 0
      %3635 = vmatpush.bf16.msra.mxu0 0
      %3636 = vmatpush.bf16.msra.mxu0 0
      %3637 = vmatpush.bf16.msra.mxu0 0
      %3638 = vmatpush.bf16.msra.mxu0 0
      %3639 = vmatpush.bf16.msra.mxu0 0
      %3640 = vmatpush.bf16.msra.mxu0 0
      %3641 = vmatpush.bf16.msra.mxu0 %v3632
      %3642 = vmatmul.bf16.gmra.mxu0 %v3584
      %v3643 = vpop.f32.mrf.mxu0
      %v3644 = vadd.f32 0.0, %v3643
      %v3645 = vpop.f32.mrf.mxu0
      %v3646 = vadd.f32 0.0, %v3645
      %3647 = vmatmul.bf16.gmra.mxu0 %v3587
      %v3648 = vpop.f32.mrf.mxu0
      %v3649 = vadd.f32 0.0, %v3648
      %v3650 = vpop.f32.mrf.mxu0
      %v3651 = vadd.f32 0.0, %v3650
      %3652 = vmatmul.bf16.gmra.mxu0 %v3590
      %v3653 = vpop.f32.mrf.mxu0
      %v3654 = vadd.f32 0.0, %v3653
      %v3655 = vpop.f32.mrf.mxu0
      %v3656 = vadd.f32 0.0, %v3655
      %3657 = vmatmul.bf16.gmra.mxu0 %v3593
      %v3658 = vpop.f32.mrf.mxu0
      %v3659 = vadd.f32 0.0, %v3658
      %v3660 = vpop.f32.mrf.mxu0
      %v3661 = vadd.f32 0.0, %v3660
      %3662 = vmatmul.bf16.gmra.mxu0 %v3596
      %v3663 = vpop.f32.mrf.mxu0
      %v3664 = vadd.f32 0.0, %v3663
      %v3665 = vpop.f32.mrf.mxu0
      %v3666 = vadd.f32 0.0, %v3665
      %3667 = vmatmul.bf16.gmra.mxu0 %v3599
      %v3668 = vpop.f32.mrf.mxu0
      %v3669 = vadd.f32 0.0, %v3668
      %v3670 = vpop.f32.mrf.mxu0
      %v3671 = vadd.f32 0.0, %v3670
      %3672 = vmatmul.bf16.gmra.mxu0 %v3602
      %v3673 = vpop.f32.mrf.mxu0
      %v3674 = vadd.f32 0.0, %v3673
      %v3675 = vpop.f32.mrf.mxu0
      %v3676 = vadd.f32 0.0, %v3675
      %3677 = vmatmul.bf16.gmra.mxu0 %v3605
      %v3678 = vpop.f32.mrf.mxu0
      %v3679 = vadd.f32 0.0, %v3678
      %v3680 = vpop.f32.mrf.mxu0
      %v3681 = vadd.f32 0.0, %v3680
      %3682 = vmatmul.bf16.gmra.mxu0 %v3608
      %v3683 = vpop.f32.mrf.mxu0
      %v3684 = vadd.f32 0.0, %v3683
      %v3685 = vpop.f32.mrf.mxu0
      %v3686 = vadd.f32 0.0, %v3685
      %3687 = vmatmul.bf16.gmra.mxu0 %v3611
      %v3688 = vpop.f32.mrf.mxu0
      %v3689 = vadd.f32 0.0, %v3688
      %v3690 = vpop.f32.mrf.mxu0
      %v3691 = vadd.f32 0.0, %v3690
      %3692 = vmatmul.bf16.gmra.mxu0 %v3614
      %v3693 = vpop.f32.mrf.mxu0
      %v3694 = vadd.f32 0.0, %v3693
      %v3695 = vpop.f32.mrf.mxu0
      %v3696 = vadd.f32 0.0, %v3695
      %3697 = vmatmul.bf16.gmra.mxu0 %v3617
      %v3698 = vpop.f32.mrf.mxu0
      %v3699 = vadd.f32 0.0, %v3698
      %v3700 = vpop.f32.mrf.mxu0
      %v3701 = vadd.f32 0.0, %v3700
      %3702 = vmatmul.bf16.gmra.mxu0 %v3620
      %v3703 = vpop.f32.mrf.mxu0
      %v3704 = vadd.f32 0.0, %v3703
      %v3705 = vpop.f32.mrf.mxu0
      %v3706 = vadd.f32 0.0, %v3705
      %3707 = vmatmul.bf16.gmra.mxu0 %v3623
      %v3708 = vpop.f32.mrf.mxu0
      %v3709 = vadd.f32 0.0, %v3708
      %v3710 = vpop.f32.mrf.mxu0
      %v3711 = vadd.f32 0.0, %v3710
      %3712 = vmatmul.bf16.gmra.mxu0 %v3626
      %v3713 = vpop.f32.mrf.mxu0
      %v3714 = vadd.f32 0.0, %v3713
      %v3715 = vpop.f32.mrf.mxu0
      %v3716 = vadd.f32 0.0, %v3715
      %3717 = vmatmul.bf16.gmra.mxu0 %v3629
      %v3718 = vpop.f32.mrf.mxu0
      %v3719 = vadd.f32 0.0, %v3718
      %v3720 = vpop.f32.mrf.mxu0
      %v3721 = vadd.f32 0.0, %v3720
      %3722 = vdwg.mxu0
      %v3723 = vadd.f32 %v3501, %v3644
      %v3724 = vadd.f32 %v3502, %v3646
      %v3725 = vadd.f32 %v3503, %v3649
      %v3726 = vadd.f32 %v3504, %v3651
      %v3727 = vadd.f32 %v3505, %v3654
      %v3728 = vadd.f32 %v3506, %v3656
      %v3729 = vadd.f32 %v3507, %v3659
      %v3730 = vadd.f32 %v3508, %v3661
      %v3731 = vadd.f32 %v3509, %v3664
      %v3732 = vadd.f32 %v3510, %v3666
      %v3733 = vadd.f32 %v3511, %v3669
      %v3734 = vadd.f32 %v3512, %v3671
      %v3735 = vadd.f32 %v3513, %v3674
      %v3736 = vadd.f32 %v3514, %v3676
      %v3737 = vadd.f32 %v3515, %v3679
      %v3738 = vadd.f32 %v3516, %v3681
      %v3739 = vadd.f32 %v3517, %v3684
      %v3740 = vadd.f32 %v3518, %v3686
      %v3741 = vadd.f32 %v3519, %v3689
      %v3742 = vadd.f32 %v3520, %v3691
      %v3743 = vadd.f32 %v3521, %v3694
      %v3744 = vadd.f32 %v3522, %v3696
      %v3745 = vadd.f32 %v3523, %v3699
      %v3746 = vadd.f32 %v3524, %v3701
      %v3747 = vadd.f32 %v3525, %v3704
      %v3748 = vadd.f32 %v3526, %v3706
      %v3749 = vadd.f32 %v3527, %v3709
      %v3750 = vadd.f32 %v3528, %v3711
      %v3751 = vadd.f32 %v3529, %v3714
      %v3752 = vadd.f32 %v3530, %v3716
      %v3753 = vadd.f32 %v3531, %v3719
      %v3754 = vadd.f32 %v3532, %v3721
      %v3755 = vadd.f32 %v3723, %v3724
      %v3756 = vadd.f32 %v3755, %v3725
      %v3757 = vadd.f32 %v3756, %v3726
      %v3758 = vadd.f32 %v3757, %v3727
      %v3759 = vadd.f32 %v3758, %v3728
      %v3760 = vadd.f32 %v3759, %v3729
      %v3761 = vadd.f32 %v3760, %v3730
      %v3762 = vadd.f32 %v3761, %v3731
      %v3763 = vadd.f32 %v3762, %v3732
      %v3764 = vadd.f32 %v3763, %v3733
      %v3765 = vadd.f32 %v3764, %v3734
      %v3766 = vadd.f32 %v3765, %v3735
      %v3767 = vadd.f32 %v3766, %v3736
      %v3768 = vadd.f32 %v3767, %v3737
      %v3769 = vadd.f32 %v3768, %v3738
      %v3770 = vadd.f32 %v3769, %v3739
      %v3771 = vadd.f32 %v3770, %v3740
      %v3772 = vadd.f32 %v3771, %v3741
      %v3773 = vadd.f32 %v3772, %v3742
      %v3774 = vadd.f32 %v3773, %v3743
      %v3775 = vadd.f32 %v3774, %v3744
      %v3776 = vadd.f32 %v3775, %v3745
      %v3777 = vadd.f32 %v3776, %v3746
      %v3778 = vadd.f32 %v3777, %v3747
      %v3779 = vadd.f32 %v3778, %v3748
      %v3780 = vadd.f32 %v3779, %v3749
      %v3781 = vadd.f32 %v3780, %v3750
      %v3782 = vadd.f32 %v3781, %v3751
      %v3783 = vadd.f32 %v3782, %v3752
      %v3784 = vadd.f32 %v3783, %v3753
      %v3785 = vadd.f32 %v3784, %v3754
      %v3786 = vrot.slane %v3785, 4
      %v3787 = vadd.f32 %v3785, %v3786
      %v3788 = vrot.slane %v3787, 2
      %v3789 = vadd.f32 %v3787, %v3788
      %v3790 = vrot.slane %v3789, 1
      %v3791 = vadd.f32 %v3789, %v3790
      %v3792 = vadd.f32 %v2988, %v3791
      %v3793 = vmul.f32 %v3723, %v3723
      %v3794 = vmul.f32 %v3724, %v3724
      %v3795 = vmul.f32 %v3725, %v3725
      %v3796 = vmul.f32 %v3726, %v3726
      %v3797 = vmul.f32 %v3727, %v3727
      %v3798 = vmul.f32 %v3728, %v3728
      %v3799 = vmul.f32 %v3729, %v3729
      %v3800 = vmul.f32 %v3730, %v3730
      %v3801 = vmul.f32 %v3731, %v3731
      %v3802 = vmul.f32 %v3732, %v3732
      %v3803 = vmul.f32 %v3733, %v3733
      %v3804 = vmul.f32 %v3734, %v3734
      %v3805 = vmul.f32 %v3735, %v3735
      %v3806 = vmul.f32 %v3736, %v3736
      %v3807 = vmul.f32 %v3737, %v3737
      %v3808 = vmul.f32 %v3738, %v3738
      %v3809 = vmul.f32 %v3739, %v3739
      %v3810 = vmul.f32 %v3740, %v3740
      %v3811 = vmul.f32 %v3741, %v3741
      %v3812 = vmul.f32 %v3742, %v3742
      %v3813 = vmul.f32 %v3743, %v3743
      %v3814 = vmul.f32 %v3744, %v3744
      %v3815 = vmul.f32 %v3745, %v3745
      %v3816 = vmul.f32 %v3746, %v3746
      %v3817 = vmul.f32 %v3747, %v3747
      %v3818 = vmul.f32 %v3748, %v3748
      %v3819 = vmul.f32 %v3749, %v3749
      %v3820 = vmul.f32 %v3750, %v3750
      %v3821 = vmul.f32 %v3751, %v3751
      %v3822 = vmul.f32 %v3752, %v3752
      %v3823 = vmul.f32 %v3753, %v3753
      %v3824 = vmul.f32 %v3754, %v3754
      %v3825 = vadd.f32 %v3793, %v3794
      %v3826 = vadd.f32 %v3825, %v3795
      %v3827 = vadd.f32 %v3826, %v3796
      %v3828 = vadd.f32 %v3827, %v3797
      %v3829 = vadd.f32 %v3828, %v3798
      %v3830 = vadd.f32 %v3829, %v3799
      %v3831 = vadd.f32 %v3830, %v3800
      %v3832 = vadd.f32 %v3831, %v3801
      %v3833 = vadd.f32 %v3832, %v3802
      %v3834 = vadd.f32 %v3833, %v3803
      %v3835 = vadd.f32 %v3834, %v3804
      %v3836 = vadd.f32 %v3835, %v3805
      %v3837 = vadd.f32 %v3836, %v3806
      %v3838 = vadd.f32 %v3837, %v3807
      %v3839 = vadd.f32 %v3838, %v3808
      %v3840 = vadd.f32 %v3839, %v3809
      %v3841 = vadd.f32 %v3840, %v3810
      %v3842 = vadd.f32 %v3841, %v3811
      %v3843 = vadd.f32 %v3842, %v3812
      %v3844 = vadd.f32 %v3843, %v3813
      %v3845 = vadd.f32 %v3844, %v3814
      %v3846 = vadd.f32 %v3845, %v3815
      %v3847 = vadd.f32 %v3846, %v3816
      %v3848 = vadd.f32 %v3847, %v3817
      %v3849 = vadd.f32 %v3848, %v3818
      %v3850 = vadd.f32 %v3849, %v3819
      %v3851 = vadd.f32 %v3850, %v3820
      %v3852 = vadd.f32 %v3851, %v3821
      %v3853 = vadd.f32 %v3852, %v3822
      %v3854 = vadd.f32 %v3853, %v3823
      %v3855 = vadd.f32 %v3854, %v3824
      %v3856 = vrot.slane %v3855, 4
      %v3857 = vadd.f32 %v3855, %v3856
      %v3858 = vrot.slane %v3857, 2
      %v3859 = vadd.f32 %v3857, %v3858
      %v3860 = vrot.slane %v3859, 1
      %v3861 = vadd.f32 %v3859, %v3860
      %v3862 = vadd.f32 %v3058, %v3861
      %v3863 = vpack.c.bf16 %v3723, %v3723
      %v3864 = vpack.c.bf16 %v3724, %v3724
      %v3865 = vpack.c.bf16 %v3725, %v3725
      %v3866 = vpack.c.bf16 %v3726, %v3726
      %v3867 = vpack.c.bf16 %v3727, %v3727
      %v3868 = vpack.c.bf16 %v3728, %v3728
      %v3869 = vpack.c.bf16 %v3729, %v3729
      %v3870 = vpack.c.bf16 %v3730, %v3730
      %v3871 = vpack.c.bf16 %v3731, %v3731
      %v3872 = vpack.c.bf16 %v3732, %v3732
      %v3873 = vpack.c.bf16 %v3733, %v3733
      %v3874 = vpack.c.bf16 %v3734, %v3734
      %v3875 = vpack.c.bf16 %v3735, %v3735
      %v3876 = vpack.c.bf16 %v3736, %v3736
      %v3877 = vpack.c.bf16 %v3737, %v3737
      %v3878 = vpack.c.bf16 %v3738, %v3738
      %v3879 = vpack.c.bf16 %v3739, %v3739
      %v3880 = vpack.c.bf16 %v3740, %v3740
      %v3881 = vpack.c.bf16 %v3741, %v3741
      %v3882 = vpack.c.bf16 %v3742, %v3742
      %v3883 = vpack.c.bf16 %v3743, %v3743
      %v3884 = vpack.c.bf16 %v3744, %v3744
      %v3885 = vpack.c.bf16 %v3745, %v3745
      %v3886 = vpack.c.bf16 %v3746, %v3746
      %v3887 = vpack.c.bf16 %v3747, %v3747
      %v3888 = vpack.c.bf16 %v3748, %v3748
      %v3889 = vpack.c.bf16 %v3749, %v3749
      %v3890 = vpack.c.bf16 %v3750, %v3750
      %v3891 = vpack.c.bf16 %v3751, %v3751
      %v3892 = vpack.c.bf16 %v3752, %v3752
      %v3893 = vpack.c.bf16 %v3753, %v3753
      %v3894 = vpack.c.bf16 %v3754, %v3754
      %3895 = vst [vmem:[%s236 + $0x4] sm:$0xf] %v3863
      %3896 = vst [vmem:[%s236 + $0xc] sm:$0xf] %v3864
      %3897 = vst [vmem:[%s236 + $0x24] sm:$0xf] %v3865
      %3898 = vst [vmem:[%s236 + $0x2c] sm:$0xf] %v3866
      %3899 = vst [vmem:[%s236 + $0x44] sm:$0xf] %v3867
      %3900 = vst [vmem:[%s236 + $0x4c] sm:$0xf] %v3868
      %3901 = vst [vmem:[%s236 + $0x64] sm:$0xf] %v3869
      %3902 = vst [vmem:[%s236 + $0x6c] sm:$0xf] %v3870
      %3903 = vst [vmem:[%s236 + $0x84] sm:$0xf] %v3871
      %3904 = vst [vmem:[%s236 + $0x8c] sm:$0xf] %v3872
      %3905 = vst [vmem:[%s236 + $0xa4] sm:$0xf] %v3873
      %3906 = vst [vmem:[%s236 + $0xac] sm:$0xf] %v3874
      %3907 = vst [vmem:[%s236 + $0xc4] sm:$0xf] %v3875
      %3908 = vst [vmem:[%s236 + $0xcc] sm:$0xf] %v3876
      %3909 = vst [vmem:[%s236 + $0xe4] sm:$0xf] %v3877
      %3910 = vst [vmem:[%s236 + $0xec] sm:$0xf] %v3878
      %3911 = vst [vmem:[%s236 + $0x104] sm:$0xf] %v3879
      %3912 = vst [vmem:[%s236 + $0x10c] sm:$0xf] %v3880
      %3913 = vst [vmem:[%s236 + $0x124] sm:$0xf] %v3881
      %3914 = vst [vmem:[%s236 + $0x12c] sm:$0xf] %v3882
      %3915 = vst [vmem:[%s236 + $0x144] sm:$0xf] %v3883
      %3916 = vst [vmem:[%s236 + $0x14c] sm:$0xf] %v3884
      %3917 = vst [vmem:[%s236 + $0x164] sm:$0xf] %v3885
      %3918 = vst [vmem:[%s236 + $0x16c] sm:$0xf] %v3886
      %3919 = vst [vmem:[%s236 + $0x184] sm:$0xf] %v3887
      %3920 = vst [vmem:[%s236 + $0x18c] sm:$0xf] %v3888
      %3921 = vst [vmem:[%s236 + $0x1a4] sm:$0xf] %v3889
      %3922 = vst [vmem:[%s236 + $0x1ac] sm:$0xf] %v3890
      %3923 = vst [vmem:[%s236 + $0x1c4] sm:$0xf] %v3891
      %3924 = vst [vmem:[%s236 + $0x1cc] sm:$0xf] %v3892
      %3925 = vst [vmem:[%s236 + $0x1e4] sm:$0xf] %v3893
      %3926 = vst [vmem:[%s236 + $0x1ec] sm:$0xf] %v3894
      %s3927 = scalar_lea.vmem %s1, 16
      %v3928 = vld [vmem:[%s3927] sm:$0x3]
      %s3929 = scalar_lea.vmem %s1, 18
      %v3930 = vld [vmem:[%s3929] sm:$0x3]
      %v3932 = vsel %vm2194, %v3930, 0
      %3934 = vmatpush.bf16.msra.mxu0 0
      %3935 = vmatpush.bf16.msra.mxu0 0
      %3936 = vmatpush.bf16.msra.mxu0 0
      %3937 = vmatpush.bf16.msra.mxu0 0
      %3938 = vmatpush.bf16.msra.mxu0 0
      %3939 = vmatpush.bf16.msra.mxu0 0
      %3940 = vmatpush.bf16.msra.mxu0 0
      %3941 = vmatpush.bf16.msra.mxu0 %v3932
      %3942 = vmatmul.bf16.gmra.mxu0 %v2780
      %v3943 = vpop.f32.mrf.mxu0
      %v3944 = vadd.f32 0.0, %v3943
      %v3945 = vpop.f32.mrf.mxu0
      %v3946 = vadd.f32 0.0, %v3945
      %3947 = vmatmul.bf16.gmra.mxu0 %v2783
      %v3948 = vpop.f32.mrf.mxu0
      %v3949 = vadd.f32 0.0, %v3948
      %v3950 = vpop.f32.mrf.mxu0
      %v3951 = vadd.f32 0.0, %v3950
      %3952 = vmatmul.bf16.gmra.mxu0 %v2786
      %v3953 = vpop.f32.mrf.mxu0
      %v3954 = vadd.f32 0.0, %v3953
      %v3955 = vpop.f32.mrf.mxu0
      %v3956 = vadd.f32 0.0, %v3955
      %3957 = vmatmul.bf16.gmra.mxu0 %v2789
      %v3958 = vpop.f32.mrf.mxu0
      %v3959 = vadd.f32 0.0, %v3958
      %v3960 = vpop.f32.mrf.mxu0
      %v3961 = vadd.f32 0.0, %v3960
      %3962 = vmatmul.bf16.gmra.mxu0 %v2792
      %v3963 = vpop.f32.mrf.mxu0
      %v3964 = vadd.f32 0.0, %v3963
      %v3965 = vpop.f32.mrf.mxu0
      %v3966 = vadd.f32 0.0, %v3965
      %3967 = vmatmul.bf16.gmra.mxu0 %v2795
      %v3968 = vpop.f32.mrf.mxu0
      %v3969 = vadd.f32 0.0, %v3968
      %v3970 = vpop.f32.mrf.mxu0
      %v3971 = vadd.f32 0.0, %v3970
      %3972 = vmatmul.bf16.gmra.mxu0 %v2798
      %v3973 = vpop.f32.mrf.mxu0
      %v3974 = vadd.f32 0.0, %v3973
      %v3975 = vpop.f32.mrf.mxu0
      %v3976 = vadd.f32 0.0, %v3975
      %3977 = vmatmul.bf16.gmra.mxu0 %v2801
      %v3978 = vpop.f32.mrf.mxu0
      %v3979 = vadd.f32 0.0, %v3978
      %v3980 = vpop.f32.mrf.mxu0
      %v3981 = vadd.f32 0.0, %v3980
      %3982 = vmatmul.bf16.gmra.mxu0 %v2804
      %v3983 = vpop.f32.mrf.mxu0
      %v3984 = vadd.f32 0.0, %v3983
      %v3985 = vpop.f32.mrf.mxu0
      %v3986 = vadd.f32 0.0, %v3985
      %3987 = vmatmul.bf16.gmra.mxu0 %v2807
      %v3988 = vpop.f32.mrf.mxu0
      %v3989 = vadd.f32 0.0, %v3988
      %v3990 = vpop.f32.mrf.mxu0
      %v3991 = vadd.f32 0.0, %v3990
      %3992 = vmatmul.bf16.gmra.mxu0 %v2810
      %v3993 = vpop.f32.mrf.mxu0
      %v3994 = vadd.f32 0.0, %v3993
      %v3995 = vpop.f32.mrf.mxu0
      %v3996 = vadd.f32 0.0, %v3995
      %3997 = vmatmul.bf16.gmra.mxu0 %v2813
      %v3998 = vpop.f32.mrf.mxu0
      %v3999 = vadd.f32 0.0, %v3998
      %v4000 = vpop.f32.mrf.mxu0
      %v4001 = vadd.f32 0.0, %v4000
      %4002 = vmatmul.bf16.gmra.mxu0 %v2816
      %v4003 = vpop.f32.mrf.mxu0
      %v4004 = vadd.f32 0.0, %v4003
      %v4005 = vpop.f32.mrf.mxu0
      %v4006 = vadd.f32 0.0, %v4005
      %4007 = vmatmul.bf16.gmra.mxu0 %v2819
      %v4008 = vpop.f32.mrf.mxu0
      %v4009 = vadd.f32 0.0, %v4008
      %v4010 = vpop.f32.mrf.mxu0
      %v4011 = vadd.f32 0.0, %v4010
      %4012 = vmatmul.bf16.gmra.mxu0 %v2822
      %v4013 = vpop.f32.mrf.mxu0
      %v4014 = vadd.f32 0.0, %v4013
      %v4015 = vpop.f32.mrf.mxu0
      %v4016 = vadd.f32 0.0, %v4015
      %4017 = vmatmul.bf16.gmra.mxu0 %v2825
      %v4018 = vpop.f32.mrf.mxu0
      %v4019 = vadd.f32 0.0, %v4018
      %v4020 = vpop.f32.mrf.mxu0
      %v4021 = vadd.f32 0.0, %v4020
      %4022 = vdwg.mxu0
      %v4024 = vsel %vm2194, %v3928, 0
      %4026 = vmatpush.bf16.msra.mxu0 0
      %4027 = vmatpush.bf16.msra.mxu0 0
      %4028 = vmatpush.bf16.msra.mxu0 0
      %4029 = vmatpush.bf16.msra.mxu0 0
      %4030 = vmatpush.bf16.msra.mxu0 0
      %4031 = vmatpush.bf16.msra.mxu0 0
      %4032 = vmatpush.bf16.msra.mxu0 0
      %4033 = vmatpush.bf16.msra.mxu0 %v4024
      %4034 = vmatmul.bf16.gmra.mxu0 %v2558
      %v4035 = vpop.f32.mrf.mxu0
      %v4036 = vadd.f32 %v3944, %v4035
      %v4037 = vpop.f32.mrf.mxu0
      %v4038 = vadd.f32 %v3946, %v4037
      %4039 = vmatmul.bf16.gmra.mxu0 %v2561
      %v4040 = vpop.f32.mrf.mxu0
      %v4041 = vadd.f32 %v3949, %v4040
      %v4042 = vpop.f32.mrf.mxu0
      %v4043 = vadd.f32 %v3951, %v4042
      %4044 = vmatmul.bf16.gmra.mxu0 %v2564
      %v4045 = vpop.f32.mrf.mxu0
      %v4046 = vadd.f32 %v3954, %v4045
      %v4047 = vpop.f32.mrf.mxu0
      %v4048 = vadd.f32 %v3956, %v4047
      %4049 = vmatmul.bf16.gmra.mxu0 %v2567
      %v4050 = vpop.f32.mrf.mxu0
      %v4051 = vadd.f32 %v3959, %v4050
      %v4052 = vpop.f32.mrf.mxu0
      %v4053 = vadd.f32 %v3961, %v4052
      %4054 = vmatmul.bf16.gmra.mxu0 %v2570
      %v4055 = vpop.f32.mrf.mxu0
      %v4056 = vadd.f32 %v3964, %v4055
      %v4057 = vpop.f32.mrf.mxu0
      %v4058 = vadd.f32 %v3966, %v4057
      %4059 = vmatmul.bf16.gmra.mxu0 %v2573
      %v4060 = vpop.f32.mrf.mxu0
      %v4061 = vadd.f32 %v3969, %v4060
      %v4062 = vpop.f32.mrf.mxu0
      %v4063 = vadd.f32 %v3971, %v4062
      %4064 = vmatmul.bf16.gmra.mxu0 %v2576
      %v4065 = vpop.f32.mrf.mxu0
      %v4066 = vadd.f32 %v3974, %v4065
      %v4067 = vpop.f32.mrf.mxu0
      %v4068 = vadd.f32 %v3976, %v4067
      %4069 = vmatmul.bf16.gmra.mxu0 %v2579
      %v4070 = vpop.f32.mrf.mxu0
      %v4071 = vadd.f32 %v3979, %v4070
      %v4072 = vpop.f32.mrf.mxu0
      %v4073 = vadd.f32 %v3981, %v4072
      %4074 = vmatmul.bf16.gmra.mxu0 %v2582
      %v4075 = vpop.f32.mrf.mxu0
      %v4076 = vadd.f32 %v3984, %v4075
      %v4077 = vpop.f32.mrf.mxu0
      %v4078 = vadd.f32 %v3986, %v4077
      %4079 = vmatmul.bf16.gmra.mxu0 %v2585
      %v4080 = vpop.f32.mrf.mxu0
      %v4081 = vadd.f32 %v3989, %v4080
      %v4082 = vpop.f32.mrf.mxu0
      %v4083 = vadd.f32 %v3991, %v4082
      %4084 = vmatmul.bf16.gmra.mxu0 %v2588
      %v4085 = vpop.f32.mrf.mxu0
      %v4086 = vadd.f32 %v3994, %v4085
      %v4087 = vpop.f32.mrf.mxu0
      %v4088 = vadd.f32 %v3996, %v4087
      %4089 = vmatmul.bf16.gmra.mxu0 %v2591
      %v4090 = vpop.f32.mrf.mxu0
      %v4091 = vadd.f32 %v3999, %v4090
      %v4092 = vpop.f32.mrf.mxu0
      %v4093 = vadd.f32 %v4001, %v4092
      %4094 = vmatmul.bf16.gmra.mxu0 %v2594
      %v4095 = vpop.f32.mrf.mxu0
      %v4096 = vadd.f32 %v4004, %v4095
      %v4097 = vpop.f32.mrf.mxu0
      %v4098 = vadd.f32 %v4006, %v4097
      %4099 = vmatmul.bf16.gmra.mxu0 %v2597
      %v4100 = vpop.f32.mrf.mxu0
      %v4101 = vadd.f32 %v4009, %v4100
      %v4102 = vpop.f32.mrf.mxu0
      %v4103 = vadd.f32 %v4011, %v4102
      %4104 = vmatmul.bf16.gmra.mxu0 %v2600
      %v4105 = vpop.f32.mrf.mxu0
      %v4106 = vadd.f32 %v4014, %v4105
      %v4107 = vpop.f32.mrf.mxu0
      %v4108 = vadd.f32 %v4016, %v4107
      %4109 = vmatmul.bf16.gmra.mxu0 %v2603
      %v4110 = vpop.f32.mrf.mxu0
      %v4111 = vadd.f32 %v4019, %v4110
      %v4112 = vpop.f32.mrf.mxu0
      %v4113 = vadd.f32 %v4021, %v4112
      %4114 = vdwg.mxu0
      %s4115 = scalar_lea.vmem %s1, 20
      %v4116 = vld [vmem:[%s4115] sm:$0x3]
      %v4133 = vunpack.c.l.b16 %v1486
      %v4134 = vunpack.c.l.b16 %v1487
      %v4135 = vunpack.c.l.b16 %v1488
      %v4136 = vunpack.c.l.b16 %v1489
      %v4137 = vunpack.c.l.b16 %v1490
      %v4138 = vunpack.c.l.b16 %v1491
      %v4139 = vunpack.c.l.b16 %v1492
      %v4140 = vunpack.c.l.b16 %v1493
      %v4141 = vunpack.c.l.b16 %v1494
      %v4142 = vunpack.c.l.b16 %v1495
      %v4143 = vunpack.c.l.b16 %v1496
      %v4144 = vunpack.c.l.b16 %v1497
      %v4145 = vunpack.c.l.b16 %v1498
      %v4146 = vunpack.c.l.b16 %v1499
      %v4147 = vunpack.c.l.b16 %v1500
      %v4148 = vunpack.c.l.b16 %v1501
      %v4149 = vunpack.c.l.b16 %v1502
      %v4150 = vunpack.c.l.b16 %v1503
      %v4151 = vunpack.c.l.b16 %v1504
      %v4152 = vunpack.c.l.b16 %v1505
      %v4153 = vunpack.c.l.b16 %v1506
      %v4154 = vunpack.c.l.b16 %v1507
      %v4155 = vunpack.c.l.b16 %v1508
      %v4156 = vunpack.c.l.b16 %v1509
      %v4157 = vunpack.c.l.b16 %v1510
      %v4158 = vunpack.c.l.b16 %v1511
      %v4159 = vunpack.c.l.b16 %v1512
      %v4160 = vunpack.c.l.b16 %v1513
      %v4161 = vunpack.c.l.b16 %v1514
      %v4162 = vunpack.c.l.b16 %v1515
      %v4163 = vunpack.c.l.b16 %v1516
      %v4164 = vunpack.c.l.b16 %v1517
      %v4165 = vpack.c.b16 %v4134, %v4133
      %v4166 = vpack.c.b16 %v4136, %v4135
      %v4167 = vpack.c.b16 %v4138, %v4137
      %v4168 = vpack.c.b16 %v4140, %v4139
      %v4169 = vpack.c.b16 %v4142, %v4141
      %v4170 = vpack.c.b16 %v4144, %v4143
      %v4171 = vpack.c.b16 %v4146, %v4145
      %v4172 = vpack.c.b16 %v4148, %v4147
      %v4173 = vpack.c.b16 %v4150, %v4149
      %v4174 = vpack.c.b16 %v4152, %v4151
      %v4175 = vpack.c.b16 %v4154, %v4153
      %v4176 = vpack.c.b16 %v4156, %v4155
      %v4177 = vpack.c.b16 %v4158, %v4157
      %v4178 = vpack.c.b16 %v4160, %v4159
      %v4179 = vpack.c.b16 %v4162, %v4161
      %v4180 = vpack.c.b16 %v4164, %v4163
      %v4182 = vsel %vm2145, %v4165, 0
      %v4185 = vsel %vm2145, %v4166, 0
      %v4188 = vsel %vm2145, %v4167, 0
      %v4191 = vsel %vm2145, %v4168, 0
      %v4194 = vsel %vm2145, %v4169, 0
      %v4197 = vsel %vm2145, %v4170, 0
      %v4200 = vsel %vm2145, %v4171, 0
      %v4203 = vsel %vm2145, %v4172, 0
      %v4206 = vsel %vm2145, %v4173, 0
      %v4209 = vsel %vm2145, %v4174, 0
      %v4212 = vsel %vm2145, %v4175, 0
      %v4215 = vsel %vm2145, %v4176, 0
      %v4218 = vsel %vm2145, %v4177, 0
      %v4221 = vsel %vm2145, %v4178, 0
      %v4224 = vsel %vm2145, %v4179, 0
      %v4227 = vsel %vm2145, %v4180, 0
      %v4230 = vsel %vm2194, %v4116, 0
      %4232 = vmatpush.bf16.msra.mxu0 0
      %4233 = vmatpush.bf16.msra.mxu0 0
      %4234 = vmatpush.bf16.msra.mxu0 0
      %4235 = vmatpush.bf16.msra.mxu0 0
      %4236 = vmatpush.bf16.msra.mxu0 0
      %4237 = vmatpush.bf16.msra.mxu0 0
      %4238 = vmatpush.bf16.msra.mxu0 0
      %4239 = vmatpush.bf16.msra.mxu0 %v4230
      %4240 = vmatmul.bf16.gmra.mxu0 %v4182
      %v4241 = vpop.f32.mrf.mxu0
      %v4242 = vadd.f32 0.0, %v4241
      %v4243 = vpop.f32.mrf.mxu0
      %v4244 = vadd.f32 0.0, %v4243
      %4245 = vmatmul.bf16.gmra.mxu0 %v4185
      %v4246 = vpop.f32.mrf.mxu0
      %v4247 = vadd.f32 0.0, %v4246
      %v4248 = vpop.f32.mrf.mxu0
      %v4249 = vadd.f32 0.0, %v4248
      %4250 = vmatmul.bf16.gmra.mxu0 %v4188
      %v4251 = vpop.f32.mrf.mxu0
      %v4252 = vadd.f32 0.0, %v4251
      %v4253 = vpop.f32.mrf.mxu0
      %v4254 = vadd.f32 0.0, %v4253
      %4255 = vmatmul.bf16.gmra.mxu0 %v4191
      %v4256 = vpop.f32.mrf.mxu0
      %v4257 = vadd.f32 0.0, %v4256
      %v4258 = vpop.f32.mrf.mxu0
      %v4259 = vadd.f32 0.0, %v4258
      %4260 = vmatmul.bf16.gmra.mxu0 %v4194
      %v4261 = vpop.f32.mrf.mxu0
      %v4262 = vadd.f32 0.0, %v4261
      %v4263 = vpop.f32.mrf.mxu0
      %v4264 = vadd.f32 0.0, %v4263
      %4265 = vmatmul.bf16.gmra.mxu0 %v4197
      %v4266 = vpop.f32.mrf.mxu0
      %v4267 = vadd.f32 0.0, %v4266
      %v4268 = vpop.f32.mrf.mxu0
      %v4269 = vadd.f32 0.0, %v4268
      %4270 = vmatmul.bf16.gmra.mxu0 %v4200
      %v4271 = vpop.f32.mrf.mxu0
      %v4272 = vadd.f32 0.0, %v4271
      %v4273 = vpop.f32.mrf.mxu0
      %v4274 = vadd.f32 0.0, %v4273
      %4275 = vmatmul.bf16.gmra.mxu0 %v4203
      %v4276 = vpop.f32.mrf.mxu0
      %v4277 = vadd.f32 0.0, %v4276
      %v4278 = vpop.f32.mrf.mxu0
      %v4279 = vadd.f32 0.0, %v4278
      %4280 = vmatmul.bf16.gmra.mxu0 %v4206
      %v4281 = vpop.f32.mrf.mxu0
      %v4282 = vadd.f32 0.0, %v4281
      %v4283 = vpop.f32.mrf.mxu0
      %v4284 = vadd.f32 0.0, %v4283
      %4285 = vmatmul.bf16.gmra.mxu0 %v4209
      %v4286 = vpop.f32.mrf.mxu0
      %v4287 = vadd.f32 0.0, %v4286
      %v4288 = vpop.f32.mrf.mxu0
      %v4289 = vadd.f32 0.0, %v4288
      %4290 = vmatmul.bf16.gmra.mxu0 %v4212
      %v4291 = vpop.f32.mrf.mxu0
      %v4292 = vadd.f32 0.0, %v4291
      %v4293 = vpop.f32.mrf.mxu0
      %v4294 = vadd.f32 0.0, %v4293
      %4295 = vmatmul.bf16.gmra.mxu0 %v4215
      %v4296 = vpop.f32.mrf.mxu0
      %v4297 = vadd.f32 0.0, %v4296
      %v4298 = vpop.f32.mrf.mxu0
      %v4299 = vadd.f32 0.0, %v4298
      %4300 = vmatmul.bf16.gmra.mxu0 %v4218
      %v4301 = vpop.f32.mrf.mxu0
      %v4302 = vadd.f32 0.0, %v4301
      %v4303 = vpop.f32.mrf.mxu0
      %v4304 = vadd.f32 0.0, %v4303
      %4305 = vmatmul.bf16.gmra.mxu0 %v4221
      %v4306 = vpop.f32.mrf.mxu0
      %v4307 = vadd.f32 0.0, %v4306
      %v4308 = vpop.f32.mrf.mxu0
      %v4309 = vadd.f32 0.0, %v4308
      %4310 = vmatmul.bf16.gmra.mxu0 %v4224
      %v4311 = vpop.f32.mrf.mxu0
      %v4312 = vadd.f32 0.0, %v4311
      %v4313 = vpop.f32.mrf.mxu0
      %v4314 = vadd.f32 0.0, %v4313
      %4315 = vmatmul.bf16.gmra.mxu0 %v4227
      %v4316 = vpop.f32.mrf.mxu0
      %v4317 = vadd.f32 0.0, %v4316
      %v4318 = vpop.f32.mrf.mxu0
      %v4319 = vadd.f32 0.0, %v4318
      %4320 = vdwg.mxu0
      %v4321 = vadd.f32 %v4036, %v4242
      %v4322 = vadd.f32 %v4038, %v4244
      %v4323 = vadd.f32 %v4041, %v4247
      %v4324 = vadd.f32 %v4043, %v4249
      %v4325 = vadd.f32 %v4046, %v4252
      %v4326 = vadd.f32 %v4048, %v4254
      %v4327 = vadd.f32 %v4051, %v4257
      %v4328 = vadd.f32 %v4053, %v4259
      %v4329 = vadd.f32 %v4056, %v4262
      %v4330 = vadd.f32 %v4058, %v4264
      %v4331 = vadd.f32 %v4061, %v4267
      %v4332 = vadd.f32 %v4063, %v4269
      %v4333 = vadd.f32 %v4066, %v4272
      %v4334 = vadd.f32 %v4068, %v4274
      %v4335 = vadd.f32 %v4071, %v4277
      %v4336 = vadd.f32 %v4073, %v4279
      %v4337 = vadd.f32 %v4076, %v4282
      %v4338 = vadd.f32 %v4078, %v4284
      %v4339 = vadd.f32 %v4081, %v4287
      %v4340 = vadd.f32 %v4083, %v4289
      %v4341 = vadd.f32 %v4086, %v4292
      %v4342 = vadd.f32 %v4088, %v4294
      %v4343 = vadd.f32 %v4091, %v4297
      %v4344 = vadd.f32 %v4093, %v4299
      %v4345 = vadd.f32 %v4096, %v4302
      %v4346 = vadd.f32 %v4098, %v4304
      %v4347 = vadd.f32 %v4101, %v4307
      %v4348 = vadd.f32 %v4103, %v4309
      %v4349 = vadd.f32 %v4106, %v4312
      %v4350 = vadd.f32 %v4108, %v4314
      %v4351 = vadd.f32 %v4111, %v4317
      %v4352 = vadd.f32 %v4113, %v4319
      %s4353 = scalar_lea.vmem %s1, 22
      %v4354 = vld [vmem:[%s4353] sm:$0x3]
      %v4355 = vunpack.c.l.b16 %v1547
      %v4356 = vunpack.c.l.b16 %v1557
      %v4357 = vunpack.c.l.b16 %v1571
      %v4358 = vunpack.c.l.b16 %v1581
      %v4359 = vunpack.c.l.b16 %v1595
      %v4360 = vunpack.c.l.b16 %v1605
      %v4361 = vunpack.c.l.b16 %v1619
      %v4362 = vunpack.c.l.b16 %v1629
      %v4363 = vunpack.c.l.b16 %v1643
      %v4364 = vunpack.c.l.b16 %v1653
      %v4365 = vunpack.c.l.b16 %v1667
      %v4366 = vunpack.c.l.b16 %v1677
      %v4367 = vunpack.c.l.b16 %v1691
      %v4368 = vunpack.c.l.b16 %v1701
      %v4369 = vunpack.c.l.b16 %v1715
      %v4370 = vunpack.c.l.b16 %v1725
      %v4371 = vunpack.c.l.b16 %v1739
      %v4372 = vunpack.c.l.b16 %v1749
      %v4373 = vunpack.c.l.b16 %v1763
      %v4374 = vunpack.c.l.b16 %v1773
      %v4375 = vunpack.c.l.b16 %v1787
      %v4376 = vunpack.c.l.b16 %v1797
      %v4377 = vunpack.c.l.b16 %v1811
      %v4378 = vunpack.c.l.b16 %v1821
      %v4379 = vunpack.c.l.b16 %v1835
      %v4380 = vunpack.c.l.b16 %v1845
      %v4381 = vunpack.c.l.b16 %v1859
      %v4382 = vunpack.c.l.b16 %v1869
      %v4383 = vunpack.c.l.b16 %v1883
      %v4384 = vunpack.c.l.b16 %v1893
      %v4385 = vunpack.c.l.b16 %v1907
      %v4386 = vunpack.c.l.b16 %v1917
      %v4387 = vpack.c.b16 %v4356, %v4355
      %v4388 = vpack.c.b16 %v4358, %v4357
      %v4389 = vpack.c.b16 %v4360, %v4359
      %v4390 = vpack.c.b16 %v4362, %v4361
      %v4391 = vpack.c.b16 %v4364, %v4363
      %v4392 = vpack.c.b16 %v4366, %v4365
      %v4393 = vpack.c.b16 %v4368, %v4367
      %v4394 = vpack.c.b16 %v4370, %v4369
      %v4395 = vpack.c.b16 %v4372, %v4371
      %v4396 = vpack.c.b16 %v4374, %v4373
      %v4397 = vpack.c.b16 %v4376, %v4375
      %v4398 = vpack.c.b16 %v4378, %v4377
      %v4399 = vpack.c.b16 %v4380, %v4379
      %v4400 = vpack.c.b16 %v4382, %v4381
      %v4401 = vpack.c.b16 %v4384, %v4383
      %v4402 = vpack.c.b16 %v4386, %v4385
      %v4404 = vsel %vm2145, %v4387, 0
      %v4407 = vsel %vm2145, %v4388, 0
      %v4410 = vsel %vm2145, %v4389, 0
      %v4413 = vsel %vm2145, %v4390, 0
      %v4416 = vsel %vm2145, %v4391, 0
      %v4419 = vsel %vm2145, %v4392, 0
      %v4422 = vsel %vm2145, %v4393, 0
      %v4425 = vsel %vm2145, %v4394, 0
      %v4428 = vsel %vm2145, %v4395, 0
      %v4431 = vsel %vm2145, %v4396, 0
      %v4434 = vsel %vm2145, %v4397, 0
      %v4437 = vsel %vm2145, %v4398, 0
      %v4440 = vsel %vm2145, %v4399, 0
      %v4443 = vsel %vm2145, %v4400, 0
      %v4446 = vsel %vm2145, %v4401, 0
      %v4449 = vsel %vm2145, %v4402, 0
      %v4452 = vsel %vm2194, %v4354, 0
      %4454 = vmatpush.bf16.msra.mxu0 0
      %4455 = vmatpush.bf16.msra.mxu0 0
      %4456 = vmatpush.bf16.msra.mxu0 0
      %4457 = vmatpush.bf16.msra.mxu0 0
      %4458 = vmatpush.bf16.msra.mxu0 0
      %4459 = vmatpush.bf16.msra.mxu0 0
      %4460 = vmatpush.bf16.msra.mxu0 0
      %4461 = vmatpush.bf16.msra.mxu0 %v4452
      %4462 = vmatmul.bf16.gmra.mxu0 %v4404
      %v4463 = vpop.f32.mrf.mxu0
      %v4464 = vadd.f32 0.0, %v4463
      %v4465 = vpop.f32.mrf.mxu0
      %v4466 = vadd.f32 0.0, %v4465
      %4467 = vmatmul.bf16.gmra.mxu0 %v4407
      %v4468 = vpop.f32.mrf.mxu0
      %v4469 = vadd.f32 0.0, %v4468
      %v4470 = vpop.f32.mrf.mxu0
      %v4471 = vadd.f32 0.0, %v4470
      %4472 = vmatmul.bf16.gmra.mxu0 %v4410
      %v4473 = vpop.f32.mrf.mxu0
      %v4474 = vadd.f32 0.0, %v4473
      %v4475 = vpop.f32.mrf.mxu0
      %v4476 = vadd.f32 0.0, %v4475
      %4477 = vmatmul.bf16.gmra.mxu0 %v4413
      %v4478 = vpop.f32.mrf.mxu0
      %v4479 = vadd.f32 0.0, %v4478
      %v4480 = vpop.f32.mrf.mxu0
      %v4481 = vadd.f32 0.0, %v4480
      %4482 = vmatmul.bf16.gmra.mxu0 %v4416
      %v4483 = vpop.f32.mrf.mxu0
      %v4484 = vadd.f32 0.0, %v4483
      %v4485 = vpop.f32.mrf.mxu0
      %v4486 = vadd.f32 0.0, %v4485
      %4487 = vmatmul.bf16.gmra.mxu0 %v4419
      %v4488 = vpop.f32.mrf.mxu0
      %v4489 = vadd.f32 0.0, %v4488
      %v4490 = vpop.f32.mrf.mxu0
      %v4491 = vadd.f32 0.0, %v4490
      %4492 = vmatmul.bf16.gmra.mxu0 %v4422
      %v4493 = vpop.f32.mrf.mxu0
      %v4494 = vadd.f32 0.0, %v4493
      %v4495 = vpop.f32.mrf.mxu0
      %v4496 = vadd.f32 0.0, %v4495
      %4497 = vmatmul.bf16.gmra.mxu0 %v4425
      %v4498 = vpop.f32.mrf.mxu0
      %v4499 = vadd.f32 0.0, %v4498
      %v4500 = vpop.f32.mrf.mxu0
      %v4501 = vadd.f32 0.0, %v4500
      %4502 = vmatmul.bf16.gmra.mxu0 %v4428
      %v4503 = vpop.f32.mrf.mxu0
      %v4504 = vadd.f32 0.0, %v4503
      %v4505 = vpop.f32.mrf.mxu0
      %v4506 = vadd.f32 0.0, %v4505
      %4507 = vmatmul.bf16.gmra.mxu0 %v4431
      %v4508 = vpop.f32.mrf.mxu0
      %v4509 = vadd.f32 0.0, %v4508
      %v4510 = vpop.f32.mrf.mxu0
      %v4511 = vadd.f32 0.0, %v4510
      %4512 = vmatmul.bf16.gmra.mxu0 %v4434
      %v4513 = vpop.f32.mrf.mxu0
      %v4514 = vadd.f32 0.0, %v4513
      %v4515 = vpop.f32.mrf.mxu0
      %v4516 = vadd.f32 0.0, %v4515
      %4517 = vmatmul.bf16.gmra.mxu0 %v4437
      %v4518 = vpop.f32.mrf.mxu0
      %v4519 = vadd.f32 0.0, %v4518
      %v4520 = vpop.f32.mrf.mxu0
      %v4521 = vadd.f32 0.0, %v4520
      %4522 = vmatmul.bf16.gmra.mxu0 %v4440
      %v4523 = vpop.f32.mrf.mxu0
      %v4524 = vadd.f32 0.0, %v4523
      %v4525 = vpop.f32.mrf.mxu0
      %v4526 = vadd.f32 0.0, %v4525
      %4527 = vmatmul.bf16.gmra.mxu0 %v4443
      %v4528 = vpop.f32.mrf.mxu0
      %v4529 = vadd.f32 0.0, %v4528
      %v4530 = vpop.f32.mrf.mxu0
      %v4531 = vadd.f32 0.0, %v4530
      %4532 = vmatmul.bf16.gmra.mxu0 %v4446
      %v4533 = vpop.f32.mrf.mxu0
      %v4534 = vadd.f32 0.0, %v4533
      %v4535 = vpop.f32.mrf.mxu0
      %v4536 = vadd.f32 0.0, %v4535
      %4537 = vmatmul.bf16.gmra.mxu0 %v4449
      %v4538 = vpop.f32.mrf.mxu0
      %v4539 = vadd.f32 0.0, %v4538
      %v4540 = vpop.f32.mrf.mxu0
      %v4541 = vadd.f32 0.0, %v4540
      %4542 = vdwg.mxu0
      %v4543 = vadd.f32 %v4321, %v4464
      %v4544 = vadd.f32 %v4322, %v4466
      %v4545 = vadd.f32 %v4323, %v4469
      %v4546 = vadd.f32 %v4324, %v4471
      %v4547 = vadd.f32 %v4325, %v4474
      %v4548 = vadd.f32 %v4326, %v4476
      %v4549 = vadd.f32 %v4327, %v4479
      %v4550 = vadd.f32 %v4328, %v4481
      %v4551 = vadd.f32 %v4329, %v4484
      %v4552 = vadd.f32 %v4330, %v4486
      %v4553 = vadd.f32 %v4331, %v4489
      %v4554 = vadd.f32 %v4332, %v4491
      %v4555 = vadd.f32 %v4333, %v4494
      %v4556 = vadd.f32 %v4334, %v4496
      %v4557 = vadd.f32 %v4335, %v4499
      %v4558 = vadd.f32 %v4336, %v4501
      %v4559 = vadd.f32 %v4337, %v4504
      %v4560 = vadd.f32 %v4338, %v4506
      %v4561 = vadd.f32 %v4339, %v4509
      %v4562 = vadd.f32 %v4340, %v4511
      %v4563 = vadd.f32 %v4341, %v4514
      %v4564 = vadd.f32 %v4342, %v4516
      %v4565 = vadd.f32 %v4343, %v4519
      %v4566 = vadd.f32 %v4344, %v4521
      %v4567 = vadd.f32 %v4345, %v4524
      %v4568 = vadd.f32 %v4346, %v4526
      %v4569 = vadd.f32 %v4347, %v4529
      %v4570 = vadd.f32 %v4348, %v4531
      %v4571 = vadd.f32 %v4349, %v4534
      %v4572 = vadd.f32 %v4350, %v4536
      %v4573 = vadd.f32 %v4351, %v4539
      %v4574 = vadd.f32 %v4352, %v4541
      %v4575 = vadd.f32 %v4543, %v4544
      %v4576 = vadd.f32 %v4575, %v4545
      %v4577 = vadd.f32 %v4576, %v4546
      %v4578 = vadd.f32 %v4577, %v4547
      %v4579 = vadd.f32 %v4578, %v4548
      %v4580 = vadd.f32 %v4579, %v4549
      %v4581 = vadd.f32 %v4580, %v4550
      %v4582 = vadd.f32 %v4581, %v4551
      %v4583 = vadd.f32 %v4582, %v4552
      %v4584 = vadd.f32 %v4583, %v4553
      %v4585 = vadd.f32 %v4584, %v4554
      %v4586 = vadd.f32 %v4585, %v4555
      %v4587 = vadd.f32 %v4586, %v4556
      %v4588 = vadd.f32 %v4587, %v4557
      %v4589 = vadd.f32 %v4588, %v4558
      %v4590 = vadd.f32 %v4589, %v4559
      %v4591 = vadd.f32 %v4590, %v4560
      %v4592 = vadd.f32 %v4591, %v4561
      %v4593 = vadd.f32 %v4592, %v4562
      %v4594 = vadd.f32 %v4593, %v4563
      %v4595 = vadd.f32 %v4594, %v4564
      %v4596 = vadd.f32 %v4595, %v4565
      %v4597 = vadd.f32 %v4596, %v4566
      %v4598 = vadd.f32 %v4597, %v4567
      %v4599 = vadd.f32 %v4598, %v4568
      %v4600 = vadd.f32 %v4599, %v4569
      %v4601 = vadd.f32 %v4600, %v4570
      %v4602 = vadd.f32 %v4601, %v4571
      %v4603 = vadd.f32 %v4602, %v4572
      %v4604 = vadd.f32 %v4603, %v4573
      %v4605 = vadd.f32 %v4604, %v4574
      %v4606 = vrot.slane %v4605, 4
      %v4607 = vadd.f32 %v4605, %v4606
      %v4608 = vrot.slane %v4607, 2
      %v4609 = vadd.f32 %v4607, %v4608
      %v4610 = vrot.slane %v4609, 1
      %v4611 = vadd.f32 %v4609, %v4610
      %v4612 = vadd.f32 %v3792, %v4611
      %v4613 = vmul.f32 %v4543, %v4543
      %v4614 = vmul.f32 %v4544, %v4544
      %v4615 = vmul.f32 %v4545, %v4545
      %v4616 = vmul.f32 %v4546, %v4546
      %v4617 = vmul.f32 %v4547, %v4547
      %v4618 = vmul.f32 %v4548, %v4548
      %v4619 = vmul.f32 %v4549, %v4549
      %v4620 = vmul.f32 %v4550, %v4550
      %v4621 = vmul.f32 %v4551, %v4551
      %v4622 = vmul.f32 %v4552, %v4552
      %v4623 = vmul.f32 %v4553, %v4553
      %v4624 = vmul.f32 %v4554, %v4554
      %v4625 = vmul.f32 %v4555, %v4555
      %v4626 = vmul.f32 %v4556, %v4556
      %v4627 = vmul.f32 %v4557, %v4557
      %v4628 = vmul.f32 %v4558, %v4558
      %v4629 = vmul.f32 %v4559, %v4559
      %v4630 = vmul.f32 %v4560, %v4560
      %v4631 = vmul.f32 %v4561, %v4561
      %v4632 = vmul.f32 %v4562, %v4562
      %v4633 = vmul.f32 %v4563, %v4563
      %v4634 = vmul.f32 %v4564, %v4564
      %v4635 = vmul.f32 %v4565, %v4565
      %v4636 = vmul.f32 %v4566, %v4566
      %v4637 = vmul.f32 %v4567, %v4567
      %v4638 = vmul.f32 %v4568, %v4568
      %v4639 = vmul.f32 %v4569, %v4569
      %v4640 = vmul.f32 %v4570, %v4570
      %v4641 = vmul.f32 %v4571, %v4571
      %v4642 = vmul.f32 %v4572, %v4572
      %v4643 = vmul.f32 %v4573, %v4573
      %v4644 = vmul.f32 %v4574, %v4574
      %v4645 = vadd.f32 %v4613, %v4614
      %v4646 = vadd.f32 %v4645, %v4615
      %v4647 = vadd.f32 %v4646, %v4616
      %v4648 = vadd.f32 %v4647, %v4617
      %v4649 = vadd.f32 %v4648, %v4618
      %v4650 = vadd.f32 %v4649, %v4619
      %v4651 = vadd.f32 %v4650, %v4620
      %v4652 = vadd.f32 %v4651, %v4621
      %v4653 = vadd.f32 %v4652, %v4622
      %v4654 = vadd.f32 %v4653, %v4623
      %v4655 = vadd.f32 %v4654, %v4624
      %v4656 = vadd.f32 %v4655, %v4625
      %v4657 = vadd.f32 %v4656, %v4626
      %v4658 = vadd.f32 %v4657, %v4627
      %v4659 = vadd.f32 %v4658, %v4628
      %v4660 = vadd.f32 %v4659, %v4629
      %v4661 = vadd.f32 %v4660, %v4630
      %v4662 = vadd.f32 %v4661, %v4631
      %v4663 = vadd.f32 %v4662, %v4632
      %v4664 = vadd.f32 %v4663, %v4633
      %v4665 = vadd.f32 %v4664, %v4634
      %v4666 = vadd.f32 %v4665, %v4635
      %v4667 = vadd.f32 %v4666, %v4636
      %v4668 = vadd.f32 %v4667, %v4637
      %v4669 = vadd.f32 %v4668, %v4638
      %v4670 = vadd.f32 %v4669, %v4639
      %v4671 = vadd.f32 %v4670, %v4640
      %v4672 = vadd.f32 %v4671, %v4641
      %v4673 = vadd.f32 %v4672, %v4642
      %v4674 = vadd.f32 %v4673, %v4643
      %v4675 = vadd.f32 %v4674, %v4644
      %v4676 = vrot.slane %v4675, 4
      %v4677 = vadd.f32 %v4675, %v4676
      %v4678 = vrot.slane %v4677, 2
      %v4679 = vadd.f32 %v4677, %v4678
      %v4680 = vrot.slane %v4679, 1
      %v4681 = vadd.f32 %v4679, %v4680
      %v4682 = vadd.f32 %v3862, %v4681
      %v4683 = vpack.c.bf16 %v4543, %v4543
      %v4684 = vpack.c.bf16 %v4544, %v4544
      %v4685 = vpack.c.bf16 %v4545, %v4545
      %v4686 = vpack.c.bf16 %v4546, %v4546
      %v4687 = vpack.c.bf16 %v4547, %v4547
      %v4688 = vpack.c.bf16 %v4548, %v4548
      %v4689 = vpack.c.bf16 %v4549, %v4549
      %v4690 = vpack.c.bf16 %v4550, %v4550
      %v4691 = vpack.c.bf16 %v4551, %v4551
      %v4692 = vpack.c.bf16 %v4552, %v4552
      %v4693 = vpack.c.bf16 %v4553, %v4553
      %v4694 = vpack.c.bf16 %v4554, %v4554
      %v4695 = vpack.c.bf16 %v4555, %v4555
      %v4696 = vpack.c.bf16 %v4556, %v4556
      %v4697 = vpack.c.bf16 %v4557, %v4557
      %v4698 = vpack.c.bf16 %v4558, %v4558
      %v4699 = vpack.c.bf16 %v4559, %v4559
      %v4700 = vpack.c.bf16 %v4560, %v4560
      %v4701 = vpack.c.bf16 %v4561, %v4561
      %v4702 = vpack.c.bf16 %v4562, %v4562
      %v4703 = vpack.c.bf16 %v4563, %v4563
      %v4704 = vpack.c.bf16 %v4564, %v4564
      %v4705 = vpack.c.bf16 %v4565, %v4565
      %v4706 = vpack.c.bf16 %v4566, %v4566
      %v4707 = vpack.c.bf16 %v4567, %v4567
      %v4708 = vpack.c.bf16 %v4568, %v4568
      %v4709 = vpack.c.bf16 %v4569, %v4569
      %v4710 = vpack.c.bf16 %v4570, %v4570
      %v4711 = vpack.c.bf16 %v4571, %v4571
      %v4712 = vpack.c.bf16 %v4572, %v4572
      %v4713 = vpack.c.bf16 %v4573, %v4573
      %v4714 = vpack.c.bf16 %v4574, %v4574
      %s4715 = scalar_lea.vmem %s236, 16
      %4716 = vst [vmem:[%s4715] sm:$0xf] %v4683
      %4717 = vst [vmem:[%s4715 + $0x8] sm:$0xf] %v4684
      %4718 = vst [vmem:[%s4715 + $0x20] sm:$0xf] %v4685
      %4719 = vst [vmem:[%s4715 + $0x28] sm:$0xf] %v4686
      %4720 = vst [vmem:[%s4715 + $0x40] sm:$0xf] %v4687
      %4721 = vst [vmem:[%s4715 + $0x48] sm:$0xf] %v4688
      %4722 = vst [vmem:[%s4715 + $0x60] sm:$0xf] %v4689
      %4723 = vst [vmem:[%s4715 + $0x68] sm:$0xf] %v4690
      %4724 = vst [vmem:[%s4715 + $0x80] sm:$0xf] %v4691
      %4725 = vst [vmem:[%s4715 + $0x88] sm:$0xf] %v4692
      %4726 = vst [vmem:[%s4715 + $0xa0] sm:$0xf] %v4693
      %4727 = vst [vmem:[%s4715 + $0xa8] sm:$0xf] %v4694
      %4728 = vst [vmem:[%s4715 + $0xc0] sm:$0xf] %v4695
      %4729 = vst [vmem:[%s4715 + $0xc8] sm:$0xf] %v4696
      %4730 = vst [vmem:[%s4715 + $0xe0] sm:$0xf] %v4697
      %4731 = vst [vmem:[%s4715 + $0xe8] sm:$0xf] %v4698
      %4732 = vst [vmem:[%s4715 + $0x100] sm:$0xf] %v4699
      %4733 = vst [vmem:[%s4715 + $0x108] sm:$0xf] %v4700
      %4734 = vst [vmem:[%s4715 + $0x120] sm:$0xf] %v4701
      %4735 = vst [vmem:[%s4715 + $0x128] sm:$0xf] %v4702
      %4736 = vst [vmem:[%s4715 + $0x140] sm:$0xf] %v4703
      %4737 = vst [vmem:[%s4715 + $0x148] sm:$0xf] %v4704
      %4738 = vst [vmem:[%s4715 + $0x160] sm:$0xf] %v4705
      %4739 = vst [vmem:[%s4715 + $0x168] sm:$0xf] %v4706
      %4740 = vst [vmem:[%s4715 + $0x180] sm:$0xf] %v4707
      %4741 = vst [vmem:[%s4715 + $0x188] sm:$0xf] %v4708
      %4742 = vst [vmem:[%s4715 + $0x1a0] sm:$0xf] %v4709
      %4743 = vst [vmem:[%s4715 + $0x1a8] sm:$0xf] %v4710
      %4744 = vst [vmem:[%s4715 + $0x1c0] sm:$0xf] %v4711
      %4745 = vst [vmem:[%s4715 + $0x1c8] sm:$0xf] %v4712
      %4746 = vst [vmem:[%s4715 + $0x1e0] sm:$0xf] %v4713
      %4747 = vst [vmem:[%s4715 + $0x1e8] sm:$0xf] %v4714
      %s4748 = scalar_lea.vmem %s1, 24
      %v4749 = vld [vmem:[%s4748] sm:$0x3]
      %s4750 = scalar_lea.vmem %s1, 26
      %v4751 = vld [vmem:[%s4750] sm:$0x3]
      %v4753 = vsel %vm2194, %v4751, 0
      %4755 = vmatpush.bf16.msra.mxu0 0
      %4756 = vmatpush.bf16.msra.mxu0 0
      %4757 = vmatpush.bf16.msra.mxu0 0
      %4758 = vmatpush.bf16.msra.mxu0 0
      %4759 = vmatpush.bf16.msra.mxu0 0
      %4760 = vmatpush.bf16.msra.mxu0 0
      %4761 = vmatpush.bf16.msra.mxu0 0
      %4762 = vmatpush.bf16.msra.mxu0 %v4753
      %4763 = vmatmul.bf16.gmra.mxu0 %v3584
      %v4764 = vpop.f32.mrf.mxu0
      %v4765 = vadd.f32 0.0, %v4764
      %v4766 = vpop.f32.mrf.mxu0
      %v4767 = vadd.f32 0.0, %v4766
      %4768 = vmatmul.bf16.gmra.mxu0 %v3587
      %v4769 = vpop.f32.mrf.mxu0
      %v4770 = vadd.f32 0.0, %v4769
      %v4771 = vpop.f32.mrf.mxu0
      %v4772 = vadd.f32 0.0, %v4771
      %4773 = vmatmul.bf16.gmra.mxu0 %v3590
      %v4774 = vpop.f32.mrf.mxu0
      %v4775 = vadd.f32 0.0, %v4774
      %v4776 = vpop.f32.mrf.mxu0
      %v4777 = vadd.f32 0.0, %v4776
      %4778 = vmatmul.bf16.gmra.mxu0 %v3593
      %v4779 = vpop.f32.mrf.mxu0
      %v4780 = vadd.f32 0.0, %v4779
      %v4781 = vpop.f32.mrf.mxu0
      %v4782 = vadd.f32 0.0, %v4781
      %4783 = vmatmul.bf16.gmra.mxu0 %v3596
      %v4784 = vpop.f32.mrf.mxu0
      %v4785 = vadd.f32 0.0, %v4784
      %v4786 = vpop.f32.mrf.mxu0
      %v4787 = vadd.f32 0.0, %v4786
      %4788 = vmatmul.bf16.gmra.mxu0 %v3599
      %v4789 = vpop.f32.mrf.mxu0
      %v4790 = vadd.f32 0.0, %v4789
      %v4791 = vpop.f32.mrf.mxu0
      %v4792 = vadd.f32 0.0, %v4791
      %4793 = vmatmul.bf16.gmra.mxu0 %v3602
      %v4794 = vpop.f32.mrf.mxu0
      %v4795 = vadd.f32 0.0, %v4794
      %v4796 = vpop.f32.mrf.mxu0
      %v4797 = vadd.f32 0.0, %v4796
      %4798 = vmatmul.bf16.gmra.mxu0 %v3605
      %v4799 = vpop.f32.mrf.mxu0
      %v4800 = vadd.f32 0.0, %v4799
      %v4801 = vpop.f32.mrf.mxu0
      %v4802 = vadd.f32 0.0, %v4801
      %4803 = vmatmul.bf16.gmra.mxu0 %v3608
      %v4804 = vpop.f32.mrf.mxu0
      %v4805 = vadd.f32 0.0, %v4804
      %v4806 = vpop.f32.mrf.mxu0
      %v4807 = vadd.f32 0.0, %v4806
      %4808 = vmatmul.bf16.gmra.mxu0 %v3611
      %v4809 = vpop.f32.mrf.mxu0
      %v4810 = vadd.f32 0.0, %v4809
      %v4811 = vpop.f32.mrf.mxu0
      %v4812 = vadd.f32 0.0, %v4811
      %4813 = vmatmul.bf16.gmra.mxu0 %v3614
      %v4814 = vpop.f32.mrf.mxu0
      %v4815 = vadd.f32 0.0, %v4814
      %v4816 = vpop.f32.mrf.mxu0
      %v4817 = vadd.f32 0.0, %v4816
      %4818 = vmatmul.bf16.gmra.mxu0 %v3617
      %v4819 = vpop.f32.mrf.mxu0
      %v4820 = vadd.f32 0.0, %v4819
      %v4821 = vpop.f32.mrf.mxu0
      %v4822 = vadd.f32 0.0, %v4821
      %4823 = vmatmul.bf16.gmra.mxu0 %v3620
      %v4824 = vpop.f32.mrf.mxu0
      %v4825 = vadd.f32 0.0, %v4824
      %v4826 = vpop.f32.mrf.mxu0
      %v4827 = vadd.f32 0.0, %v4826
      %4828 = vmatmul.bf16.gmra.mxu0 %v3623
      %v4829 = vpop.f32.mrf.mxu0
      %v4830 = vadd.f32 0.0, %v4829
      %v4831 = vpop.f32.mrf.mxu0
      %v4832 = vadd.f32 0.0, %v4831
      %4833 = vmatmul.bf16.gmra.mxu0 %v3626
      %v4834 = vpop.f32.mrf.mxu0
      %v4835 = vadd.f32 0.0, %v4834
      %v4836 = vpop.f32.mrf.mxu0
      %v4837 = vadd.f32 0.0, %v4836
      %4838 = vmatmul.bf16.gmra.mxu0 %v3629
      %v4839 = vpop.f32.mrf.mxu0
      %v4840 = vadd.f32 0.0, %v4839
      %v4841 = vpop.f32.mrf.mxu0
      %v4842 = vadd.f32 0.0, %v4841
      %4843 = vdwg.mxu0
      %v4845 = vsel %vm2194, %v4749, 0
      %4847 = vmatpush.bf16.msra.mxu0 0
      %4848 = vmatpush.bf16.msra.mxu0 0
      %4849 = vmatpush.bf16.msra.mxu0 0
      %4850 = vmatpush.bf16.msra.mxu0 0
      %4851 = vmatpush.bf16.msra.mxu0 0
      %4852 = vmatpush.bf16.msra.mxu0 0
      %4853 = vmatpush.bf16.msra.mxu0 0
      %4854 = vmatpush.bf16.msra.mxu0 %v4845
      %4855 = vmatmul.bf16.gmra.mxu0 %v2780
      %v4856 = vpop.f32.mrf.mxu0
      %v4857 = vadd.f32 %v4765, %v4856
      %v4858 = vpop.f32.mrf.mxu0
      %v4859 = vadd.f32 %v4767, %v4858
      %4860 = vmatmul.bf16.gmra.mxu0 %v2783
      %v4861 = vpop.f32.mrf.mxu0
      %v4862 = vadd.f32 %v4770, %v4861
      %v4863 = vpop.f32.mrf.mxu0
      %v4864 = vadd.f32 %v4772, %v4863
      %4865 = vmatmul.bf16.gmra.mxu0 %v2786
      %v4866 = vpop.f32.mrf.mxu0
      %v4867 = vadd.f32 %v4775, %v4866
      %v4868 = vpop.f32.mrf.mxu0
      %v4869 = vadd.f32 %v4777, %v4868
      %4870 = vmatmul.bf16.gmra.mxu0 %v2789
      %v4871 = vpop.f32.mrf.mxu0
      %v4872 = vadd.f32 %v4780, %v4871
      %v4873 = vpop.f32.mrf.mxu0
      %v4874 = vadd.f32 %v4782, %v4873
      %4875 = vmatmul.bf16.gmra.mxu0 %v2792
      %v4876 = vpop.f32.mrf.mxu0
      %v4877 = vadd.f32 %v4785, %v4876
      %v4878 = vpop.f32.mrf.mxu0
      %v4879 = vadd.f32 %v4787, %v4878
      %4880 = vmatmul.bf16.gmra.mxu0 %v2795
      %v4881 = vpop.f32.mrf.mxu0
      %v4882 = vadd.f32 %v4790, %v4881
      %v4883 = vpop.f32.mrf.mxu0
      %v4884 = vadd.f32 %v4792, %v4883
      %4885 = vmatmul.bf16.gmra.mxu0 %v2798
      %v4886 = vpop.f32.mrf.mxu0
      %v4887 = vadd.f32 %v4795, %v4886
      %v4888 = vpop.f32.mrf.mxu0
      %v4889 = vadd.f32 %v4797, %v4888
      %4890 = vmatmul.bf16.gmra.mxu0 %v2801
      %v4891 = vpop.f32.mrf.mxu0
      %v4892 = vadd.f32 %v4800, %v4891
      %v4893 = vpop.f32.mrf.mxu0
      %v4894 = vadd.f32 %v4802, %v4893
      %4895 = vmatmul.bf16.gmra.mxu0 %v2804
      %v4896 = vpop.f32.mrf.mxu0
      %v4897 = vadd.f32 %v4805, %v4896
      %v4898 = vpop.f32.mrf.mxu0
      %v4899 = vadd.f32 %v4807, %v4898
      %4900 = vmatmul.bf16.gmra.mxu0 %v2807
      %v4901 = vpop.f32.mrf.mxu0
      %v4902 = vadd.f32 %v4810, %v4901
      %v4903 = vpop.f32.mrf.mxu0
      %v4904 = vadd.f32 %v4812, %v4903
      %4905 = vmatmul.bf16.gmra.mxu0 %v2810
      %v4906 = vpop.f32.mrf.mxu0
      %v4907 = vadd.f32 %v4815, %v4906
      %v4908 = vpop.f32.mrf.mxu0
      %v4909 = vadd.f32 %v4817, %v4908
      %4910 = vmatmul.bf16.gmra.mxu0 %v2813
      %v4911 = vpop.f32.mrf.mxu0
      %v4912 = vadd.f32 %v4820, %v4911
      %v4913 = vpop.f32.mrf.mxu0
      %v4914 = vadd.f32 %v4822, %v4913
      %4915 = vmatmul.bf16.gmra.mxu0 %v2816
      %v4916 = vpop.f32.mrf.mxu0
      %v4917 = vadd.f32 %v4825, %v4916
      %v4918 = vpop.f32.mrf.mxu0
      %v4919 = vadd.f32 %v4827, %v4918
      %4920 = vmatmul.bf16.gmra.mxu0 %v2819
      %v4921 = vpop.f32.mrf.mxu0
      %v4922 = vadd.f32 %v4830, %v4921
      %v4923 = vpop.f32.mrf.mxu0
      %v4924 = vadd.f32 %v4832, %v4923
      %4925 = vmatmul.bf16.gmra.mxu0 %v2822
      %v4926 = vpop.f32.mrf.mxu0
      %v4927 = vadd.f32 %v4835, %v4926
      %v4928 = vpop.f32.mrf.mxu0
      %v4929 = vadd.f32 %v4837, %v4928
      %4930 = vmatmul.bf16.gmra.mxu0 %v2825
      %v4931 = vpop.f32.mrf.mxu0
      %v4932 = vadd.f32 %v4840, %v4931
      %v4933 = vpop.f32.mrf.mxu0
      %v4934 = vadd.f32 %v4842, %v4933
      %4935 = vdwg.mxu0
      %s4936 = scalar_lea.vmem %s1, 28
      %v4937 = vld [vmem:[%s4936] sm:$0x3]
      %v4939 = vsel %vm2194, %v4937, 0
      %4941 = vmatpush.bf16.msra.mxu0 0
      %4942 = vmatpush.bf16.msra.mxu0 0
      %4943 = vmatpush.bf16.msra.mxu0 0
      %4944 = vmatpush.bf16.msra.mxu0 0
      %4945 = vmatpush.bf16.msra.mxu0 0
      %4946 = vmatpush.bf16.msra.mxu0 0
      %4947 = vmatpush.bf16.msra.mxu0 0
      %4948 = vmatpush.bf16.msra.mxu0 %v4939
      %4949 = vmatmul.bf16.gmra.mxu0 %v4404
      %v4950 = vpop.f32.mrf.mxu0
      %v4951 = vadd.f32 0.0, %v4950
      %v4952 = vpop.f32.mrf.mxu0
      %v4953 = vadd.f32 0.0, %v4952
      %4954 = vmatmul.bf16.gmra.mxu0 %v4407
      %v4955 = vpop.f32.mrf.mxu0
      %v4956 = vadd.f32 0.0, %v4955
      %v4957 = vpop.f32.mrf.mxu0
      %v4958 = vadd.f32 0.0, %v4957
      %4959 = vmatmul.bf16.gmra.mxu0 %v4410
      %v4960 = vpop.f32.mrf.mxu0
      %v4961 = vadd.f32 0.0, %v4960
      %v4962 = vpop.f32.mrf.mxu0
      %v4963 = vadd.f32 0.0, %v4962
      %4964 = vmatmul.bf16.gmra.mxu0 %v4413
      %v4965 = vpop.f32.mrf.mxu0
      %v4966 = vadd.f32 0.0, %v4965
      %v4967 = vpop.f32.mrf.mxu0
      %v4968 = vadd.f32 0.0, %v4967
      %4969 = vmatmul.bf16.gmra.mxu0 %v4416
      %v4970 = vpop.f32.mrf.mxu0
      %v4971 = vadd.f32 0.0, %v4970
      %v4972 = vpop.f32.mrf.mxu0
      %v4973 = vadd.f32 0.0, %v4972
      %4974 = vmatmul.bf16.gmra.mxu0 %v4419
      %v4975 = vpop.f32.mrf.mxu0
      %v4976 = vadd.f32 0.0, %v4975
      %v4977 = vpop.f32.mrf.mxu0
      %v4978 = vadd.f32 0.0, %v4977
      %4979 = vmatmul.bf16.gmra.mxu0 %v4422
      %v4980 = vpop.f32.mrf.mxu0
      %v4981 = vadd.f32 0.0, %v4980
      %v4982 = vpop.f32.mrf.mxu0
      %v4983 = vadd.f32 0.0, %v4982
      %4984 = vmatmul.bf16.gmra.mxu0 %v4425
      %v4985 = vpop.f32.mrf.mxu0
      %v4986 = vadd.f32 0.0, %v4985
      %v4987 = vpop.f32.mrf.mxu0
      %v4988 = vadd.f32 0.0, %v4987
      %4989 = vmatmul.bf16.gmra.mxu0 %v4428
      %v4990 = vpop.f32.mrf.mxu0
      %v4991 = vadd.f32 0.0, %v4990
      %v4992 = vpop.f32.mrf.mxu0
      %v4993 = vadd.f32 0.0, %v4992
      %4994 = vmatmul.bf16.gmra.mxu0 %v4431
      %v4995 = vpop.f32.mrf.mxu0
      %v4996 = vadd.f32 0.0, %v4995
      %v4997 = vpop.f32.mrf.mxu0
      %v4998 = vadd.f32 0.0, %v4997
      %4999 = vmatmul.bf16.gmra.mxu0 %v4434
      %v5000 = vpop.f32.mrf.mxu0
      %v5001 = vadd.f32 0.0, %v5000
      %v5002 = vpop.f32.mrf.mxu0
      %v5003 = vadd.f32 0.0, %v5002
      %5004 = vmatmul.bf16.gmra.mxu0 %v4437
      %v5005 = vpop.f32.mrf.mxu0
      %v5006 = vadd.f32 0.0, %v5005
      %v5007 = vpop.f32.mrf.mxu0
      %v5008 = vadd.f32 0.0, %v5007
      %5009 = vmatmul.bf16.gmra.mxu0 %v4440
      %v5010 = vpop.f32.mrf.mxu0
      %v5011 = vadd.f32 0.0, %v5010
      %v5012 = vpop.f32.mrf.mxu0
      %v5013 = vadd.f32 0.0, %v5012
      %5014 = vmatmul.bf16.gmra.mxu0 %v4443
      %v5015 = vpop.f32.mrf.mxu0
      %v5016 = vadd.f32 0.0, %v5015
      %v5017 = vpop.f32.mrf.mxu0
      %v5018 = vadd.f32 0.0, %v5017
      %5019 = vmatmul.bf16.gmra.mxu0 %v4446
      %v5020 = vpop.f32.mrf.mxu0
      %v5021 = vadd.f32 0.0, %v5020
      %v5022 = vpop.f32.mrf.mxu0
      %v5023 = vadd.f32 0.0, %v5022
      %5024 = vmatmul.bf16.gmra.mxu0 %v4449
      %v5025 = vpop.f32.mrf.mxu0
      %v5026 = vadd.f32 0.0, %v5025
      %v5027 = vpop.f32.mrf.mxu0
      %v5028 = vadd.f32 0.0, %v5027
      %5029 = vdwg.mxu0
      %v5030 = vadd.f32 %v4857, %v4951
      %v5031 = vadd.f32 %v4859, %v4953
      %v5032 = vadd.f32 %v4862, %v4956
      %v5033 = vadd.f32 %v4864, %v4958
      %v5034 = vadd.f32 %v4867, %v4961
      %v5035 = vadd.f32 %v4869, %v4963
      %v5036 = vadd.f32 %v4872, %v4966
      %v5037 = vadd.f32 %v4874, %v4968
      %v5038 = vadd.f32 %v4877, %v4971
      %v5039 = vadd.f32 %v4879, %v4973
      %v5040 = vadd.f32 %v4882, %v4976
      %v5041 = vadd.f32 %v4884, %v4978
      %v5042 = vadd.f32 %v4887, %v4981
      %v5043 = vadd.f32 %v4889, %v4983
      %v5044 = vadd.f32 %v4892, %v4986
      %v5045 = vadd.f32 %v4894, %v4988
      %v5046 = vadd.f32 %v4897, %v4991
      %v5047 = vadd.f32 %v4899, %v4993
      %v5048 = vadd.f32 %v4902, %v4996
      %v5049 = vadd.f32 %v4904, %v4998
      %v5050 = vadd.f32 %v4907, %v5001
      %v5051 = vadd.f32 %v4909, %v5003
      %v5052 = vadd.f32 %v4912, %v5006
      %v5053 = vadd.f32 %v4914, %v5008
      %v5054 = vadd.f32 %v4917, %v5011
      %v5055 = vadd.f32 %v4919, %v5013
      %v5056 = vadd.f32 %v4922, %v5016
      %v5057 = vadd.f32 %v4924, %v5018
      %v5058 = vadd.f32 %v4927, %v5021
      %v5059 = vadd.f32 %v4929, %v5023
      %v5060 = vadd.f32 %v4932, %v5026
      %v5061 = vadd.f32 %v4934, %v5028
      %s5062 = scalar_lea.vmem %s1, 30
      %v5063 = vld [vmem:[%s5062] sm:$0x3]
      %v5064 = vunpack.c.l.b16 %v1985
      %v5065 = vunpack.c.l.b16 %v1988
      %v5066 = vunpack.c.l.b16 %v1992
      %v5067 = vunpack.c.l.b16 %v1995
      %v5068 = vunpack.c.l.b16 %v1999
      %v5069 = vunpack.c.l.b16 %v2002
      %v5070 = vunpack.c.l.b16 %v2006
      %v5071 = vunpack.c.l.b16 %v2009
      %v5072 = vunpack.c.l.b16 %v2013
      %v5073 = vunpack.c.l.b16 %v2016
      %v5074 = vunpack.c.l.b16 %v2020
      %v5075 = vunpack.c.l.b16 %v2023
      %v5076 = vunpack.c.l.b16 %v2027
      %v5077 = vunpack.c.l.b16 %v2030
      %v5078 = vunpack.c.l.b16 %v2034
      %v5079 = vunpack.c.l.b16 %v2037
      %v5080 = vunpack.c.l.b16 %v2041
      %v5081 = vunpack.c.l.b16 %v2044
      %v5082 = vunpack.c.l.b16 %v2048
      %v5083 = vunpack.c.l.b16 %v2051
      %v5084 = vunpack.c.l.b16 %v2055
      %v5085 = vunpack.c.l.b16 %v2058
      %v5086 = vunpack.c.l.b16 %v2062
      %v5087 = vunpack.c.l.b16 %v2065
      %v5088 = vunpack.c.l.b16 %v2069
      %v5089 = vunpack.c.l.b16 %v2072
      %v5090 = vunpack.c.l.b16 %v2076
      %v5091 = vunpack.c.l.b16 %v2079
      %v5092 = vunpack.c.l.b16 %v2083
      %v5093 = vunpack.c.l.b16 %v2086
      %v5094 = vunpack.c.l.b16 %v2090
      %v5095 = vunpack.c.l.b16 %v2093
      %v5096 = vpack.c.b16 %v5065, %v5064
      %v5097 = vpack.c.b16 %v5067, %v5066
      %v5098 = vpack.c.b16 %v5069, %v5068
      %v5099 = vpack.c.b16 %v5071, %v5070
      %v5100 = vpack.c.b16 %v5073, %v5072
      %v5101 = vpack.c.b16 %v5075, %v5074
      %v5102 = vpack.c.b16 %v5077, %v5076
      %v5103 = vpack.c.b16 %v5079, %v5078
      %v5104 = vpack.c.b16 %v5081, %v5080
      %v5105 = vpack.c.b16 %v5083, %v5082
      %v5106 = vpack.c.b16 %v5085, %v5084
      %v5107 = vpack.c.b16 %v5087, %v5086
      %v5108 = vpack.c.b16 %v5089, %v5088
      %v5109 = vpack.c.b16 %v5091, %v5090
      %v5110 = vpack.c.b16 %v5093, %v5092
      %v5111 = vpack.c.b16 %v5095, %v5094
      %v5113 = vsel %vm2145, %v5096, 0
      %v5116 = vsel %vm2145, %v5097, 0
      %v5119 = vsel %vm2145, %v5098, 0
      %v5122 = vsel %vm2145, %v5099, 0
      %v5125 = vsel %vm2145, %v5100, 0
      %v5128 = vsel %vm2145, %v5101, 0
      %v5131 = vsel %vm2145, %v5102, 0
      %v5134 = vsel %vm2145, %v5103, 0
      %v5137 = vsel %vm2145, %v5104, 0
      %v5140 = vsel %vm2145, %v5105, 0
      %v5143 = vsel %vm2145, %v5106, 0
      %v5146 = vsel %vm2145, %v5107, 0
      %v5149 = vsel %vm2145, %v5108, 0
      %v5152 = vsel %vm2145, %v5109, 0
      %v5155 = vsel %vm2145, %v5110, 0
      %v5158 = vsel %vm2145, %v5111, 0
      %v5161 = vsel %vm2194, %v5063, 0
      %5163 = vmatpush.bf16.msra.mxu0 0
      %5164 = vmatpush.bf16.msra.mxu0 0
      %5165 = vmatpush.bf16.msra.mxu0 0
      %5166 = vmatpush.bf16.msra.mxu0 0
      %5167 = vmatpush.bf16.msra.mxu0 0
      %5168 = vmatpush.bf16.msra.mxu0 0
      %5169 = vmatpush.bf16.msra.mxu0 0
      %5170 = vmatpush.bf16.msra.mxu0 %v5161
      %5171 = vmatmul.bf16.gmra.mxu0 %v5113
      %v5172 = vpop.f32.mrf.mxu0
      %v5173 = vadd.f32 0.0, %v5172
      %v5174 = vpop.f32.mrf.mxu0
      %v5175 = vadd.f32 0.0, %v5174
      %5176 = vmatmul.bf16.gmra.mxu0 %v5116
      %v5177 = vpop.f32.mrf.mxu0
      %v5178 = vadd.f32 0.0, %v5177
      %v5179 = vpop.f32.mrf.mxu0
      %v5180 = vadd.f32 0.0, %v5179
      %5181 = vmatmul.bf16.gmra.mxu0 %v5119
      %v5182 = vpop.f32.mrf.mxu0
      %v5183 = vadd.f32 0.0, %v5182
      %v5184 = vpop.f32.mrf.mxu0
      %v5185 = vadd.f32 0.0, %v5184
      %5186 = vmatmul.bf16.gmra.mxu0 %v5122
      %v5187 = vpop.f32.mrf.mxu0
      %v5188 = vadd.f32 0.0, %v5187
      %v5189 = vpop.f32.mrf.mxu0
      %v5190 = vadd.f32 0.0, %v5189
      %5191 = vmatmul.bf16.gmra.mxu0 %v5125
      %v5192 = vpop.f32.mrf.mxu0
      %v5193 = vadd.f32 0.0, %v5192
      %v5194 = vpop.f32.mrf.mxu0
      %v5195 = vadd.f32 0.0, %v5194
      %5196 = vmatmul.bf16.gmra.mxu0 %v5128
      %v5197 = vpop.f32.mrf.mxu0
      %v5198 = vadd.f32 0.0, %v5197
      %v5199 = vpop.f32.mrf.mxu0
      %v5200 = vadd.f32 0.0, %v5199
      %5201 = vmatmul.bf16.gmra.mxu0 %v5131
      %v5202 = vpop.f32.mrf.mxu0
      %v5203 = vadd.f32 0.0, %v5202
      %v5204 = vpop.f32.mrf.mxu0
      %v5205 = vadd.f32 0.0, %v5204
      %5206 = vmatmul.bf16.gmra.mxu0 %v5134
      %v5207 = vpop.f32.mrf.mxu0
      %v5208 = vadd.f32 0.0, %v5207
      %v5209 = vpop.f32.mrf.mxu0
      %v5210 = vadd.f32 0.0, %v5209
      %5211 = vmatmul.bf16.gmra.mxu0 %v5137
      %v5212 = vpop.f32.mrf.mxu0
      %v5213 = vadd.f32 0.0, %v5212
      %v5214 = vpop.f32.mrf.mxu0
      %v5215 = vadd.f32 0.0, %v5214
      %5216 = vmatmul.bf16.gmra.mxu0 %v5140
      %v5217 = vpop.f32.mrf.mxu0
      %v5218 = vadd.f32 0.0, %v5217
      %v5219 = vpop.f32.mrf.mxu0
      %v5220 = vadd.f32 0.0, %v5219
      %5221 = vmatmul.bf16.gmra.mxu0 %v5143
      %v5222 = vpop.f32.mrf.mxu0
      %v5223 = vadd.f32 0.0, %v5222
      %v5224 = vpop.f32.mrf.mxu0
      %v5225 = vadd.f32 0.0, %v5224
      %5226 = vmatmul.bf16.gmra.mxu0 %v5146
      %v5227 = vpop.f32.mrf.mxu0
      %v5228 = vadd.f32 0.0, %v5227
      %v5229 = vpop.f32.mrf.mxu0
      %v5230 = vadd.f32 0.0, %v5229
      %5231 = vmatmul.bf16.gmra.mxu0 %v5149
      %v5232 = vpop.f32.mrf.mxu0
      %v5233 = vadd.f32 0.0, %v5232
      %v5234 = vpop.f32.mrf.mxu0
      %v5235 = vadd.f32 0.0, %v5234
      %5236 = vmatmul.bf16.gmra.mxu0 %v5152
      %v5237 = vpop.f32.mrf.mxu0
      %v5238 = vadd.f32 0.0, %v5237
      %v5239 = vpop.f32.mrf.mxu0
      %v5240 = vadd.f32 0.0, %v5239
      %5241 = vmatmul.bf16.gmra.mxu0 %v5155
      %v5242 = vpop.f32.mrf.mxu0
      %v5243 = vadd.f32 0.0, %v5242
      %v5244 = vpop.f32.mrf.mxu0
      %v5245 = vadd.f32 0.0, %v5244
      %5246 = vmatmul.bf16.gmra.mxu0 %v5158
      %v5247 = vpop.f32.mrf.mxu0
      %v5248 = vadd.f32 0.0, %v5247
      %v5249 = vpop.f32.mrf.mxu0
      %v5250 = vadd.f32 0.0, %v5249
      %5251 = vdwg.mxu0
      %v5252 = vadd.f32 %v5030, %v5173
      %v5253 = vadd.f32 %v5031, %v5175
      %v5254 = vadd.f32 %v5032, %v5178
      %v5255 = vadd.f32 %v5033, %v5180
      %v5256 = vadd.f32 %v5034, %v5183
      %v5257 = vadd.f32 %v5035, %v5185
      %v5258 = vadd.f32 %v5036, %v5188
      %v5259 = vadd.f32 %v5037, %v5190
      %v5260 = vadd.f32 %v5038, %v5193
      %v5261 = vadd.f32 %v5039, %v5195
      %v5262 = vadd.f32 %v5040, %v5198
      %v5263 = vadd.f32 %v5041, %v5200
      %v5264 = vadd.f32 %v5042, %v5203
      %v5265 = vadd.f32 %v5043, %v5205
      %v5266 = vadd.f32 %v5044, %v5208
      %v5267 = vadd.f32 %v5045, %v5210
      %v5268 = vadd.f32 %v5046, %v5213
      %v5269 = vadd.f32 %v5047, %v5215
      %v5270 = vadd.f32 %v5048, %v5218
      %v5271 = vadd.f32 %v5049, %v5220
      %v5272 = vadd.f32 %v5050, %v5223
      %v5273 = vadd.f32 %v5051, %v5225
      %v5274 = vadd.f32 %v5052, %v5228
      %v5275 = vadd.f32 %v5053, %v5230
      %v5276 = vadd.f32 %v5054, %v5233
      %v5277 = vadd.f32 %v5055, %v5235
      %v5278 = vadd.f32 %v5056, %v5238
      %v5279 = vadd.f32 %v5057, %v5240
      %v5280 = vadd.f32 %v5058, %v5243
      %v5281 = vadd.f32 %v5059, %v5245
      %v5282 = vadd.f32 %v5060, %v5248
      %v5283 = vadd.f32 %v5061, %v5250
      %v5284 = vadd.f32 %v5252, %v5253
      %v5285 = vadd.f32 %v5284, %v5254
      %v5286 = vadd.f32 %v5285, %v5255
      %v5287 = vadd.f32 %v5286, %v5256
      %v5288 = vadd.f32 %v5287, %v5257
      %v5289 = vadd.f32 %v5288, %v5258
      %v5290 = vadd.f32 %v5289, %v5259
      %v5291 = vadd.f32 %v5290, %v5260
      %v5292 = vadd.f32 %v5291, %v5261
      %v5293 = vadd.f32 %v5292, %v5262
      %v5294 = vadd.f32 %v5293, %v5263
      %v5295 = vadd.f32 %v5294, %v5264
      %v5296 = vadd.f32 %v5295, %v5265
      %v5297 = vadd.f32 %v5296, %v5266
      %v5298 = vadd.f32 %v5297, %v5267
      %v5299 = vadd.f32 %v5298, %v5268
      %v5300 = vadd.f32 %v5299, %v5269
      %v5301 = vadd.f32 %v5300, %v5270
      %v5302 = vadd.f32 %v5301, %v5271
      %v5303 = vadd.f32 %v5302, %v5272
      %v5304 = vadd.f32 %v5303, %v5273
      %v5305 = vadd.f32 %v5304, %v5274
      %v5306 = vadd.f32 %v5305, %v5275
      %v5307 = vadd.f32 %v5306, %v5276
      %v5308 = vadd.f32 %v5307, %v5277
      %v5309 = vadd.f32 %v5308, %v5278
      %v5310 = vadd.f32 %v5309, %v5279
      %v5311 = vadd.f32 %v5310, %v5280
      %v5312 = vadd.f32 %v5311, %v5281
      %v5313 = vadd.f32 %v5312, %v5282
      %v5314 = vadd.f32 %v5313, %v5283
      %v5315 = vrot.slane %v5314, 4
      %v5316 = vadd.f32 %v5314, %v5315
      %v5317 = vrot.slane %v5316, 2
      %v5318 = vadd.f32 %v5316, %v5317
      %v5319 = vrot.slane %v5318, 1
      %v5320 = vadd.f32 %v5318, %v5319
      %v5321 = vadd.f32 %v4612, %v5320
      %v5322 = vmul.f32 %v5252, %v5252
      %v5323 = vmul.f32 %v5253, %v5253
      %v5324 = vmul.f32 %v5254, %v5254
      %v5325 = vmul.f32 %v5255, %v5255
      %v5326 = vmul.f32 %v5256, %v5256
      %v5327 = vmul.f32 %v5257, %v5257
      %v5328 = vmul.f32 %v5258, %v5258
      %v5329 = vmul.f32 %v5259, %v5259
      %v5330 = vmul.f32 %v5260, %v5260
      %v5331 = vmul.f32 %v5261, %v5261
      %v5332 = vmul.f32 %v5262, %v5262
      %v5333 = vmul.f32 %v5263, %v5263
      %v5334 = vmul.f32 %v5264, %v5264
      %v5335 = vmul.f32 %v5265, %v5265
      %v5336 = vmul.f32 %v5266, %v5266
      %v5337 = vmul.f32 %v5267, %v5267
      %v5338 = vmul.f32 %v5268, %v5268
      %v5339 = vmul.f32 %v5269, %v5269
      %v5340 = vmul.f32 %v5270, %v5270
      %v5341 = vmul.f32 %v5271, %v5271
      %v5342 = vmul.f32 %v5272, %v5272
      %v5343 = vmul.f32 %v5273, %v5273
      %v5344 = vmul.f32 %v5274, %v5274
      %v5345 = vmul.f32 %v5275, %v5275
      %v5346 = vmul.f32 %v5276, %v5276
      %v5347 = vmul.f32 %v5277, %v5277
      %v5348 = vmul.f32 %v5278, %v5278
      %v5349 = vmul.f32 %v5279, %v5279
      %v5350 = vmul.f32 %v5280, %v5280
      %v5351 = vmul.f32 %v5281, %v5281
      %v5352 = vmul.f32 %v5282, %v5282
      %v5353 = vmul.f32 %v5283, %v5283
      %v5354 = vadd.f32 %v5322, %v5323
      %v5355 = vadd.f32 %v5354, %v5324
      %v5356 = vadd.f32 %v5355, %v5325
      %v5357 = vadd.f32 %v5356, %v5326
      %v5358 = vadd.f32 %v5357, %v5327
      %v5359 = vadd.f32 %v5358, %v5328
      %v5360 = vadd.f32 %v5359, %v5329
      %v5361 = vadd.f32 %v5360, %v5330
      %v5362 = vadd.f32 %v5361, %v5331
      %v5363 = vadd.f32 %v5362, %v5332
      %v5364 = vadd.f32 %v5363, %v5333
      %v5365 = vadd.f32 %v5364, %v5334
      %v5366 = vadd.f32 %v5365, %v5335
      %v5367 = vadd.f32 %v5366, %v5336
      %v5368 = vadd.f32 %v5367, %v5337
      %v5369 = vadd.f32 %v5368, %v5338
      %v5370 = vadd.f32 %v5369, %v5339
      %v5371 = vadd.f32 %v5370, %v5340
      %v5372 = vadd.f32 %v5371, %v5341
      %v5373 = vadd.f32 %v5372, %v5342
      %v5374 = vadd.f32 %v5373, %v5343
      %v5375 = vadd.f32 %v5374, %v5344
      %v5376 = vadd.f32 %v5375, %v5345
      %v5377 = vadd.f32 %v5376, %v5346
      %v5378 = vadd.f32 %v5377, %v5347
      %v5379 = vadd.f32 %v5378, %v5348
      %v5380 = vadd.f32 %v5379, %v5349
      %v5381 = vadd.f32 %v5380, %v5350
      %v5382 = vadd.f32 %v5381, %v5351
      %v5383 = vadd.f32 %v5382, %v5352
      %v5384 = vadd.f32 %v5383, %v5353
      %v5385 = vrot.slane %v5384, 4
      %v5386 = vadd.f32 %v5384, %v5385
      %v5387 = vrot.slane %v5386, 2
      %v5388 = vadd.f32 %v5386, %v5387
      %v5389 = vrot.slane %v5388, 1
      %v5390 = vadd.f32 %v5388, %v5389
      %v5391 = vadd.f32 %v4682, %v5390
      %v5392 = vpack.c.bf16 %v5252, %v5252
      %v5393 = vpack.c.bf16 %v5253, %v5253
      %v5394 = vpack.c.bf16 %v5254, %v5254
      %v5395 = vpack.c.bf16 %v5255, %v5255
      %v5396 = vpack.c.bf16 %v5256, %v5256
      %v5397 = vpack.c.bf16 %v5257, %v5257
      %v5398 = vpack.c.bf16 %v5258, %v5258
      %v5399 = vpack.c.bf16 %v5259, %v5259
      %v5400 = vpack.c.bf16 %v5260, %v5260
      %v5401 = vpack.c.bf16 %v5261, %v5261
      %v5402 = vpack.c.bf16 %v5262, %v5262
      %v5403 = vpack.c.bf16 %v5263, %v5263
      %v5404 = vpack.c.bf16 %v5264, %v5264
      %v5405 = vpack.c.bf16 %v5265, %v5265
      %v5406 = vpack.c.bf16 %v5266, %v5266
      %v5407 = vpack.c.bf16 %v5267, %v5267
      %v5408 = vpack.c.bf16 %v5268, %v5268
      %v5409 = vpack.c.bf16 %v5269, %v5269
      %v5410 = vpack.c.bf16 %v5270, %v5270
      %v5411 = vpack.c.bf16 %v5271, %v5271
      %v5412 = vpack.c.bf16 %v5272, %v5272
      %v5413 = vpack.c.bf16 %v5273, %v5273
      %v5414 = vpack.c.bf16 %v5274, %v5274
      %v5415 = vpack.c.bf16 %v5275, %v5275
      %v5416 = vpack.c.bf16 %v5276, %v5276
      %v5417 = vpack.c.bf16 %v5277, %v5277
      %v5418 = vpack.c.bf16 %v5278, %v5278
      %v5419 = vpack.c.bf16 %v5279, %v5279
      %v5420 = vpack.c.bf16 %v5280, %v5280
      %v5421 = vpack.c.bf16 %v5281, %v5281
      %v5422 = vpack.c.bf16 %v5282, %v5282
      %v5423 = vpack.c.bf16 %v5283, %v5283
      %5424 = vst [vmem:[%s4715 + $0x4] sm:$0xf] %v5392
      %5425 = vst [vmem:[%s4715 + $0xc] sm:$0xf] %v5393
      %5426 = vst [vmem:[%s4715 + $0x24] sm:$0xf] %v5394
      %5427 = vst [vmem:[%s4715 + $0x2c] sm:$0xf] %v5395
      %5428 = vst [vmem:[%s4715 + $0x44] sm:$0xf] %v5396
      %5429 = vst [vmem:[%s4715 + $0x4c] sm:$0xf] %v5397
      %5430 = vst [vmem:[%s4715 + $0x64] sm:$0xf] %v5398
      %5431 = vst [vmem:[%s4715 + $0x6c] sm:$0xf] %v5399
      %5432 = vst [vmem:[%s4715 + $0x84] sm:$0xf] %v5400
      %5433 = vst [vmem:[%s4715 + $0x8c] sm:$0xf] %v5401
      %5434 = vst [vmem:[%s4715 + $0xa4] sm:$0xf] %v5402
      %5435 = vst [vmem:[%s4715 + $0xac] sm:$0xf] %v5403
      %5436 = vst [vmem:[%s4715 + $0xc4] sm:$0xf] %v5404
      %5437 = vst [vmem:[%s4715 + $0xcc] sm:$0xf] %v5405
      %5438 = vst [vmem:[%s4715 + $0xe4] sm:$0xf] %v5406
      %5439 = vst [vmem:[%s4715 + $0xec] sm:$0xf] %v5407
      %5440 = vst [vmem:[%s4715 + $0x104] sm:$0xf] %v5408
      %5441 = vst [vmem:[%s4715 + $0x10c] sm:$0xf] %v5409
      %5442 = vst [vmem:[%s4715 + $0x124] sm:$0xf] %v5410
      %5443 = vst [vmem:[%s4715 + $0x12c] sm:$0xf] %v5411
      %5444 = vst [vmem:[%s4715 + $0x144] sm:$0xf] %v5412
      %5445 = vst [vmem:[%s4715 + $0x14c] sm:$0xf] %v5413
      %5446 = vst [vmem:[%s4715 + $0x164] sm:$0xf] %v5414
      %5447 = vst [vmem:[%s4715 + $0x16c] sm:$0xf] %v5415
      %5448 = vst [vmem:[%s4715 + $0x184] sm:$0xf] %v5416
      %5449 = vst [vmem:[%s4715 + $0x18c] sm:$0xf] %v5417
      %5450 = vst [vmem:[%s4715 + $0x1a4] sm:$0xf] %v5418
      %5451 = vst [vmem:[%s4715 + $0x1ac] sm:$0xf] %v5419
      %5452 = vst [vmem:[%s4715 + $0x1c4] sm:$0xf] %v5420
      %5453 = vst [vmem:[%s4715 + $0x1cc] sm:$0xf] %v5421
      %5454 = vst [vmem:[%s4715 + $0x1e4] sm:$0xf] %v5422
      %5455 = vst [vmem:[%s4715 + $0x1ec] sm:$0xf] %v5423
      %5456 = vst [vmem:[%s244] sm:$0x1] %v5321
      %5457 = vst [vmem:[%s250] sm:$0x1] %v5391
      %s5458 = sadd.s32 %s20, %s21
      %s5459 = smul.u32 16, %s5458
      %p5460 = scmp.lt.s32.totalorder %s5459, 31
      %s5461 = scalar_select %p5460, %s5459, 31
      %s5462 = smul.addr %s5461, 8
      %s5463 = smul.addr %s5462, 4
      %s5464 = scalar_lea.vmem %s2, %s5463
      %p5465 = scmp.lt.s32.totalorder %s20, 1
      %s5466 = scalar_select %p5465, %s20, 1
      %p5467 = scmp.lt.s32.totalorder %s21, 0
      %s5468 = scalar_select %p5467, %s21, 0
      %s5469 = sadd.s32 %s5468, %s5466
      %s5470 = scalar_lea.vmem %s3, %s5469
      %p5471 = scmp.lt.s32.totalorder %s20, 1
      %s5472 = scalar_select %p5471, %s20, 1
      %p5473 = scmp.lt.s32.totalorder %s21, 0
      %s5474 = scalar_select %p5473, %s21, 0
      %s5475 = sadd.s32 %s5474, %s5472
      %s5476 = scalar_lea.vmem %s4, %s5475
      // Predicated region
      $region29: #{upblock2d_forward.2} parent=27 // pred_check
        %p5477 = pneg %p95
      $region30: #{upblock2d_forward.2} parent=27 // pred_check_branch
        %5479 = sbr.rel (%p5477) target = $region32
      $region31: #{upblock2d_forward.2} parent=27 // pred_region
        %s5480 = sadd.s32 %s20, %s21
        %s5481 = smul.u32 16, %s5480
      $region32: #{upblock2d_forward.2} parent=27 // pred_fallthru
        _
      // Predicated region
      $region33: #{upblock2d_forward.2} parent=27 // pred_check
        %p5482 = pneg %p123
      $region34: #{upblock2d_forward.2} parent=27 // pred_check_branch
        %5484 = sbr.rel (%p5482) target = $region36
      $region35: #{upblock2d_forward.2} parent=27 // pred_region
        _
      $region36: #{upblock2d_forward.2} parent=27 // pred_fallthru
        _
      // Predicated region
      $region37: #{upblock2d_forward.2} parent=27 // pred_check
        %p5485 = pneg %p151
      $region38: #{upblock2d_forward.2} parent=27 // pred_check_branch
        %5487 = sbr.rel (%p5485) target = $region40
      $region39: #{upblock2d_forward.2} parent=27 // pred_region
        _
      $region40: #{upblock2d_forward.2} parent=27 // pred_fallthru
        _
    $region28: #{upblock2d_forward.2} parent=5 // pred_fallthru
      _
    %p5488 = scmp.le.s32.totalorder 2, %s11
    // Predicated region
    $region41: #{upblock2d_forward.2} parent=5 // pred_check
      %p5489 = pneg %p5488
    $region42: #{upblock2d_forward.2} parent=5 // pred_check_branch
      %5491 = sbr.rel (%p5489) target = $region44
    $region43: #{upblock2d_forward.2} parent=5 // pred_region
      %s5492 = ssub.s32 %s11, 2
      // Predicated region
      $region45: #{upblock2d_forward.2} parent=43 // pred_check
        %p5493 = pneg %p101
      $region46: #{upblock2d_forward.2} parent=43 // pred_check_branch
        %5495 = sbr.rel (%p5493) target = $region48
      $region47: #{upblock2d_forward.2} parent=43 // pred_region
        %s5496 = sadd.s32 %s22, %s23
        %s5497 = smul.u32 16, %s5496
        %p5498 = scmp.lt.s32.totalorder %s5497, 31
        %s5499 = scalar_select %p5498, %s5497, 31
        %s5500 = smul.addr %s5499, 8
        %s5501 = smul.addr %s5500, 4
        %s5502 = scalar_lea.vmem %s2, %s5501
      $region48: #{upblock2d_forward.2} parent=43 // pred_fallthru
        _
      // Predicated region
      $region49: #{upblock2d_forward.2} parent=43 // pred_check
        %p5503 = pneg %p129
      $region50: #{upblock2d_forward.2} parent=43 // pred_check_branch
        %5505 = sbr.rel (%p5503) target = $region52
      $region51: #{upblock2d_forward.2} parent=43 // pred_region
        %p5506 = scmp.lt.s32.totalorder %s22, 1
        %s5507 = scalar_select %p5506, %s22, 1
        %p5508 = scmp.lt.s32.totalorder %s23, 0
        %s5509 = scalar_select %p5508, %s23, 0
        %s5510 = sadd.s32 %s5509, %s5507
        %s5511 = scalar_lea.vmem %s3, %s5510
      $region52: #{upblock2d_forward.2} parent=43 // pred_fallthru
        _
      // Predicated region
      $region53: #{upblock2d_forward.2} parent=43 // pred_check
        %p5512 = pneg %p157
      $region54: #{upblock2d_forward.2} parent=43 // pred_check_branch
        %5514 = sbr.rel (%p5512) target = $region56
      $region55: #{upblock2d_forward.2} parent=43 // pred_region
        %p5515 = scmp.lt.s32.totalorder %s22, 1
        %s5516 = scalar_select %p5515, %s22, 1
        %p5517 = scmp.lt.s32.totalorder %s23, 0
        %s5518 = scalar_select %p5517, %s23, 0
        %s5519 = sadd.s32 %s5518, %s5516
        %s5520 = scalar_lea.vmem %s4, %s5519
      $region56: #{upblock2d_forward.2} parent=43 // pred_fallthru
        _
    $region44: #{upblock2d_forward.2} parent=5 // pred_fallthru
      _
  $region6: #{upblock2d_forward.2} parent=0 // loop_footer
    %s15 = sadd.s32 1, %s11
  $region7: #{upblock2d_forward.2} parent=0 // loop_footer_branch
    %10 = sbr.rel target = $region3
  $region8: #{upblock2d_forward.2} parent=0 // loop_exit
    _

</llo_original>
